<compile_context>
chip_gen: v5e
topology: v5e:2x2
jax: 0.10.0
libtpu: 0.0.40
codegen_flags: <defaults>
</compile_context>

<pallas_src>
import functools

import jax
import jax.numpy as jnp
from jax.experimental import pallas as pl
from jax.experimental.pallas import tpu as pltpu

# ---- small, self-consistent config -----------------------------------------
VOCAB = 32
ENC_HIDDEN = 128          # encoder_hidden
DEC_HIDDEN = 128          # decoder_hidden (must equal ENC_HIDDEN and embed dim 128)
DEC_LSTM = 128            # decoder_lstm
ENC_LAYERS = 2            # enc_num_layers (bidirectional)
DEC_LAYERS = 1            # dec_num_layers
LANE_PAD = 128            # final head padded to a full lane width (sliced to VOCAB)
BN_EPS = 1e-5
L2_EPS = 1e-12


# =============================================================================
# Shared in-kernel LSTM cell (f32 math, PyTorch gate order i,f,g,o)
# =============================================================================
def _lstm_cell(gates, c_prev):
    H = c_prev.shape[-1]
    i_g = jax.nn.sigmoid(gates[:, 0:H])
    f_g = jax.nn.sigmoid(gates[:, H:2 * H])
    g_g = jnp.tanh(gates[:, 2 * H:3 * H])
    o_g = jax.nn.sigmoid(gates[:, 3 * H:4 * H])
    c_new = f_g * c_prev + i_g * g_g
    h_new = o_g * jnp.tanh(c_new)
    return h_new, c_new


# =============================================================================
# Fused bidirectional LSTM layer: one kernel, grid=(2,) over direction.
# Each grid step = one full direction (whole-sequence input projection into a
# VMEM scratch + unrolled time loop).  "parallel" => v7x megacore runs the two
# independent directions on its two TensorCores.
# =============================================================================
def _bilstm_kernel(x_ref, wih_ref, b_ref, whh_ref, h0_ref, c0_ref, ys_ref, g_sc):
    d = pl.program_id(0)                       # 0 = forward, 1 = backward
    S, Bp, Din = x_ref.shape
    G = wih_ref.shape[1]

    # hoisted whole-sequence input projection (one MXU call), gates stay in VMEM
    x_flat = x_ref[...].reshape(S * Bp, Din).astype(jnp.bfloat16)
    g_sc[...] = (jnp.dot(x_flat, wih_ref[...], preferred_element_type=jnp.float32)
                 + b_ref[...]).reshape(S, Bp, G)

    def body(t, carry):
        h, c = carry
        idx = jnp.where(d == 0, t, S - 1 - t)  # bwd stream walks time in reverse
        gates = g_sc[idx] + jnp.dot(h.astype(jnp.bfloat16), whh_ref[...],
                                    preferred_element_type=jnp.float32)
        h, c = _lstm_cell(gates, c)
        ys_ref[idx] = h
        return h, c

    _ = jax.lax.fori_loop(0, S, body, (h0_ref[0], c0_ref[0]), unroll=True)


def bilstm_layer(x, wih_cat, b_cat, whh_cat, h0, c0):
    """x: (S, Bp, Din) f32.  wih_cat/b_cat/whh_cat hold [fwd | bwd] along the
    last axis; h0/c0: (2, Bp, H) with index 0 = fwd, 1 = bwd.
    Returns ys: (S, Bp, 2H) f32 with [fwd | bwd] concatenated on the last axis."""
    S, Bp, Din = x.shape
    H = whh_cat.shape[0]
    G = 4 * H
    return pl.pallas_call(
        _bilstm_kernel,
        out_shape=jax.ShapeDtypeStruct((S, Bp, 2 * H), jnp.float32),
        grid_spec=pltpu.PrefetchScalarGridSpec(
            num_scalar_prefetch=0,
            grid=(2,),
            in_specs=[pl.BlockSpec((S, Bp, Din), lambda d: (0, 0, 0)),
                      pl.BlockSpec((Din, G), lambda d: (0, d)),
                      pl.BlockSpec((1, G), lambda d: (0, d)),
                      pl.BlockSpec((H, G), lambda d: (0, d)),
                      pl.BlockSpec((1, Bp, H), lambda d: (d, 0, 0)),
                      pl.BlockSpec((1, Bp, H), lambda d: (d, 0, 0))],
            out_specs=pl.BlockSpec((S, Bp, H), lambda d: (0, 0, d)),
            scratch_shapes=[pltpu.VMEM((S, Bp, G), jnp.float32)]),
        compiler_params=pltpu.CompilerParams(
            dimension_semantics=("parallel",)),
    )(x, wih_cat, b_cat, whh_cat, h0, c0)


# =============================================================================
# Last encoder layer (reverse direction only) fused with the neck
# (BatchNorm1d + L2-normalize) and the decoder-init head
# ([cell | hid] = BN(ReLU(neck @ [Wc | Wh] + b))).
# =============================================================================
def _enc_tail_kernel(x_ref, wih_ref, b_ref, whh_ref, h0_ref, c0_ref,
                     bng_ref, bnb_ref, chw_ref, chb_ref, chg_ref, chbeta_ref,
                     cell_ref, hid_ref, g_sc, *, b_real):
    S, Bp, Din = x_ref.shape
    G = wih_ref.shape[1]
    L = cell_ref.shape[-1]

    x_flat = x_ref[...].reshape(S * Bp, Din).astype(jnp.bfloat16)
    g_sc[...] = (jnp.dot(x_flat, wih_ref[...], preferred_element_type=jnp.float32)
                 + b_ref[...]).reshape(S, Bp, G)

    def body(t, carry):
        h, c = carry
        gates = g_sc[S - 1 - t] + jnp.dot(h.astype(jnp.bfloat16), whh_ref[...],
                                          preferred_element_type=jnp.float32)
        return _lstm_cell(gates, c)

    _, c_fin = jax.lax.fori_loop(0, S, body, (h0_ref[...], c0_ref[...]),
                                 unroll=True)

    # neck = F.normalize(BatchNorm1d(cell[-1])): train-mode batch stats over the
    # real (unpadded) rows only; L2-normalize via a single rsqrt.
    cr = c_fin[:b_real]
    mean = jnp.mean(cr, axis=0, keepdims=True)
    var = jnp.mean((cr - mean) ** 2, axis=0, keepdims=True)
    y = (c_fin - mean) * jax.lax.rsqrt(var + BN_EPS) * bng_ref[...] + bnb_ref[...]
    sumsq = jnp.sum(y * y, axis=1, keepdims=True)
    neck = y * jax.lax.rsqrt(jnp.maximum(sumsq, L2_EPS * L2_EPS))

    # fused decoder-init head: [cell | hid] = BN(ReLU(neck @ [Wc | Wh] + b))
    ch = jnp.dot(neck.astype(jnp.bfloat16), chw_ref[...],
                 preferred_element_type=jnp.float32) + chb_ref[...]
    ch = jnp.maximum(ch, 0.0)
    chr_ = ch[:b_real]
    m2 = jnp.mean(chr_, axis=0, keepdims=True)
    v2 = jnp.mean((chr_ - m2) ** 2, axis=0, keepdims=True)
    ch = (ch - m2) * jax.lax.rsqrt(v2 + BN_EPS) * chg_ref[...] + chbeta_ref[...]
    cell_ref[...] = ch[:, :L]
    hid_ref[...] = ch[:, L:]


def enc_tail(x, wih_b, b_b, whh_b, h0b, c0b, bn_g, bn_b,
             ch_w, ch_b, ch_g, ch_beta, *, b_real):
    S, Bp, _ = x.shape
    H = whh_b.shape[0]
    L = ch_w.shape[1] // 2
    return pl.pallas_call(
        functools.partial(_enc_tail_kernel, b_real=b_real),
        out_shape=(jax.ShapeDtypeStruct((Bp, L), jnp.float32),
                   jax.ShapeDtypeStruct((Bp, L), jnp.float32)),
        scratch_shapes=[pltpu.VMEM((S, Bp, 4 * H), jnp.float32)],
    )(x, wih_b, b_b, whh_b, h0b, c0b, bn_g, bn_b, ch_w, ch_b, ch_g, ch_beta)


# =============================================================================
# Decoder: LSTM + (permute / BatchNorm1d(L) / permute) + final Linear + ReLU,
# all fused; ys kept in a VMEM scratch, BN stats over real rows x all timesteps.
# =============================================================================
def _decoder_kernel(x_ref, wih_ref, b_ref, whh_ref, h0_ref, c0_ref,
                    bng_ref, bnb_ref, wf_ref, bf_ref, out_ref,
                    g_sc, ys_sc, *, b_real):
    T, Bp, Din = x_ref.shape
    G = wih_ref.shape[1]
    L = whh_ref.shape[0]

    x_flat = x_ref[...].reshape(T * Bp, Din).astype(jnp.bfloat16)
    g_sc[...] = (jnp.dot(x_flat, wih_ref[...], preferred_element_type=jnp.float32)
                 + b_ref[...]).reshape(T, Bp, G)

    def body(t, carry):
        h, c = carry
        gates = g_sc[t] + jnp.dot(h.astype(jnp.bfloat16), whh_ref[...],
                                  preferred_element_type=jnp.float32)
        h, c = _lstm_cell(gates, c)
        ys_sc[t] = h
        return h, c

    _ = jax.lax.fori_loop(0, T, body, (h0_ref[...], c0_ref[...]), unroll=True)

    # BatchNorm1d(L) over (real batch x time) per channel, padded rows masked out
    ys = ys_sc[...]                                        # (T, Bp, L) f32
    row = jax.lax.broadcasted_iota(jnp.int32, (T, Bp, 1), 1)
    mask = (row < b_real).astype(jnp.float32)
    cnt = float(T * b_real)
    mean = jnp.sum(jnp.sum(ys * mask, axis=0), axis=0, keepdims=True) / cnt
    dd = (ys - mean) * mask
    var = jnp.sum(jnp.sum(dd * dd, axis=0), axis=0, keepdims=True) / cnt
    yn = (ys - mean) * jax.lax.rsqrt(var + BN_EPS) * bng_ref[...] + bnb_ref[...]

    # final Linear (lane-padded to 128 outputs) + ReLU, lane-dense store
    z = jnp.dot(yn.reshape(T * Bp, L).astype(jnp.bfloat16), wf_ref[...],
                preferred_element_type=jnp.float32) + bf_ref[...]
    out_ref[...] = jnp.maximum(z, 0.0)


def decoder_forward(x, wih, b, whh, hid, cell, bn_g, bn_b, w_fin, b_fin, *, b_real):
    T, Bp, _ = x.shape
    L = whh.shape[0]
    return pl.pallas_call(
        functools.partial(_decoder_kernel, b_real=b_real),
        out_shape=jax.ShapeDtypeStruct((T * Bp, w_fin.shape[1]), jnp.float32),
        scratch_shapes=[pltpu.VMEM((T, Bp, 4 * L), jnp.float32),
                        pltpu.VMEM((T, Bp, L), jnp.float32)],
    )(x, wih, b, whh, hid, cell, bn_g, bn_b, w_fin, b_fin)


# =============================================================================
# Parameters (deterministic synthetic init)
# =============================================================================
def _uniform(key, shape, scale):
    return jax.random.uniform(key, shape, jnp.float32, -scale, scale)


def init_params(key):
    keys = iter(jax.random.split(key, 48))
    p = {}
    # --- Encoder ---
    p["enc_embed"] = 0.1 * jax.random.normal(next(keys), (VOCAB, ENC_HIDDEN),
                                             jnp.float32)
    s = 1.0 / float(ENC_HIDDEN) ** 0.5
    G = 4 * ENC_HIDDEN
    enc = []
    for l in range(ENC_LAYERS):
        d_in = ENC_HIDDEN if l == 0 else 2 * ENC_HIDDEN
        wih_f = _uniform(next(keys), (d_in, G), s)
        wih_b = _uniform(next(keys), (d_in, G), s)
        whh_f = _uniform(next(keys), (ENC_HIDDEN, G), s)
        whh_b = _uniform(next(keys), (ENC_HIDDEN, G), s)
        b_f = _uniform(next(keys), (1, G), s)               # b_ih + b_hh folded
        b_b = _uniform(next(keys), (1, G), s)
        if l < ENC_LAYERS - 1:
            enc.append({
                "wih_cat": jnp.concatenate([wih_f, wih_b], 1).astype(jnp.bfloat16),
                "whh_cat": jnp.concatenate([whh_f, whh_b], 1).astype(jnp.bfloat16),
                "b_cat": jnp.concatenate([b_f, b_b], 1),
            })
        else:
            # only the reverse direction of the last layer reaches the output
            enc.append({"wih_b": wih_b.astype(jnp.bfloat16),
                        "whh_b": whh_b.astype(jnp.bfloat16),
                        "b_b": b_b})
    p["enc_lstm"] = enc
    p["enc_bn_g"] = jnp.ones((1, ENC_HIDDEN), jnp.float32)
    p["enc_bn_b"] = jnp.zeros((1, ENC_HIDDEN), jnp.float32)

    # --- Decoder ---
    p["dec_embed"] = 0.1 * jax.random.normal(next(keys), (VOCAB, DEC_HIDDEN),
                                             jnp.float32)
    sd = 1.0 / float(DEC_HIDDEN) ** 0.5
    w_cell = _uniform(next(keys), (DEC_HIDDEN, DEC_LSTM * DEC_LAYERS), sd)
    w_hid = _uniform(next(keys), (DEC_HIDDEN, DEC_LSTM * DEC_LAYERS), sd)
    b_cell = _uniform(next(keys), (1, DEC_LSTM * DEC_LAYERS), sd)
    b_hid = _uniform(next(keys), (1, DEC_LSTM * DEC_LAYERS), sd)
    p["dec_ch_w"] = jnp.concatenate([w_cell, w_hid], axis=1).astype(jnp.bfloat16)
    p["dec_ch_b"] = jnp.concatenate([b_cell, b_hid], axis=1)
    p["dec_ch_g"] = jnp.ones((1, 2 * DEC_LSTM), jnp.float32)     # bn_cell ++ bn_hid
    p["dec_ch_beta"] = jnp.zeros((1, 2 * DEC_LSTM), jnp.float32)

    sl = 1.0 / float(DEC_LSTM) ** 0.5
    p["dec_lstm"] = {
        "wih": _uniform(next(keys), (DEC_HIDDEN, 4 * DEC_LSTM), sl).astype(jnp.bfloat16),
        "whh": _uniform(next(keys), (DEC_LSTM, 4 * DEC_LSTM), sl).astype(jnp.bfloat16),
        "b": _uniform(next(keys), (1, 4 * DEC_LSTM), sl),
    }
    w_fin = _uniform(next(keys), (DEC_LSTM, VOCAB), sl)
    b_fin = _uniform(next(keys), (1, VOCAB), sl)
    # lane-dense final head: pad the VOCAB-wide projection to 128 output lanes.
    p["dec_final_w"] = (jnp.zeros((DEC_LSTM, LANE_PAD), jnp.float32)
                        .at[:, :VOCAB].set(w_fin).astype(jnp.bfloat16))
    p["dec_final_b"] = jnp.zeros((1, LANE_PAD), jnp.float32).at[:, :VOCAB].set(b_fin)
    p["bn_final_g"] = jnp.ones((1, DEC_LSTM), jnp.float32)
    p["bn_final_b"] = jnp.zeros((1, DEC_LSTM), jnp.float32)
    return p


def orthogonal_states(key, num, B, H, Bp):
    """Mimic torch.nn.init.orthogonal_ on a (num, B, H) tensor (rows of the
    flattened (num, B*H) matrix orthonormal).  Computed OUTSIDE jit (QR hoisted
    off the forward path) and zero-padded to the sublane-padded batch Bp."""
    a = jax.random.normal(key, (B * H, num), jnp.float32)
    q, _ = jnp.linalg.qr(a)                       # (B*H, num) orthonormal columns
    st = q.T.reshape(num, B, H)
    return jnp.zeros((num, Bp, H), jnp.float32).at[:, :B].set(st)


# =============================================================================
# Forward pass: embeddings / transposes in XLA, everything else in 3 kernels.
# =============================================================================
def reaction_encoder_forward(params, x_tokens, t_tokens, h0, c0):
    B, S = x_tokens.shape
    _, T = t_tokens.shape
    Bp = ((B + 7) // 8) * 8                      # pad batch onto full sublanes

    # ---------------- Encoder ----------------
    xp = jnp.zeros((Bp, S), jnp.int32).at[:B].set(x_tokens)
    emb = jnp.take(params["enc_embed"], xp, axis=0)              # (Bp, S, He)
    # TODO(synk): encoder Dropout(0.2) treated as identity (inference semantics).
    inp = jnp.transpose(emb, (1, 0, 2))                          # (S, Bp, He)

    for l in range(ENC_LAYERS - 1):
        lp = params["enc_lstm"][l]
        inp = bilstm_layer(inp, lp["wih_cat"], lp["b_cat"], lp["whh_cat"],
                           h0[2 * l:2 * l + 2], c0[2 * l:2 * l + 2])

    # Last layer: only cell[-1] (reverse-direction final cell) feeds the neck;
    # neck BN + L2-normalize + decoder cell/hid head are fused in one kernel.
    ll = ENC_LAYERS - 1
    lp = params["enc_lstm"][ll]
    cell, hid = enc_tail(inp, lp["wih_b"], lp["b_b"], lp["whh_b"],
                         h0[2 * ll + 1], c0[2 * ll + 1],
                         params["enc_bn_g"], params["enc_bn_b"],
                         params["dec_ch_w"], params["dec_ch_b"],
                         params["dec_ch_g"], params["dec_ch_beta"], b_real=B)

    # ---------------- Decoder ----------------
    tp = jnp.zeros((Bp, T), jnp.int32).at[:B].set(t_tokens)
    demb = jnp.take(params["dec_embed"], tp, axis=0)             # (Bp, T, 128)
    # TODO(synk): decoder Dropout(0.2) treated as identity (inference semantics).
    dseq = jnp.transpose(demb, (1, 0, 2))                        # (T, Bp, 128)

    # PyTorch: self.dec(input, (hid, cell))  ->  h0 = hid, c0 = cell.
    out = decoder_forward(dseq, params["dec_lstm"]["wih"], params["dec_lstm"]["b"],
                          params["dec_lstm"]["whh"], hid, cell,
                          params["bn_final_g"], params["bn_final_b"],
                          params["dec_final_w"], params["dec_final_b"],
                          b_real=B)                              # (T*Bp, 128)
    out = out.reshape(T, Bp, LANE_PAD)
    return jnp.transpose(out, (1, 0, 2))[:B, :, :VOCAB]


# =============================================================================
if __name__ == "__main__":
    key = jax.random.PRNGKey(0)
    kp, kx, kt, kh, kc = jax.random.split(key, 5)
    params = init_params(kp)

    B, S_ENC, S_DEC = 2, 8, 8
    Bp = ((B + 7) // 8) * 8
    x = jax.random.randint(kx, (B, S_ENC), 0, VOCAB, dtype=jnp.int32)
    t = jax.random.randint(kt, (B, S_DEC), 0, VOCAB, dtype=jnp.int32)

    # Orthogonal initial states: QR hoisted out of the jitted forward path.
    h0 = orthogonal_states(kh, ENC_LAYERS * 2, B, ENC_HIDDEN, Bp)
    c0 = orthogonal_states(kc, ENC_LAYERS * 2, B, ENC_HIDDEN, Bp)

    fwd = jax.jit(reaction_encoder_forward)
    out = jax.block_until_ready(fwd(params, x, t, h0, c0))
    assert out.shape == (B, S_DEC, VOCAB), out.shape
    assert bool(jnp.all(jnp.isfinite(out)))
    print("KERNEL_OK")
</pallas_src>

<mosaic_0001>
module attributes {stable_mosaic.version = 11 : i64} {
  func.func @_decoder_kernel(%arg0: memref<8x8x128xf32, #tpu.memory_space<vmem>>, %arg1: memref<128x512xbf16, #tpu.memory_space<vmem>>, %arg2: memref<1x512xf32, #tpu.memory_space<vmem>>, %arg3: memref<128x512xbf16, #tpu.memory_space<vmem>>, %arg4: memref<8x128xf32, #tpu.memory_space<vmem>>, %arg5: memref<8x128xf32, #tpu.memory_space<vmem>>, %arg6: memref<1x128xf32, #tpu.memory_space<vmem>>, %arg7: memref<1x128xf32, #tpu.memory_space<vmem>>, %arg8: memref<128x128xbf16, #tpu.memory_space<vmem>>, %arg9: memref<1x128xf32, #tpu.memory_space<vmem>>, %arg10: memref<64x128xf32, #tpu.memory_space<vmem>>, %arg11: memref<8x8x512xf32, #tpu.memory_space<vmem>>, %arg12: memref<8x8x128xf32, #tpu.memory_space<vmem>>) attributes {dimension_semantics = [], scalar_prefetch = 0 : i64, scratch_operands = 2 : i64, tpu.core_type = #tpu.core_type<tc>} {
    %c0 = arith.constant 0 : index
    %c0_0 = arith.constant 0 : index
    %c0_1 = arith.constant 0 : index
    %0 = vector.load %arg0[%c0, %c0_0, %c0_1] : memref<8x8x128xf32, #tpu.memory_space<vmem>>, vector<8x8x128xf32>
    %1 = vector.shape_cast %0 : vector<8x8x128xf32> to vector<64x128xf32>
    %2 = arith.truncf %1 : vector<64x128xf32> to vector<64x128xbf16>
    %c0_2 = arith.constant 0 : index
    %c0_3 = arith.constant 0 : index
    %3 = vector.load %arg1[%c0_2, %c0_3] : memref<128x512xbf16, #tpu.memory_space<vmem>>, vector<128x512xbf16>
    %cst = arith.constant dense<0.000000e+00> : vector<64x512xf32>
    %4 = tpu.matmul %2, %3, %cst {dimension_numbers = #tpu.dot_dimension_numbers<[1], [0], [0], [1], [0, 0, 1, 1], [], []>} : vector<64x128xbf16>, vector<128x512xbf16>, vector<64x512xf32> -> vector<64x512xf32>
    %c0_4 = arith.constant 0 : index
    %c0_5 = arith.constant 0 : index
    %5 = vector.load %arg2[%c0_4, %c0_5] : memref<1x512xf32, #tpu.memory_space<vmem>>, vector<1x512xf32>
    %6 = vector.broadcast %5 : vector<1x512xf32> to vector<64x512xf32>
    %7 = arith.addf %4, %6 : vector<64x512xf32>
    %8 = vector.shape_cast %7 : vector<64x512xf32> to vector<8x8x512xf32>
    %c0_6 = arith.constant 0 : index
    %c0_7 = arith.constant 0 : index
    %c0_8 = arith.constant 0 : index
    %9 = vector.load %arg11[%c0_6, %c0_7, %c0_8] : memref<8x8x512xf32, #tpu.memory_space<vmem>>, vector<8x8x512xf32>
    tpu.vector_store %arg11[%c0_6, %c0_7, %c0_8], %8 {strides = array<i32>} : memref<8x8x512xf32, #tpu.memory_space<vmem>>, vector<8x8x512xf32>,
    %c0_9 = arith.constant 0 : index
    %c0_10 = arith.constant 0 : index
    %10 = vector.load %arg4[%c0_9, %c0_10] : memref<8x128xf32, #tpu.memory_space<vmem>>, vector<8x128xf32>
    %c0_11 = arith.constant 0 : index
    %c0_12 = arith.constant 0 : index
    %11 = vector.load %arg5[%c0_11, %c0_12] : memref<8x128xf32, #tpu.memory_space<vmem>>, vector<8x128xf32>
    %c0_i32 = arith.constant 0 : i32
    %12 = arith.index_cast %c0_i32 : i32 to index
    %c0_13 = arith.constant 0 : index
    %c0_14 = arith.constant 0 : index
    %13 = vector.load %arg11[%12, %c0_13, %c0_14] : memref<8x8x512xf32, #tpu.memory_space<vmem>>, vector<1x8x512xf32>
    %14 = vector.shape_cast %13 : vector<1x8x512xf32> to vector<8x512xf32>
    %15 = arith.truncf %10 : vector<8x128xf32> to vector<8x128xbf16>
    %c0_15 = arith.constant 0 : index
    %c0_16 = arith.constant 0 : index
    %16 = vector.load %arg3[%c0_15, %c0_16] : memref<128x512xbf16, #tpu.memory_space<vmem>>, vector<128x512xbf16>
    %cst_17 = arith.constant dense<0.000000e+00> : vector<8x512xf32>
    %17 = tpu.matmul %15, %16, %cst_17 {dimension_numbers = #tpu.dot_dimension_numbers<[1], [0], [0], [1], [0, 0, 1, 1], [], []>} : vector<8x128xbf16>, vector<128x512xbf16>, vector<8x512xf32> -> vector<8x512xf32>
    %18 = arith.addf %14, %17 : vector<8x512xf32>
    %19 = vector.extract_strided_slice %18 {offsets = [0, 0], sizes = [8, 128], strides = [1, 1]} : vector<8x512xf32> to vector<8x128xf32>
    %20 = arith.negf %19 : vector<8x128xf32>
    %21 = math.exp %20 : vector<8x128xf32>
    %cst_18 = arith.constant 1.000000e+00 : f32
    %22 = vector.broadcast %cst_18 : f32 to vector<8x128xf32>
    %23 = arith.addf %22, %21 : vector<8x128xf32>
    %24 = arith.divf %22, %23 : vector<8x128xf32>
    %25 = vector.extract_strided_slice %18 {offsets = [0, 128], sizes = [8, 128], strides = [1, 1]} : vector<8x512xf32> to vector<8x128xf32>
    %26 = arith.negf %25 : vector<8x128xf32>
    %27 = math.exp %26 : vector<8x128xf32>
    %cst_19 = arith.constant 1.000000e+00 : f32
    %28 = vector.broadcast %cst_19 : f32 to vector<8x128xf32>
    %29 = arith.addf %28, %27 : vector<8x128xf32>
    %30 = arith.divf %28, %29 : vector<8x128xf32>
    %31 = vector.extract_strided_slice %18 {offsets = [0, 256], sizes = [8, 128], strides = [1, 1]} : vector<8x512xf32> to vector<8x128xf32>
    %32 = math.tanh %31 : vector<8x128xf32>
    %33 = vector.extract_strided_slice %18 {offsets = [0, 384], sizes = [8, 128], strides = [1, 1]} : vector<8x512xf32> to vector<8x128xf32>
    %34 = arith.negf %33 : vector<8x128xf32>
    %35 = math.exp %34 : vector<8x128xf32>
    %cst_20 = arith.constant 1.000000e+00 : f32
    %36 = vector.broadcast %cst_20 : f32 to vector<8x128xf32>
    %37 = arith.addf %36, %35 : vector<8x128xf32>
    %38 = arith.divf %36, %37 : vector<8x128xf32>
    %39 = arith.mulf %30, %11 : vector<8x128xf32>
    %40 = arith.mulf %24, %32 : vector<8x128xf32>
    %41 = arith.addf %39, %40 : vector<8x128xf32>
    %42 = math.tanh %41 : vector<8x128xf32>
    %43 = arith.mulf %38, %42 : vector<8x128xf32>
    %44 = arith.index_cast %c0_i32 : i32 to index
    %c0_21 = arith.constant 0 : index
    %c0_22 = arith.constant 0 : index
    %45 = vector.load %arg12[%44, %c0_21, %c0_22] : memref<8x8x128xf32, #tpu.memory_space<vmem>>, vector<1x8x128xf32>
    %46 = vector.shape_cast %45 : vector<1x8x128xf32> to vector<8x128xf32>
    %47 = vector.shape_cast %43 : vector<8x128xf32> to vector<1x8x128xf32>
    tpu.vector_store %arg12[%44, %c0_21, %c0_22], %47 {strides = array<i32>} : memref<8x8x128xf32, #tpu.memory_space<vmem>>, vector<1x8x128xf32>,
    %c1_i32 = arith.constant 1 : i32
    %48 = arith.index_cast %c1_i32 : i32 to index
    %c0_23 = arith.constant 0 : index
    %c0_24 = arith.constant 0 : index
    %49 = vector.load %arg11[%48, %c0_23, %c0_24] : memref<8x8x512xf32, #tpu.memory_space<vmem>>, vector<1x8x512xf32>
    %50 = vector.shape_cast %49 : vector<1x8x512xf32> to vector<8x512xf32>
    %51 = arith.truncf %43 : vector<8x128xf32> to vector<8x128xbf16>
    %c0_25 = arith.constant 0 : index
    %c0_26 = arith.constant 0 : index
    %52 = vector.load %arg3[%c0_25, %c0_26] : memref<128x512xbf16, #tpu.memory_space<vmem>>, vector<128x512xbf16>
    %cst_27 = arith.constant dense<0.000000e+00> : vector<8x512xf32>
    %53 = tpu.matmul %51, %52, %cst_27 {dimension_numbers = #tpu.dot_dimension_numbers<[1], [0], [0], [1], [0, 0, 1, 1], [], []>} : vector<8x128xbf16>, vector<128x512xbf16>, vector<8x512xf32> -> vector<8x512xf32>
    %54 = arith.addf %50, %53 : vector<8x512xf32>
    %55 = vector.extract_strided_slice %54 {offsets = [0, 0], sizes = [8, 128], strides = [1, 1]} : vector<8x512xf32> to vector<8x128xf32>
    %56 = arith.negf %55 : vector<8x128xf32>
    %57 = math.exp %56 : vector<8x128xf32>
    %cst_28 = arith.constant 1.000000e+00 : f32
    %58 = vector.broadcast %cst_28 : f32 to vector<8x128xf32>
    %59 = arith.addf %58, %57 : vector<8x128xf32>
    %60 = arith.divf %58, %59 : vector<8x128xf32>
    %61 = vector.extract_strided_slice %54 {offsets = [0, 128], sizes = [8, 128], strides = [1, 1]} : vector<8x512xf32> to vector<8x128xf32>
    %62 = arith.negf %61 : vector<8x128xf32>
    %63 = math.exp %62 : vector<8x128xf32>
    %cst_29 = arith.constant 1.000000e+00 : f32
    %64 = vector.broadcast %cst_29 : f32 to vector<8x128xf32>
    %65 = arith.addf %64, %63 : vector<8x128xf32>
    %66 = arith.divf %64, %65 : vector<8x128xf32>
    %67 = vector.extract_strided_slice %54 {offsets = [0, 256], sizes = [8, 128], strides = [1, 1]} : vector<8x512xf32> to vector<8x128xf32>
    %68 = math.tanh %67 : vector<8x128xf32>
    %69 = vector.extract_strided_slice %54 {offsets = [0, 384], sizes = [8, 128], strides = [1, 1]} : vector<8x512xf32> to vector<8x128xf32>
    %70 = arith.negf %69 : vector<8x128xf32>
    %71 = math.exp %70 : vector<8x128xf32>
    %cst_30 = arith.constant 1.000000e+00 : f32
    %72 = vector.broadcast %cst_30 : f32 to vector<8x128xf32>
    %73 = arith.addf %72, %71 : vector<8x128xf32>
    %74 = arith.divf %72, %73 : vector<8x128xf32>
    %75 = arith.mulf %66, %41 : vector<8x128xf32>
    %76 = arith.mulf %60, %68 : vector<8x128xf32>
    %77 = arith.addf %75, %76 : vector<8x128xf32>
    %78 = math.tanh %77 : vector<8x128xf32>
    %79 = arith.mulf %74, %78 : vector<8x128xf32>
    %80 = arith.index_cast %c1_i32 : i32 to index
    %c0_31 = arith.constant 0 : index
    %c0_32 = arith.constant 0 : index
    %81 = vector.load %arg12[%80, %c0_31, %c0_32] : memref<8x8x128xf32, #tpu.memory_space<vmem>>, vector<1x8x128xf32>
    %82 = vector.shape_cast %81 : vector<1x8x128xf32> to vector<8x128xf32>
    %83 = vector.shape_cast %79 : vector<8x128xf32> to vector<1x8x128xf32>
    tpu.vector_store %arg12[%80, %c0_31, %c0_32], %83 {strides = array<i32>} : memref<8x8x128xf32, #tpu.memory_space<vmem>>, vector<1x8x128xf32>,
    %c2_i32 = arith.constant 2 : i32
    %84 = arith.index_cast %c2_i32 : i32 to index
    %c0_33 = arith.constant 0 : index
    %c0_34 = arith.constant 0 : index
    %85 = vector.load %arg11[%84, %c0_33, %c0_34] : memref<8x8x512xf32, #tpu.memory_space<vmem>>, vector<1x8x512xf32>
    %86 = vector.shape_cast %85 : vector<1x8x512xf32> to vector<8x512xf32>
    %87 = arith.truncf %79 : vector<8x128xf32> to vector<8x128xbf16>
    %c0_35 = arith.constant 0 : index
    %c0_36 = arith.constant 0 : index
    %88 = vector.load %arg3[%c0_35, %c0_36] : memref<128x512xbf16, #tpu.memory_space<vmem>>, vector<128x512xbf16>
    %cst_37 = arith.constant dense<0.000000e+00> : vector<8x512xf32>
    %89 = tpu.matmul %87, %88, %cst_37 {dimension_numbers = #tpu.dot_dimension_numbers<[1], [0], [0], [1], [0, 0, 1, 1], [], []>} : vector<8x128xbf16>, vector<128x512xbf16>, vector<8x512xf32> -> vector<8x512xf32>
    %90 = arith.addf %86, %89 : vector<8x512xf32>
    %91 = vector.extract_strided_slice %90 {offsets = [0, 0], sizes = [8, 128], strides = [1, 1]} : vector<8x512xf32> to vector<8x128xf32>
    %92 = arith.negf %91 : vector<8x128xf32>
    %93 = math.exp %92 : vector<8x128xf32>
    %cst_38 = arith.constant 1.000000e+00 : f32
    %94 = vector.broadcast %cst_38 : f32 to vector<8x128xf32>
    %95 = arith.addf %94, %93 : vector<8x128xf32>
    %96 = arith.divf %94, %95 : vector<8x128xf32>
    %97 = vector.extract_strided_slice %90 {offsets = [0, 128], sizes = [8, 128], strides = [1, 1]} : vector<8x512xf32> to vector<8x128xf32>
    %98 = arith.negf %97 : vector<8x128xf32>
    %99 = math.exp %98 : vector<8x128xf32>
    %cst_39 = arith.constant 1.000000e+00 : f32
    %100 = vector.broadcast %cst_39 : f32 to vector<8x128xf32>
    %101 = arith.addf %100, %99 : vector<8x128xf32>
    %102 = arith.divf %100, %101 : vector<8x128xf32>
    %103 = vector.extract_strided_slice %90 {offsets = [0, 256], sizes = [8, 128], strides = [1, 1]} : vector<8x512xf32> to vector<8x128xf32>
    %104 = math.tanh %103 : vector<8x128xf32>
    %105 = vector.extract_strided_slice %90 {offsets = [0, 384], sizes = [8, 128], strides = [1, 1]} : vector<8x512xf32> to vector<8x128xf32>
    %106 = arith.negf %105 : vector<8x128xf32>
    %107 = math.exp %106 : vector<8x128xf32>
    %cst_40 = arith.constant 1.000000e+00 : f32
    %108 = vector.broadcast %cst_40 : f32 to vector<8x128xf32>
    %109 = arith.addf %108, %107 : vector<8x128xf32>
    %110 = arith.divf %108, %109 : vector<8x128xf32>
    %111 = arith.mulf %102, %77 : vector<8x128xf32>
    %112 = arith.mulf %96, %104 : vector<8x128xf32>
    %113 = arith.addf %111, %112 : vector<8x128xf32>
    %114 = math.tanh %113 : vector<8x128xf32>
    %115 = arith.mulf %110, %114 : vector<8x128xf32>
    %116 = arith.index_cast %c2_i32 : i32 to index
    %c0_41 = arith.constant 0 : index
    %c0_42 = arith.constant 0 : index
    %117 = vector.load %arg12[%116, %c0_41, %c0_42] : memref<8x8x128xf32, #tpu.memory_space<vmem>>, vector<1x8x128xf32>
    %118 = vector.shape_cast %117 : vector<1x8x128xf32> to vector<8x128xf32>
    %119 = vector.shape_cast %115 : vector<8x128xf32> to vector<1x8x128xf32>
    tpu.vector_store %arg12[%116, %c0_41, %c0_42], %119 {strides = array<i32>} : memref<8x8x128xf32, #tpu.memory_space<vmem>>, vector<1x8x128xf32>,
    %c3_i32 = arith.constant 3 : i32
    %120 = arith.index_cast %c3_i32 : i32 to index
    %c0_43 = arith.constant 0 : index
    %c0_44 = arith.constant 0 : index
    %121 = vector.load %arg11[%120, %c0_43, %c0_44] : memref<8x8x512xf32, #tpu.memory_space<vmem>>, vector<1x8x512xf32>
    %122 = vector.shape_cast %121 : vector<1x8x512xf32> to vector<8x512xf32>
    %123 = arith.truncf %115 : vector<8x128xf32> to vector<8x128xbf16>
    %c0_45 = arith.constant 0 : index
    %c0_46 = arith.constant 0 : index
    %124 = vector.load %arg3[%c0_45, %c0_46] : memref<128x512xbf16, #tpu.memory_space<vmem>>, vector<128x512xbf16>
    %cst_47 = arith.constant dense<0.000000e+00> : vector<8x512xf32>
    %125 = tpu.matmul %123, %124, %cst_47 {dimension_numbers = #tpu.dot_dimension_numbers<[1], [0], [0], [1], [0, 0, 1, 1], [], []>} : vector<8x128xbf16>, vector<128x512xbf16>, vector<8x512xf32> -> vector<8x512xf32>
    %126 = arith.addf %122, %125 : vector<8x512xf32>
    %127 = vector.extract_strided_slice %126 {offsets = [0, 0], sizes = [8, 128], strides = [1, 1]} : vector<8x512xf32> to vector<8x128xf32>
    %128 = arith.negf %127 : vector<8x128xf32>
    %129 = math.exp %128 : vector<8x128xf32>
    %cst_48 = arith.constant 1.000000e+00 : f32
    %130 = vector.broadcast %cst_48 : f32 to vector<8x128xf32>
    %131 = arith.addf %130, %129 : vector<8x128xf32>
    %132 = arith.divf %130, %131 : vector<8x128xf32>
    %133 = vector.extract_strided_slice %126 {offsets = [0, 128], sizes = [8, 128], strides = [1, 1]} : vector<8x512xf32> to vector<8x128xf32>
    %134 = arith.negf %133 : vector<8x128xf32>
    %135 = math.exp %134 : vector<8x128xf32>
    %cst_49 = arith.constant 1.000000e+00 : f32
    %136 = vector.broadcast %cst_49 : f32 to vector<8x128xf32>
    %137 = arith.addf %136, %135 : vector<8x128xf32>
    %138 = arith.divf %136, %137 : vector<8x128xf32>
    %139 = vector.extract_strided_slice %126 {offsets = [0, 256], sizes = [8, 128], strides = [1, 1]} : vector<8x512xf32> to vector<8x128xf32>
    %140 = math.tanh %139 : vector<8x128xf32>
    %141 = vector.extract_strided_slice %126 {offsets = [0, 384], sizes = [8, 128], strides = [1, 1]} : vector<8x512xf32> to vector<8x128xf32>
    %142 = arith.negf %141 : vector<8x128xf32>
    %143 = math.exp %142 : vector<8x128xf32>
    %cst_50 = arith.constant 1.000000e+00 : f32
    %144 = vector.broadcast %cst_50 : f32 to vector<8x128xf32>
    %145 = arith.addf %144, %143 : vector<8x128xf32>
    %146 = arith.divf %144, %145 : vector<8x128xf32>
    %147 = arith.mulf %138, %113 : vector<8x128xf32>
    %148 = arith.mulf %132, %140 : vector<8x128xf32>
    %149 = arith.addf %147, %148 : vector<8x128xf32>
    %150 = math.tanh %149 : vector<8x128xf32>
    %151 = arith.mulf %146, %150 : vector<8x128xf32>
    %152 = arith.index_cast %c3_i32 : i32 to index
    %c0_51 = arith.constant 0 : index
    %c0_52 = arith.constant 0 : index
    %153 = vector.load %arg12[%152, %c0_51, %c0_52] : memref<8x8x128xf32, #tpu.memory_space<vmem>>, vector<1x8x128xf32>
    %154 = vector.shape_cast %153 : vector<1x8x128xf32> to vector<8x128xf32>
    %155 = vector.shape_cast %151 : vector<8x128xf32> to vector<1x8x128xf32>
    tpu.vector_store %arg12[%152, %c0_51, %c0_52], %155 {strides = array<i32>} : memref<8x8x128xf32, #tpu.memory_space<vmem>>, vector<1x8x128xf32>,
    %c4_i32 = arith.constant 4 : i32
    %156 = arith.index_cast %c4_i32 : i32 to index
    %c0_53 = arith.constant 0 : index
    %c0_54 = arith.constant 0 : index
    %157 = vector.load %arg11[%156, %c0_53, %c0_54] : memref<8x8x512xf32, #tpu.memory_space<vmem>>, vector<1x8x512xf32>
    %158 = vector.shape_cast %157 : vector<1x8x512xf32> to vector<8x512xf32>
    %159 = arith.truncf %151 : vector<8x128xf32> to vector<8x128xbf16>
    %c0_55 = arith.constant 0 : index
    %c0_56 = arith.constant 0 : index
    %160 = vector.load %arg3[%c0_55, %c0_56] : memref<128x512xbf16, #tpu.memory_space<vmem>>, vector<128x512xbf16>
    %cst_57 = arith.constant dense<0.000000e+00> : vector<8x512xf32>
    %161 = tpu.matmul %159, %160, %cst_57 {dimension_numbers = #tpu.dot_dimension_numbers<[1], [0], [0], [1], [0, 0, 1, 1], [], []>} : vector<8x128xbf16>, vector<128x512xbf16>, vector<8x512xf32> -> vector<8x512xf32>
    %162 = arith.addf %158, %161 : vector<8x512xf32>
    %163 = vector.extract_strided_slice %162 {offsets = [0, 0], sizes = [8, 128], strides = [1, 1]} : vector<8x512xf32> to vector<8x128xf32>
    %164 = arith.negf %163 : vector<8x128xf32>
    %165 = math.exp %164 : vector<8x128xf32>
    %cst_58 = arith.constant 1.000000e+00 : f32
    %166 = vector.broadcast %cst_58 : f32 to vector<8x128xf32>
    %167 = arith.addf %166, %165 : vector<8x128xf32>
    %168 = arith.divf %166, %167 : vector<8x128xf32>
    %169 = vector.extract_strided_slice %162 {offsets = [0, 128], sizes = [8, 128], strides = [1, 1]} : vector<8x512xf32> to vector<8x128xf32>
    %170 = arith.negf %169 : vector<8x128xf32>
    %171 = math.exp %170 : vector<8x128xf32>
    %cst_59 = arith.constant 1.000000e+00 : f32
    %172 = vector.broadcast %cst_59 : f32 to vector<8x128xf32>
    %173 = arith.addf %172, %171 : vector<8x128xf32>
    %174 = arith.divf %172, %173 : vector<8x128xf32>
    %175 = vector.extract_strided_slice %162 {offsets = [0, 256], sizes = [8, 128], strides = [1, 1]} : vector<8x512xf32> to vector<8x128xf32>
    %176 = math.tanh %175 : vector<8x128xf32>
    %177 = vector.extract_strided_slice %162 {offsets = [0, 384], sizes = [8, 128], strides = [1, 1]} : vector<8x512xf32> to vector<8x128xf32>
    %178 = arith.negf %177 : vector<8x128xf32>
    %179 = math.exp %178 : vector<8x128xf32>
    %cst_60 = arith.constant 1.000000e+00 : f32
    %180 = vector.broadcast %cst_60 : f32 to vector<8x128xf32>
    %181 = arith.addf %180, %179 : vector<8x128xf32>
    %182 = arith.divf %180, %181 : vector<8x128xf32>
    %183 = arith.mulf %174, %149 : vector<8x128xf32>
    %184 = arith.mulf %168, %176 : vector<8x128xf32>
    %185 = arith.addf %183, %184 : vector<8x128xf32>
    %186 = math.tanh %185 : vector<8x128xf32>
    %187 = arith.mulf %182, %186 : vector<8x128xf32>
    %188 = arith.index_cast %c4_i32 : i32 to index
    %c0_61 = arith.constant 0 : index
    %c0_62 = arith.constant 0 : index
    %189 = vector.load %arg12[%188, %c0_61, %c0_62] : memref<8x8x128xf32, #tpu.memory_space<vmem>>, vector<1x8x128xf32>
    %190 = vector.shape_cast %189 : vector<1x8x128xf32> to vector<8x128xf32>
    %191 = vector.shape_cast %187 : vector<8x128xf32> to vector<1x8x128xf32>
    tpu.vector_store %arg12[%188, %c0_61, %c0_62], %191 {strides = array<i32>} : memref<8x8x128xf32, #tpu.memory_space<vmem>>, vector<1x8x128xf32>,
    %c5_i32 = arith.constant 5 : i32
    %192 = arith.index_cast %c5_i32 : i32 to index
    %c0_63 = arith.constant 0 : index
    %c0_64 = arith.constant 0 : index
    %193 = vector.load %arg11[%192, %c0_63, %c0_64] : memref<8x8x512xf32, #tpu.memory_space<vmem>>, vector<1x8x512xf32>
    %194 = vector.shape_cast %193 : vector<1x8x512xf32> to vector<8x512xf32>
    %195 = arith.truncf %187 : vector<8x128xf32> to vector<8x128xbf16>
    %c0_65 = arith.constant 0 : index
    %c0_66 = arith.constant 0 : index
    %196 = vector.load %arg3[%c0_65, %c0_66] : memref<128x512xbf16, #tpu.memory_space<vmem>>, vector<128x512xbf16>
    %cst_67 = arith.constant dense<0.000000e+00> : vector<8x512xf32>
    %197 = tpu.matmul %195, %196, %cst_67 {dimension_numbers = #tpu.dot_dimension_numbers<[1], [0], [0], [1], [0, 0, 1, 1], [], []>} : vector<8x128xbf16>, vector<128x512xbf16>, vector<8x512xf32> -> vector<8x512xf32>
    %198 = arith.addf %194, %197 : vector<8x512xf32>
    %199 = vector.extract_strided_slice %198 {offsets = [0, 0], sizes = [8, 128], strides = [1, 1]} : vector<8x512xf32> to vector<8x128xf32>
    %200 = arith.negf %199 : vector<8x128xf32>
    %201 = math.exp %200 : vector<8x128xf32>
    %cst_68 = arith.constant 1.000000e+00 : f32
    %202 = vector.broadcast %cst_68 : f32 to vector<8x128xf32>
    %203 = arith.addf %202, %201 : vector<8x128xf32>
    %204 = arith.divf %202, %203 : vector<8x128xf32>
    %205 = vector.extract_strided_slice %198 {offsets = [0, 128], sizes = [8, 128], strides = [1, 1]} : vector<8x512xf32> to vector<8x128xf32>
    %206 = arith.negf %205 : vector<8x128xf32>
    %207 = math.exp %206 : vector<8x128xf32>
    %cst_69 = arith.constant 1.000000e+00 : f32
    %208 = vector.broadcast %cst_69 : f32 to vector<8x128xf32>
    %209 = arith.addf %208, %207 : vector<8x128xf32>
    %210 = arith.divf %208, %209 : vector<8x128xf32>
    %211 = vector.extract_strided_slice %198 {offsets = [0, 256], sizes = [8, 128], strides = [1, 1]} : vector<8x512xf32> to vector<8x128xf32>
    %212 = math.tanh %211 : vector<8x128xf32>
    %213 = vector.extract_strided_slice %198 {offsets = [0, 384], sizes = [8, 128], strides = [1, 1]} : vector<8x512xf32> to vector<8x128xf32>
    %214 = arith.negf %213 : vector<8x128xf32>
    %215 = math.exp %214 : vector<8x128xf32>
    %cst_70 = arith.constant 1.000000e+00 : f32
    %216 = vector.broadcast %cst_70 : f32 to vector<8x128xf32>
    %217 = arith.addf %216, %215 : vector<8x128xf32>
    %218 = arith.divf %216, %217 : vector<8x128xf32>
    %219 = arith.mulf %210, %185 : vector<8x128xf32>
    %220 = arith.mulf %204, %212 : vector<8x128xf32>
    %221 = arith.addf %219, %220 : vector<8x128xf32>
    %222 = math.tanh %221 : vector<8x128xf32>
    %223 = arith.mulf %218, %222 : vector<8x128xf32>
    %224 = arith.index_cast %c5_i32 : i32 to index
    %c0_71 = arith.constant 0 : index
    %c0_72 = arith.constant 0 : index
    %225 = vector.load %arg12[%224, %c0_71, %c0_72] : memref<8x8x128xf32, #tpu.memory_space<vmem>>, vector<1x8x128xf32>
    %226 = vector.shape_cast %225 : vector<1x8x128xf32> to vector<8x128xf32>
    %227 = vector.shape_cast %223 : vector<8x128xf32> to vector<1x8x128xf32>
    tpu.vector_store %arg12[%224, %c0_71, %c0_72], %227 {strides = array<i32>} : memref<8x8x128xf32, #tpu.memory_space<vmem>>, vector<1x8x128xf32>,
    %c6_i32 = arith.constant 6 : i32
    %228 = arith.index_cast %c6_i32 : i32 to index
    %c0_73 = arith.constant 0 : index
    %c0_74 = arith.constant 0 : index
    %229 = vector.load %arg11[%228, %c0_73, %c0_74] : memref<8x8x512xf32, #tpu.memory_space<vmem>>, vector<1x8x512xf32>
    %230 = vector.shape_cast %229 : vector<1x8x512xf32> to vector<8x512xf32>
    %231 = arith.truncf %223 : vector<8x128xf32> to vector<8x128xbf16>
    %c0_75 = arith.constant 0 : index
    %c0_76 = arith.constant 0 : index
    %232 = vector.load %arg3[%c0_75, %c0_76] : memref<128x512xbf16, #tpu.memory_space<vmem>>, vector<128x512xbf16>
    %cst_77 = arith.constant dense<0.000000e+00> : vector<8x512xf32>
    %233 = tpu.matmul %231, %232, %cst_77 {dimension_numbers = #tpu.dot_dimension_numbers<[1], [0], [0], [1], [0, 0, 1, 1], [], []>} : vector<8x128xbf16>, vector<128x512xbf16>, vector<8x512xf32> -> vector<8x512xf32>
    %234 = arith.addf %230, %233 : vector<8x512xf32>
    %235 = vector.extract_strided_slice %234 {offsets = [0, 0], sizes = [8, 128], strides = [1, 1]} : vector<8x512xf32> to vector<8x128xf32>
    %236 = arith.negf %235 : vector<8x128xf32>
    %237 = math.exp %236 : vector<8x128xf32>
    %cst_78 = arith.constant 1.000000e+00 : f32
    %238 = vector.broadcast %cst_78 : f32 to vector<8x128xf32>
    %239 = arith.addf %238, %237 : vector<8x128xf32>
    %240 = arith.divf %238, %239 : vector<8x128xf32>
    %241 = vector.extract_strided_slice %234 {offsets = [0, 128], sizes = [8, 128], strides = [1, 1]} : vector<8x512xf32> to vector<8x128xf32>
    %242 = arith.negf %241 : vector<8x128xf32>
    %243 = math.exp %242 : vector<8x128xf32>
    %cst_79 = arith.constant 1.000000e+00 : f32
    %244 = vector.broadcast %cst_79 : f32 to vector<8x128xf32>
    %245 = arith.addf %244, %243 : vector<8x128xf32>
    %246 = arith.divf %244, %245 : vector<8x128xf32>
    %247 = vector.extract_strided_slice %234 {offsets = [0, 256], sizes = [8, 128], strides = [1, 1]} : vector<8x512xf32> to vector<8x128xf32>
    %248 = math.tanh %247 : vector<8x128xf32>
    %249 = vector.extract_strided_slice %234 {offsets = [0, 384], sizes = [8, 128], strides = [1, 1]} : vector<8x512xf32> to vector<8x128xf32>
    %250 = arith.negf %249 : vector<8x128xf32>
    %251 = math.exp %250 : vector<8x128xf32>
    %cst_80 = arith.constant 1.000000e+00 : f32
    %252 = vector.broadcast %cst_80 : f32 to vector<8x128xf32>
    %253 = arith.addf %252, %251 : vector<8x128xf32>
    %254 = arith.divf %252, %253 : vector<8x128xf32>
    %255 = arith.mulf %246, %221 : vector<8x128xf32>
    %256 = arith.mulf %240, %248 : vector<8x128xf32>
    %257 = arith.addf %255, %256 : vector<8x128xf32>
    %258 = math.tanh %257 : vector<8x128xf32>
    %259 = arith.mulf %254, %258 : vector<8x128xf32>
    %260 = arith.index_cast %c6_i32 : i32 to index
    %c0_81 = arith.constant 0 : index
    %c0_82 = arith.constant 0 : index
    %261 = vector.load %arg12[%260, %c0_81, %c0_82] : memref<8x8x128xf32, #tpu.memory_space<vmem>>, vector<1x8x128xf32>
    %262 = vector.shape_cast %261 : vector<1x8x128xf32> to vector<8x128xf32>
    %263 = vector.shape_cast %259 : vector<8x128xf32> to vector<1x8x128xf32>
    tpu.vector_store %arg12[%260, %c0_81, %c0_82], %263 {strides = array<i32>} : memref<8x8x128xf32, #tpu.memory_space<vmem>>, vector<1x8x128xf32>,
    %c7_i32 = arith.constant 7 : i32
    %264 = arith.index_cast %c7_i32 : i32 to index
    %c0_83 = arith.constant 0 : index
    %c0_84 = arith.constant 0 : index
    %265 = vector.load %arg11[%264, %c0_83, %c0_84] : memref<8x8x512xf32, #tpu.memory_space<vmem>>, vector<1x8x512xf32>
    %266 = vector.shape_cast %265 : vector<1x8x512xf32> to vector<8x512xf32>
    %267 = arith.truncf %259 : vector<8x128xf32> to vector<8x128xbf16>
    %c0_85 = arith.constant 0 : index
    %c0_86 = arith.constant 0 : index
    %268 = vector.load %arg3[%c0_85, %c0_86] : memref<128x512xbf16, #tpu.memory_space<vmem>>, vector<128x512xbf16>
    %cst_87 = arith.constant dense<0.000000e+00> : vector<8x512xf32>
    %269 = tpu.matmul %267, %268, %cst_87 {dimension_numbers = #tpu.dot_dimension_numbers<[1], [0], [0], [1], [0, 0, 1, 1], [], []>} : vector<8x128xbf16>, vector<128x512xbf16>, vector<8x512xf32> -> vector<8x512xf32>
    %270 = arith.addf %266, %269 : vector<8x512xf32>
    %271 = vector.extract_strided_slice %270 {offsets = [0, 0], sizes = [8, 128], strides = [1, 1]} : vector<8x512xf32> to vector<8x128xf32>
    %272 = arith.negf %271 : vector<8x128xf32>
    %273 = math.exp %272 : vector<8x128xf32>
    %cst_88 = arith.constant 1.000000e+00 : f32
    %274 = vector.broadcast %cst_88 : f32 to vector<8x128xf32>
    %275 = arith.addf %274, %273 : vector<8x128xf32>
    %276 = arith.divf %274, %275 : vector<8x128xf32>
    %277 = vector.extract_strided_slice %270 {offsets = [0, 128], sizes = [8, 128], strides = [1, 1]} : vector<8x512xf32> to vector<8x128xf32>
    %278 = arith.negf %277 : vector<8x128xf32>
    %279 = math.exp %278 : vector<8x128xf32>
    %cst_89 = arith.constant 1.000000e+00 : f32
    %280 = vector.broadcast %cst_89 : f32 to vector<8x128xf32>
    %281 = arith.addf %280, %279 : vector<8x128xf32>
    %282 = arith.divf %280, %281 : vector<8x128xf32>
    %283 = vector.extract_strided_slice %270 {offsets = [0, 256], sizes = [8, 128], strides = [1, 1]} : vector<8x512xf32> to vector<8x128xf32>
    %284 = math.tanh %283 : vector<8x128xf32>
    %285 = vector.extract_strided_slice %270 {offsets = [0, 384], sizes = [8, 128], strides = [1, 1]} : vector<8x512xf32> to vector<8x128xf32>
    %286 = arith.negf %285 : vector<8x128xf32>
    %287 = math.exp %286 : vector<8x128xf32>
    %cst_90 = arith.constant 1.000000e+00 : f32
    %288 = vector.broadcast %cst_90 : f32 to vector<8x128xf32>
    %289 = arith.addf %288, %287 : vector<8x128xf32>
    %290 = arith.divf %288, %289 : vector<8x128xf32>
    %291 = arith.mulf %282, %257 : vector<8x128xf32>
    %292 = arith.mulf %276, %284 : vector<8x128xf32>
    %293 = arith.addf %291, %292 : vector<8x128xf32>
    %294 = math.tanh %293 : vector<8x128xf32>
    %295 = arith.mulf %290, %294 : vector<8x128xf32>
    %296 = arith.index_cast %c7_i32 : i32 to index
    %c0_91 = arith.constant 0 : index
    %c0_92 = arith.constant 0 : index
    %297 = vector.load %arg12[%296, %c0_91, %c0_92] : memref<8x8x128xf32, #tpu.memory_space<vmem>>, vector<1x8x128xf32>
    %298 = vector.shape_cast %297 : vector<1x8x128xf32> to vector<8x128xf32>
    %299 = vector.shape_cast %295 : vector<8x128xf32> to vector<1x8x128xf32>
    tpu.vector_store %arg12[%296, %c0_91, %c0_92], %299 {strides = array<i32>} : memref<8x8x128xf32, #tpu.memory_space<vmem>>, vector<1x8x128xf32>,
    %c8_i32 = arith.constant 8 : i32
    %c0_93 = arith.constant 0 : index
    %c0_94 = arith.constant 0 : index
    %c0_95 = arith.constant 0 : index
    %300 = vector.load %arg12[%c0_93, %c0_94, %c0_95] : memref<8x8x128xf32, #tpu.memory_space<vmem>>, vector<8x8x128xf32>
    %301 = tpu.iota {dimensions = array<i32: 1>} : vector<8x8x1xi32>
    %c2_i32_96 = arith.constant 2 : i32
    %302 = vector.broadcast %c2_i32_96 : i32 to vector<8x8x1xi32>
    %303 = arith.cmpi slt, %301, %302 : vector<8x8x1xi32>
    %304 = arith.extui %303 : vector<8x8x1xi1> to vector<8x8x1xi32>
    %305 = arith.sitofp %304 : vector<8x8x1xi32> to vector<8x8x1xf32>
    %306 = vector.broadcast %305 : vector<8x8x1xf32> to vector<8x8x128xf32>
    %307 = arith.mulf %300, %306 : vector<8x8x128xf32>
    %cst_97 = arith.constant dense<0.000000e+00> : vector<8x128xf32>
    %308 = vector.multi_reduction <add>, %307, %cst_97 [0] : vector<8x8x128xf32> to vector<8x128xf32>
    %cst_98 = arith.constant dense<0.000000e+00> : vector<128xf32>
    %309 = vector.multi_reduction <add>, %308, %cst_98 [0] : vector<8x128xf32> to vector<128xf32>
    %310 = vector.shape_cast %309 : vector<128xf32> to vector<1x128xf32>
    %cst_99 = arith.constant 1.600000e+01 : f32
    %311 = vector.broadcast %cst_99 : f32 to vector<1x128xf32>
    %312 = arith.divf %310, %311 : vector<1x128xf32>
    %313 = vector.shape_cast %312 : vector<1x128xf32> to vector<1x1x128xf32>
    %314 = vector.broadcast %313 : vector<1x1x128xf32> to vector<8x8x128xf32>
    %315 = arith.subf %300, %314 : vector<8x8x128xf32>
    %316 = vector.broadcast %305 : vector<8x8x1xf32> to vector<8x8x128xf32>
    %317 = arith.mulf %315, %316 : vector<8x8x128xf32>
    %318 = arith.mulf %317, %317 : vector<8x8x128xf32>
    %cst_100 = arith.constant dense<0.000000e+00> : vector<8x128xf32>
    %319 = vector.multi_reduction <add>, %318, %cst_100 [0] : vector<8x8x128xf32> to vector<8x128xf32>
    %cst_101 = arith.constant dense<0.000000e+00> : vector<128xf32>
    %320 = vector.multi_reduction <add>, %319, %cst_101 [0] : vector<8x128xf32> to vector<128xf32>
    %321 = vector.shape_cast %320 : vector<128xf32> to vector<1x128xf32>
    %cst_102 = arith.constant 1.600000e+01 : f32
    %322 = vector.broadcast %cst_102 : f32 to vector<1x128xf32>
    %323 = arith.divf %321, %322 : vector<1x128xf32>
    %324 = vector.shape_cast %312 : vector<1x128xf32> to vector<1x1x128xf32>
    %325 = vector.broadcast %324 : vector<1x1x128xf32> to vector<8x8x128xf32>
    %326 = arith.subf %300, %325 : vector<8x8x128xf32>
    %cst_103 = arith.constant 9.99999974E-6 : f32
    %327 = vector.broadcast %cst_103 : f32 to vector<1x128xf32>
    %328 = arith.addf %323, %327 : vector<1x128xf32>
    %329 = math.rsqrt %328 : vector<1x128xf32>
    %330 = vector.shape_cast %329 : vector<1x128xf32> to vector<1x1x128xf32>
    %331 = vector.broadcast %330 : vector<1x1x128xf32> to vector<8x8x128xf32>
    %332 = arith.mulf %326, %331 : vector<8x8x128xf32>
    %c0_104 = arith.constant 0 : index
    %c0_105 = arith.constant 0 : index
    %333 = vector.load %arg6[%c0_104, %c0_105] : memref<1x128xf32, #tpu.memory_space<vmem>>, vector<1x128xf32>
    %334 = vector.shape_cast %333 : vector<1x128xf32> to vector<1x1x128xf32>
    %335 = vector.broadcast %334 : vector<1x1x128xf32> to vector<8x8x128xf32>
    %336 = arith.mulf %332, %335 : vector<8x8x128xf32>
    %c0_106 = arith.constant 0 : index
    %c0_107 = arith.constant 0 : index
    %337 = vector.load %arg7[%c0_106, %c0_107] : memref<1x128xf32, #tpu.memory_space<vmem>>, vector<1x128xf32>
    %338 = vector.shape_cast %337 : vector<1x128xf32> to vector<1x1x128xf32>
    %339 = vector.broadcast %338 : vector<1x1x128xf32> to vector<8x8x128xf32>
    %340 = arith.addf %336, %339 : vector<8x8x128xf32>
    %341 = vector.shape_cast %340 : vector<8x8x128xf32> to vector<64x128xf32>
    %342 = arith.truncf %341 : vector<64x128xf32> to vector<64x128xbf16>
    %c0_108 = arith.constant 0 : index
    %c0_109 = arith.constant 0 : index
    %343 = vector.load %arg8[%c0_108, %c0_109] : memref<128x128xbf16, #tpu.memory_space<vmem>>, vector<128x128xbf16>
    %cst_110 = arith.constant dense<0.000000e+00> : vector<64x128xf32>
    %344 = tpu.matmul %342, %343, %cst_110 {dimension_numbers = #tpu.dot_dimension_numbers<[1], [0], [0], [1], [0, 0, 1, 1], [], []>} : vector<64x128xbf16>, vector<128x128xbf16>, vector<64x128xf32> -> vector<64x128xf32>
    %c0_111 = arith.constant 0 : index
    %c0_112 = arith.constant 0 : index
    %345 = vector.load %arg9[%c0_111, %c0_112] : memref<1x128xf32, #tpu.memory_space<vmem>>, vector<1x128xf32>
    %346 = vector.broadcast %345 : vector<1x128xf32> to vector<64x128xf32>
    %347 = arith.addf %344, %346 : vector<64x128xf32>
    %cst_113 = arith.constant 0.000000e+00 : f32
    %348 = vector.broadcast %cst_113 : f32 to vector<64x128xf32>
    %349 = arith.maximumf %347, %348 : vector<64x128xf32>
    %c0_114 = arith.constant 0 : index
    %c0_115 = arith.constant 0 : index
    %350 = vector.load %arg10[%c0_114, %c0_115] : memref<64x128xf32, #tpu.memory_space<vmem>>, vector<64x128xf32>
    tpu.vector_store %arg10[%c0_114, %c0_115], %349 {strides = array<i32>} : memref<64x128xf32, #tpu.memory_space<vmem>>, vector<64x128xf32>,
    return
  }
}

module attributes {stable_mosaic.version = 11 : i64} {
  func.func @_enc_tail_kernel(%arg0: memref<8x8x256xf32, #tpu.memory_space<vmem>>, %arg1: memref<256x512xbf16, #tpu.memory_space<vmem>>, %arg2: memref<1x512xf32, #tpu.memory_space<vmem>>, %arg3: memref<128x512xbf16, #tpu.memory_space<vmem>>, %arg4: memref<8x128xf32, #tpu.memory_space<vmem>>, %arg5: memref<8x128xf32, #tpu.memory_space<vmem>>, %arg6: memref<1x128xf32, #tpu.memory_space<vmem>>, %arg7: memref<1x128xf32, #tpu.memory_space<vmem>>, %arg8: memref<128x256xbf16, #tpu.memory_space<vmem>>, %arg9: memref<1x256xf32, #tpu.memory_space<vmem>>, %arg10: memref<1x256xf32, #tpu.memory_space<vmem>>, %arg11: memref<1x256xf32, #tpu.memory_space<vmem>>, %arg12: memref<8x128xf32, #tpu.memory_space<vmem>>, %arg13: memref<8x128xf32, #tpu.memory_space<vmem>>, %arg14: memref<8x8x512xf32, #tpu.memory_space<vmem>>) attributes {dimension_semantics = [], scalar_prefetch = 0 : i64, scratch_operands = 1 : i64, tpu.core_type = #tpu.core_type<tc>} {
    %c0 = arith.constant 0 : index
    %c0_0 = arith.constant 0 : index
    %c0_1 = arith.constant 0 : index
    %0 = vector.load %arg0[%c0, %c0_0, %c0_1] : memref<8x8x256xf32, #tpu.memory_space<vmem>>, vector<8x8x256xf32>
    %1 = vector.shape_cast %0 : vector<8x8x256xf32> to vector<64x256xf32>
    %2 = arith.truncf %1 : vector<64x256xf32> to vector<64x256xbf16>
    %c0_2 = arith.constant 0 : index
    %c0_3 = arith.constant 0 : index
    %3 = vector.load %arg1[%c0_2, %c0_3] : memref<256x512xbf16, #tpu.memory_space<vmem>>, vector<256x512xbf16>
    %cst = arith.constant dense<0.000000e+00> : vector<64x512xf32>
    %4 = tpu.matmul %2, %3, %cst {dimension_numbers = #tpu.dot_dimension_numbers<[1], [0], [0], [1], [0, 0, 1, 1], [], []>} : vector<64x256xbf16>, vector<256x512xbf16>, vector<64x512xf32> -> vector<64x512xf32>
    %c0_4 = arith.constant 0 : index
    %c0_5 = arith.constant 0 : index
    %5 = vector.load %arg2[%c0_4, %c0_5] : memref<1x512xf32, #tpu.memory_space<vmem>>, vector<1x512xf32>
    %6 = vector.broadcast %5 : vector<1x512xf32> to vector<64x512xf32>
    %7 = arith.addf %4, %6 : vector<64x512xf32>
    %8 = vector.shape_cast %7 : vector<64x512xf32> to vector<8x8x512xf32>
    %c0_6 = arith.constant 0 : index
    %c0_7 = arith.constant 0 : index
    %c0_8 = arith.constant 0 : index
    %9 = vector.load %arg14[%c0_6, %c0_7, %c0_8] : memref<8x8x512xf32, #tpu.memory_space<vmem>>, vector<8x8x512xf32>
    tpu.vector_store %arg14[%c0_6, %c0_7, %c0_8], %8 {strides = array<i32>} : memref<8x8x512xf32, #tpu.memory_space<vmem>>, vector<8x8x512xf32>,
    %c0_9 = arith.constant 0 : index
    %c0_10 = arith.constant 0 : index
    %10 = vector.load %arg4[%c0_9, %c0_10] : memref<8x128xf32, #tpu.memory_space<vmem>>, vector<8x128xf32>
    %c0_11 = arith.constant 0 : index
    %c0_12 = arith.constant 0 : index
    %11 = vector.load %arg5[%c0_11, %c0_12] : memref<8x128xf32, #tpu.memory_space<vmem>>, vector<8x128xf32>
    %c0_i32 = arith.constant 0 : i32
    %c7_i32 = arith.constant 7 : i32
    %12 = arith.subi %c7_i32, %c0_i32 : i32
    %13 = arith.index_cast %12 : i32 to index
    %c0_13 = arith.constant 0 : index
    %c0_14 = arith.constant 0 : index
    %14 = vector.load %arg14[%13, %c0_13, %c0_14] : memref<8x8x512xf32, #tpu.memory_space<vmem>>, vector<1x8x512xf32>
    %15 = vector.shape_cast %14 : vector<1x8x512xf32> to vector<8x512xf32>
    %16 = arith.truncf %10 : vector<8x128xf32> to vector<8x128xbf16>
    %c0_15 = arith.constant 0 : index
    %c0_16 = arith.constant 0 : index
    %17 = vector.load %arg3[%c0_15, %c0_16] : memref<128x512xbf16, #tpu.memory_space<vmem>>, vector<128x512xbf16>
    %cst_17 = arith.constant dense<0.000000e+00> : vector<8x512xf32>
    %18 = tpu.matmul %16, %17, %cst_17 {dimension_numbers = #tpu.dot_dimension_numbers<[1], [0], [0], [1], [0, 0, 1, 1], [], []>} : vector<8x128xbf16>, vector<128x512xbf16>, vector<8x512xf32> -> vector<8x512xf32>
    %19 = arith.addf %15, %18 : vector<8x512xf32>
    %20 = vector.extract_strided_slice %19 {offsets = [0, 0], sizes = [8, 128], strides = [1, 1]} : vector<8x512xf32> to vector<8x128xf32>
    %21 = arith.negf %20 : vector<8x128xf32>
    %22 = math.exp %21 : vector<8x128xf32>
    %cst_18 = arith.constant 1.000000e+00 : f32
    %23 = vector.broadcast %cst_18 : f32 to vector<8x128xf32>
    %24 = arith.addf %23, %22 : vector<8x128xf32>
    %25 = arith.divf %23, %24 : vector<8x128xf32>
    %26 = vector.extract_strided_slice %19 {offsets = [0, 128], sizes = [8, 128], strides = [1, 1]} : vector<8x512xf32> to vector<8x128xf32>
    %27 = arith.negf %26 : vector<8x128xf32>
    %28 = math.exp %27 : vector<8x128xf32>
    %cst_19 = arith.constant 1.000000e+00 : f32
    %29 = vector.broadcast %cst_19 : f32 to vector<8x128xf32>
    %30 = arith.addf %29, %28 : vector<8x128xf32>
    %31 = arith.divf %29, %30 : vector<8x128xf32>
    %32 = vector.extract_strided_slice %19 {offsets = [0, 256], sizes = [8, 128], strides = [1, 1]} : vector<8x512xf32> to vector<8x128xf32>
    %33 = math.tanh %32 : vector<8x128xf32>
    %34 = vector.extract_strided_slice %19 {offsets = [0, 384], sizes = [8, 128], strides = [1, 1]} : vector<8x512xf32> to vector<8x128xf32>
    %35 = arith.negf %34 : vector<8x128xf32>
    %36 = math.exp %35 : vector<8x128xf32>
    %cst_20 = arith.constant 1.000000e+00 : f32
    %37 = vector.broadcast %cst_20 : f32 to vector<8x128xf32>
    %38 = arith.addf %37, %36 : vector<8x128xf32>
    %39 = arith.divf %37, %38 : vector<8x128xf32>
    %40 = arith.mulf %31, %11 : vector<8x128xf32>
    %41 = arith.mulf %25, %33 : vector<8x128xf32>
    %42 = arith.addf %40, %41 : vector<8x128xf32>
    %43 = math.tanh %42 : vector<8x128xf32>
    %44 = arith.mulf %39, %43 : vector<8x128xf32>
    %c1_i32 = arith.constant 1 : i32
    %c7_i32_21 = arith.constant 7 : i32
    %45 = arith.subi %c7_i32_21, %c1_i32 : i32
    %46 = arith.index_cast %45 : i32 to index
    %c0_22 = arith.constant 0 : index
    %c0_23 = arith.constant 0 : index
    %47 = vector.load %arg14[%46, %c0_22, %c0_23] : memref<8x8x512xf32, #tpu.memory_space<vmem>>, vector<1x8x512xf32>
    %48 = vector.shape_cast %47 : vector<1x8x512xf32> to vector<8x512xf32>
    %49 = arith.truncf %44 : vector<8x128xf32> to vector<8x128xbf16>
    %c0_24 = arith.constant 0 : index
    %c0_25 = arith.constant 0 : index
    %50 = vector.load %arg3[%c0_24, %c0_25] : memref<128x512xbf16, #tpu.memory_space<vmem>>, vector<128x512xbf16>
    %cst_26 = arith.constant dense<0.000000e+00> : vector<8x512xf32>
    %51 = tpu.matmul %49, %50, %cst_26 {dimension_numbers = #tpu.dot_dimension_numbers<[1], [0], [0], [1], [0, 0, 1, 1], [], []>} : vector<8x128xbf16>, vector<128x512xbf16>, vector<8x512xf32> -> vector<8x512xf32>
    %52 = arith.addf %48, %51 : vector<8x512xf32>
    %53 = vector.extract_strided_slice %52 {offsets = [0, 0], sizes = [8, 128], strides = [1, 1]} : vector<8x512xf32> to vector<8x128xf32>
    %54 = arith.negf %53 : vector<8x128xf32>
    %55 = math.exp %54 : vector<8x128xf32>
    %cst_27 = arith.constant 1.000000e+00 : f32
    %56 = vector.broadcast %cst_27 : f32 to vector<8x128xf32>
    %57 = arith.addf %56, %55 : vector<8x128xf32>
    %58 = arith.divf %56, %57 : vector<8x128xf32>
    %59 = vector.extract_strided_slice %52 {offsets = [0, 128], sizes = [8, 128], strides = [1, 1]} : vector<8x512xf32> to vector<8x128xf32>
    %60 = arith.negf %59 : vector<8x128xf32>
    %61 = math.exp %60 : vector<8x128xf32>
    %cst_28 = arith.constant 1.000000e+00 : f32
    %62 = vector.broadcast %cst_28 : f32 to vector<8x128xf32>
    %63 = arith.addf %62, %61 : vector<8x128xf32>
    %64 = arith.divf %62, %63 : vector<8x128xf32>
    %65 = vector.extract_strided_slice %52 {offsets = [0, 256], sizes = [8, 128], strides = [1, 1]} : vector<8x512xf32> to vector<8x128xf32>
    %66 = math.tanh %65 : vector<8x128xf32>
    %67 = vector.extract_strided_slice %52 {offsets = [0, 384], sizes = [8, 128], strides = [1, 1]} : vector<8x512xf32> to vector<8x128xf32>
    %68 = arith.negf %67 : vector<8x128xf32>
    %69 = math.exp %68 : vector<8x128xf32>
    %cst_29 = arith.constant 1.000000e+00 : f32
    %70 = vector.broadcast %cst_29 : f32 to vector<8x128xf32>
    %71 = arith.addf %70, %69 : vector<8x128xf32>
    %72 = arith.divf %70, %71 : vector<8x128xf32>
    %73 = arith.mulf %64, %42 : vector<8x128xf32>
    %74 = arith.mulf %58, %66 : vector<8x128xf32>
    %75 = arith.addf %73, %74 : vector<8x128xf32>
    %76 = math.tanh %75 : vector<8x128xf32>
    %77 = arith.mulf %72, %76 : vector<8x128xf32>
    %c2_i32 = arith.constant 2 : i32
    %c7_i32_30 = arith.constant 7 : i32
    %78 = arith.subi %c7_i32_30, %c2_i32 : i32
    %79 = arith.index_cast %78 : i32 to index
    %c0_31 = arith.constant 0 : index
    %c0_32 = arith.constant 0 : index
    %80 = vector.load %arg14[%79, %c0_31, %c0_32] : memref<8x8x512xf32, #tpu.memory_space<vmem>>, vector<1x8x512xf32>
    %81 = vector.shape_cast %80 : vector<1x8x512xf32> to vector<8x512xf32>
    %82 = arith.truncf %77 : vector<8x128xf32> to vector<8x128xbf16>
    %c0_33 = arith.constant 0 : index
    %c0_34 = arith.constant 0 : index
    %83 = vector.load %arg3[%c0_33, %c0_34] : memref<128x512xbf16, #tpu.memory_space<vmem>>, vector<128x512xbf16>
    %cst_35 = arith.constant dense<0.000000e+00> : vector<8x512xf32>
    %84 = tpu.matmul %82, %83, %cst_35 {dimension_numbers = #tpu.dot_dimension_numbers<[1], [0], [0], [1], [0, 0, 1, 1], [], []>} : vector<8x128xbf16>, vector<128x512xbf16>, vector<8x512xf32> -> vector<8x512xf32>
    %85 = arith.addf %81, %84 : vector<8x512xf32>
    %86 = vector.extract_strided_slice %85 {offsets = [0, 0], sizes = [8, 128], strides = [1, 1]} : vector<8x512xf32> to vector<8x128xf32>
    %87 = arith.negf %86 : vector<8x128xf32>
    %88 = math.exp %87 : vector<8x128xf32>
    %cst_36 = arith.constant 1.000000e+00 : f32
    %89 = vector.broadcast %cst_36 : f32 to vector<8x128xf32>
    %90 = arith.addf %89, %88 : vector<8x128xf32>
    %91 = arith.divf %89, %90 : vector<8x128xf32>
    %92 = vector.extract_strided_slice %85 {offsets = [0, 128], sizes = [8, 128], strides = [1, 1]} : vector<8x512xf32> to vector<8x128xf32>
    %93 = arith.negf %92 : vector<8x128xf32>
    %94 = math.exp %93 : vector<8x128xf32>
    %cst_37 = arith.constant 1.000000e+00 : f32
    %95 = vector.broadcast %cst_37 : f32 to vector<8x128xf32>
    %96 = arith.addf %95, %94 : vector<8x128xf32>
    %97 = arith.divf %95, %96 : vector<8x128xf32>
    %98 = vector.extract_strided_slice %85 {offsets = [0, 256], sizes = [8, 128], strides = [1, 1]} : vector<8x512xf32> to vector<8x128xf32>
    %99 = math.tanh %98 : vector<8x128xf32>
    %100 = vector.extract_strided_slice %85 {offsets = [0, 384], sizes = [8, 128], strides = [1, 1]} : vector<8x512xf32> to vector<8x128xf32>
    %101 = arith.negf %100 : vector<8x128xf32>
    %102 = math.exp %101 : vector<8x128xf32>
    %cst_38 = arith.constant 1.000000e+00 : f32
    %103 = vector.broadcast %cst_38 : f32 to vector<8x128xf32>
    %104 = arith.addf %103, %102 : vector<8x128xf32>
    %105 = arith.divf %103, %104 : vector<8x128xf32>
    %106 = arith.mulf %97, %75 : vector<8x128xf32>
    %107 = arith.mulf %91, %99 : vector<8x128xf32>
    %108 = arith.addf %106, %107 : vector<8x128xf32>
    %109 = math.tanh %108 : vector<8x128xf32>
    %110 = arith.mulf %105, %109 : vector<8x128xf32>
    %c3_i32 = arith.constant 3 : i32
    %c7_i32_39 = arith.constant 7 : i32
    %111 = arith.subi %c7_i32_39, %c3_i32 : i32
    %112 = arith.index_cast %111 : i32 to index
    %c0_40 = arith.constant 0 : index
    %c0_41 = arith.constant 0 : index
    %113 = vector.load %arg14[%112, %c0_40, %c0_41] : memref<8x8x512xf32, #tpu.memory_space<vmem>>, vector<1x8x512xf32>
    %114 = vector.shape_cast %113 : vector<1x8x512xf32> to vector<8x512xf32>
    %115 = arith.truncf %110 : vector<8x128xf32> to vector<8x128xbf16>
    %c0_42 = arith.constant 0 : index
    %c0_43 = arith.constant 0 : index
    %116 = vector.load %arg3[%c0_42, %c0_43] : memref<128x512xbf16, #tpu.memory_space<vmem>>, vector<128x512xbf16>
    %cst_44 = arith.constant dense<0.000000e+00> : vector<8x512xf32>
    %117 = tpu.matmul %115, %116, %cst_44 {dimension_numbers = #tpu.dot_dimension_numbers<[1], [0], [0], [1], [0, 0, 1, 1], [], []>} : vector<8x128xbf16>, vector<128x512xbf16>, vector<8x512xf32> -> vector<8x512xf32>
    %118 = arith.addf %114, %117 : vector<8x512xf32>
    %119 = vector.extract_strided_slice %118 {offsets = [0, 0], sizes = [8, 128], strides = [1, 1]} : vector<8x512xf32> to vector<8x128xf32>
    %120 = arith.negf %119 : vector<8x128xf32>
    %121 = math.exp %120 : vector<8x128xf32>
    %cst_45 = arith.constant 1.000000e+00 : f32
    %122 = vector.broadcast %cst_45 : f32 to vector<8x128xf32>
    %123 = arith.addf %122, %121 : vector<8x128xf32>
    %124 = arith.divf %122, %123 : vector<8x128xf32>
    %125 = vector.extract_strided_slice %118 {offsets = [0, 128], sizes = [8, 128], strides = [1, 1]} : vector<8x512xf32> to vector<8x128xf32>
    %126 = arith.negf %125 : vector<8x128xf32>
    %127 = math.exp %126 : vector<8x128xf32>
    %cst_46 = arith.constant 1.000000e+00 : f32
    %128 = vector.broadcast %cst_46 : f32 to vector<8x128xf32>
    %129 = arith.addf %128, %127 : vector<8x128xf32>
    %130 = arith.divf %128, %129 : vector<8x128xf32>
    %131 = vector.extract_strided_slice %118 {offsets = [0, 256], sizes = [8, 128], strides = [1, 1]} : vector<8x512xf32> to vector<8x128xf32>
    %132 = math.tanh %131 : vector<8x128xf32>
    %133 = vector.extract_strided_slice %118 {offsets = [0, 384], sizes = [8, 128], strides = [1, 1]} : vector<8x512xf32> to vector<8x128xf32>
    %134 = arith.negf %133 : vector<8x128xf32>
    %135 = math.exp %134 : vector<8x128xf32>
    %cst_47 = arith.constant 1.000000e+00 : f32
    %136 = vector.broadcast %cst_47 : f32 to vector<8x128xf32>
    %137 = arith.addf %136, %135 : vector<8x128xf32>
    %138 = arith.divf %136, %137 : vector<8x128xf32>
    %139 = arith.mulf %130, %108 : vector<8x128xf32>
    %140 = arith.mulf %124, %132 : vector<8x128xf32>
    %141 = arith.addf %139, %140 : vector<8x128xf32>
    %142 = math.tanh %141 : vector<8x128xf32>
    %143 = arith.mulf %138, %142 : vector<8x128xf32>
    %c4_i32 = arith.constant 4 : i32
    %c7_i32_48 = arith.constant 7 : i32
    %144 = arith.subi %c7_i32_48, %c4_i32 : i32
    %145 = arith.index_cast %144 : i32 to index
    %c0_49 = arith.constant 0 : index
    %c0_50 = arith.constant 0 : index
    %146 = vector.load %arg14[%145, %c0_49, %c0_50] : memref<8x8x512xf32, #tpu.memory_space<vmem>>, vector<1x8x512xf32>
    %147 = vector.shape_cast %146 : vector<1x8x512xf32> to vector<8x512xf32>
    %148 = arith.truncf %143 : vector<8x128xf32> to vector<8x128xbf16>
    %c0_51 = arith.constant 0 : index
    %c0_52 = arith.constant 0 : index
    %149 = vector.load %arg3[%c0_51, %c0_52] : memref<128x512xbf16, #tpu.memory_space<vmem>>, vector<128x512xbf16>
    %cst_53 = arith.constant dense<0.000000e+00> : vector<8x512xf32>
    %150 = tpu.matmul %148, %149, %cst_53 {dimension_numbers = #tpu.dot_dimension_numbers<[1], [0], [0], [1], [0, 0, 1, 1], [], []>} : vector<8x128xbf16>, vector<128x512xbf16>, vector<8x512xf32> -> vector<8x512xf32>
    %151 = arith.addf %147, %150 : vector<8x512xf32>
    %152 = vector.extract_strided_slice %151 {offsets = [0, 0], sizes = [8, 128], strides = [1, 1]} : vector<8x512xf32> to vector<8x128xf32>
    %153 = arith.negf %152 : vector<8x128xf32>
    %154 = math.exp %153 : vector<8x128xf32>
    %cst_54 = arith.constant 1.000000e+00 : f32
    %155 = vector.broadcast %cst_54 : f32 to vector<8x128xf32>
    %156 = arith.addf %155, %154 : vector<8x128xf32>
    %157 = arith.divf %155, %156 : vector<8x128xf32>
    %158 = vector.extract_strided_slice %151 {offsets = [0, 128], sizes = [8, 128], strides = [1, 1]} : vector<8x512xf32> to vector<8x128xf32>
    %159 = arith.negf %158 : vector<8x128xf32>
    %160 = math.exp %159 : vector<8x128xf32>
    %cst_55 = arith.constant 1.000000e+00 : f32
    %161 = vector.broadcast %cst_55 : f32 to vector<8x128xf32>
    %162 = arith.addf %161, %160 : vector<8x128xf32>
    %163 = arith.divf %161, %162 : vector<8x128xf32>
    %164 = vector.extract_strided_slice %151 {offsets = [0, 256], sizes = [8, 128], strides = [1, 1]} : vector<8x512xf32> to vector<8x128xf32>
    %165 = math.tanh %164 : vector<8x128xf32>
    %166 = vector.extract_strided_slice %151 {offsets = [0, 384], sizes = [8, 128], strides = [1, 1]} : vector<8x512xf32> to vector<8x128xf32>
    %167 = arith.negf %166 : vector<8x128xf32>
    %168 = math.exp %167 : vector<8x128xf32>
    %cst_56 = arith.constant 1.000000e+00 : f32
    %169 = vector.broadcast %cst_56 : f32 to vector<8x128xf32>
    %170 = arith.addf %169, %168 : vector<8x128xf32>
    %171 = arith.divf %169, %170 : vector<8x128xf32>
    %172 = arith.mulf %163, %141 : vector<8x128xf32>
    %173 = arith.mulf %157, %165 : vector<8x128xf32>
    %174 = arith.addf %172, %173 : vector<8x128xf32>
    %175 = math.tanh %174 : vector<8x128xf32>
    %176 = arith.mulf %171, %175 : vector<8x128xf32>
    %c5_i32 = arith.constant 5 : i32
    %c7_i32_57 = arith.constant 7 : i32
    %177 = arith.subi %c7_i32_57, %c5_i32 : i32
    %178 = arith.index_cast %177 : i32 to index
    %c0_58 = arith.constant 0 : index
    %c0_59 = arith.constant 0 : index
    %179 = vector.load %arg14[%178, %c0_58, %c0_59] : memref<8x8x512xf32, #tpu.memory_space<vmem>>, vector<1x8x512xf32>
    %180 = vector.shape_cast %179 : vector<1x8x512xf32> to vector<8x512xf32>
    %181 = arith.truncf %176 : vector<8x128xf32> to vector<8x128xbf16>
    %c0_60 = arith.constant 0 : index
    %c0_61 = arith.constant 0 : index
    %182 = vector.load %arg3[%c0_60, %c0_61] : memref<128x512xbf16, #tpu.memory_space<vmem>>, vector<128x512xbf16>
    %cst_62 = arith.constant dense<0.000000e+00> : vector<8x512xf32>
    %183 = tpu.matmul %181, %182, %cst_62 {dimension_numbers = #tpu.dot_dimension_numbers<[1], [0], [0], [1], [0, 0, 1, 1], [], []>} : vector<8x128xbf16>, vector<128x512xbf16>, vector<8x512xf32> -> vector<8x512xf32>
    %184 = arith.addf %180, %183 : vector<8x512xf32>
    %185 = vector.extract_strided_slice %184 {offsets = [0, 0], sizes = [8, 128], strides = [1, 1]} : vector<8x512xf32> to vector<8x128xf32>
    %186 = arith.negf %185 : vector<8x128xf32>
    %187 = math.exp %186 : vector<8x128xf32>
    %cst_63 = arith.constant 1.000000e+00 : f32
    %188 = vector.broadcast %cst_63 : f32 to vector<8x128xf32>
    %189 = arith.addf %188, %187 : vector<8x128xf32>
    %190 = arith.divf %188, %189 : vector<8x128xf32>
    %191 = vector.extract_strided_slice %184 {offsets = [0, 128], sizes = [8, 128], strides = [1, 1]} : vector<8x512xf32> to vector<8x128xf32>
    %192 = arith.negf %191 : vector<8x128xf32>
    %193 = math.exp %192 : vector<8x128xf32>
    %cst_64 = arith.constant 1.000000e+00 : f32
    %194 = vector.broadcast %cst_64 : f32 to vector<8x128xf32>
    %195 = arith.addf %194, %193 : vector<8x128xf32>
    %196 = arith.divf %194, %195 : vector<8x128xf32>
    %197 = vector.extract_strided_slice %184 {offsets = [0, 256], sizes = [8, 128], strides = [1, 1]} : vector<8x512xf32> to vector<8x128xf32>
    %198 = math.tanh %197 : vector<8x128xf32>
    %199 = vector.extract_strided_slice %184 {offsets = [0, 384], sizes = [8, 128], strides = [1, 1]} : vector<8x512xf32> to vector<8x128xf32>
    %200 = arith.negf %199 : vector<8x128xf32>
    %201 = math.exp %200 : vector<8x128xf32>
    %cst_65 = arith.constant 1.000000e+00 : f32
    %202 = vector.broadcast %cst_65 : f32 to vector<8x128xf32>
    %203 = arith.addf %202, %201 : vector<8x128xf32>
    %204 = arith.divf %202, %203 : vector<8x128xf32>
    %205 = arith.mulf %196, %174 : vector<8x128xf32>
    %206 = arith.mulf %190, %198 : vector<8x128xf32>
    %207 = arith.addf %205, %206 : vector<8x128xf32>
    %208 = math.tanh %207 : vector<8x128xf32>
    %209 = arith.mulf %204, %208 : vector<8x128xf32>
    %c6_i32 = arith.constant 6 : i32
    %c7_i32_66 = arith.constant 7 : i32
    %210 = arith.subi %c7_i32_66, %c6_i32 : i32
    %211 = arith.index_cast %210 : i32 to index
    %c0_67 = arith.constant 0 : index
    %c0_68 = arith.constant 0 : index
    %212 = vector.load %arg14[%211, %c0_67, %c0_68] : memref<8x8x512xf32, #tpu.memory_space<vmem>>, vector<1x8x512xf32>
    %213 = vector.shape_cast %212 : vector<1x8x512xf32> to vector<8x512xf32>
    %214 = arith.truncf %209 : vector<8x128xf32> to vector<8x128xbf16>
    %c0_69 = arith.constant 0 : index
    %c0_70 = arith.constant 0 : index
    %215 = vector.load %arg3[%c0_69, %c0_70] : memref<128x512xbf16, #tpu.memory_space<vmem>>, vector<128x512xbf16>
    %cst_71 = arith.constant dense<0.000000e+00> : vector<8x512xf32>
    %216 = tpu.matmul %214, %215, %cst_71 {dimension_numbers = #tpu.dot_dimension_numbers<[1], [0], [0], [1], [0, 0, 1, 1], [], []>} : vector<8x128xbf16>, vector<128x512xbf16>, vector<8x512xf32> -> vector<8x512xf32>
    %217 = arith.addf %213, %216 : vector<8x512xf32>
    %218 = vector.extract_strided_slice %217 {offsets = [0, 0], sizes = [8, 128], strides = [1, 1]} : vector<8x512xf32> to vector<8x128xf32>
    %219 = arith.negf %218 : vector<8x128xf32>
    %220 = math.exp %219 : vector<8x128xf32>
    %cst_72 = arith.constant 1.000000e+00 : f32
    %221 = vector.broadcast %cst_72 : f32 to vector<8x128xf32>
    %222 = arith.addf %221, %220 : vector<8x128xf32>
    %223 = arith.divf %221, %222 : vector<8x128xf32>
    %224 = vector.extract_strided_slice %217 {offsets = [0, 128], sizes = [8, 128], strides = [1, 1]} : vector<8x512xf32> to vector<8x128xf32>
    %225 = arith.negf %224 : vector<8x128xf32>
    %226 = math.exp %225 : vector<8x128xf32>
    %cst_73 = arith.constant 1.000000e+00 : f32
    %227 = vector.broadcast %cst_73 : f32 to vector<8x128xf32>
    %228 = arith.addf %227, %226 : vector<8x128xf32>
    %229 = arith.divf %227, %228 : vector<8x128xf32>
    %230 = vector.extract_strided_slice %217 {offsets = [0, 256], sizes = [8, 128], strides = [1, 1]} : vector<8x512xf32> to vector<8x128xf32>
    %231 = math.tanh %230 : vector<8x128xf32>
    %232 = vector.extract_strided_slice %217 {offsets = [0, 384], sizes = [8, 128], strides = [1, 1]} : vector<8x512xf32> to vector<8x128xf32>
    %233 = arith.negf %232 : vector<8x128xf32>
    %234 = math.exp %233 : vector<8x128xf32>
    %cst_74 = arith.constant 1.000000e+00 : f32
    %235 = vector.broadcast %cst_74 : f32 to vector<8x128xf32>
    %236 = arith.addf %235, %234 : vector<8x128xf32>
    %237 = arith.divf %235, %236 : vector<8x128xf32>
    %238 = arith.mulf %229, %207 : vector<8x128xf32>
    %239 = arith.mulf %223, %231 : vector<8x128xf32>
    %240 = arith.addf %238, %239 : vector<8x128xf32>
    %241 = math.tanh %240 : vector<8x128xf32>
    %242 = arith.mulf %237, %241 : vector<8x128xf32>
    %c7_i32_75 = arith.constant 7 : i32
    %c7_i32_76 = arith.constant 7 : i32
    %243 = arith.subi %c7_i32_76, %c7_i32_75 : i32
    %244 = arith.index_cast %243 : i32 to index
    %c0_77 = arith.constant 0 : index
    %c0_78 = arith.constant 0 : index
    %245 = vector.load %arg14[%244, %c0_77, %c0_78] : memref<8x8x512xf32, #tpu.memory_space<vmem>>, vector<1x8x512xf32>
    %246 = vector.shape_cast %245 : vector<1x8x512xf32> to vector<8x512xf32>
    %247 = arith.truncf %242 : vector<8x128xf32> to vector<8x128xbf16>
    %c0_79 = arith.constant 0 : index
    %c0_80 = arith.constant 0 : index
    %248 = vector.load %arg3[%c0_79, %c0_80] : memref<128x512xbf16, #tpu.memory_space<vmem>>, vector<128x512xbf16>
    %cst_81 = arith.constant dense<0.000000e+00> : vector<8x512xf32>
    %249 = tpu.matmul %247, %248, %cst_81 {dimension_numbers = #tpu.dot_dimension_numbers<[1], [0], [0], [1], [0, 0, 1, 1], [], []>} : vector<8x128xbf16>, vector<128x512xbf16>, vector<8x512xf32> -> vector<8x512xf32>
    %250 = arith.addf %246, %249 : vector<8x512xf32>
    %251 = vector.extract_strided_slice %250 {offsets = [0, 0], sizes = [8, 128], strides = [1, 1]} : vector<8x512xf32> to vector<8x128xf32>
    %252 = arith.negf %251 : vector<8x128xf32>
    %253 = math.exp %252 : vector<8x128xf32>
    %cst_82 = arith.constant 1.000000e+00 : f32
    %254 = vector.broadcast %cst_82 : f32 to vector<8x128xf32>
    %255 = arith.addf %254, %253 : vector<8x128xf32>
    %256 = arith.divf %254, %255 : vector<8x128xf32>
    %257 = vector.extract_strided_slice %250 {offsets = [0, 128], sizes = [8, 128], strides = [1, 1]} : vector<8x512xf32> to vector<8x128xf32>
    %258 = arith.negf %257 : vector<8x128xf32>
    %259 = math.exp %258 : vector<8x128xf32>
    %cst_83 = arith.constant 1.000000e+00 : f32
    %260 = vector.broadcast %cst_83 : f32 to vector<8x128xf32>
    %261 = arith.addf %260, %259 : vector<8x128xf32>
    %262 = arith.divf %260, %261 : vector<8x128xf32>
    %263 = vector.extract_strided_slice %250 {offsets = [0, 256], sizes = [8, 128], strides = [1, 1]} : vector<8x512xf32> to vector<8x128xf32>
    %264 = math.tanh %263 : vector<8x128xf32>
    %265 = vector.extract_strided_slice %250 {offsets = [0, 384], sizes = [8, 128], strides = [1, 1]} : vector<8x512xf32> to vector<8x128xf32>
    %266 = arith.negf %265 : vector<8x128xf32>
    %267 = math.exp %266 : vector<8x128xf32>
    %cst_84 = arith.constant 1.000000e+00 : f32
    %268 = vector.broadcast %cst_84 : f32 to vector<8x128xf32>
    %269 = arith.addf %268, %267 : vector<8x128xf32>
    %270 = arith.divf %268, %269 : vector<8x128xf32>
    %271 = arith.mulf %262, %240 : vector<8x128xf32>
    %272 = arith.mulf %256, %264 : vector<8x128xf32>
    %273 = arith.addf %271, %272 : vector<8x128xf32>
    %274 = math.tanh %273 : vector<8x128xf32>
    %275 = arith.mulf %270, %274 : vector<8x128xf32>
    %c8_i32 = arith.constant 8 : i32
    %276 = vector.extract_strided_slice %273 {offsets = [0, 0], sizes = [2, 128], strides = [1, 1]} : vector<8x128xf32> to vector<2x128xf32>
    %cst_85 = arith.constant dense<0.000000e+00> : vector<128xf32>
    %277 = vector.multi_reduction <add>, %276, %cst_85 [0] : vector<2x128xf32> to vector<128xf32>
    %278 = vector.shape_cast %277 : vector<128xf32> to vector<1x128xf32>
    %cst_86 = arith.constant 2.000000e+00 : f32
    %279 = vector.broadcast %cst_86 : f32 to vector<1x128xf32>
    %280 = arith.divf %278, %279 : vector<1x128xf32>
    %281 = vector.broadcast %280 : vector<1x128xf32> to vector<2x128xf32>
    %282 = arith.subf %276, %281 : vector<2x128xf32>
    %283 = arith.mulf %282, %282 : vector<2x128xf32>
    %cst_87 = arith.constant dense<0.000000e+00> : vector<128xf32>
    %284 = vector.multi_reduction <add>, %283, %cst_87 [0] : vector<2x128xf32> to vector<128xf32>
    %285 = vector.shape_cast %284 : vector<128xf32> to vector<1x128xf32>
    %cst_88 = arith.constant 2.000000e+00 : f32
    %286 = vector.broadcast %cst_88 : f32 to vector<1x128xf32>
    %287 = arith.divf %285, %286 : vector<1x128xf32>
    %288 = vector.broadcast %280 : vector<1x128xf32> to vector<8x128xf32>
    %289 = arith.subf %273, %288 : vector<8x128xf32>
    %cst_89 = arith.constant 9.99999974E-6 : f32
    %290 = vector.broadcast %cst_89 : f32 to vector<1x128xf32>
    %291 = arith.addf %287, %290 : vector<1x128xf32>
    %292 = math.rsqrt %291 : vector<1x128xf32>
    %293 = vector.broadcast %292 : vector<1x128xf32> to vector<8x128xf32>
    %294 = arith.mulf %289, %293 : vector<8x128xf32>
    %c0_90 = arith.constant 0 : index
    %c0_91 = arith.constant 0 : index
    %295 = vector.load %arg6[%c0_90, %c0_91] : memref<1x128xf32, #tpu.memory_space<vmem>>, vector<1x128xf32>
    %296 = vector.broadcast %295 : vector<1x128xf32> to vector<8x128xf32>
    %297 = arith.mulf %294, %296 : vector<8x128xf32>
    %c0_92 = arith.constant 0 : index
    %c0_93 = arith.constant 0 : index
    %298 = vector.load %arg7[%c0_92, %c0_93] : memref<1x128xf32, #tpu.memory_space<vmem>>, vector<1x128xf32>
    %299 = vector.broadcast %298 : vector<1x128xf32> to vector<8x128xf32>
    %300 = arith.addf %297, %299 : vector<8x128xf32>
    %301 = arith.mulf %300, %300 : vector<8x128xf32>
    %cst_94 = arith.constant dense<0.000000e+00> : vector<8xf32>
    %302 = vector.multi_reduction <add>, %301, %cst_94 [1] : vector<8x128xf32> to vector<8xf32>
    %303 = vector.shape_cast %302 : vector<8xf32> to vector<8x1xf32>
    %cst_95 = arith.constant 1.000000e-24 : f32
    %304 = vector.broadcast %cst_95 : f32 to vector<8x1xf32>
    %305 = arith.maximumf %303, %304 : vector<8x1xf32>
    %306 = math.rsqrt %305 : vector<8x1xf32>
    %307 = vector.broadcast %306 : vector<8x1xf32> to vector<8x128xf32>
    %308 = arith.mulf %300, %307 : vector<8x128xf32>
    %309 = arith.truncf %308 : vector<8x128xf32> to vector<8x128xbf16>
    %c0_96 = arith.constant 0 : index
    %c0_97 = arith.constant 0 : index
    %310 = vector.load %arg8[%c0_96, %c0_97] : memref<128x256xbf16, #tpu.memory_space<vmem>>, vector<128x256xbf16>
    %cst_98 = arith.constant dense<0.000000e+00> : vector<8x256xf32>
    %311 = tpu.matmul %309, %310, %cst_98 {dimension_numbers = #tpu.dot_dimension_numbers<[1], [0], [0], [1], [0, 0, 1, 1], [], []>} : vector<8x128xbf16>, vector<128x256xbf16>, vector<8x256xf32> -> vector<8x256xf32>
    %c0_99 = arith.constant 0 : index
    %c0_100 = arith.constant 0 : index
    %312 = vector.load %arg9[%c0_99, %c0_100] : memref<1x256xf32, #tpu.memory_space<vmem>>, vector<1x256xf32>
    %313 = vector.broadcast %312 : vector<1x256xf32> to vector<8x256xf32>
    %314 = arith.addf %311, %313 : vector<8x256xf32>
    %cst_101 = arith.constant 0.000000e+00 : f32
    %315 = vector.broadcast %cst_101 : f32 to vector<8x256xf32>
    %316 = arith.maximumf %314, %315 : vector<8x256xf32>
    %317 = vector.extract_strided_slice %316 {offsets = [0, 0], sizes = [2, 256], strides = [1, 1]} : vector<8x256xf32> to vector<2x256xf32>
    %cst_102 = arith.constant dense<0.000000e+00> : vector<256xf32>
    %318 = vector.multi_reduction <add>, %317, %cst_102 [0] : vector<2x256xf32> to vector<256xf32>
    %319 = vector.shape_cast %318 : vector<256xf32> to vector<1x256xf32>
    %cst_103 = arith.constant 2.000000e+00 : f32
    %320 = vector.broadcast %cst_103 : f32 to vector<1x256xf32>
    %321 = arith.divf %319, %320 : vector<1x256xf32>
    %322 = vector.broadcast %321 : vector<1x256xf32> to vector<2x256xf32>
    %323 = arith.subf %317, %322 : vector<2x256xf32>
    %324 = arith.mulf %323, %323 : vector<2x256xf32>
    %cst_104 = arith.constant dense<0.000000e+00> : vector<256xf32>
    %325 = vector.multi_reduction <add>, %324, %cst_104 [0] : vector<2x256xf32> to vector<256xf32>
    %326 = vector.shape_cast %325 : vector<256xf32> to vector<1x256xf32>
    %cst_105 = arith.constant 2.000000e+00 : f32
    %327 = vector.broadcast %cst_105 : f32 to vector<1x256xf32>
    %328 = arith.divf %326, %327 : vector<1x256xf32>
    %329 = vector.broadcast %321 : vector<1x256xf32> to vector<8x256xf32>
    %330 = arith.subf %316, %329 : vector<8x256xf32>
    %cst_106 = arith.constant 9.99999974E-6 : f32
    %331 = vector.broadcast %cst_106 : f32 to vector<1x256xf32>
    %332 = arith.addf %328, %331 : vector<1x256xf32>
    %333 = math.rsqrt %332 : vector<1x256xf32>
    %334 = vector.broadcast %333 : vector<1x256xf32> to vector<8x256xf32>
    %335 = arith.mulf %330, %334 : vector<8x256xf32>
    %c0_107 = arith.constant 0 : index
    %c0_108 = arith.constant 0 : index
    %336 = vector.load %arg10[%c0_107, %c0_108] : memref<1x256xf32, #tpu.memory_space<vmem>>, vector<1x256xf32>
    %337 = vector.broadcast %336 : vector<1x256xf32> to vector<8x256xf32>
    %338 = arith.mulf %335, %337 : vector<8x256xf32>
    %c0_109 = arith.constant 0 : index
    %c0_110 = arith.constant 0 : index
    %339 = vector.load %arg11[%c0_109, %c0_110] : memref<1x256xf32, #tpu.memory_space<vmem>>, vector<1x256xf32>
    %340 = vector.broadcast %339 : vector<1x256xf32> to vector<8x256xf32>
    %341 = arith.addf %338, %340 : vector<8x256xf32>
    %342 = vector.extract_strided_slice %341 {offsets = [0, 0], sizes = [8, 128], strides = [1, 1]} : vector<8x256xf32> to vector<8x128xf32>
    %c0_111 = arith.constant 0 : index
    %c0_112 = arith.constant 0 : index
    %343 = vector.load %arg12[%c0_111, %c0_112] : memref<8x128xf32, #tpu.memory_space<vmem>>, vector<8x128xf32>
    tpu.vector_store %arg12[%c0_111, %c0_112], %342 {strides = array<i32>} : memref<8x128xf32, #tpu.memory_space<vmem>>, vector<8x128xf32>,
    %344 = vector.extract_strided_slice %341 {offsets = [0, 128], sizes = [8, 128], strides = [1, 1]} : vector<8x256xf32> to vector<8x128xf32>
    %c0_113 = arith.constant 0 : index
    %c0_114 = arith.constant 0 : index
    %345 = vector.load %arg13[%c0_113, %c0_114] : memref<8x128xf32, #tpu.memory_space<vmem>>, vector<8x128xf32>
    tpu.vector_store %arg13[%c0_113, %c0_114], %344 {strides = array<i32>} : memref<8x128xf32, #tpu.memory_space<vmem>>, vector<8x128xf32>,
    return
  }
}

module attributes {stable_mosaic.version = 11 : i64} {
  func.func @_bilstm_kernel(%arg0: i32, %arg1: memref<8x8x128xf32, #tpu.memory_space<vmem>>, %arg2: memref<128x512xbf16, #tpu.memory_space<vmem>>, %arg3: memref<1x512xf32, #tpu.memory_space<vmem>>, %arg4: memref<128x512xbf16, #tpu.memory_space<vmem>>, %arg5: memref<1x8x128xf32, #tpu.memory_space<vmem>>, %arg6: memref<1x8x128xf32, #tpu.memory_space<vmem>>, %arg7: memref<8x8x128xf32, #tpu.memory_space<vmem>>, %arg8: memref<8x8x512xf32, #tpu.memory_space<vmem>>) attributes {dimension_semantics = [#tpu.dimension_semantics<parallel>], iteration_bounds = array<i64: 2>, scalar_prefetch = 0 : i64, scratch_operands = 1 : i64, tpu.core_type = #tpu.core_type<tc>, window_params = [{pipeline_mode = #tpu.pipeline_mode<synchronous>, transform_indices = @transform_0, window_bounds = array<i64: 8, 8, 128>}, {transform_indices = @transform_1, window_bounds = array<i64: 128, 512>}, {transform_indices = @transform_2, window_bounds = array<i64: 1, 512>}, {transform_indices = @transform_3, window_bounds = array<i64: 128, 512>}, {transform_indices = @transform_4, window_bounds = array<i64: 1, 8, 128>}, {transform_indices = @transform_5, window_bounds = array<i64: 1, 8, 128>}, {transform_indices = @transform_6, window_bounds = array<i64: 8, 8, 128>}]} {
    %c0 = arith.constant 0 : index
    %c0_0 = arith.constant 0 : index
    %c0_1 = arith.constant 0 : index
    %0 = vector.load %arg1[%c0, %c0_0, %c0_1] : memref<8x8x128xf32, #tpu.memory_space<vmem>>, vector<8x8x128xf32>
    %1 = vector.shape_cast %0 : vector<8x8x128xf32> to vector<64x128xf32>
    %2 = arith.truncf %1 : vector<64x128xf32> to vector<64x128xbf16>
    %c0_2 = arith.constant 0 : index
    %c0_3 = arith.constant 0 : index
    %3 = vector.load %arg2[%c0_2, %c0_3] : memref<128x512xbf16, #tpu.memory_space<vmem>>, vector<128x512xbf16>
    %cst = arith.constant dense<0.000000e+00> : vector<64x512xf32>
    %4 = tpu.matmul %2, %3, %cst {dimension_numbers = #tpu.dot_dimension_numbers<[1], [0], [0], [1], [0, 0, 1, 1], [], []>} : vector<64x128xbf16>, vector<128x512xbf16>, vector<64x512xf32> -> vector<64x512xf32>
    %c0_4 = arith.constant 0 : index
    %c0_5 = arith.constant 0 : index
    %5 = vector.load %arg3[%c0_4, %c0_5] : memref<1x512xf32, #tpu.memory_space<vmem>>, vector<1x512xf32>
    %6 = vector.broadcast %5 : vector<1x512xf32> to vector<64x512xf32>
    %7 = arith.addf %4, %6 : vector<64x512xf32>
    %8 = vector.shape_cast %7 : vector<64x512xf32> to vector<8x8x512xf32>
    %c0_6 = arith.constant 0 : index
    %c0_7 = arith.constant 0 : index
    %c0_8 = arith.constant 0 : index
    %9 = vector.load %arg8[%c0_6, %c0_7, %c0_8] : memref<8x8x512xf32, #tpu.memory_space<vmem>>, vector<8x8x512xf32>
    tpu.vector_store %arg8[%c0_6, %c0_7, %c0_8], %8 {strides = array<i32>} : memref<8x8x512xf32, #tpu.memory_space<vmem>>, vector<8x8x512xf32>,
    %c0_9 = arith.constant 0 : index
    %c0_10 = arith.constant 0 : index
    %c0_11 = arith.constant 0 : index
    %10 = vector.load %arg5[%c0_9, %c0_10, %c0_11] : memref<1x8x128xf32, #tpu.memory_space<vmem>>, vector<1x8x128xf32>
    %11 = vector.shape_cast %10 : vector<1x8x128xf32> to vector<8x128xf32>
    %c0_12 = arith.constant 0 : index
    %c0_13 = arith.constant 0 : index
    %c0_14 = arith.constant 0 : index
    %12 = vector.load %arg6[%c0_12, %c0_13, %c0_14] : memref<1x8x128xf32, #tpu.memory_space<vmem>>, vector<1x8x128xf32>
    %13 = vector.shape_cast %12 : vector<1x8x128xf32> to vector<8x128xf32>
    %c0_i32 = arith.constant 0 : i32
    %c0_i32_15 = arith.constant 0 : i32
    %14 = arith.cmpi eq, %arg0, %c0_i32_15 : i32
    %c7_i32 = arith.constant 7 : i32
    %15 = arith.subi %c7_i32, %c0_i32 : i32
    %16 = arith.select %14, %c0_i32, %15 : i32
    %17 = arith.index_cast %16 : i32 to index
    %c0_16 = arith.constant 0 : index
    %c0_17 = arith.constant 0 : index
    %18 = vector.load %arg8[%17, %c0_16, %c0_17] : memref<8x8x512xf32, #tpu.memory_space<vmem>>, vector<1x8x512xf32>
    %19 = vector.shape_cast %18 : vector<1x8x512xf32> to vector<8x512xf32>
    %20 = arith.truncf %11 : vector<8x128xf32> to vector<8x128xbf16>
    %c0_18 = arith.constant 0 : index
    %c0_19 = arith.constant 0 : index
    %21 = vector.load %arg4[%c0_18, %c0_19] : memref<128x512xbf16, #tpu.memory_space<vmem>>, vector<128x512xbf16>
    %cst_20 = arith.constant dense<0.000000e+00> : vector<8x512xf32>
    %22 = tpu.matmul %20, %21, %cst_20 {dimension_numbers = #tpu.dot_dimension_numbers<[1], [0], [0], [1], [0, 0, 1, 1], [], []>} : vector<8x128xbf16>, vector<128x512xbf16>, vector<8x512xf32> -> vector<8x512xf32>
    %23 = arith.addf %19, %22 : vector<8x512xf32>
    %24 = vector.extract_strided_slice %23 {offsets = [0, 0], sizes = [8, 128], strides = [1, 1]} : vector<8x512xf32> to vector<8x128xf32>
    %25 = arith.negf %24 : vector<8x128xf32>
    %26 = math.exp %25 : vector<8x128xf32>
    %cst_21 = arith.constant 1.000000e+00 : f32
    %27 = vector.broadcast %cst_21 : f32 to vector<8x128xf32>
    %28 = arith.addf %27, %26 : vector<8x128xf32>
    %29 = arith.divf %27, %28 : vector<8x128xf32>
    %30 = vector.extract_strided_slice %23 {offsets = [0, 128], sizes = [8, 128], strides = [1, 1]} : vector<8x512xf32> to vector<8x128xf32>
    %31 = arith.negf %30 : vector<8x128xf32>
    %32 = math.exp %31 : vector<8x128xf32>
    %cst_22 = arith.constant 1.000000e+00 : f32
    %33 = vector.broadcast %cst_22 : f32 to vector<8x128xf32>
    %34 = arith.addf %33, %32 : vector<8x128xf32>
    %35 = arith.divf %33, %34 : vector<8x128xf32>
    %36 = vector.extract_strided_slice %23 {offsets = [0, 256], sizes = [8, 128], strides = [1, 1]} : vector<8x512xf32> to vector<8x128xf32>
    %37 = math.tanh %36 : vector<8x128xf32>
    %38 = vector.extract_strided_slice %23 {offsets = [0, 384], sizes = [8, 128], strides = [1, 1]} : vector<8x512xf32> to vector<8x128xf32>
    %39 = arith.negf %38 : vector<8x128xf32>
    %40 = math.exp %39 : vector<8x128xf32>
    %cst_23 = arith.constant 1.000000e+00 : f32
    %41 = vector.broadcast %cst_23 : f32 to vector<8x128xf32>
    %42 = arith.addf %41, %40 : vector<8x128xf32>
    %43 = arith.divf %41, %42 : vector<8x128xf32>
    %44 = arith.mulf %35, %13 : vector<8x128xf32>
    %45 = arith.mulf %29, %37 : vector<8x128xf32>
    %46 = arith.addf %44, %45 : vector<8x128xf32>
    %47 = math.tanh %46 : vector<8x128xf32>
    %48 = arith.mulf %43, %47 : vector<8x128xf32>
    %49 = arith.index_cast %16 : i32 to index
    %c0_24 = arith.constant 0 : index
    %c0_25 = arith.constant 0 : index
    %50 = vector.load %arg7[%49, %c0_24, %c0_25] : memref<8x8x128xf32, #tpu.memory_space<vmem>>, vector<1x8x128xf32>
    %51 = vector.shape_cast %50 : vector<1x8x128xf32> to vector<8x128xf32>
    %52 = vector.shape_cast %48 : vector<8x128xf32> to vector<1x8x128xf32>
    tpu.vector_store %arg7[%49, %c0_24, %c0_25], %52 {strides = array<i32>} : memref<8x8x128xf32, #tpu.memory_space<vmem>>, vector<1x8x128xf32>,
    %c1_i32 = arith.constant 1 : i32
    %c0_i32_26 = arith.constant 0 : i32
    %53 = arith.cmpi eq, %arg0, %c0_i32_26 : i32
    %c7_i32_27 = arith.constant 7 : i32
    %54 = arith.subi %c7_i32_27, %c1_i32 : i32
    %55 = arith.select %53, %c1_i32, %54 : i32
    %56 = arith.index_cast %55 : i32 to index
    %c0_28 = arith.constant 0 : index
    %c0_29 = arith.constant 0 : index
    %57 = vector.load %arg8[%56, %c0_28, %c0_29] : memref<8x8x512xf32, #tpu.memory_space<vmem>>, vector<1x8x512xf32>
    %58 = vector.shape_cast %57 : vector<1x8x512xf32> to vector<8x512xf32>
    %59 = arith.truncf %48 : vector<8x128xf32> to vector<8x128xbf16>
    %c0_30 = arith.constant 0 : index
    %c0_31 = arith.constant 0 : index
    %60 = vector.load %arg4[%c0_30, %c0_31] : memref<128x512xbf16, #tpu.memory_space<vmem>>, vector<128x512xbf16>
    %cst_32 = arith.constant dense<0.000000e+00> : vector<8x512xf32>
    %61 = tpu.matmul %59, %60, %cst_32 {dimension_numbers = #tpu.dot_dimension_numbers<[1], [0], [0], [1], [0, 0, 1, 1], [], []>} : vector<8x128xbf16>, vector<128x512xbf16>, vector<8x512xf32> -> vector<8x512xf32>
    %62 = arith.addf %58, %61 : vector<8x512xf32>
    %63 = vector.extract_strided_slice %62 {offsets = [0, 0], sizes = [8, 128], strides = [1, 1]} : vector<8x512xf32> to vector<8x128xf32>
    %64 = arith.negf %63 : vector<8x128xf32>
    %65 = math.exp %64 : vector<8x128xf32>
    %cst_33 = arith.constant 1.000000e+00 : f32
    %66 = vector.broadcast %cst_33 : f32 to vector<8x128xf32>
    %67 = arith.addf %66, %65 : vector<8x128xf32>
    %68 = arith.divf %66, %67 : vector<8x128xf32>
    %69 = vector.extract_strided_slice %62 {offsets = [0, 128], sizes = [8, 128], strides = [1, 1]} : vector<8x512xf32> to vector<8x128xf32>
    %70 = arith.negf %69 : vector<8x128xf32>
    %71 = math.exp %70 : vector<8x128xf32>
    %cst_34 = arith.constant 1.000000e+00 : f32
    %72 = vector.broadcast %cst_34 : f32 to vector<8x128xf32>
    %73 = arith.addf %72, %71 : vector<8x128xf32>
    %74 = arith.divf %72, %73 : vector<8x128xf32>
    %75 = vector.extract_strided_slice %62 {offsets = [0, 256], sizes = [8, 128], strides = [1, 1]} : vector<8x512xf32> to vector<8x128xf32>
    %76 = math.tanh %75 : vector<8x128xf32>
    %77 = vector.extract_strided_slice %62 {offsets = [0, 384], sizes = [8, 128], strides = [1, 1]} : vector<8x512xf32> to vector<8x128xf32>
    %78 = arith.negf %77 : vector<8x128xf32>
    %79 = math.exp %78 : vector<8x128xf32>
    %cst_35 = arith.constant 1.000000e+00 : f32
    %80 = vector.broadcast %cst_35 : f32 to vector<8x128xf32>
    %81 = arith.addf %80, %79 : vector<8x128xf32>
    %82 = arith.divf %80, %81 : vector<8x128xf32>
    %83 = arith.mulf %74, %46 : vector<8x128xf32>
    %84 = arith.mulf %68, %76 : vector<8x128xf32>
    %85 = arith.addf %83, %84 : vector<8x128xf32>
    %86 = math.tanh %85 : vector<8x128xf32>
    %87 = arith.mulf %82, %86 : vector<8x128xf32>
    %88 = arith.index_cast %55 : i32 to index
    %c0_36 = arith.constant 0 : index
    %c0_37 = arith.constant 0 : index
    %89 = vector.load %arg7[%88, %c0_36, %c0_37] : memref<8x8x128xf32, #tpu.memory_space<vmem>>, vector<1x8x128xf32>
    %90 = vector.shape_cast %89 : vector<1x8x128xf32> to vector<8x128xf32>
    %91 = vector.shape_cast %87 : vector<8x128xf32> to vector<1x8x128xf32>
    tpu.vector_store %arg7[%88, %c0_36, %c0_37], %91 {strides = array<i32>} : memref<8x8x128xf32, #tpu.memory_space<vmem>>, vector<1x8x128xf32>,
    %c2_i32 = arith.constant 2 : i32
    %c0_i32_38 = arith.constant 0 : i32
    %92 = arith.cmpi eq, %arg0, %c0_i32_38 : i32
    %c7_i32_39 = arith.constant 7 : i32
    %93 = arith.subi %c7_i32_39, %c2_i32 : i32
    %94 = arith.select %92, %c2_i32, %93 : i32
    %95 = arith.index_cast %94 : i32 to index
    %c0_40 = arith.constant 0 : index
    %c0_41 = arith.constant 0 : index
    %96 = vector.load %arg8[%95, %c0_40, %c0_41] : memref<8x8x512xf32, #tpu.memory_space<vmem>>, vector<1x8x512xf32>
    %97 = vector.shape_cast %96 : vector<1x8x512xf32> to vector<8x512xf32>
    %98 = arith.truncf %87 : vector<8x128xf32> to vector<8x128xbf16>
    %c0_42 = arith.constant 0 : index
    %c0_43 = arith.constant 0 : index
    %99 = vector.load %arg4[%c0_42, %c0_43] : memref<128x512xbf16, #tpu.memory_space<vmem>>, vector<128x512xbf16>
    %cst_44 = arith.constant dense<0.000000e+00> : vector<8x512xf32>
    %100 = tpu.matmul %98, %99, %cst_44 {dimension_numbers = #tpu.dot_dimension_numbers<[1], [0], [0], [1], [0, 0, 1, 1], [], []>} : vector<8x128xbf16>, vector<128x512xbf16>, vector<8x512xf32> -> vector<8x512xf32>
    %101 = arith.addf %97, %100 : vector<8x512xf32>
    %102 = vector.extract_strided_slice %101 {offsets = [0, 0], sizes = [8, 128], strides = [1, 1]} : vector<8x512xf32> to vector<8x128xf32>
    %103 = arith.negf %102 : vector<8x128xf32>
    %104 = math.exp %103 : vector<8x128xf32>
    %cst_45 = arith.constant 1.000000e+00 : f32
    %105 = vector.broadcast %cst_45 : f32 to vector<8x128xf32>
    %106 = arith.addf %105, %104 : vector<8x128xf32>
    %107 = arith.divf %105, %106 : vector<8x128xf32>
    %108 = vector.extract_strided_slice %101 {offsets = [0, 128], sizes = [8, 128], strides = [1, 1]} : vector<8x512xf32> to vector<8x128xf32>
    %109 = arith.negf %108 : vector<8x128xf32>
    %110 = math.exp %109 : vector<8x128xf32>
    %cst_46 = arith.constant 1.000000e+00 : f32
    %111 = vector.broadcast %cst_46 : f32 to vector<8x128xf32>
    %112 = arith.addf %111, %110 : vector<8x128xf32>
    %113 = arith.divf %111, %112 : vector<8x128xf32>
    %114 = vector.extract_strided_slice %101 {offsets = [0, 256], sizes = [8, 128], strides = [1, 1]} : vector<8x512xf32> to vector<8x128xf32>
    %115 = math.tanh %114 : vector<8x128xf32>
    %116 = vector.extract_strided_slice %101 {offsets = [0, 384], sizes = [8, 128], strides = [1, 1]} : vector<8x512xf32> to vector<8x128xf32>
    %117 = arith.negf %116 : vector<8x128xf32>
    %118 = math.exp %117 : vector<8x128xf32>
    %cst_47 = arith.constant 1.000000e+00 : f32
    %119 = vector.broadcast %cst_47 : f32 to vector<8x128xf32>
    %120 = arith.addf %119, %118 : vector<8x128xf32>
    %121 = arith.divf %119, %120 : vector<8x128xf32>
    %122 = arith.mulf %113, %85 : vector<8x128xf32>
    %123 = arith.mulf %107, %115 : vector<8x128xf32>
    %124 = arith.addf %122, %123 : vector<8x128xf32>
    %125 = math.tanh %124 : vector<8x128xf32>
    %126 = arith.mulf %121, %125 : vector<8x128xf32>
    %127 = arith.index_cast %94 : i32 to index
    %c0_48 = arith.constant 0 : index
    %c0_49 = arith.constant 0 : index
    %128 = vector.load %arg7[%127, %c0_48, %c0_49] : memref<8x8x128xf32, #tpu.memory_space<vmem>>, vector<1x8x128xf32>
    %129 = vector.shape_cast %128 : vector<1x8x128xf32> to vector<8x128xf32>
    %130 = vector.shape_cast %126 : vector<8x128xf32> to vector<1x8x128xf32>
    tpu.vector_store %arg7[%127, %c0_48, %c0_49], %130 {strides = array<i32>} : memref<8x8x128xf32, #tpu.memory_space<vmem>>, vector<1x8x128xf32>,
    %c3_i32 = arith.constant 3 : i32
    %c0_i32_50 = arith.constant 0 : i32
    %131 = arith.cmpi eq, %arg0, %c0_i32_50 : i32
    %c7_i32_51 = arith.constant 7 : i32
    %132 = arith.subi %c7_i32_51, %c3_i32 : i32
    %133 = arith.select %131, %c3_i32, %132 : i32
    %134 = arith.index_cast %133 : i32 to index
    %c0_52 = arith.constant 0 : index
    %c0_53 = arith.constant 0 : index
    %135 = vector.load %arg8[%134, %c0_52, %c0_53] : memref<8x8x512xf32, #tpu.memory_space<vmem>>, vector<1x8x512xf32>
    %136 = vector.shape_cast %135 : vector<1x8x512xf32> to vector<8x512xf32>
    %137 = arith.truncf %126 : vector<8x128xf32> to vector<8x128xbf16>
    %c0_54 = arith.constant 0 : index
    %c0_55 = arith.constant 0 : index
    %138 = vector.load %arg4[%c0_54, %c0_55] : memref<128x512xbf16, #tpu.memory_space<vmem>>, vector<128x512xbf16>
    %cst_56 = arith.constant dense<0.000000e+00> : vector<8x512xf32>
    %139 = tpu.matmul %137, %138, %cst_56 {dimension_numbers = #tpu.dot_dimension_numbers<[1], [0], [0], [1], [0, 0, 1, 1], [], []>} : vector<8x128xbf16>, vector<128x512xbf16>, vector<8x512xf32> -> vector<8x512xf32>
    %140 = arith.addf %136, %139 : vector<8x512xf32>
    %141 = vector.extract_strided_slice %140 {offsets = [0, 0], sizes = [8, 128], strides = [1, 1]} : vector<8x512xf32> to vector<8x128xf32>
    %142 = arith.negf %141 : vector<8x128xf32>
    %143 = math.exp %142 : vector<8x128xf32>
    %cst_57 = arith.constant 1.000000e+00 : f32
    %144 = vector.broadcast %cst_57 : f32 to vector<8x128xf32>
    %145 = arith.addf %144, %143 : vector<8x128xf32>
    %146 = arith.divf %144, %145 : vector<8x128xf32>
    %147 = vector.extract_strided_slice %140 {offsets = [0, 128], sizes = [8, 128], strides = [1, 1]} : vector<8x512xf32> to vector<8x128xf32>
    %148 = arith.negf %147 : vector<8x128xf32>
    %149 = math.exp %148 : vector<8x128xf32>
    %cst_58 = arith.constant 1.000000e+00 : f32
    %150 = vector.broadcast %cst_58 : f32 to vector<8x128xf32>
    %151 = arith.addf %150, %149 : vector<8x128xf32>
    %152 = arith.divf %150, %151 : vector<8x128xf32>
    %153 = vector.extract_strided_slice %140 {offsets = [0, 256], sizes = [8, 128], strides = [1, 1]} : vector<8x512xf32> to vector<8x128xf32>
    %154 = math.tanh %153 : vector<8x128xf32>
    %155 = vector.extract_strided_slice %140 {offsets = [0, 384], sizes = [8, 128], strides = [1, 1]} : vector<8x512xf32> to vector<8x128xf32>
    %156 = arith.negf %155 : vector<8x128xf32>
    %157 = math.exp %156 : vector<8x128xf32>
    %cst_59 = arith.constant 1.000000e+00 : f32
    %158 = vector.broadcast %cst_59 : f32 to vector<8x128xf32>
    %159 = arith.addf %158, %157 : vector<8x128xf32>
    %160 = arith.divf %158, %159 : vector<8x128xf32>
    %161 = arith.mulf %152, %124 : vector<8x128xf32>
    %162 = arith.mulf %146, %154 : vector<8x128xf32>
    %163 = arith.addf %161, %162 : vector<8x128xf32>
    %164 = math.tanh %163 : vector<8x128xf32>
    %165 = arith.mulf %160, %164 : vector<8x128xf32>
    %166 = arith.index_cast %133 : i32 to index
    %c0_60 = arith.constant 0 : index
    %c0_61 = arith.constant 0 : index
    %167 = vector.load %arg7[%166, %c0_60, %c0_61] : memref<8x8x128xf32, #tpu.memory_space<vmem>>, vector<1x8x128xf32>
    %168 = vector.shape_cast %167 : vector<1x8x128xf32> to vector<8x128xf32>
    %169 = vector.shape_cast %165 : vector<8x128xf32> to vector<1x8x128xf32>
    tpu.vector_store %arg7[%166, %c0_60, %c0_61], %169 {strides = array<i32>} : memref<8x8x128xf32, #tpu.memory_space<vmem>>, vector<1x8x128xf32>,
    %c4_i32 = arith.constant 4 : i32
    %c0_i32_62 = arith.constant 0 : i32
    %170 = arith.cmpi eq, %arg0, %c0_i32_62 : i32
    %c7_i32_63 = arith.constant 7 : i32
    %171 = arith.subi %c7_i32_63, %c4_i32 : i32
    %172 = arith.select %170, %c4_i32, %171 : i32
    %173 = arith.index_cast %172 : i32 to index
    %c0_64 = arith.constant 0 : index
    %c0_65 = arith.constant 0 : index
    %174 = vector.load %arg8[%173, %c0_64, %c0_65] : memref<8x8x512xf32, #tpu.memory_space<vmem>>, vector<1x8x512xf32>
    %175 = vector.shape_cast %174 : vector<1x8x512xf32> to vector<8x512xf32>
    %176 = arith.truncf %165 : vector<8x128xf32> to vector<8x128xbf16>
    %c0_66 = arith.constant 0 : index
    %c0_67 = arith.constant 0 : index
    %177 = vector.load %arg4[%c0_66, %c0_67] : memref<128x512xbf16, #tpu.memory_space<vmem>>, vector<128x512xbf16>
    %cst_68 = arith.constant dense<0.000000e+00> : vector<8x512xf32>
    %178 = tpu.matmul %176, %177, %cst_68 {dimension_numbers = #tpu.dot_dimension_numbers<[1], [0], [0], [1], [0, 0, 1, 1], [], []>} : vector<8x128xbf16>, vector<128x512xbf16>, vector<8x512xf32> -> vector<8x512xf32>
    %179 = arith.addf %175, %178 : vector<8x512xf32>
    %180 = vector.extract_strided_slice %179 {offsets = [0, 0], sizes = [8, 128], strides = [1, 1]} : vector<8x512xf32> to vector<8x128xf32>
    %181 = arith.negf %180 : vector<8x128xf32>
    %182 = math.exp %181 : vector<8x128xf32>
    %cst_69 = arith.constant 1.000000e+00 : f32
    %183 = vector.broadcast %cst_69 : f32 to vector<8x128xf32>
    %184 = arith.addf %183, %182 : vector<8x128xf32>
    %185 = arith.divf %183, %184 : vector<8x128xf32>
    %186 = vector.extract_strided_slice %179 {offsets = [0, 128], sizes = [8, 128], strides = [1, 1]} : vector<8x512xf32> to vector<8x128xf32>
    %187 = arith.negf %186 : vector<8x128xf32>
    %188 = math.exp %187 : vector<8x128xf32>
    %cst_70 = arith.constant 1.000000e+00 : f32
    %189 = vector.broadcast %cst_70 : f32 to vector<8x128xf32>
    %190 = arith.addf %189, %188 : vector<8x128xf32>
    %191 = arith.divf %189, %190 : vector<8x128xf32>
    %192 = vector.extract_strided_slice %179 {offsets = [0, 256], sizes = [8, 128], strides = [1, 1]} : vector<8x512xf32> to vector<8x128xf32>
    %193 = math.tanh %192 : vector<8x128xf32>
    %194 = vector.extract_strided_slice %179 {offsets = [0, 384], sizes = [8, 128], strides = [1, 1]} : vector<8x512xf32> to vector<8x128xf32>
    %195 = arith.negf %194 : vector<8x128xf32>
    %196 = math.exp %195 : vector<8x128xf32>
    %cst_71 = arith.constant 1.000000e+00 : f32
    %197 = vector.broadcast %cst_71 : f32 to vector<8x128xf32>
    %198 = arith.addf %197, %196 : vector<8x128xf32>
    %199 = arith.divf %197, %198 : vector<8x128xf32>
    %200 = arith.mulf %191, %163 : vector<8x128xf32>
    %201 = arith.mulf %185, %193 : vector<8x128xf32>
    %202 = arith.addf %200, %201 : vector<8x128xf32>
    %203 = math.tanh %202 : vector<8x128xf32>
    %204 = arith.mulf %199, %203 : vector<8x128xf32>
    %205 = arith.index_cast %172 : i32 to index
    %c0_72 = arith.constant 0 : index
    %c0_73 = arith.constant 0 : index
    %206 = vector.load %arg7[%205, %c0_72, %c0_73] : memref<8x8x128xf32, #tpu.memory_space<vmem>>, vector<1x8x128xf32>
    %207 = vector.shape_cast %206 : vector<1x8x128xf32> to vector<8x128xf32>
    %208 = vector.shape_cast %204 : vector<8x128xf32> to vector<1x8x128xf32>
    tpu.vector_store %arg7[%205, %c0_72, %c0_73], %208 {strides = array<i32>} : memref<8x8x128xf32, #tpu.memory_space<vmem>>, vector<1x8x128xf32>,
    %c5_i32 = arith.constant 5 : i32
    %c0_i32_74 = arith.constant 0 : i32
    %209 = arith.cmpi eq, %arg0, %c0_i32_74 : i32
    %c7_i32_75 = arith.constant 7 : i32
    %210 = arith.subi %c7_i32_75, %c5_i32 : i32
    %211 = arith.select %209, %c5_i32, %210 : i32
    %212 = arith.index_cast %211 : i32 to index
    %c0_76 = arith.constant 0 : index
    %c0_77 = arith.constant 0 : index
    %213 = vector.load %arg8[%212, %c0_76, %c0_77] : memref<8x8x512xf32, #tpu.memory_space<vmem>>, vector<1x8x512xf32>
    %214 = vector.shape_cast %213 : vector<1x8x512xf32> to vector<8x512xf32>
    %215 = arith.truncf %204 : vector<8x128xf32> to vector<8x128xbf16>
    %c0_78 = arith.constant 0 : index
    %c0_79 = arith.constant 0 : index
    %216 = vector.load %arg4[%c0_78, %c0_79] : memref<128x512xbf16, #tpu.memory_space<vmem>>, vector<128x512xbf16>
    %cst_80 = arith.constant dense<0.000000e+00> : vector<8x512xf32>
    %217 = tpu.matmul %215, %216, %cst_80 {dimension_numbers = #tpu.dot_dimension_numbers<[1], [0], [0], [1], [0, 0, 1, 1], [], []>} : vector<8x128xbf16>, vector<128x512xbf16>, vector<8x512xf32> -> vector<8x512xf32>
    %218 = arith.addf %214, %217 : vector<8x512xf32>
    %219 = vector.extract_strided_slice %218 {offsets = [0, 0], sizes = [8, 128], strides = [1, 1]} : vector<8x512xf32> to vector<8x128xf32>
    %220 = arith.negf %219 : vector<8x128xf32>
    %221 = math.exp %220 : vector<8x128xf32>
    %cst_81 = arith.constant 1.000000e+00 : f32
    %222 = vector.broadcast %cst_81 : f32 to vector<8x128xf32>
    %223 = arith.addf %222, %221 : vector<8x128xf32>
    %224 = arith.divf %222, %223 : vector<8x128xf32>
    %225 = vector.extract_strided_slice %218 {offsets = [0, 128], sizes = [8, 128], strides = [1, 1]} : vector<8x512xf32> to vector<8x128xf32>
    %226 = arith.negf %225 : vector<8x128xf32>
    %227 = math.exp %226 : vector<8x128xf32>
    %cst_82 = arith.constant 1.000000e+00 : f32
    %228 = vector.broadcast %cst_82 : f32 to vector<8x128xf32>
    %229 = arith.addf %228, %227 : vector<8x128xf32>
    %230 = arith.divf %228, %229 : vector<8x128xf32>
    %231 = vector.extract_strided_slice %218 {offsets = [0, 256], sizes = [8, 128], strides = [1, 1]} : vector<8x512xf32> to vector<8x128xf32>
    %232 = math.tanh %231 : vector<8x128xf32>
    %233 = vector.extract_strided_slice %218 {offsets = [0, 384], sizes = [8, 128], strides = [1, 1]} : vector<8x512xf32> to vector<8x128xf32>
    %234 = arith.negf %233 : vector<8x128xf32>
    %235 = math.exp %234 : vector<8x128xf32>
    %cst_83 = arith.constant 1.000000e+00 : f32
    %236 = vector.broadcast %cst_83 : f32 to vector<8x128xf32>
    %237 = arith.addf %236, %235 : vector<8x128xf32>
    %238 = arith.divf %236, %237 : vector<8x128xf32>
    %239 = arith.mulf %230, %202 : vector<8x128xf32>
    %240 = arith.mulf %224, %232 : vector<8x128xf32>
    %241 = arith.addf %239, %240 : vector<8x128xf32>
    %242 = math.tanh %241 : vector<8x128xf32>
    %243 = arith.mulf %238, %242 : vector<8x128xf32>
    %244 = arith.index_cast %211 : i32 to index
    %c0_84 = arith.constant 0 : index
    %c0_85 = arith.constant 0 : index
    %245 = vector.load %arg7[%244, %c0_84, %c0_85] : memref<8x8x128xf32, #tpu.memory_space<vmem>>, vector<1x8x128xf32>
    %246 = vector.shape_cast %245 : vector<1x8x128xf32> to vector<8x128xf32>
    %247 = vector.shape_cast %243 : vector<8x128xf32> to vector<1x8x128xf32>
    tpu.vector_store %arg7[%244, %c0_84, %c0_85], %247 {strides = array<i32>} : memref<8x8x128xf32, #tpu.memory_space<vmem>>, vector<1x8x128xf32>,
    %c6_i32 = arith.constant 6 : i32
    %c0_i32_86 = arith.constant 0 : i32
    %248 = arith.cmpi eq, %arg0, %c0_i32_86 : i32
    %c7_i32_87 = arith.constant 7 : i32
    %249 = arith.subi %c7_i32_87, %c6_i32 : i32
    %250 = arith.select %248, %c6_i32, %249 : i32
    %251 = arith.index_cast %250 : i32 to index
    %c0_88 = arith.constant 0 : index
    %c0_89 = arith.constant 0 : index
    %252 = vector.load %arg8[%251, %c0_88, %c0_89] : memref<8x8x512xf32, #tpu.memory_space<vmem>>, vector<1x8x512xf32>
    %253 = vector.shape_cast %252 : vector<1x8x512xf32> to vector<8x512xf32>
    %254 = arith.truncf %243 : vector<8x128xf32> to vector<8x128xbf16>
    %c0_90 = arith.constant 0 : index
    %c0_91 = arith.constant 0 : index
    %255 = vector.load %arg4[%c0_90, %c0_91] : memref<128x512xbf16, #tpu.memory_space<vmem>>, vector<128x512xbf16>
    %cst_92 = arith.constant dense<0.000000e+00> : vector<8x512xf32>
    %256 = tpu.matmul %254, %255, %cst_92 {dimension_numbers = #tpu.dot_dimension_numbers<[1], [0], [0], [1], [0, 0, 1, 1], [], []>} : vector<8x128xbf16>, vector<128x512xbf16>, vector<8x512xf32> -> vector<8x512xf32>
    %257 = arith.addf %253, %256 : vector<8x512xf32>
    %258 = vector.extract_strided_slice %257 {offsets = [0, 0], sizes = [8, 128], strides = [1, 1]} : vector<8x512xf32> to vector<8x128xf32>
    %259 = arith.negf %258 : vector<8x128xf32>
    %260 = math.exp %259 : vector<8x128xf32>
    %cst_93 = arith.constant 1.000000e+00 : f32
    %261 = vector.broadcast %cst_93 : f32 to vector<8x128xf32>
    %262 = arith.addf %261, %260 : vector<8x128xf32>
    %263 = arith.divf %261, %262 : vector<8x128xf32>
    %264 = vector.extract_strided_slice %257 {offsets = [0, 128], sizes = [8, 128], strides = [1, 1]} : vector<8x512xf32> to vector<8x128xf32>
    %265 = arith.negf %264 : vector<8x128xf32>
    %266 = math.exp %265 : vector<8x128xf32>
    %cst_94 = arith.constant 1.000000e+00 : f32
    %267 = vector.broadcast %cst_94 : f32 to vector<8x128xf32>
    %268 = arith.addf %267, %266 : vector<8x128xf32>
    %269 = arith.divf %267, %268 : vector<8x128xf32>
    %270 = vector.extract_strided_slice %257 {offsets = [0, 256], sizes = [8, 128], strides = [1, 1]} : vector<8x512xf32> to vector<8x128xf32>
    %271 = math.tanh %270 : vector<8x128xf32>
    %272 = vector.extract_strided_slice %257 {offsets = [0, 384], sizes = [8, 128], strides = [1, 1]} : vector<8x512xf32> to vector<8x128xf32>
    %273 = arith.negf %272 : vector<8x128xf32>
    %274 = math.exp %273 : vector<8x128xf32>
    %cst_95 = arith.constant 1.000000e+00 : f32
    %275 = vector.broadcast %cst_95 : f32 to vector<8x128xf32>
    %276 = arith.addf %275, %274 : vector<8x128xf32>
    %277 = arith.divf %275, %276 : vector<8x128xf32>
    %278 = arith.mulf %269, %241 : vector<8x128xf32>
    %279 = arith.mulf %263, %271 : vector<8x128xf32>
    %280 = arith.addf %278, %279 : vector<8x128xf32>
    %281 = math.tanh %280 : vector<8x128xf32>
    %282 = arith.mulf %277, %281 : vector<8x128xf32>
    %283 = arith.index_cast %250 : i32 to index
    %c0_96 = arith.constant 0 : index
    %c0_97 = arith.constant 0 : index
    %284 = vector.load %arg7[%283, %c0_96, %c0_97] : memref<8x8x128xf32, #tpu.memory_space<vmem>>, vector<1x8x128xf32>
    %285 = vector.shape_cast %284 : vector<1x8x128xf32> to vector<8x128xf32>
    %286 = vector.shape_cast %282 : vector<8x128xf32> to vector<1x8x128xf32>
    tpu.vector_store %arg7[%283, %c0_96, %c0_97], %286 {strides = array<i32>} : memref<8x8x128xf32, #tpu.memory_space<vmem>>, vector<1x8x128xf32>,
    %c7_i32_98 = arith.constant 7 : i32
    %c0_i32_99 = arith.constant 0 : i32
    %287 = arith.cmpi eq, %arg0, %c0_i32_99 : i32
    %c7_i32_100 = arith.constant 7 : i32
    %288 = arith.subi %c7_i32_100, %c7_i32_98 : i32
    %289 = arith.select %287, %c7_i32_98, %288 : i32
    %290 = arith.index_cast %289 : i32 to index
    %c0_101 = arith.constant 0 : index
    %c0_102 = arith.constant 0 : index
    %291 = vector.load %arg8[%290, %c0_101, %c0_102] : memref<8x8x512xf32, #tpu.memory_space<vmem>>, vector<1x8x512xf32>
    %292 = vector.shape_cast %291 : vector<1x8x512xf32> to vector<8x512xf32>
    %293 = arith.truncf %282 : vector<8x128xf32> to vector<8x128xbf16>
    %c0_103 = arith.constant 0 : index
    %c0_104 = arith.constant 0 : index
    %294 = vector.load %arg4[%c0_103, %c0_104] : memref<128x512xbf16, #tpu.memory_space<vmem>>, vector<128x512xbf16>
    %cst_105 = arith.constant dense<0.000000e+00> : vector<8x512xf32>
    %295 = tpu.matmul %293, %294, %cst_105 {dimension_numbers = #tpu.dot_dimension_numbers<[1], [0], [0], [1], [0, 0, 1, 1], [], []>} : vector<8x128xbf16>, vector<128x512xbf16>, vector<8x512xf32> -> vector<8x512xf32>
    %296 = arith.addf %292, %295 : vector<8x512xf32>
    %297 = vector.extract_strided_slice %296 {offsets = [0, 0], sizes = [8, 128], strides = [1, 1]} : vector<8x512xf32> to vector<8x128xf32>
    %298 = arith.negf %297 : vector<8x128xf32>
    %299 = math.exp %298 : vector<8x128xf32>
    %cst_106 = arith.constant 1.000000e+00 : f32
    %300 = vector.broadcast %cst_106 : f32 to vector<8x128xf32>
    %301 = arith.addf %300, %299 : vector<8x128xf32>
    %302 = arith.divf %300, %301 : vector<8x128xf32>
    %303 = vector.extract_strided_slice %296 {offsets = [0, 128], sizes = [8, 128], strides = [1, 1]} : vector<8x512xf32> to vector<8x128xf32>
    %304 = arith.negf %303 : vector<8x128xf32>
    %305 = math.exp %304 : vector<8x128xf32>
    %cst_107 = arith.constant 1.000000e+00 : f32
    %306 = vector.broadcast %cst_107 : f32 to vector<8x128xf32>
    %307 = arith.addf %306, %305 : vector<8x128xf32>
    %308 = arith.divf %306, %307 : vector<8x128xf32>
    %309 = vector.extract_strided_slice %296 {offsets = [0, 256], sizes = [8, 128], strides = [1, 1]} : vector<8x512xf32> to vector<8x128xf32>
    %310 = math.tanh %309 : vector<8x128xf32>
    %311 = vector.extract_strided_slice %296 {offsets = [0, 384], sizes = [8, 128], strides = [1, 1]} : vector<8x512xf32> to vector<8x128xf32>
    %312 = arith.negf %311 : vector<8x128xf32>
    %313 = math.exp %312 : vector<8x128xf32>
    %cst_108 = arith.constant 1.000000e+00 : f32
    %314 = vector.broadcast %cst_108 : f32 to vector<8x128xf32>
    %315 = arith.addf %314, %313 : vector<8x128xf32>
    %316 = arith.divf %314, %315 : vector<8x128xf32>
    %317 = arith.mulf %308, %280 : vector<8x128xf32>
    %318 = arith.mulf %302, %310 : vector<8x128xf32>
    %319 = arith.addf %317, %318 : vector<8x128xf32>
    %320 = math.tanh %319 : vector<8x128xf32>
    %321 = arith.mulf %316, %320 : vector<8x128xf32>
    %322 = arith.index_cast %289 : i32 to index
    %c0_109 = arith.constant 0 : index
    %c0_110 = arith.constant 0 : index
    %323 = vector.load %arg7[%322, %c0_109, %c0_110] : memref<8x8x128xf32, #tpu.memory_space<vmem>>, vector<1x8x128xf32>
    %324 = vector.shape_cast %323 : vector<1x8x128xf32> to vector<8x128xf32>
    %325 = vector.shape_cast %321 : vector<8x128xf32> to vector<1x8x128xf32>
    tpu.vector_store %arg7[%322, %c0_109, %c0_110], %325 {strides = array<i32>} : memref<8x8x128xf32, #tpu.memory_space<vmem>>, vector<1x8x128xf32>,
    %c8_i32 = arith.constant 8 : i32
    return
  }
  func.func @transform_0(%arg0: i32) -> (i32, i32, i32) {
    %c0_i32 = arith.constant 0 : i32
    %c0_i32_0 = arith.constant 0 : i32
    %c0_i32_1 = arith.constant 0 : i32
    %c0_i32_2 = arith.constant 0 : i32
    return %c0_i32, %c0_i32_0, %c0_i32_1 : i32, i32, i32
  }
  func.func @transform_1(%arg0: i32) -> (i32, i32) {
    %c0_i32 = arith.constant 0 : i32
    %c0_i32_0 = arith.constant 0 : i32
    return %c0_i32, %arg0 : i32, i32
  }
  func.func @transform_2(%arg0: i32) -> (i32, i32) {
    %c0_i32 = arith.constant 0 : i32
    %c0_i32_0 = arith.constant 0 : i32
    return %c0_i32, %arg0 : i32, i32
  }
  func.func @transform_3(%arg0: i32) -> (i32, i32) {
    %c0_i32 = arith.constant 0 : i32
    %c0_i32_0 = arith.constant 0 : i32
    return %c0_i32, %arg0 : i32, i32
  }
  func.func @transform_4(%arg0: i32) -> (i32, i32, i32) {
    %c0_i32 = arith.constant 0 : i32
    %c0_i32_0 = arith.constant 0 : i32
    %c0_i32_1 = arith.constant 0 : i32
    return %arg0, %c0_i32, %c0_i32_0 : i32, i32, i32
  }
  func.func @transform_5(%arg0: i32) -> (i32, i32, i32) {
    %c0_i32 = arith.constant 0 : i32
    %c0_i32_0 = arith.constant 0 : i32
    %c0_i32_1 = arith.constant 0 : i32
    return %arg0, %c0_i32, %c0_i32_0 : i32, i32, i32
  }
  func.func @transform_6(%arg0: i32) -> (i32, i32, i32) {
    %c0_i32 = arith.constant 0 : i32
    %c0_i32_0 = arith.constant 0 : i32
    %c0_i32_1 = arith.constant 0 : i32
    return %c0_i32, %c0_i32_0, %arg0 : i32, i32, i32
  }
}

</mosaic_0001>

<llo_original>
// kernel: reaction_encoder_forward.4
$region0: #{reaction_encoder_forward.4}
  #allocation0 [shape = 'u32[]', space=smem, size = 0x4, offset = 0x4, fixed_abs, tag = 'smem constant byte address 0x4 - core index']
  #allocation1 [shape = 'u32[72,128]{1,0:T(1,128)}', space=vmem, size = 0x9000, scoped, tag = 'internal scratch']
  #allocation2 [shape = 'f32[8,8,512]{2,1,0:T(8,128)}', space=vmem, size = 0x20000, scoped, tag = 'scratch operand']
  %s0 = inlined_call_operand.vmem [shape: f32[8,8,256], index: 0, kind: input, shape index: {}]
  %s1 = inlined_call_operand.hbm [shape: bf16[256,512], index: 1, kind: input, shape index: {}]
  %s2 = inlined_call_operand.vmem [shape: f32[1,512], index: 2, kind: input, shape index: {}]
  %s3 = inlined_call_operand.hbm [shape: bf16[128,512], index: 3, kind: input, shape index: {}]
  %s4 = inlined_call_operand.vmem [shape: f32[8,128], index: 4, kind: input, shape index: {}]
  %s5 = inlined_call_operand.vmem [shape: f32[8,128], index: 5, kind: input, shape index: {}]
  %s6 = inlined_call_operand.vmem [shape: f32[1,128], index: 6, kind: input, shape index: {}]
  %s7 = inlined_call_operand.vmem [shape: f32[1,128], index: 7, kind: input, shape index: {}]
  %s8 = inlined_call_operand.vmem [shape: bf16[128,256], index: 8, kind: input, shape index: {}]
  %s9 = inlined_call_operand.vmem [shape: f32[1,256], index: 9, kind: input, shape index: {}]
  %s10 = inlined_call_operand.vmem [shape: f32[1,256], index: 10, kind: input, shape index: {}]
  %s11 = inlined_call_operand.vmem [shape: f32[1,256], index: 11, kind: input, shape index: {}]
  %s12 = inlined_call_operand.vmem [shape: f32[8,128], index: 12, kind: output, shape index: {0}]
  %s13 = inlined_call_operand.vmem [shape: f32[8,128], index: 13, kind: output, shape index: {1}]
  %14 = xla_tuple %s12, %s13
  %s15 = sld [smem:[#allocation0]]
  $region74: #{reaction_encoder_forward.4} parent=0
    _
  %s17 = ssub.s32 1, %s15
  %s18 = scalar_select 0, %s17, %s15
  $region1: #{reaction_encoder_forward.4} parent=0
    #allocation3 [shape = 'u8[262144]{0}', space=vmem, size = 0x40000, scoped, tag = 'input window, operand 1, single buffered']
    #allocation4 [shape = 's32[1]{0}', space=sflag, size = 0x4, scoped, tag = 'scoped memory for reaction_encoder_forward.4']
    #allocation5 [shape = 'u8[131072]{0}', space=vmem, size = 0x20000, scoped, tag = 'input window, operand 3, single buffered']
    #allocation6 [shape = 's32[1]{0}', space=sflag, size = 0x4, scoped, tag = 'scoped memory for reaction_encoder_forward.4']
    %19 = vsyncpa [#allocation4], 0
    %20 = vsyncpa [#allocation6], 0
    // Predicated region
    $region2: #{reaction_encoder_forward.4} parent=1 // pred_check
      _
    $region3: #{reaction_encoder_forward.4} parent=1 // pred_check_branch
      %22 = sbr.rel (0) target = $region5
    $region4: #{reaction_encoder_forward.4} parent=1 // pred_region
      _
    $region5: #{reaction_encoder_forward.4} parent=1 // pred_fallthru
      _
    // Predicated region
    $region6: #{reaction_encoder_forward.4} parent=1 // pred_check
      _
    $region7: #{reaction_encoder_forward.4} parent=1 // pred_check_branch
      %24 = sbr.rel (0) target = $region9
    $region8: #{reaction_encoder_forward.4} parent=1 // pred_region
      %26 = vsyncadd [#allocation4], 0
      %s27 = sshll.u32 %s1, 4
      %s28 = int_to_ptr.hbm [resolvable:$true] %s27
      %s29 = sshll.u32 [#allocation3], 4
      %s30 = int_to_ptr.vmem [resolvable:$true] %s29
      %35 = dma.hbm_to_vmem [thread:$0]  %s28, 8192, %s30, [#allocation4], 256, 256, 16
    $region9: #{reaction_encoder_forward.4} parent=1 // pred_fallthru
      _
    // Predicated region
    $region10: #{reaction_encoder_forward.4} parent=1 // pred_check
      _
    $region11: #{reaction_encoder_forward.4} parent=1 // pred_check_branch
      %37 = sbr.rel (0) target = $region13
    $region12: #{reaction_encoder_forward.4} parent=1 // pred_region
      _
    $region13: #{reaction_encoder_forward.4} parent=1 // pred_fallthru
      _
    // Predicated region
    $region14: #{reaction_encoder_forward.4} parent=1 // pred_check
      _
    $region15: #{reaction_encoder_forward.4} parent=1 // pred_check_branch
      %39 = sbr.rel (0) target = $region17
    $region16: #{reaction_encoder_forward.4} parent=1 // pred_region
      %41 = vsyncadd [#allocation6], 0
      %s42 = sshll.u32 %s3, 4
      %s43 = int_to_ptr.hbm [resolvable:$true] %s42
      %s44 = sshll.u32 [#allocation5], 4
      %s45 = int_to_ptr.vmem [resolvable:$true] %s44
      %50 = dma.hbm_to_vmem [thread:$0]  %s43, 4096, %s45, [#allocation6], 256, 256, 16
    $region17: #{reaction_encoder_forward.4} parent=1 // pred_fallthru
      _
    // Predicated region
    $region18: #{reaction_encoder_forward.4} parent=1 // pred_check
      _
    $region19: #{reaction_encoder_forward.4} parent=1 // pred_check_branch
      %52 = sbr.rel (0) target = $region21
    $region20: #{reaction_encoder_forward.4} parent=1 // pred_region
      _
    $region21: #{reaction_encoder_forward.4} parent=1 // pred_fallthru
      _
    // Predicated region
    $region22: #{reaction_encoder_forward.4} parent=1 // pred_check
      _
    $region23: #{reaction_encoder_forward.4} parent=1 // pred_check_branch
      %54 = sbr.rel (0) target = $region25
    $region24: #{reaction_encoder_forward.4} parent=1 // pred_region
      _
    $region25: #{reaction_encoder_forward.4} parent=1 // pred_fallthru
      _
    // Predicated region
    $region26: #{reaction_encoder_forward.4} parent=1 // pred_check
      _
    $region27: #{reaction_encoder_forward.4} parent=1 // pred_check_branch
      %56 = sbr.rel (0) target = $region29
    $region28: #{reaction_encoder_forward.4} parent=1 // pred_region
      _
    $region29: #{reaction_encoder_forward.4} parent=1 // pred_fallthru
      _
    // Predicated region
    $region30: #{reaction_encoder_forward.4} parent=1 // pred_check
      _
    $region31: #{reaction_encoder_forward.4} parent=1 // pred_check_branch
      %58 = sbr.rel (0) target = $region33
    $region32: #{reaction_encoder_forward.4} parent=1 // pred_region
      _
    $region33: #{reaction_encoder_forward.4} parent=1 // pred_fallthru
      _
    // Predicated region
    $region34: #{reaction_encoder_forward.4} parent=1 // pred_check
      _
    $region35: #{reaction_encoder_forward.4} parent=1 // pred_check_branch
      %60 = sbr.rel (0) target = $region37
    $region36: #{reaction_encoder_forward.4} parent=1 // pred_region
      _
    $region37: #{reaction_encoder_forward.4} parent=1 // pred_fallthru
      _
    // Predicated region
    $region38: #{reaction_encoder_forward.4} parent=1 // pred_check
      _
    $region39: #{reaction_encoder_forward.4} parent=1 // pred_check_branch
      %62 = sbr.rel (0) target = $region41
    $region40: #{reaction_encoder_forward.4} parent=1 // pred_region
      _
    $region41: #{reaction_encoder_forward.4} parent=1 // pred_fallthru
      _
    // Predicated region
    $region42: #{reaction_encoder_forward.4} parent=1 // pred_check
      _
    $region43: #{reaction_encoder_forward.4} parent=1 // pred_check_branch
      %64 = sbr.rel (0) target = $region45
    $region44: #{reaction_encoder_forward.4} parent=1 // pred_region
      _
    $region45: #{reaction_encoder_forward.4} parent=1 // pred_fallthru
      _
    // Predicated region
    $region46: #{reaction_encoder_forward.4} parent=1 // pred_check
      _
    $region47: #{reaction_encoder_forward.4} parent=1 // pred_check_branch
      %66 = sbr.rel (0) target = $region49
    $region48: #{reaction_encoder_forward.4} parent=1 // pred_region
      _
    $region49: #{reaction_encoder_forward.4} parent=1 // pred_fallthru
      _
    // Predicated region
    $region50: #{reaction_encoder_forward.4} parent=1 // pred_check
      _
    $region51: #{reaction_encoder_forward.4} parent=1 // pred_check_branch
      %68 = sbr.rel (0) target = $region53
    $region52: #{reaction_encoder_forward.4} parent=1 // pred_region
      %70 = dma.done [#allocation4], 8192
    $region53: #{reaction_encoder_forward.4} parent=1 // pred_fallthru
      _
    // Predicated region
    $region54: #{reaction_encoder_forward.4} parent=1 // pred_check
      _
    $region55: #{reaction_encoder_forward.4} parent=1 // pred_check_branch
      %72 = sbr.rel (0) target = $region57
    $region56: #{reaction_encoder_forward.4} parent=1 // pred_region
      %74 = dma.done [#allocation6], 4096
    $region57: #{reaction_encoder_forward.4} parent=1 // pred_fallthru
      _
    %v75 = vld [vmem:[%s0] sm:$0xff]
    %v76 = vld [vmem:[%s0 + $0x8] sm:$0xff]
    %v77 = vld [vmem:[%s0 + $0x10] sm:$0xff]
    %v78 = vld [vmem:[%s0 + $0x18] sm:$0xff]
    %v79 = vld [vmem:[%s0 + $0x20] sm:$0xff]
    %v80 = vld [vmem:[%s0 + $0x28] sm:$0xff]
    %v81 = vld [vmem:[%s0 + $0x30] sm:$0xff]
    %v82 = vld [vmem:[%s0 + $0x38] sm:$0xff]
    %v83 = vld [vmem:[%s0 + $0x40] sm:$0xff]
    %v84 = vld [vmem:[%s0 + $0x48] sm:$0xff]
    %v85 = vld [vmem:[%s0 + $0x50] sm:$0xff]
    %v86 = vld [vmem:[%s0 + $0x58] sm:$0xff]
    %v87 = vld [vmem:[%s0 + $0x60] sm:$0xff]
    %v88 = vld [vmem:[%s0 + $0x68] sm:$0xff]
    %v89 = vld [vmem:[%s0 + $0x70] sm:$0xff]
    %v90 = vld [vmem:[%s0 + $0x78] sm:$0xff]
    %v91 = vpack.c.bf16 %v77, %v75
    %v92 = vpack.c.bf16 %v78, %v76
    %v93 = vpack.c.bf16 %v81, %v79
    %v94 = vpack.c.bf16 %v82, %v80
    %v95 = vpack.c.bf16 %v85, %v83
    %v96 = vpack.c.bf16 %v86, %v84
    %v97 = vpack.c.bf16 %v89, %v87
    %v98 = vpack.c.bf16 %v90, %v88
    %v99 = vld [vmem:[#allocation3] sm:$0xff]
    %v100 = vld [vmem:[#allocation3 + $0x8] sm:$0xff]
    %v101 = vld [vmem:[#allocation3 + $0x10] sm:$0xff]
    %v102 = vld [vmem:[#allocation3 + $0x18] sm:$0xff]
    %v103 = vld [vmem:[#allocation3 + $0x20] sm:$0xff]
    %v104 = vld [vmem:[#allocation3 + $0x28] sm:$0xff]
    %v105 = vld [vmem:[#allocation3 + $0x30] sm:$0xff]
    %v106 = vld [vmem:[#allocation3 + $0x38] sm:$0xff]
    %v107 = vld [vmem:[#allocation3 + $0x40] sm:$0xff]
    %v108 = vld [vmem:[#allocation3 + $0x48] sm:$0xff]
    %v109 = vld [vmem:[#allocation3 + $0x50] sm:$0xff]
    %v110 = vld [vmem:[#allocation3 + $0x58] sm:$0xff]
    %v111 = vld [vmem:[#allocation3 + $0x60] sm:$0xff]
    %v112 = vld [vmem:[#allocation3 + $0x68] sm:$0xff]
    %v113 = vld [vmem:[#allocation3 + $0x70] sm:$0xff]
    %v114 = vld [vmem:[#allocation3 + $0x78] sm:$0xff]
    %v115 = vld [vmem:[#allocation3 + $0x80] sm:$0xff]
    %v116 = vld [vmem:[#allocation3 + $0x88] sm:$0xff]
    %v117 = vld [vmem:[#allocation3 + $0x90] sm:$0xff]
    %v118 = vld [vmem:[#allocation3 + $0x98] sm:$0xff]
    %v119 = vld [vmem:[#allocation3 + $0xa0] sm:$0xff]
    %v120 = vld [vmem:[#allocation3 + $0xa8] sm:$0xff]
    %v121 = vld [vmem:[#allocation3 + $0xb0] sm:$0xff]
    %v122 = vld [vmem:[#allocation3 + $0xb8] sm:$0xff]
    %v123 = vld [vmem:[#allocation3 + $0xc0] sm:$0xff]
    %v124 = vld [vmem:[#allocation3 + $0xc8] sm:$0xff]
    %v125 = vld [vmem:[#allocation3 + $0xd0] sm:$0xff]
    %v126 = vld [vmem:[#allocation3 + $0xd8] sm:$0xff]
    %v127 = vld [vmem:[#allocation3 + $0xe0] sm:$0xff]
    %v128 = vld [vmem:[#allocation3 + $0xe8] sm:$0xff]
    %v129 = vld [vmem:[#allocation3 + $0xf0] sm:$0xff]
    %v130 = vld [vmem:[#allocation3 + $0xf8] sm:$0xff]
    %v131 = vld [vmem:[#allocation3 + $0x100] sm:$0xff]
    %v132 = vld [vmem:[#allocation3 + $0x108] sm:$0xff]
    %v133 = vld [vmem:[#allocation3 + $0x110] sm:$0xff]
    %v134 = vld [vmem:[#allocation3 + $0x118] sm:$0xff]
    %v135 = vld [vmem:[#allocation3 + $0x120] sm:$0xff]
    %v136 = vld [vmem:[#allocation3 + $0x128] sm:$0xff]
    %v137 = vld [vmem:[#allocation3 + $0x130] sm:$0xff]
    %v138 = vld [vmem:[#allocation3 + $0x138] sm:$0xff]
    %v139 = vld [vmem:[#allocation3 + $0x140] sm:$0xff]
    %v140 = vld [vmem:[#allocation3 + $0x148] sm:$0xff]
    %v141 = vld [vmem:[#allocation3 + $0x150] sm:$0xff]
    %v142 = vld [vmem:[#allocation3 + $0x158] sm:$0xff]
    %v143 = vld [vmem:[#allocation3 + $0x160] sm:$0xff]
    %v144 = vld [vmem:[#allocation3 + $0x168] sm:$0xff]
    %v145 = vld [vmem:[#allocation3 + $0x170] sm:$0xff]
    %v146 = vld [vmem:[#allocation3 + $0x178] sm:$0xff]
    %v147 = vld [vmem:[#allocation3 + $0x180] sm:$0xff]
    %v148 = vld [vmem:[#allocation3 + $0x188] sm:$0xff]
    %v149 = vld [vmem:[#allocation3 + $0x190] sm:$0xff]
    %v150 = vld [vmem:[#allocation3 + $0x198] sm:$0xff]
    %v151 = vld [vmem:[#allocation3 + $0x1a0] sm:$0xff]
    %v152 = vld [vmem:[#allocation3 + $0x1a8] sm:$0xff]
    %v153 = vld [vmem:[#allocation3 + $0x1b0] sm:$0xff]
    %v154 = vld [vmem:[#allocation3 + $0x1b8] sm:$0xff]
    %v155 = vld [vmem:[#allocation3 + $0x1c0] sm:$0xff]
    %v156 = vld [vmem:[#allocation3 + $0x1c8] sm:$0xff]
    %v157 = vld [vmem:[#allocation3 + $0x1d0] sm:$0xff]
    %v158 = vld [vmem:[#allocation3 + $0x1d8] sm:$0xff]
    %v159 = vld [vmem:[#allocation3 + $0x1e0] sm:$0xff]
    %v160 = vld [vmem:[#allocation3 + $0x1e8] sm:$0xff]
    %v161 = vld [vmem:[#allocation3 + $0x1f0] sm:$0xff]
    %v162 = vld [vmem:[#allocation3 + $0x1f8] sm:$0xff]
    %v163 = vld [vmem:[%s2] sm:$0xf]
    %v165 = vperm.slane %v163, 0
    %v166 = vperm.slane %v163, 1
    %v167 = vperm.slane %v163, 2
    %v168 = vperm.slane %v163, 3
    %v237 = vunpack.c.l.b16 %v99
    %v238 = vunpack.c.h.b16 %v99
    %v239 = vunpack.c.l.b16 %v100
    %v240 = vunpack.c.h.b16 %v100
    %v241 = vunpack.c.l.b16 %v101
    %v242 = vunpack.c.h.b16 %v101
    %v243 = vunpack.c.l.b16 %v102
    %v244 = vunpack.c.h.b16 %v102
    %v245 = vunpack.c.l.b16 %v103
    %v246 = vunpack.c.h.b16 %v103
    %v247 = vunpack.c.l.b16 %v104
    %v248 = vunpack.c.h.b16 %v104
    %v249 = vunpack.c.l.b16 %v105
    %v250 = vunpack.c.h.b16 %v105
    %v251 = vunpack.c.l.b16 %v106
    %v252 = vunpack.c.h.b16 %v106
    %v253 = vunpack.c.l.b16 %v107
    %v254 = vunpack.c.h.b16 %v107
    %v255 = vunpack.c.l.b16 %v108
    %v256 = vunpack.c.h.b16 %v108
    %v257 = vunpack.c.l.b16 %v109
    %v258 = vunpack.c.h.b16 %v109
    %v259 = vunpack.c.l.b16 %v110
    %v260 = vunpack.c.h.b16 %v110
    %v261 = vunpack.c.l.b16 %v111
    %v262 = vunpack.c.h.b16 %v111
    %v263 = vunpack.c.l.b16 %v112
    %v264 = vunpack.c.h.b16 %v112
    %v265 = vunpack.c.l.b16 %v113
    %v266 = vunpack.c.h.b16 %v113
    %v267 = vunpack.c.l.b16 %v114
    %v268 = vunpack.c.h.b16 %v114
    %v269 = vunpack.c.l.b16 %v115
    %v270 = vunpack.c.h.b16 %v115
    %v271 = vunpack.c.l.b16 %v116
    %v272 = vunpack.c.h.b16 %v116
    %v273 = vunpack.c.l.b16 %v117
    %v274 = vunpack.c.h.b16 %v117
    %v275 = vunpack.c.l.b16 %v118
    %v276 = vunpack.c.h.b16 %v118
    %v277 = vunpack.c.l.b16 %v119
    %v278 = vunpack.c.h.b16 %v119
    %v279 = vunpack.c.l.b16 %v120
    %v280 = vunpack.c.h.b16 %v120
    %v281 = vunpack.c.l.b16 %v121
    %v282 = vunpack.c.h.b16 %v121
    %v283 = vunpack.c.l.b16 %v122
    %v284 = vunpack.c.h.b16 %v122
    %v285 = vunpack.c.l.b16 %v123
    %v286 = vunpack.c.h.b16 %v123
    %v287 = vunpack.c.l.b16 %v124
    %v288 = vunpack.c.h.b16 %v124
    %v289 = vunpack.c.l.b16 %v125
    %v290 = vunpack.c.h.b16 %v125
    %v291 = vunpack.c.l.b16 %v126
    %v292 = vunpack.c.h.b16 %v126
    %v293 = vunpack.c.l.b16 %v127
    %v294 = vunpack.c.h.b16 %v127
    %v295 = vunpack.c.l.b16 %v128
    %v296 = vunpack.c.h.b16 %v128
    %v297 = vunpack.c.l.b16 %v129
    %v298 = vunpack.c.h.b16 %v129
    %v299 = vunpack.c.l.b16 %v130
    %v300 = vunpack.c.h.b16 %v130
    %v301 = vunpack.c.l.b16 %v131
    %v302 = vunpack.c.h.b16 %v131
    %v303 = vunpack.c.l.b16 %v132
    %v304 = vunpack.c.h.b16 %v132
    %v305 = vunpack.c.l.b16 %v133
    %v306 = vunpack.c.h.b16 %v133
    %v307 = vunpack.c.l.b16 %v134
    %v308 = vunpack.c.h.b16 %v134
    %v309 = vunpack.c.l.b16 %v135
    %v310 = vunpack.c.h.b16 %v135
    %v311 = vunpack.c.l.b16 %v136
    %v312 = vunpack.c.h.b16 %v136
    %v313 = vunpack.c.l.b16 %v137
    %v314 = vunpack.c.h.b16 %v137
    %v315 = vunpack.c.l.b16 %v138
    %v316 = vunpack.c.h.b16 %v138
    %v317 = vunpack.c.l.b16 %v139
    %v318 = vunpack.c.h.b16 %v139
    %v319 = vunpack.c.l.b16 %v140
    %v320 = vunpack.c.h.b16 %v140
    %v321 = vunpack.c.l.b16 %v141
    %v322 = vunpack.c.h.b16 %v141
    %v323 = vunpack.c.l.b16 %v142
    %v324 = vunpack.c.h.b16 %v142
    %v325 = vunpack.c.l.b16 %v143
    %v326 = vunpack.c.h.b16 %v143
    %v327 = vunpack.c.l.b16 %v144
    %v328 = vunpack.c.h.b16 %v144
    %v329 = vunpack.c.l.b16 %v145
    %v330 = vunpack.c.h.b16 %v145
    %v331 = vunpack.c.l.b16 %v146
    %v332 = vunpack.c.h.b16 %v146
    %v333 = vunpack.c.l.b16 %v147
    %v334 = vunpack.c.h.b16 %v147
    %v335 = vunpack.c.l.b16 %v148
    %v336 = vunpack.c.h.b16 %v148
    %v337 = vunpack.c.l.b16 %v149
    %v338 = vunpack.c.h.b16 %v149
    %v339 = vunpack.c.l.b16 %v150
    %v340 = vunpack.c.h.b16 %v150
    %v341 = vunpack.c.l.b16 %v151
    %v342 = vunpack.c.h.b16 %v151
    %v343 = vunpack.c.l.b16 %v152
    %v344 = vunpack.c.h.b16 %v152
    %v345 = vunpack.c.l.b16 %v153
    %v346 = vunpack.c.h.b16 %v153
    %v347 = vunpack.c.l.b16 %v154
    %v348 = vunpack.c.h.b16 %v154
    %v349 = vunpack.c.l.b16 %v155
    %v350 = vunpack.c.h.b16 %v155
    %v351 = vunpack.c.l.b16 %v156
    %v352 = vunpack.c.h.b16 %v156
    %v353 = vunpack.c.l.b16 %v157
    %v354 = vunpack.c.h.b16 %v157
    %v355 = vunpack.c.l.b16 %v158
    %v356 = vunpack.c.h.b16 %v158
    %v357 = vunpack.c.l.b16 %v159
    %v358 = vunpack.c.h.b16 %v159
    %v359 = vunpack.c.l.b16 %v160
    %v360 = vunpack.c.h.b16 %v160
    %v361 = vunpack.c.l.b16 %v161
    %v362 = vunpack.c.h.b16 %v161
    %v363 = vunpack.c.l.b16 %v162
    %v364 = vunpack.c.h.b16 %v162
    %v365 = vpack.c.b16 %v241, %v237
    %v366 = vpack.c.b16 %v242, %v238
    %v367 = vpack.c.b16 %v243, %v239
    %v368 = vpack.c.b16 %v244, %v240
    %v369 = vpack.c.b16 %v249, %v245
    %v370 = vpack.c.b16 %v250, %v246
    %v371 = vpack.c.b16 %v251, %v247
    %v372 = vpack.c.b16 %v252, %v248
    %v373 = vpack.c.b16 %v257, %v253
    %v374 = vpack.c.b16 %v258, %v254
    %v375 = vpack.c.b16 %v259, %v255
    %v376 = vpack.c.b16 %v260, %v256
    %v377 = vpack.c.b16 %v265, %v261
    %v378 = vpack.c.b16 %v266, %v262
    %v379 = vpack.c.b16 %v267, %v263
    %v380 = vpack.c.b16 %v268, %v264
    %v381 = vpack.c.b16 %v273, %v269
    %v382 = vpack.c.b16 %v274, %v270
    %v383 = vpack.c.b16 %v275, %v271
    %v384 = vpack.c.b16 %v276, %v272
    %v385 = vpack.c.b16 %v281, %v277
    %v386 = vpack.c.b16 %v282, %v278
    %v387 = vpack.c.b16 %v283, %v279
    %v388 = vpack.c.b16 %v284, %v280
    %v389 = vpack.c.b16 %v289, %v285
    %v390 = vpack.c.b16 %v290, %v286
    %v391 = vpack.c.b16 %v291, %v287
    %v392 = vpack.c.b16 %v292, %v288
    %v393 = vpack.c.b16 %v297, %v293
    %v394 = vpack.c.b16 %v298, %v294
    %v395 = vpack.c.b16 %v299, %v295
    %v396 = vpack.c.b16 %v300, %v296
    %v397 = vpack.c.b16 %v305, %v301
    %v398 = vpack.c.b16 %v306, %v302
    %v399 = vpack.c.b16 %v307, %v303
    %v400 = vpack.c.b16 %v308, %v304
    %v401 = vpack.c.b16 %v313, %v309
    %v402 = vpack.c.b16 %v314, %v310
    %v403 = vpack.c.b16 %v315, %v311
    %v404 = vpack.c.b16 %v316, %v312
    %v405 = vpack.c.b16 %v321, %v317
    %v406 = vpack.c.b16 %v322, %v318
    %v407 = vpack.c.b16 %v323, %v319
    %v408 = vpack.c.b16 %v324, %v320
    %v409 = vpack.c.b16 %v329, %v325
    %v410 = vpack.c.b16 %v330, %v326
    %v411 = vpack.c.b16 %v331, %v327
    %v412 = vpack.c.b16 %v332, %v328
    %v413 = vpack.c.b16 %v337, %v333
    %v414 = vpack.c.b16 %v338, %v334
    %v415 = vpack.c.b16 %v339, %v335
    %v416 = vpack.c.b16 %v340, %v336
    %v417 = vpack.c.b16 %v345, %v341
    %v418 = vpack.c.b16 %v346, %v342
    %v419 = vpack.c.b16 %v347, %v343
    %v420 = vpack.c.b16 %v348, %v344
    %v421 = vpack.c.b16 %v353, %v349
    %v422 = vpack.c.b16 %v354, %v350
    %v423 = vpack.c.b16 %v355, %v351
    %v424 = vpack.c.b16 %v356, %v352
    %v425 = vpack.c.b16 %v361, %v357
    %v426 = vpack.c.b16 %v362, %v358
    %v427 = vpack.c.b16 %v363, %v359
    %v428 = vpack.c.b16 %v364, %v360
    %493 = vmatpush.bf16.msra.mxu0 %v393
    %494 = vmatpush.bf16.msra.mxu0 %v389
    %495 = vmatpush.bf16.msra.mxu0 %v385
    %496 = vmatpush.bf16.msra.mxu0 %v381
    %497 = vmatpush.bf16.msra.mxu0 %v377
    %498 = vmatpush.bf16.msra.mxu0 %v373
    %499 = vmatpush.bf16.msra.mxu0 %v369
    %500 = vmatpush.bf16.msra.mxu0 %v365
    %501 = vmatmul.bf16.gmra.mxu0 %v91
    %v502 = vpop.f32.mrf.mxu0
    %v503 = vadd.f32 %v165, %v502
    %v504 = vpop.f32.mrf.mxu0
    %v505 = vadd.f32 %v165, %v504
    %506 = vmatmul.bf16.gmra.mxu0 %v93
    %v507 = vpop.f32.mrf.mxu0
    %v508 = vadd.f32 %v165, %v507
    %v509 = vpop.f32.mrf.mxu0
    %v510 = vadd.f32 %v165, %v509
    %511 = vmatmul.bf16.gmra.mxu0 %v95
    %v512 = vpop.f32.mrf.mxu0
    %v513 = vadd.f32 %v165, %v512
    %v514 = vpop.f32.mrf.mxu0
    %v515 = vadd.f32 %v165, %v514
    %516 = vmatmul.bf16.gmra.mxu0 %v97
    %v517 = vpop.f32.mrf.mxu0
    %v518 = vadd.f32 %v165, %v517
    %v519 = vpop.f32.mrf.mxu0
    %v520 = vadd.f32 %v165, %v519
    %521 = vdwg.mxu0
    %522 = vmatpush.bf16.msra.mxu0 %v425
    %523 = vmatpush.bf16.msra.mxu0 %v421
    %524 = vmatpush.bf16.msra.mxu0 %v417
    %525 = vmatpush.bf16.msra.mxu0 %v413
    %526 = vmatpush.bf16.msra.mxu0 %v409
    %527 = vmatpush.bf16.msra.mxu0 %v405
    %528 = vmatpush.bf16.msra.mxu0 %v401
    %529 = vmatpush.bf16.msra.mxu0 %v397
    %530 = vmatmul.bf16.gmra.mxu0 %v92
    %v531 = vpop.f32.mrf.mxu0
    %v532 = vadd.f32 %v503, %v531
    %v533 = vpop.f32.mrf.mxu0
    %v534 = vadd.f32 %v505, %v533
    %535 = vmatmul.bf16.gmra.mxu0 %v94
    %v536 = vpop.f32.mrf.mxu0
    %v537 = vadd.f32 %v508, %v536
    %v538 = vpop.f32.mrf.mxu0
    %v539 = vadd.f32 %v510, %v538
    %540 = vmatmul.bf16.gmra.mxu0 %v96
    %v541 = vpop.f32.mrf.mxu0
    %v542 = vadd.f32 %v513, %v541
    %v543 = vpop.f32.mrf.mxu0
    %v544 = vadd.f32 %v515, %v543
    %545 = vmatmul.bf16.gmra.mxu0 %v98
    %v546 = vpop.f32.mrf.mxu0
    %v547 = vadd.f32 %v518, %v546
    %v548 = vpop.f32.mrf.mxu0
    %v549 = vadd.f32 %v520, %v548
    %550 = vdwg.mxu0
    %551 = vmatpush.bf16.msra.mxu0 %v394
    %552 = vmatpush.bf16.msra.mxu0 %v390
    %553 = vmatpush.bf16.msra.mxu0 %v386
    %554 = vmatpush.bf16.msra.mxu0 %v382
    %555 = vmatpush.bf16.msra.mxu0 %v378
    %556 = vmatpush.bf16.msra.mxu0 %v374
    %557 = vmatpush.bf16.msra.mxu0 %v370
    %558 = vmatpush.bf16.msra.mxu0 %v366
    %559 = vmatmul.bf16.gmra.mxu0 %v91
    %v560 = vpop.f32.mrf.mxu0
    %v561 = vadd.f32 %v166, %v560
    %v562 = vpop.f32.mrf.mxu0
    %v563 = vadd.f32 %v166, %v562
    %564 = vmatmul.bf16.gmra.mxu0 %v93
    %v565 = vpop.f32.mrf.mxu0
    %v566 = vadd.f32 %v166, %v565
    %v567 = vpop.f32.mrf.mxu0
    %v568 = vadd.f32 %v166, %v567
    %569 = vmatmul.bf16.gmra.mxu0 %v95
    %v570 = vpop.f32.mrf.mxu0
    %v571 = vadd.f32 %v166, %v570
    %v572 = vpop.f32.mrf.mxu0
    %v573 = vadd.f32 %v166, %v572
    %574 = vmatmul.bf16.gmra.mxu0 %v97
    %v575 = vpop.f32.mrf.mxu0
    %v576 = vadd.f32 %v166, %v575
    %v577 = vpop.f32.mrf.mxu0
    %v578 = vadd.f32 %v166, %v577
    %579 = vdwg.mxu0
    %580 = vmatpush.bf16.msra.mxu0 %v426
    %581 = vmatpush.bf16.msra.mxu0 %v422
    %582 = vmatpush.bf16.msra.mxu0 %v418
    %583 = vmatpush.bf16.msra.mxu0 %v414
    %584 = vmatpush.bf16.msra.mxu0 %v410
    %585 = vmatpush.bf16.msra.mxu0 %v406
    %586 = vmatpush.bf16.msra.mxu0 %v402
    %587 = vmatpush.bf16.msra.mxu0 %v398
    %588 = vmatmul.bf16.gmra.mxu0 %v92
    %v589 = vpop.f32.mrf.mxu0
    %v590 = vadd.f32 %v561, %v589
    %v591 = vpop.f32.mrf.mxu0
    %v592 = vadd.f32 %v563, %v591
    %593 = vmatmul.bf16.gmra.mxu0 %v94
    %v594 = vpop.f32.mrf.mxu0
    %v595 = vadd.f32 %v566, %v594
    %v596 = vpop.f32.mrf.mxu0
    %v597 = vadd.f32 %v568, %v596
    %598 = vmatmul.bf16.gmra.mxu0 %v96
    %v599 = vpop.f32.mrf.mxu0
    %v600 = vadd.f32 %v571, %v599
    %v601 = vpop.f32.mrf.mxu0
    %v602 = vadd.f32 %v573, %v601
    %603 = vmatmul.bf16.gmra.mxu0 %v98
    %v604 = vpop.f32.mrf.mxu0
    %v605 = vadd.f32 %v576, %v604
    %v606 = vpop.f32.mrf.mxu0
    %v607 = vadd.f32 %v578, %v606
    %608 = vdwg.mxu0
    %609 = vmatpush.bf16.msra.mxu0 %v395
    %610 = vmatpush.bf16.msra.mxu0 %v391
    %611 = vmatpush.bf16.msra.mxu0 %v387
    %612 = vmatpush.bf16.msra.mxu0 %v383
    %613 = vmatpush.bf16.msra.mxu0 %v379
    %614 = vmatpush.bf16.msra.mxu0 %v375
    %615 = vmatpush.bf16.msra.mxu0 %v371
    %616 = vmatpush.bf16.msra.mxu0 %v367
    %617 = vmatmul.bf16.gmra.mxu0 %v91
    %v618 = vpop.f32.mrf.mxu0
    %v619 = vadd.f32 %v167, %v618
    %v620 = vpop.f32.mrf.mxu0
    %v621 = vadd.f32 %v167, %v620
    %622 = vmatmul.bf16.gmra.mxu0 %v93
    %v623 = vpop.f32.mrf.mxu0
    %v624 = vadd.f32 %v167, %v623
    %v625 = vpop.f32.mrf.mxu0
    %v626 = vadd.f32 %v167, %v625
    %627 = vmatmul.bf16.gmra.mxu0 %v95
    %v628 = vpop.f32.mrf.mxu0
    %v629 = vadd.f32 %v167, %v628
    %v630 = vpop.f32.mrf.mxu0
    %v631 = vadd.f32 %v167, %v630
    %632 = vmatmul.bf16.gmra.mxu0 %v97
    %v633 = vpop.f32.mrf.mxu0
    %v634 = vadd.f32 %v167, %v633
    %v635 = vpop.f32.mrf.mxu0
    %v636 = vadd.f32 %v167, %v635
    %637 = vdwg.mxu0
    %638 = vmatpush.bf16.msra.mxu0 %v427
    %639 = vmatpush.bf16.msra.mxu0 %v423
    %640 = vmatpush.bf16.msra.mxu0 %v419
    %641 = vmatpush.bf16.msra.mxu0 %v415
    %642 = vmatpush.bf16.msra.mxu0 %v411
    %643 = vmatpush.bf16.msra.mxu0 %v407
    %644 = vmatpush.bf16.msra.mxu0 %v403
    %645 = vmatpush.bf16.msra.mxu0 %v399
    %646 = vmatmul.bf16.gmra.mxu0 %v92
    %v647 = vpop.f32.mrf.mxu0
    %v648 = vadd.f32 %v619, %v647
    %v649 = vpop.f32.mrf.mxu0
    %v650 = vadd.f32 %v621, %v649
    %651 = vmatmul.bf16.gmra.mxu0 %v94
    %v652 = vpop.f32.mrf.mxu0
    %v653 = vadd.f32 %v624, %v652
    %v654 = vpop.f32.mrf.mxu0
    %v655 = vadd.f32 %v626, %v654
    %656 = vmatmul.bf16.gmra.mxu0 %v96
    %v657 = vpop.f32.mrf.mxu0
    %v658 = vadd.f32 %v629, %v657
    %v659 = vpop.f32.mrf.mxu0
    %v660 = vadd.f32 %v631, %v659
    %661 = vmatmul.bf16.gmra.mxu0 %v98
    %v662 = vpop.f32.mrf.mxu0
    %v663 = vadd.f32 %v634, %v662
    %v664 = vpop.f32.mrf.mxu0
    %v665 = vadd.f32 %v636, %v664
    %666 = vdwg.mxu0
    %667 = vmatpush.bf16.msra.mxu0 %v396
    %668 = vmatpush.bf16.msra.mxu0 %v392
    %669 = vmatpush.bf16.msra.mxu0 %v388
    %670 = vmatpush.bf16.msra.mxu0 %v384
    %671 = vmatpush.bf16.msra.mxu0 %v380
    %672 = vmatpush.bf16.msra.mxu0 %v376
    %673 = vmatpush.bf16.msra.mxu0 %v372
    %674 = vmatpush.bf16.msra.mxu0 %v368
    %675 = vmatmul.bf16.gmra.mxu0 %v91
    %v676 = vpop.f32.mrf.mxu0
    %v677 = vadd.f32 %v168, %v676
    %v678 = vpop.f32.mrf.mxu0
    %v679 = vadd.f32 %v168, %v678
    %680 = vmatmul.bf16.gmra.mxu0 %v93
    %v681 = vpop.f32.mrf.mxu0
    %v682 = vadd.f32 %v168, %v681
    %v683 = vpop.f32.mrf.mxu0
    %v684 = vadd.f32 %v168, %v683
    %685 = vmatmul.bf16.gmra.mxu0 %v95
    %v686 = vpop.f32.mrf.mxu0
    %v687 = vadd.f32 %v168, %v686
    %v688 = vpop.f32.mrf.mxu0
    %v689 = vadd.f32 %v168, %v688
    %690 = vmatmul.bf16.gmra.mxu0 %v97
    %v691 = vpop.f32.mrf.mxu0
    %v692 = vadd.f32 %v168, %v691
    %v693 = vpop.f32.mrf.mxu0
    %v694 = vadd.f32 %v168, %v693
    %695 = vdwg.mxu0
    %696 = vmatpush.bf16.msra.mxu0 %v428
    %697 = vmatpush.bf16.msra.mxu0 %v424
    %698 = vmatpush.bf16.msra.mxu0 %v420
    %699 = vmatpush.bf16.msra.mxu0 %v416
    %700 = vmatpush.bf16.msra.mxu0 %v412
    %701 = vmatpush.bf16.msra.mxu0 %v408
    %702 = vmatpush.bf16.msra.mxu0 %v404
    %703 = vmatpush.bf16.msra.mxu0 %v400
    %704 = vmatmul.bf16.gmra.mxu0 %v92
    %v705 = vpop.f32.mrf.mxu0
    %v706 = vadd.f32 %v677, %v705
    %v707 = vpop.f32.mrf.mxu0
    %v708 = vadd.f32 %v679, %v707
    %709 = vmatmul.bf16.gmra.mxu0 %v94
    %v710 = vpop.f32.mrf.mxu0
    %v711 = vadd.f32 %v682, %v710
    %v712 = vpop.f32.mrf.mxu0
    %v713 = vadd.f32 %v684, %v712
    %714 = vmatmul.bf16.gmra.mxu0 %v96
    %v715 = vpop.f32.mrf.mxu0
    %v716 = vadd.f32 %v687, %v715
    %v717 = vpop.f32.mrf.mxu0
    %v718 = vadd.f32 %v689, %v717
    %719 = vmatmul.bf16.gmra.mxu0 %v98
    %v720 = vpop.f32.mrf.mxu0
    %v721 = vadd.f32 %v692, %v720
    %v722 = vpop.f32.mrf.mxu0
    %v723 = vadd.f32 %v694, %v722
    %724 = vdwg.mxu0
    %725 = vst [vmem:[#allocation2] sm:$0xff] %v532
    %726 = vst [vmem:[#allocation2 + $0x8] sm:$0xff] %v590
    %727 = vst [vmem:[#allocation2 + $0x10] sm:$0xff] %v648
    %728 = vst [vmem:[#allocation2 + $0x18] sm:$0xff] %v706
    %729 = vst [vmem:[#allocation2 + $0x20] sm:$0xff] %v534
    %730 = vst [vmem:[#allocation2 + $0x28] sm:$0xff] %v592
    %731 = vst [vmem:[#allocation2 + $0x30] sm:$0xff] %v650
    %732 = vst [vmem:[#allocation2 + $0x38] sm:$0xff] %v708
    %733 = vst [vmem:[#allocation2 + $0x40] sm:$0xff] %v537
    %734 = vst [vmem:[#allocation2 + $0x48] sm:$0xff] %v595
    %735 = vst [vmem:[#allocation2 + $0x50] sm:$0xff] %v653
    %736 = vst [vmem:[#allocation2 + $0x58] sm:$0xff] %v711
    %737 = vst [vmem:[#allocation2 + $0x60] sm:$0xff] %v539
    %738 = vst [vmem:[#allocation2 + $0x68] sm:$0xff] %v597
    %739 = vst [vmem:[#allocation2 + $0x70] sm:$0xff] %v655
    %740 = vst [vmem:[#allocation2 + $0x78] sm:$0xff] %v713
    %741 = vst [vmem:[#allocation2 + $0x80] sm:$0xff] %v542
    %742 = vst [vmem:[#allocation2 + $0x88] sm:$0xff] %v600
    %743 = vst [vmem:[#allocation2 + $0x90] sm:$0xff] %v658
    %744 = vst [vmem:[#allocation2 + $0x98] sm:$0xff] %v716
    %745 = vst [vmem:[#allocation2 + $0xa0] sm:$0xff] %v544
    %746 = vst [vmem:[#allocation2 + $0xa8] sm:$0xff] %v602
    %747 = vst [vmem:[#allocation2 + $0xb0] sm:$0xff] %v660
    %748 = vst [vmem:[#allocation2 + $0xb8] sm:$0xff] %v718
    %749 = vst [vmem:[#allocation2 + $0xc0] sm:$0xff] %v547
    %750 = vst [vmem:[#allocation2 + $0xc8] sm:$0xff] %v605
    %751 = vst [vmem:[#allocation2 + $0xd0] sm:$0xff] %v663
    %752 = vst [vmem:[#allocation2 + $0xd8] sm:$0xff] %v721
    %753 = vst [vmem:[#allocation2 + $0xe0] sm:$0xff] %v549
    %754 = vst [vmem:[#allocation2 + $0xe8] sm:$0xff] %v607
    %755 = vst [vmem:[#allocation2 + $0xf0] sm:$0xff] %v665
    %756 = vst [vmem:[#allocation2 + $0xf8] sm:$0xff] %v723
    %v757 = vld [vmem:[%s4] sm:$0xff]
    %v758 = vld [vmem:[%s5] sm:$0xff]
    %s759 = scalar_lea.vmem [#allocation2], 224
    %v760 = vld [vmem:[%s759] sm:$0xff]
    %v761 = vld [vmem:[%s759 + $0x8] sm:$0xff]
    %v762 = vld [vmem:[%s759 + $0x10] sm:$0xff]
    %v763 = vld [vmem:[%s759 + $0x18] sm:$0xff]
    %v764 = vpack.c.bf16 %v757, %v757
    %v765 = vld [vmem:[#allocation5] sm:$0xff]
    %v766 = vld [vmem:[#allocation5 + $0x8] sm:$0xff]
    %v767 = vld [vmem:[#allocation5 + $0x10] sm:$0xff]
    %v768 = vld [vmem:[#allocation5 + $0x18] sm:$0xff]
    %v769 = vld [vmem:[#allocation5 + $0x20] sm:$0xff]
    %v770 = vld [vmem:[#allocation5 + $0x28] sm:$0xff]
    %v771 = vld [vmem:[#allocation5 + $0x30] sm:$0xff]
    %v772 = vld [vmem:[#allocation5 + $0x38] sm:$0xff]
    %v773 = vld [vmem:[#allocation5 + $0x40] sm:$0xff]
    %v774 = vld [vmem:[#allocation5 + $0x48] sm:$0xff]
    %v775 = vld [vmem:[#allocation5 + $0x50] sm:$0xff]
    %v776 = vld [vmem:[#allocation5 + $0x58] sm:$0xff]
    %v777 = vld [vmem:[#allocation5 + $0x60] sm:$0xff]
    %v778 = vld [vmem:[#allocation5 + $0x68] sm:$0xff]
    %v779 = vld [vmem:[#allocation5 + $0x70] sm:$0xff]
    %v780 = vld [vmem:[#allocation5 + $0x78] sm:$0xff]
    %v781 = vld [vmem:[#allocation5 + $0x80] sm:$0xff]
    %v782 = vld [vmem:[#allocation5 + $0x88] sm:$0xff]
    %v783 = vld [vmem:[#allocation5 + $0x90] sm:$0xff]
    %v784 = vld [vmem:[#allocation5 + $0x98] sm:$0xff]
    %v785 = vld [vmem:[#allocation5 + $0xa0] sm:$0xff]
    %v786 = vld [vmem:[#allocation5 + $0xa8] sm:$0xff]
    %v787 = vld [vmem:[#allocation5 + $0xb0] sm:$0xff]
    %v788 = vld [vmem:[#allocation5 + $0xb8] sm:$0xff]
    %v789 = vld [vmem:[#allocation5 + $0xc0] sm:$0xff]
    %v790 = vld [vmem:[#allocation5 + $0xc8] sm:$0xff]
    %v791 = vld [vmem:[#allocation5 + $0xd0] sm:$0xff]
    %v792 = vld [vmem:[#allocation5 + $0xd8] sm:$0xff]
    %v793 = vld [vmem:[#allocation5 + $0xe0] sm:$0xff]
    %v794 = vld [vmem:[#allocation5 + $0xe8] sm:$0xff]
    %v795 = vld [vmem:[#allocation5 + $0xf0] sm:$0xff]
    %v796 = vld [vmem:[#allocation5 + $0xf8] sm:$0xff]
    %v829 = vunpack.c.l.b16 %v765
    %v830 = vunpack.c.h.b16 %v765
    %v831 = vunpack.c.l.b16 %v766
    %v832 = vunpack.c.h.b16 %v766
    %v833 = vunpack.c.l.b16 %v767
    %v834 = vunpack.c.h.b16 %v767
    %v835 = vunpack.c.l.b16 %v768
    %v836 = vunpack.c.h.b16 %v768
    %v837 = vunpack.c.l.b16 %v769
    %v838 = vunpack.c.h.b16 %v769
    %v839 = vunpack.c.l.b16 %v770
    %v840 = vunpack.c.h.b16 %v770
    %v841 = vunpack.c.l.b16 %v771
    %v842 = vunpack.c.h.b16 %v771
    %v843 = vunpack.c.l.b16 %v772
    %v844 = vunpack.c.h.b16 %v772
    %v845 = vunpack.c.l.b16 %v773
    %v846 = vunpack.c.h.b16 %v773
    %v847 = vunpack.c.l.b16 %v774
    %v848 = vunpack.c.h.b16 %v774
    %v849 = vunpack.c.l.b16 %v775
    %v850 = vunpack.c.h.b16 %v775
    %v851 = vunpack.c.l.b16 %v776
    %v852 = vunpack.c.h.b16 %v776
    %v853 = vunpack.c.l.b16 %v777
    %v854 = vunpack.c.h.b16 %v777
    %v855 = vunpack.c.l.b16 %v778
    %v856 = vunpack.c.h.b16 %v778
    %v857 = vunpack.c.l.b16 %v779
    %v858 = vunpack.c.h.b16 %v779
    %v859 = vunpack.c.l.b16 %v780
    %v860 = vunpack.c.h.b16 %v780
    %v861 = vunpack.c.l.b16 %v781
    %v862 = vunpack.c.h.b16 %v781
    %v863 = vunpack.c.l.b16 %v782
    %v864 = vunpack.c.h.b16 %v782
    %v865 = vunpack.c.l.b16 %v783
    %v866 = vunpack.c.h.b16 %v783
    %v867 = vunpack.c.l.b16 %v784
    %v868 = vunpack.c.h.b16 %v784
    %v869 = vunpack.c.l.b16 %v785
    %v870 = vunpack.c.h.b16 %v785
    %v871 = vunpack.c.l.b16 %v786
    %v872 = vunpack.c.h.b16 %v786
    %v873 = vunpack.c.l.b16 %v787
    %v874 = vunpack.c.h.b16 %v787
    %v875 = vunpack.c.l.b16 %v788
    %v876 = vunpack.c.h.b16 %v788
    %v877 = vunpack.c.l.b16 %v789
    %v878 = vunpack.c.h.b16 %v789
    %v879 = vunpack.c.l.b16 %v790
    %v880 = vunpack.c.h.b16 %v790
    %v881 = vunpack.c.l.b16 %v791
    %v882 = vunpack.c.h.b16 %v791
    %v883 = vunpack.c.l.b16 %v792
    %v884 = vunpack.c.h.b16 %v792
    %v885 = vunpack.c.l.b16 %v793
    %v886 = vunpack.c.h.b16 %v793
    %v887 = vunpack.c.l.b16 %v794
    %v888 = vunpack.c.h.b16 %v794
    %v889 = vunpack.c.l.b16 %v795
    %v890 = vunpack.c.h.b16 %v795
    %v891 = vunpack.c.l.b16 %v796
    %v892 = vunpack.c.h.b16 %v796
    %v893 = vpack.c.b16 %v833, %v829
    %v894 = vpack.c.b16 %v834, %v830
    %v895 = vpack.c.b16 %v835, %v831
    %v896 = vpack.c.b16 %v836, %v832
    %v897 = vpack.c.b16 %v841, %v837
    %v898 = vpack.c.b16 %v842, %v838
    %v899 = vpack.c.b16 %v843, %v839
    %v900 = vpack.c.b16 %v844, %v840
    %v901 = vpack.c.b16 %v849, %v845
    %v902 = vpack.c.b16 %v850, %v846
    %v903 = vpack.c.b16 %v851, %v847
    %v904 = vpack.c.b16 %v852, %v848
    %v905 = vpack.c.b16 %v857, %v853
    %v906 = vpack.c.b16 %v858, %v854
    %v907 = vpack.c.b16 %v859, %v855
    %v908 = vpack.c.b16 %v860, %v856
    %v909 = vpack.c.b16 %v865, %v861
    %v910 = vpack.c.b16 %v866, %v862
    %v911 = vpack.c.b16 %v867, %v863
    %v912 = vpack.c.b16 %v868, %v864
    %v913 = vpack.c.b16 %v873, %v869
    %v914 = vpack.c.b16 %v874, %v870
    %v915 = vpack.c.b16 %v875, %v871
    %v916 = vpack.c.b16 %v876, %v872
    %v917 = vpack.c.b16 %v881, %v877
    %v918 = vpack.c.b16 %v882, %v878
    %v919 = vpack.c.b16 %v883, %v879
    %v920 = vpack.c.b16 %v884, %v880
    %v921 = vpack.c.b16 %v889, %v885
    %v922 = vpack.c.b16 %v890, %v886
    %v923 = vpack.c.b16 %v891, %v887
    %v924 = vpack.c.b16 %v892, %v888
    %957 = vmatpush.bf16.msra.mxu0 %v921
    %958 = vmatpush.bf16.msra.mxu0 %v917
    %959 = vmatpush.bf16.msra.mxu0 %v913
    %960 = vmatpush.bf16.msra.mxu0 %v909
    %961 = vmatpush.bf16.msra.mxu0 %v905
    %962 = vmatpush.bf16.msra.mxu0 %v901
    %963 = vmatpush.bf16.msra.mxu0 %v897
    %964 = vmatpush.bf16.msra.mxu0 %v893
    %965 = vmatmul.bf16.gmra.mxu0 %v764
    %v966 = vpop.f32.mrf.mxu0
    %v967 = vadd.f32 0.0, %v966
    %v968 = vpop.f32.mrf.mxu0
    %969 = vdwg.mxu0
    %970 = vmatpush.bf16.msra.mxu0 %v922
    %971 = vmatpush.bf16.msra.mxu0 %v918
    %972 = vmatpush.bf16.msra.mxu0 %v914
    %973 = vmatpush.bf16.msra.mxu0 %v910
    %974 = vmatpush.bf16.msra.mxu0 %v906
    %975 = vmatpush.bf16.msra.mxu0 %v902
    %976 = vmatpush.bf16.msra.mxu0 %v898
    %977 = vmatpush.bf16.msra.mxu0 %v894
    %978 = vmatmul.bf16.gmra.mxu0 %v764
    %v979 = vpop.f32.mrf.mxu0
    %v980 = vadd.f32 0.0, %v979
    %v981 = vpop.f32.mrf.mxu0
    %982 = vdwg.mxu0
    %983 = vmatpush.bf16.msra.mxu0 %v923
    %984 = vmatpush.bf16.msra.mxu0 %v919
    %985 = vmatpush.bf16.msra.mxu0 %v915
    %986 = vmatpush.bf16.msra.mxu0 %v911
    %987 = vmatpush.bf16.msra.mxu0 %v907
    %988 = vmatpush.bf16.msra.mxu0 %v903
    %989 = vmatpush.bf16.msra.mxu0 %v899
    %990 = vmatpush.bf16.msra.mxu0 %v895
    %991 = vmatmul.bf16.gmra.mxu0 %v764
    %v992 = vpop.f32.mrf.mxu0
    %v993 = vadd.f32 0.0, %v992
    %v994 = vpop.f32.mrf.mxu0
    %995 = vdwg.mxu0
    %996 = vmatpush.bf16.msra.mxu0 %v924
    %997 = vmatpush.bf16.msra.mxu0 %v920
    %998 = vmatpush.bf16.msra.mxu0 %v916
    %999 = vmatpush.bf16.msra.mxu0 %v912
    %1000 = vmatpush.bf16.msra.mxu0 %v908
    %1001 = vmatpush.bf16.msra.mxu0 %v904
    %1002 = vmatpush.bf16.msra.mxu0 %v900
    %1003 = vmatpush.bf16.msra.mxu0 %v896
    %1004 = vmatmul.bf16.gmra.mxu0 %v764
    %v1005 = vpop.f32.mrf.mxu0
    %v1006 = vadd.f32 0.0, %v1005
    %v1007 = vpop.f32.mrf.mxu0
    %1008 = vdwg.mxu0
    %v1009 = vadd.f32 %v760, %v967
    %v1010 = vadd.f32 %v761, %v980
    %v1011 = vadd.f32 %v762, %v993
    %v1012 = vadd.f32 %v763, %v1006
    %v1013 = vxor.u32 %v1009, 2147483648
    %v1014 = vmul.f32 %v1013, 1.442695
    %v1015 = vpow.pop %v1014
    %v1016 = vadd.f32 %v1015, 1.0
    %v1017 = vrcp.pop %v1016
    %v1018 = vmul.f32 %v1016, %v1017
    %v1019 = vsub.f32 1.0, %v1018
    %v1020 = vmul.f32 %v1017, %v1019
    %v1021 = vadd.f32 %v1017, %v1020
    %vm1022 = vweird.f32 %v1016
    %vm1023 = vweird.f32 %v1017
    %vm1024 = vmor %vm1022, %vm1023
    %v1025 = vsel %vm1024, %v1017, %v1021
    %v1026 = vand.u32 2147483647, %v1016
    %vm1027 = vcmp.eq.f32.partialorder %v1026, 8.507059e+37
    %v1028 = vand.u32 %v1016, 2147483648
    %v1029 = vor.u32 1.1754944e-38, %v1028
    %v1030 = vsel %vm1027, %v1029, %v1025
    %v1031 = vmul.f32 1.0, %v1030
    %v1032 = vxor.u32 %v1010, 2147483648
    %v1033 = vmul.f32 %v1032, 1.442695
    %v1034 = vpow.pop %v1033
    %v1035 = vadd.f32 %v1034, 1.0
    %v1036 = vrcp.pop %v1035
    %v1037 = vmul.f32 %v1035, %v1036
    %v1038 = vsub.f32 1.0, %v1037
    %v1039 = vmul.f32 %v1036, %v1038
    %v1040 = vadd.f32 %v1036, %v1039
    %vm1041 = vweird.f32 %v1035
    %vm1042 = vweird.f32 %v1036
    %vm1043 = vmor %vm1041, %vm1042
    %v1044 = vsel %vm1043, %v1036, %v1040
    %v1045 = vand.u32 2147483647, %v1035
    %vm1046 = vcmp.eq.f32.partialorder %v1045, 8.507059e+37
    %v1047 = vand.u32 %v1035, 2147483648
    %v1048 = vor.u32 1.1754944e-38, %v1047
    %v1049 = vsel %vm1046, %v1048, %v1044
    %v1050 = vmul.f32 1.0, %v1049
    %v1051 = vtanh.pop %v1011
    %v1052 = vxor.u32 %v1012, 2147483648
    %v1053 = vmul.f32 %v1052, 1.442695
    %v1054 = vpow.pop %v1053
    %v1055 = vadd.f32 %v1054, 1.0
    %v1056 = vrcp.pop %v1055
    %v1057 = vmul.f32 %v1055, %v1056
    %v1058 = vsub.f32 1.0, %v1057
    %v1059 = vmul.f32 %v1056, %v1058
    %v1060 = vadd.f32 %v1056, %v1059
    %vm1061 = vweird.f32 %v1055
    %vm1062 = vweird.f32 %v1056
    %vm1063 = vmor %vm1061, %vm1062
    %v1064 = vsel %vm1063, %v1056, %v1060
    %v1065 = vand.u32 2147483647, %v1055
    %vm1066 = vcmp.eq.f32.partialorder %v1065, 8.507059e+37
    %v1067 = vand.u32 %v1055, 2147483648
    %v1068 = vor.u32 1.1754944e-38, %v1067
    %v1069 = vsel %vm1066, %v1068, %v1064
    %v1070 = vmul.f32 1.0, %v1069
    %v1071 = vmul.f32 %v1050, %v758
    %v1072 = vmul.f32 %v1031, %v1051
    %v1073 = vadd.f32 %v1071, %v1072
    %v1074 = vtanh.pop %v1073
    %v1075 = vmul.f32 %v1070, %v1074
    %s1076 = scalar_lea.vmem [#allocation2], 192
    %v1077 = vld [vmem:[%s1076] sm:$0xff]
    %v1078 = vld [vmem:[%s1076 + $0x8] sm:$0xff]
    %v1079 = vld [vmem:[%s1076 + $0x10] sm:$0xff]
    %v1080 = vld [vmem:[%s1076 + $0x18] sm:$0xff]
    %v1081 = vpack.c.bf16 %v1075, %v1075
    %1082 = vmatpush.bf16.msra.mxu0 %v921
    %1083 = vmatpush.bf16.msra.mxu0 %v917
    %1084 = vmatpush.bf16.msra.mxu0 %v913
    %1085 = vmatpush.bf16.msra.mxu0 %v909
    %1086 = vmatpush.bf16.msra.mxu0 %v905
    %1087 = vmatpush.bf16.msra.mxu0 %v901
    %1088 = vmatpush.bf16.msra.mxu0 %v897
    %1089 = vmatpush.bf16.msra.mxu0 %v893
    %1090 = vmatmul.bf16.gmra.mxu0 %v1081
    %v1091 = vpop.f32.mrf.mxu0
    %v1092 = vadd.f32 0.0, %v1091
    %v1093 = vpop.f32.mrf.mxu0
    %1094 = vdwg.mxu0
    %1095 = vmatpush.bf16.msra.mxu0 %v922
    %1096 = vmatpush.bf16.msra.mxu0 %v918
    %1097 = vmatpush.bf16.msra.mxu0 %v914
    %1098 = vmatpush.bf16.msra.mxu0 %v910
    %1099 = vmatpush.bf16.msra.mxu0 %v906
    %1100 = vmatpush.bf16.msra.mxu0 %v902
    %1101 = vmatpush.bf16.msra.mxu0 %v898
    %1102 = vmatpush.bf16.msra.mxu0 %v894
    %1103 = vmatmul.bf16.gmra.mxu0 %v1081
    %v1104 = vpop.f32.mrf.mxu0
    %v1105 = vadd.f32 0.0, %v1104
    %v1106 = vpop.f32.mrf.mxu0
    %1107 = vdwg.mxu0
    %1108 = vmatpush.bf16.msra.mxu0 %v923
    %1109 = vmatpush.bf16.msra.mxu0 %v919
    %1110 = vmatpush.bf16.msra.mxu0 %v915
    %1111 = vmatpush.bf16.msra.mxu0 %v911
    %1112 = vmatpush.bf16.msra.mxu0 %v907
    %1113 = vmatpush.bf16.msra.mxu0 %v903
    %1114 = vmatpush.bf16.msra.mxu0 %v899
    %1115 = vmatpush.bf16.msra.mxu0 %v895
    %1116 = vmatmul.bf16.gmra.mxu0 %v1081
    %v1117 = vpop.f32.mrf.mxu0
    %v1118 = vadd.f32 0.0, %v1117
    %v1119 = vpop.f32.mrf.mxu0
    %1120 = vdwg.mxu0
    %1121 = vmatpush.bf16.msra.mxu0 %v924
    %1122 = vmatpush.bf16.msra.mxu0 %v920
    %1123 = vmatpush.bf16.msra.mxu0 %v916
    %1124 = vmatpush.bf16.msra.mxu0 %v912
    %1125 = vmatpush.bf16.msra.mxu0 %v908
    %1126 = vmatpush.bf16.msra.mxu0 %v904
    %1127 = vmatpush.bf16.msra.mxu0 %v900
    %1128 = vmatpush.bf16.msra.mxu0 %v896
    %1129 = vmatmul.bf16.gmra.mxu0 %v1081
    %v1130 = vpop.f32.mrf.mxu0
    %v1131 = vadd.f32 0.0, %v1130
    %v1132 = vpop.f32.mrf.mxu0
    %1133 = vdwg.mxu0
    %v1134 = vadd.f32 %v1077, %v1092
    %v1135 = vadd.f32 %v1078, %v1105
    %v1136 = vadd.f32 %v1079, %v1118
    %v1137 = vadd.f32 %v1080, %v1131
    %v1138 = vxor.u32 %v1134, 2147483648
    %v1139 = vmul.f32 %v1138, 1.442695
    %v1140 = vpow.pop %v1139
    %v1141 = vadd.f32 %v1140, 1.0
    %v1142 = vrcp.pop %v1141
    %v1143 = vmul.f32 %v1141, %v1142
    %v1144 = vsub.f32 1.0, %v1143
    %v1145 = vmul.f32 %v1142, %v1144
    %v1146 = vadd.f32 %v1142, %v1145
    %vm1147 = vweird.f32 %v1141
    %vm1148 = vweird.f32 %v1142
    %vm1149 = vmor %vm1147, %vm1148
    %v1150 = vsel %vm1149, %v1142, %v1146
    %v1151 = vand.u32 2147483647, %v1141
    %vm1152 = vcmp.eq.f32.partialorder %v1151, 8.507059e+37
    %v1153 = vand.u32 %v1141, 2147483648
    %v1154 = vor.u32 1.1754944e-38, %v1153
    %v1155 = vsel %vm1152, %v1154, %v1150
    %v1156 = vmul.f32 1.0, %v1155
    %v1157 = vxor.u32 %v1135, 2147483648
    %v1158 = vmul.f32 %v1157, 1.442695
    %v1159 = vpow.pop %v1158
    %v1160 = vadd.f32 %v1159, 1.0
    %v1161 = vrcp.pop %v1160
    %v1162 = vmul.f32 %v1160, %v1161
    %v1163 = vsub.f32 1.0, %v1162
    %v1164 = vmul.f32 %v1161, %v1163
    %v1165 = vadd.f32 %v1161, %v1164
    %vm1166 = vweird.f32 %v1160
    %vm1167 = vweird.f32 %v1161
    %vm1168 = vmor %vm1166, %vm1167
    %v1169 = vsel %vm1168, %v1161, %v1165
    %v1170 = vand.u32 2147483647, %v1160
    %vm1171 = vcmp.eq.f32.partialorder %v1170, 8.507059e+37
    %v1172 = vand.u32 %v1160, 2147483648
    %v1173 = vor.u32 1.1754944e-38, %v1172
    %v1174 = vsel %vm1171, %v1173, %v1169
    %v1175 = vmul.f32 1.0, %v1174
    %v1176 = vtanh.pop %v1136
    %v1177 = vxor.u32 %v1137, 2147483648
    %v1178 = vmul.f32 %v1177, 1.442695
    %v1179 = vpow.pop %v1178
    %v1180 = vadd.f32 %v1179, 1.0
    %v1181 = vrcp.pop %v1180
    %v1182 = vmul.f32 %v1180, %v1181
    %v1183 = vsub.f32 1.0, %v1182
    %v1184 = vmul.f32 %v1181, %v1183
    %v1185 = vadd.f32 %v1181, %v1184
    %vm1186 = vweird.f32 %v1180
    %vm1187 = vweird.f32 %v1181
    %vm1188 = vmor %vm1186, %vm1187
    %v1189 = vsel %vm1188, %v1181, %v1185
    %v1190 = vand.u32 2147483647, %v1180
    %vm1191 = vcmp.eq.f32.partialorder %v1190, 8.507059e+37
    %v1192 = vand.u32 %v1180, 2147483648
    %v1193 = vor.u32 1.1754944e-38, %v1192
    %v1194 = vsel %vm1191, %v1193, %v1189
    %v1195 = vmul.f32 1.0, %v1194
    %v1196 = vmul.f32 %v1175, %v1073
    %v1197 = vmul.f32 %v1156, %v1176
    %v1198 = vadd.f32 %v1196, %v1197
    %v1199 = vtanh.pop %v1198
    %v1200 = vmul.f32 %v1195, %v1199
    %s1201 = scalar_lea.vmem [#allocation2], 160
    %v1202 = vld [vmem:[%s1201] sm:$0xff]
    %v1203 = vld [vmem:[%s1201 + $0x8] sm:$0xff]
    %v1204 = vld [vmem:[%s1201 + $0x10] sm:$0xff]
    %v1205 = vld [vmem:[%s1201 + $0x18] sm:$0xff]
    %v1206 = vpack.c.bf16 %v1200, %v1200
    %1207 = vmatpush.bf16.msra.mxu0 %v921
    %1208 = vmatpush.bf16.msra.mxu0 %v917
    %1209 = vmatpush.bf16.msra.mxu0 %v913
    %1210 = vmatpush.bf16.msra.mxu0 %v909
    %1211 = vmatpush.bf16.msra.mxu0 %v905
    %1212 = vmatpush.bf16.msra.mxu0 %v901
    %1213 = vmatpush.bf16.msra.mxu0 %v897
    %1214 = vmatpush.bf16.msra.mxu0 %v893
    %1215 = vmatmul.bf16.gmra.mxu0 %v1206
    %v1216 = vpop.f32.mrf.mxu0
    %v1217 = vadd.f32 0.0, %v1216
    %v1218 = vpop.f32.mrf.mxu0
    %1219 = vdwg.mxu0
    %1220 = vmatpush.bf16.msra.mxu0 %v922
    %1221 = vmatpush.bf16.msra.mxu0 %v918
    %1222 = vmatpush.bf16.msra.mxu0 %v914
    %1223 = vmatpush.bf16.msra.mxu0 %v910
    %1224 = vmatpush.bf16.msra.mxu0 %v906
    %1225 = vmatpush.bf16.msra.mxu0 %v902
    %1226 = vmatpush.bf16.msra.mxu0 %v898
    %1227 = vmatpush.bf16.msra.mxu0 %v894
    %1228 = vmatmul.bf16.gmra.mxu0 %v1206
    %v1229 = vpop.f32.mrf.mxu0
    %v1230 = vadd.f32 0.0, %v1229
    %v1231 = vpop.f32.mrf.mxu0
    %1232 = vdwg.mxu0
    %1233 = vmatpush.bf16.msra.mxu0 %v923
    %1234 = vmatpush.bf16.msra.mxu0 %v919
    %1235 = vmatpush.bf16.msra.mxu0 %v915
    %1236 = vmatpush.bf16.msra.mxu0 %v911
    %1237 = vmatpush.bf16.msra.mxu0 %v907
    %1238 = vmatpush.bf16.msra.mxu0 %v903
    %1239 = vmatpush.bf16.msra.mxu0 %v899
    %1240 = vmatpush.bf16.msra.mxu0 %v895
    %1241 = vmatmul.bf16.gmra.mxu0 %v1206
    %v1242 = vpop.f32.mrf.mxu0
    %v1243 = vadd.f32 0.0, %v1242
    %v1244 = vpop.f32.mrf.mxu0
    %1245 = vdwg.mxu0
    %1246 = vmatpush.bf16.msra.mxu0 %v924
    %1247 = vmatpush.bf16.msra.mxu0 %v920
    %1248 = vmatpush.bf16.msra.mxu0 %v916
    %1249 = vmatpush.bf16.msra.mxu0 %v912
    %1250 = vmatpush.bf16.msra.mxu0 %v908
    %1251 = vmatpush.bf16.msra.mxu0 %v904
    %1252 = vmatpush.bf16.msra.mxu0 %v900
    %1253 = vmatpush.bf16.msra.mxu0 %v896
    %1254 = vmatmul.bf16.gmra.mxu0 %v1206
    %v1255 = vpop.f32.mrf.mxu0
    %v1256 = vadd.f32 0.0, %v1255
    %v1257 = vpop.f32.mrf.mxu0
    %1258 = vdwg.mxu0
    %v1259 = vadd.f32 %v1202, %v1217
    %v1260 = vadd.f32 %v1203, %v1230
    %v1261 = vadd.f32 %v1204, %v1243
    %v1262 = vadd.f32 %v1205, %v1256
    %v1263 = vxor.u32 %v1259, 2147483648
    %v1264 = vmul.f32 %v1263, 1.442695
    %v1265 = vpow.pop %v1264
    %v1266 = vadd.f32 %v1265, 1.0
    %v1267 = vrcp.pop %v1266
    %v1268 = vmul.f32 %v1266, %v1267
    %v1269 = vsub.f32 1.0, %v1268
    %v1270 = vmul.f32 %v1267, %v1269
    %v1271 = vadd.f32 %v1267, %v1270
    %vm1272 = vweird.f32 %v1266
    %vm1273 = vweird.f32 %v1267
    %vm1274 = vmor %vm1272, %vm1273
    %v1275 = vsel %vm1274, %v1267, %v1271
    %v1276 = vand.u32 2147483647, %v1266
    %vm1277 = vcmp.eq.f32.partialorder %v1276, 8.507059e+37
    %v1278 = vand.u32 %v1266, 2147483648
    %v1279 = vor.u32 1.1754944e-38, %v1278
    %v1280 = vsel %vm1277, %v1279, %v1275
    %v1281 = vmul.f32 1.0, %v1280
    %v1282 = vxor.u32 %v1260, 2147483648
    %v1283 = vmul.f32 %v1282, 1.442695
    %v1284 = vpow.pop %v1283
    %v1285 = vadd.f32 %v1284, 1.0
    %v1286 = vrcp.pop %v1285
    %v1287 = vmul.f32 %v1285, %v1286
    %v1288 = vsub.f32 1.0, %v1287
    %v1289 = vmul.f32 %v1286, %v1288
    %v1290 = vadd.f32 %v1286, %v1289
    %vm1291 = vweird.f32 %v1285
    %vm1292 = vweird.f32 %v1286
    %vm1293 = vmor %vm1291, %vm1292
    %v1294 = vsel %vm1293, %v1286, %v1290
    %v1295 = vand.u32 2147483647, %v1285
    %vm1296 = vcmp.eq.f32.partialorder %v1295, 8.507059e+37
    %v1297 = vand.u32 %v1285, 2147483648
    %v1298 = vor.u32 1.1754944e-38, %v1297
    %v1299 = vsel %vm1296, %v1298, %v1294
    %v1300 = vmul.f32 1.0, %v1299
    %v1301 = vtanh.pop %v1261
    %v1302 = vxor.u32 %v1262, 2147483648
    %v1303 = vmul.f32 %v1302, 1.442695
    %v1304 = vpow.pop %v1303
    %v1305 = vadd.f32 %v1304, 1.0
    %v1306 = vrcp.pop %v1305
    %v1307 = vmul.f32 %v1305, %v1306
    %v1308 = vsub.f32 1.0, %v1307
    %v1309 = vmul.f32 %v1306, %v1308
    %v1310 = vadd.f32 %v1306, %v1309
    %vm1311 = vweird.f32 %v1305
    %vm1312 = vweird.f32 %v1306
    %vm1313 = vmor %vm1311, %vm1312
    %v1314 = vsel %vm1313, %v1306, %v1310
    %v1315 = vand.u32 2147483647, %v1305
    %vm1316 = vcmp.eq.f32.partialorder %v1315, 8.507059e+37
    %v1317 = vand.u32 %v1305, 2147483648
    %v1318 = vor.u32 1.1754944e-38, %v1317
    %v1319 = vsel %vm1316, %v1318, %v1314
    %v1320 = vmul.f32 1.0, %v1319
    %v1321 = vmul.f32 %v1300, %v1198
    %v1322 = vmul.f32 %v1281, %v1301
    %v1323 = vadd.f32 %v1321, %v1322
    %v1324 = vtanh.pop %v1323
    %v1325 = vmul.f32 %v1320, %v1324
    %s1326 = scalar_lea.vmem [#allocation2], 128
    %v1327 = vld [vmem:[%s1326] sm:$0xff]
    %v1328 = vld [vmem:[%s1326 + $0x8] sm:$0xff]
    %v1329 = vld [vmem:[%s1326 + $0x10] sm:$0xff]
    %v1330 = vld [vmem:[%s1326 + $0x18] sm:$0xff]
    %v1331 = vpack.c.bf16 %v1325, %v1325
    %1332 = vmatpush.bf16.msra.mxu0 %v921
    %1333 = vmatpush.bf16.msra.mxu0 %v917
    %1334 = vmatpush.bf16.msra.mxu0 %v913
    %1335 = vmatpush.bf16.msra.mxu0 %v909
    %1336 = vmatpush.bf16.msra.mxu0 %v905
    %1337 = vmatpush.bf16.msra.mxu0 %v901
    %1338 = vmatpush.bf16.msra.mxu0 %v897
    %1339 = vmatpush.bf16.msra.mxu0 %v893
    %1340 = vmatmul.bf16.gmra.mxu0 %v1331
    %v1341 = vpop.f32.mrf.mxu0
    %v1342 = vadd.f32 0.0, %v1341
    %v1343 = vpop.f32.mrf.mxu0
    %1344 = vdwg.mxu0
    %1345 = vmatpush.bf16.msra.mxu0 %v922
    %1346 = vmatpush.bf16.msra.mxu0 %v918
    %1347 = vmatpush.bf16.msra.mxu0 %v914
    %1348 = vmatpush.bf16.msra.mxu0 %v910
    %1349 = vmatpush.bf16.msra.mxu0 %v906
    %1350 = vmatpush.bf16.msra.mxu0 %v902
    %1351 = vmatpush.bf16.msra.mxu0 %v898
    %1352 = vmatpush.bf16.msra.mxu0 %v894
    %1353 = vmatmul.bf16.gmra.mxu0 %v1331
    %v1354 = vpop.f32.mrf.mxu0
    %v1355 = vadd.f32 0.0, %v1354
    %v1356 = vpop.f32.mrf.mxu0
    %1357 = vdwg.mxu0
    %1358 = vmatpush.bf16.msra.mxu0 %v923
    %1359 = vmatpush.bf16.msra.mxu0 %v919
    %1360 = vmatpush.bf16.msra.mxu0 %v915
    %1361 = vmatpush.bf16.msra.mxu0 %v911
    %1362 = vmatpush.bf16.msra.mxu0 %v907
    %1363 = vmatpush.bf16.msra.mxu0 %v903
    %1364 = vmatpush.bf16.msra.mxu0 %v899
    %1365 = vmatpush.bf16.msra.mxu0 %v895
    %1366 = vmatmul.bf16.gmra.mxu0 %v1331
    %v1367 = vpop.f32.mrf.mxu0
    %v1368 = vadd.f32 0.0, %v1367
    %v1369 = vpop.f32.mrf.mxu0
    %1370 = vdwg.mxu0
    %1371 = vmatpush.bf16.msra.mxu0 %v924
    %1372 = vmatpush.bf16.msra.mxu0 %v920
    %1373 = vmatpush.bf16.msra.mxu0 %v916
    %1374 = vmatpush.bf16.msra.mxu0 %v912
    %1375 = vmatpush.bf16.msra.mxu0 %v908
    %1376 = vmatpush.bf16.msra.mxu0 %v904
    %1377 = vmatpush.bf16.msra.mxu0 %v900
    %1378 = vmatpush.bf16.msra.mxu0 %v896
    %1379 = vmatmul.bf16.gmra.mxu0 %v1331
    %v1380 = vpop.f32.mrf.mxu0
    %v1381 = vadd.f32 0.0, %v1380
    %v1382 = vpop.f32.mrf.mxu0
    %1383 = vdwg.mxu0
    %v1384 = vadd.f32 %v1327, %v1342
    %v1385 = vadd.f32 %v1328, %v1355
    %v1386 = vadd.f32 %v1329, %v1368
    %v1387 = vadd.f32 %v1330, %v1381
    %v1388 = vxor.u32 %v1384, 2147483648
    %v1389 = vmul.f32 %v1388, 1.442695
    %v1390 = vpow.pop %v1389
    %v1391 = vadd.f32 %v1390, 1.0
    %v1392 = vrcp.pop %v1391
    %v1393 = vmul.f32 %v1391, %v1392
    %v1394 = vsub.f32 1.0, %v1393
    %v1395 = vmul.f32 %v1392, %v1394
    %v1396 = vadd.f32 %v1392, %v1395
    %vm1397 = vweird.f32 %v1391
    %vm1398 = vweird.f32 %v1392
    %vm1399 = vmor %vm1397, %vm1398
    %v1400 = vsel %vm1399, %v1392, %v1396
    %v1401 = vand.u32 2147483647, %v1391
    %vm1402 = vcmp.eq.f32.partialorder %v1401, 8.507059e+37
    %v1403 = vand.u32 %v1391, 2147483648
    %v1404 = vor.u32 1.1754944e-38, %v1403
    %v1405 = vsel %vm1402, %v1404, %v1400
    %v1406 = vmul.f32 1.0, %v1405
    %v1407 = vxor.u32 %v1385, 2147483648
    %v1408 = vmul.f32 %v1407, 1.442695
    %v1409 = vpow.pop %v1408
    %v1410 = vadd.f32 %v1409, 1.0
    %v1411 = vrcp.pop %v1410
    %v1412 = vmul.f32 %v1410, %v1411
    %v1413 = vsub.f32 1.0, %v1412
    %v1414 = vmul.f32 %v1411, %v1413
    %v1415 = vadd.f32 %v1411, %v1414
    %vm1416 = vweird.f32 %v1410
    %vm1417 = vweird.f32 %v1411
    %vm1418 = vmor %vm1416, %vm1417
    %v1419 = vsel %vm1418, %v1411, %v1415
    %v1420 = vand.u32 2147483647, %v1410
    %vm1421 = vcmp.eq.f32.partialorder %v1420, 8.507059e+37
    %v1422 = vand.u32 %v1410, 2147483648
    %v1423 = vor.u32 1.1754944e-38, %v1422
    %v1424 = vsel %vm1421, %v1423, %v1419
    %v1425 = vmul.f32 1.0, %v1424
    %v1426 = vtanh.pop %v1386
    %v1427 = vxor.u32 %v1387, 2147483648
    %v1428 = vmul.f32 %v1427, 1.442695
    %v1429 = vpow.pop %v1428
    %v1430 = vadd.f32 %v1429, 1.0
    %v1431 = vrcp.pop %v1430
    %v1432 = vmul.f32 %v1430, %v1431
    %v1433 = vsub.f32 1.0, %v1432
    %v1434 = vmul.f32 %v1431, %v1433
    %v1435 = vadd.f32 %v1431, %v1434
    %vm1436 = vweird.f32 %v1430
    %vm1437 = vweird.f32 %v1431
    %vm1438 = vmor %vm1436, %vm1437
    %v1439 = vsel %vm1438, %v1431, %v1435
    %v1440 = vand.u32 2147483647, %v1430
    %vm1441 = vcmp.eq.f32.partialorder %v1440, 8.507059e+37
    %v1442 = vand.u32 %v1430, 2147483648
    %v1443 = vor.u32 1.1754944e-38, %v1442
    %v1444 = vsel %vm1441, %v1443, %v1439
    %v1445 = vmul.f32 1.0, %v1444
    %v1446 = vmul.f32 %v1425, %v1323
    %v1447 = vmul.f32 %v1406, %v1426
    %v1448 = vadd.f32 %v1446, %v1447
    %v1449 = vtanh.pop %v1448
    %v1450 = vmul.f32 %v1445, %v1449
    %s1451 = scalar_lea.vmem [#allocation2], 96
    %v1452 = vld [vmem:[%s1451] sm:$0xff]
    %v1453 = vld [vmem:[%s1451 + $0x8] sm:$0xff]
    %v1454 = vld [vmem:[%s1451 + $0x10] sm:$0xff]
    %v1455 = vld [vmem:[%s1451 + $0x18] sm:$0xff]
    %v1456 = vpack.c.bf16 %v1450, %v1450
    %1457 = vmatpush.bf16.msra.mxu0 %v921
    %1458 = vmatpush.bf16.msra.mxu0 %v917
    %1459 = vmatpush.bf16.msra.mxu0 %v913
    %1460 = vmatpush.bf16.msra.mxu0 %v909
    %1461 = vmatpush.bf16.msra.mxu0 %v905
    %1462 = vmatpush.bf16.msra.mxu0 %v901
    %1463 = vmatpush.bf16.msra.mxu0 %v897
    %1464 = vmatpush.bf16.msra.mxu0 %v893
    %1465 = vmatmul.bf16.gmra.mxu0 %v1456
    %v1466 = vpop.f32.mrf.mxu0
    %v1467 = vadd.f32 0.0, %v1466
    %v1468 = vpop.f32.mrf.mxu0
    %1469 = vdwg.mxu0
    %1470 = vmatpush.bf16.msra.mxu0 %v922
    %1471 = vmatpush.bf16.msra.mxu0 %v918
    %1472 = vmatpush.bf16.msra.mxu0 %v914
    %1473 = vmatpush.bf16.msra.mxu0 %v910
    %1474 = vmatpush.bf16.msra.mxu0 %v906
    %1475 = vmatpush.bf16.msra.mxu0 %v902
    %1476 = vmatpush.bf16.msra.mxu0 %v898
    %1477 = vmatpush.bf16.msra.mxu0 %v894
    %1478 = vmatmul.bf16.gmra.mxu0 %v1456
    %v1479 = vpop.f32.mrf.mxu0
    %v1480 = vadd.f32 0.0, %v1479
    %v1481 = vpop.f32.mrf.mxu0
    %1482 = vdwg.mxu0
    %1483 = vmatpush.bf16.msra.mxu0 %v923
    %1484 = vmatpush.bf16.msra.mxu0 %v919
    %1485 = vmatpush.bf16.msra.mxu0 %v915
    %1486 = vmatpush.bf16.msra.mxu0 %v911
    %1487 = vmatpush.bf16.msra.mxu0 %v907
    %1488 = vmatpush.bf16.msra.mxu0 %v903
    %1489 = vmatpush.bf16.msra.mxu0 %v899
    %1490 = vmatpush.bf16.msra.mxu0 %v895
    %1491 = vmatmul.bf16.gmra.mxu0 %v1456
    %v1492 = vpop.f32.mrf.mxu0
    %v1493 = vadd.f32 0.0, %v1492
    %v1494 = vpop.f32.mrf.mxu0
    %1495 = vdwg.mxu0
    %1496 = vmatpush.bf16.msra.mxu0 %v924
    %1497 = vmatpush.bf16.msra.mxu0 %v920
    %1498 = vmatpush.bf16.msra.mxu0 %v916
    %1499 = vmatpush.bf16.msra.mxu0 %v912
    %1500 = vmatpush.bf16.msra.mxu0 %v908
    %1501 = vmatpush.bf16.msra.mxu0 %v904
    %1502 = vmatpush.bf16.msra.mxu0 %v900
    %1503 = vmatpush.bf16.msra.mxu0 %v896
    %1504 = vmatmul.bf16.gmra.mxu0 %v1456
    %v1505 = vpop.f32.mrf.mxu0
    %v1506 = vadd.f32 0.0, %v1505
    %v1507 = vpop.f32.mrf.mxu0
    %1508 = vdwg.mxu0
    %v1509 = vadd.f32 %v1452, %v1467
    %v1510 = vadd.f32 %v1453, %v1480
    %v1511 = vadd.f32 %v1454, %v1493
    %v1512 = vadd.f32 %v1455, %v1506
    %v1513 = vxor.u32 %v1509, 2147483648
    %v1514 = vmul.f32 %v1513, 1.442695
    %v1515 = vpow.pop %v1514
    %v1516 = vadd.f32 %v1515, 1.0
    %v1517 = vrcp.pop %v1516
    %v1518 = vmul.f32 %v1516, %v1517
    %v1519 = vsub.f32 1.0, %v1518
    %v1520 = vmul.f32 %v1517, %v1519
    %v1521 = vadd.f32 %v1517, %v1520
    %vm1522 = vweird.f32 %v1516
    %vm1523 = vweird.f32 %v1517
    %vm1524 = vmor %vm1522, %vm1523
    %v1525 = vsel %vm1524, %v1517, %v1521
    %v1526 = vand.u32 2147483647, %v1516
    %vm1527 = vcmp.eq.f32.partialorder %v1526, 8.507059e+37
    %v1528 = vand.u32 %v1516, 2147483648
    %v1529 = vor.u32 1.1754944e-38, %v1528
    %v1530 = vsel %vm1527, %v1529, %v1525
    %v1531 = vmul.f32 1.0, %v1530
    %v1532 = vxor.u32 %v1510, 2147483648
    %v1533 = vmul.f32 %v1532, 1.442695
    %v1534 = vpow.pop %v1533
    %v1535 = vadd.f32 %v1534, 1.0
    %v1536 = vrcp.pop %v1535
    %v1537 = vmul.f32 %v1535, %v1536
    %v1538 = vsub.f32 1.0, %v1537
    %v1539 = vmul.f32 %v1536, %v1538
    %v1540 = vadd.f32 %v1536, %v1539
    %vm1541 = vweird.f32 %v1535
    %vm1542 = vweird.f32 %v1536
    %vm1543 = vmor %vm1541, %vm1542
    %v1544 = vsel %vm1543, %v1536, %v1540
    %v1545 = vand.u32 2147483647, %v1535
    %vm1546 = vcmp.eq.f32.partialorder %v1545, 8.507059e+37
    %v1547 = vand.u32 %v1535, 2147483648
    %v1548 = vor.u32 1.1754944e-38, %v1547
    %v1549 = vsel %vm1546, %v1548, %v1544
    %v1550 = vmul.f32 1.0, %v1549
    %v1551 = vtanh.pop %v1511
    %v1552 = vxor.u32 %v1512, 2147483648
    %v1553 = vmul.f32 %v1552, 1.442695
    %v1554 = vpow.pop %v1553
    %v1555 = vadd.f32 %v1554, 1.0
    %v1556 = vrcp.pop %v1555
    %v1557 = vmul.f32 %v1555, %v1556
    %v1558 = vsub.f32 1.0, %v1557
    %v1559 = vmul.f32 %v1556, %v1558
    %v1560 = vadd.f32 %v1556, %v1559
    %vm1561 = vweird.f32 %v1555
    %vm1562 = vweird.f32 %v1556
    %vm1563 = vmor %vm1561, %vm1562
    %v1564 = vsel %vm1563, %v1556, %v1560
    %v1565 = vand.u32 2147483647, %v1555
    %vm1566 = vcmp.eq.f32.partialorder %v1565, 8.507059e+37
    %v1567 = vand.u32 %v1555, 2147483648
    %v1568 = vor.u32 1.1754944e-38, %v1567
    %v1569 = vsel %vm1566, %v1568, %v1564
    %v1570 = vmul.f32 1.0, %v1569
    %v1571 = vmul.f32 %v1550, %v1448
    %v1572 = vmul.f32 %v1531, %v1551
    %v1573 = vadd.f32 %v1571, %v1572
    %v1574 = vtanh.pop %v1573
    %v1575 = vmul.f32 %v1570, %v1574
    %s1576 = scalar_lea.vmem [#allocation2], 64
    %v1577 = vld [vmem:[%s1576] sm:$0xff]
    %v1578 = vld [vmem:[%s1576 + $0x8] sm:$0xff]
    %v1579 = vld [vmem:[%s1576 + $0x10] sm:$0xff]
    %v1580 = vld [vmem:[%s1576 + $0x18] sm:$0xff]
    %v1581 = vpack.c.bf16 %v1575, %v1575
    %1582 = vmatpush.bf16.msra.mxu0 %v921
    %1583 = vmatpush.bf16.msra.mxu0 %v917
    %1584 = vmatpush.bf16.msra.mxu0 %v913
    %1585 = vmatpush.bf16.msra.mxu0 %v909
    %1586 = vmatpush.bf16.msra.mxu0 %v905
    %1587 = vmatpush.bf16.msra.mxu0 %v901
    %1588 = vmatpush.bf16.msra.mxu0 %v897
    %1589 = vmatpush.bf16.msra.mxu0 %v893
    %1590 = vmatmul.bf16.gmra.mxu0 %v1581
    %v1591 = vpop.f32.mrf.mxu0
    %v1592 = vadd.f32 0.0, %v1591
    %v1593 = vpop.f32.mrf.mxu0
    %1594 = vdwg.mxu0
    %1595 = vmatpush.bf16.msra.mxu0 %v922
    %1596 = vmatpush.bf16.msra.mxu0 %v918
    %1597 = vmatpush.bf16.msra.mxu0 %v914
    %1598 = vmatpush.bf16.msra.mxu0 %v910
    %1599 = vmatpush.bf16.msra.mxu0 %v906
    %1600 = vmatpush.bf16.msra.mxu0 %v902
    %1601 = vmatpush.bf16.msra.mxu0 %v898
    %1602 = vmatpush.bf16.msra.mxu0 %v894
    %1603 = vmatmul.bf16.gmra.mxu0 %v1581
    %v1604 = vpop.f32.mrf.mxu0
    %v1605 = vadd.f32 0.0, %v1604
    %v1606 = vpop.f32.mrf.mxu0
    %1607 = vdwg.mxu0
    %1608 = vmatpush.bf16.msra.mxu0 %v923
    %1609 = vmatpush.bf16.msra.mxu0 %v919
    %1610 = vmatpush.bf16.msra.mxu0 %v915
    %1611 = vmatpush.bf16.msra.mxu0 %v911
    %1612 = vmatpush.bf16.msra.mxu0 %v907
    %1613 = vmatpush.bf16.msra.mxu0 %v903
    %1614 = vmatpush.bf16.msra.mxu0 %v899
    %1615 = vmatpush.bf16.msra.mxu0 %v895
    %1616 = vmatmul.bf16.gmra.mxu0 %v1581
    %v1617 = vpop.f32.mrf.mxu0
    %v1618 = vadd.f32 0.0, %v1617
    %v1619 = vpop.f32.mrf.mxu0
    %1620 = vdwg.mxu0
    %1621 = vmatpush.bf16.msra.mxu0 %v924
    %1622 = vmatpush.bf16.msra.mxu0 %v920
    %1623 = vmatpush.bf16.msra.mxu0 %v916
    %1624 = vmatpush.bf16.msra.mxu0 %v912
    %1625 = vmatpush.bf16.msra.mxu0 %v908
    %1626 = vmatpush.bf16.msra.mxu0 %v904
    %1627 = vmatpush.bf16.msra.mxu0 %v900
    %1628 = vmatpush.bf16.msra.mxu0 %v896
    %1629 = vmatmul.bf16.gmra.mxu0 %v1581
    %v1630 = vpop.f32.mrf.mxu0
    %v1631 = vadd.f32 0.0, %v1630
    %v1632 = vpop.f32.mrf.mxu0
    %1633 = vdwg.mxu0
    %v1634 = vadd.f32 %v1577, %v1592
    %v1635 = vadd.f32 %v1578, %v1605
    %v1636 = vadd.f32 %v1579, %v1618
    %v1637 = vadd.f32 %v1580, %v1631
    %v1638 = vxor.u32 %v1634, 2147483648
    %v1639 = vmul.f32 %v1638, 1.442695
    %v1640 = vpow.pop %v1639
    %v1641 = vadd.f32 %v1640, 1.0
    %v1642 = vrcp.pop %v1641
    %v1643 = vmul.f32 %v1641, %v1642
    %v1644 = vsub.f32 1.0, %v1643
    %v1645 = vmul.f32 %v1642, %v1644
    %v1646 = vadd.f32 %v1642, %v1645
    %vm1647 = vweird.f32 %v1641
    %vm1648 = vweird.f32 %v1642
    %vm1649 = vmor %vm1647, %vm1648
    %v1650 = vsel %vm1649, %v1642, %v1646
    %v1651 = vand.u32 2147483647, %v1641
    %vm1652 = vcmp.eq.f32.partialorder %v1651, 8.507059e+37
    %v1653 = vand.u32 %v1641, 2147483648
    %v1654 = vor.u32 1.1754944e-38, %v1653
    %v1655 = vsel %vm1652, %v1654, %v1650
    %v1656 = vmul.f32 1.0, %v1655
    %v1657 = vxor.u32 %v1635, 2147483648
    %v1658 = vmul.f32 %v1657, 1.442695
    %v1659 = vpow.pop %v1658
    %v1660 = vadd.f32 %v1659, 1.0
    %v1661 = vrcp.pop %v1660
    %v1662 = vmul.f32 %v1660, %v1661
    %v1663 = vsub.f32 1.0, %v1662
    %v1664 = vmul.f32 %v1661, %v1663
    %v1665 = vadd.f32 %v1661, %v1664
    %vm1666 = vweird.f32 %v1660
    %vm1667 = vweird.f32 %v1661
    %vm1668 = vmor %vm1666, %vm1667
    %v1669 = vsel %vm1668, %v1661, %v1665
    %v1670 = vand.u32 2147483647, %v1660
    %vm1671 = vcmp.eq.f32.partialorder %v1670, 8.507059e+37
    %v1672 = vand.u32 %v1660, 2147483648
    %v1673 = vor.u32 1.1754944e-38, %v1672
    %v1674 = vsel %vm1671, %v1673, %v1669
    %v1675 = vmul.f32 1.0, %v1674
    %v1676 = vtanh.pop %v1636
    %v1677 = vxor.u32 %v1637, 2147483648
    %v1678 = vmul.f32 %v1677, 1.442695
    %v1679 = vpow.pop %v1678
    %v1680 = vadd.f32 %v1679, 1.0
    %v1681 = vrcp.pop %v1680
    %v1682 = vmul.f32 %v1680, %v1681
    %v1683 = vsub.f32 1.0, %v1682
    %v1684 = vmul.f32 %v1681, %v1683
    %v1685 = vadd.f32 %v1681, %v1684
    %vm1686 = vweird.f32 %v1680
    %vm1687 = vweird.f32 %v1681
    %vm1688 = vmor %vm1686, %vm1687
    %v1689 = vsel %vm1688, %v1681, %v1685
    %v1690 = vand.u32 2147483647, %v1680
    %vm1691 = vcmp.eq.f32.partialorder %v1690, 8.507059e+37
    %v1692 = vand.u32 %v1680, 2147483648
    %v1693 = vor.u32 1.1754944e-38, %v1692
    %v1694 = vsel %vm1691, %v1693, %v1689
    %v1695 = vmul.f32 1.0, %v1694
    %v1696 = vmul.f32 %v1675, %v1573
    %v1697 = vmul.f32 %v1656, %v1676
    %v1698 = vadd.f32 %v1696, %v1697
    %v1699 = vtanh.pop %v1698
    %v1700 = vmul.f32 %v1695, %v1699
    %s1701 = scalar_lea.vmem [#allocation2], 32
    %v1702 = vld [vmem:[%s1701] sm:$0xff]
    %v1703 = vld [vmem:[%s1701 + $0x8] sm:$0xff]
    %v1704 = vld [vmem:[%s1701 + $0x10] sm:$0xff]
    %v1705 = vld [vmem:[%s1701 + $0x18] sm:$0xff]
    %v1706 = vpack.c.bf16 %v1700, %v1700
    %1707 = vmatpush.bf16.msra.mxu0 %v921
    %1708 = vmatpush.bf16.msra.mxu0 %v917
    %1709 = vmatpush.bf16.msra.mxu0 %v913
    %1710 = vmatpush.bf16.msra.mxu0 %v909
    %1711 = vmatpush.bf16.msra.mxu0 %v905
    %1712 = vmatpush.bf16.msra.mxu0 %v901
    %1713 = vmatpush.bf16.msra.mxu0 %v897
    %1714 = vmatpush.bf16.msra.mxu0 %v893
    %1715 = vmatmul.bf16.gmra.mxu0 %v1706
    %v1716 = vpop.f32.mrf.mxu0
    %v1717 = vadd.f32 0.0, %v1716
    %v1718 = vpop.f32.mrf.mxu0
    %1719 = vdwg.mxu0
    %1720 = vmatpush.bf16.msra.mxu0 %v922
    %1721 = vmatpush.bf16.msra.mxu0 %v918
    %1722 = vmatpush.bf16.msra.mxu0 %v914
    %1723 = vmatpush.bf16.msra.mxu0 %v910
    %1724 = vmatpush.bf16.msra.mxu0 %v906
    %1725 = vmatpush.bf16.msra.mxu0 %v902
    %1726 = vmatpush.bf16.msra.mxu0 %v898
    %1727 = vmatpush.bf16.msra.mxu0 %v894
    %1728 = vmatmul.bf16.gmra.mxu0 %v1706
    %v1729 = vpop.f32.mrf.mxu0
    %v1730 = vadd.f32 0.0, %v1729
    %v1731 = vpop.f32.mrf.mxu0
    %1732 = vdwg.mxu0
    %1733 = vmatpush.bf16.msra.mxu0 %v923
    %1734 = vmatpush.bf16.msra.mxu0 %v919
    %1735 = vmatpush.bf16.msra.mxu0 %v915
    %1736 = vmatpush.bf16.msra.mxu0 %v911
    %1737 = vmatpush.bf16.msra.mxu0 %v907
    %1738 = vmatpush.bf16.msra.mxu0 %v903
    %1739 = vmatpush.bf16.msra.mxu0 %v899
    %1740 = vmatpush.bf16.msra.mxu0 %v895
    %1741 = vmatmul.bf16.gmra.mxu0 %v1706
    %v1742 = vpop.f32.mrf.mxu0
    %v1743 = vadd.f32 0.0, %v1742
    %v1744 = vpop.f32.mrf.mxu0
    %1745 = vdwg.mxu0
    %1746 = vmatpush.bf16.msra.mxu0 %v924
    %1747 = vmatpush.bf16.msra.mxu0 %v920
    %1748 = vmatpush.bf16.msra.mxu0 %v916
    %1749 = vmatpush.bf16.msra.mxu0 %v912
    %1750 = vmatpush.bf16.msra.mxu0 %v908
    %1751 = vmatpush.bf16.msra.mxu0 %v904
    %1752 = vmatpush.bf16.msra.mxu0 %v900
    %1753 = vmatpush.bf16.msra.mxu0 %v896
    %1754 = vmatmul.bf16.gmra.mxu0 %v1706
    %v1755 = vpop.f32.mrf.mxu0
    %v1756 = vadd.f32 0.0, %v1755
    %v1757 = vpop.f32.mrf.mxu0
    %1758 = vdwg.mxu0
    %v1759 = vadd.f32 %v1702, %v1717
    %v1760 = vadd.f32 %v1703, %v1730
    %v1761 = vadd.f32 %v1704, %v1743
    %v1762 = vadd.f32 %v1705, %v1756
    %v1763 = vxor.u32 %v1759, 2147483648
    %v1764 = vmul.f32 %v1763, 1.442695
    %v1765 = vpow.pop %v1764
    %v1766 = vadd.f32 %v1765, 1.0
    %v1767 = vrcp.pop %v1766
    %v1768 = vmul.f32 %v1766, %v1767
    %v1769 = vsub.f32 1.0, %v1768
    %v1770 = vmul.f32 %v1767, %v1769
    %v1771 = vadd.f32 %v1767, %v1770
    %vm1772 = vweird.f32 %v1766
    %vm1773 = vweird.f32 %v1767
    %vm1774 = vmor %vm1772, %vm1773
    %v1775 = vsel %vm1774, %v1767, %v1771
    %v1776 = vand.u32 2147483647, %v1766
    %vm1777 = vcmp.eq.f32.partialorder %v1776, 8.507059e+37
    %v1778 = vand.u32 %v1766, 2147483648
    %v1779 = vor.u32 1.1754944e-38, %v1778
    %v1780 = vsel %vm1777, %v1779, %v1775
    %v1781 = vmul.f32 1.0, %v1780
    %v1782 = vxor.u32 %v1760, 2147483648
    %v1783 = vmul.f32 %v1782, 1.442695
    %v1784 = vpow.pop %v1783
    %v1785 = vadd.f32 %v1784, 1.0
    %v1786 = vrcp.pop %v1785
    %v1787 = vmul.f32 %v1785, %v1786
    %v1788 = vsub.f32 1.0, %v1787
    %v1789 = vmul.f32 %v1786, %v1788
    %v1790 = vadd.f32 %v1786, %v1789
    %vm1791 = vweird.f32 %v1785
    %vm1792 = vweird.f32 %v1786
    %vm1793 = vmor %vm1791, %vm1792
    %v1794 = vsel %vm1793, %v1786, %v1790
    %v1795 = vand.u32 2147483647, %v1785
    %vm1796 = vcmp.eq.f32.partialorder %v1795, 8.507059e+37
    %v1797 = vand.u32 %v1785, 2147483648
    %v1798 = vor.u32 1.1754944e-38, %v1797
    %v1799 = vsel %vm1796, %v1798, %v1794
    %v1800 = vmul.f32 1.0, %v1799
    %v1801 = vtanh.pop %v1761
    %v1802 = vxor.u32 %v1762, 2147483648
    %v1803 = vmul.f32 %v1802, 1.442695
    %v1804 = vpow.pop %v1803
    %v1805 = vadd.f32 %v1804, 1.0
    %v1806 = vrcp.pop %v1805
    %v1807 = vmul.f32 %v1805, %v1806
    %v1808 = vsub.f32 1.0, %v1807
    %v1809 = vmul.f32 %v1806, %v1808
    %v1810 = vadd.f32 %v1806, %v1809
    %vm1811 = vweird.f32 %v1805
    %vm1812 = vweird.f32 %v1806
    %vm1813 = vmor %vm1811, %vm1812
    %v1814 = vsel %vm1813, %v1806, %v1810
    %v1815 = vand.u32 2147483647, %v1805
    %vm1816 = vcmp.eq.f32.partialorder %v1815, 8.507059e+37
    %v1817 = vand.u32 %v1805, 2147483648
    %v1818 = vor.u32 1.1754944e-38, %v1817
    %v1819 = vsel %vm1816, %v1818, %v1814
    %v1820 = vmul.f32 1.0, %v1819
    %v1821 = vmul.f32 %v1800, %v1698
    %v1822 = vmul.f32 %v1781, %v1801
    %v1823 = vadd.f32 %v1821, %v1822
    %v1824 = vtanh.pop %v1823
    %v1825 = vmul.f32 %v1820, %v1824
    %v1826 = vld [vmem:[#allocation2] sm:$0xff]
    %v1827 = vld [vmem:[#allocation2 + $0x8] sm:$0xff]
    %v1828 = vld [vmem:[#allocation2 + $0x10] sm:$0xff]
    %v1829 = vpack.c.bf16 %v1825, %v1825
    %1830 = vmatpush.bf16.msra.mxu0 %v921
    %1831 = vmatpush.bf16.msra.mxu0 %v917
    %1832 = vmatpush.bf16.msra.mxu0 %v913
    %1833 = vmatpush.bf16.msra.mxu0 %v909
    %1834 = vmatpush.bf16.msra.mxu0 %v905
    %1835 = vmatpush.bf16.msra.mxu0 %v901
    %1836 = vmatpush.bf16.msra.mxu0 %v897
    %1837 = vmatpush.bf16.msra.mxu0 %v893
    %1838 = vmatmul.bf16.gmra.mxu0 %v1829
    %v1839 = vpop.f32.mrf.mxu0
    %v1840 = vadd.f32 0.0, %v1839
    %v1841 = vpop.f32.mrf.mxu0
    %1842 = vdwg.mxu0
    %1843 = vmatpush.bf16.msra.mxu0 %v922
    %1844 = vmatpush.bf16.msra.mxu0 %v918
    %1845 = vmatpush.bf16.msra.mxu0 %v914
    %1846 = vmatpush.bf16.msra.mxu0 %v910
    %1847 = vmatpush.bf16.msra.mxu0 %v906
    %1848 = vmatpush.bf16.msra.mxu0 %v902
    %1849 = vmatpush.bf16.msra.mxu0 %v898
    %1850 = vmatpush.bf16.msra.mxu0 %v894
    %1851 = vmatmul.bf16.gmra.mxu0 %v1829
    %v1852 = vpop.f32.mrf.mxu0
    %v1853 = vadd.f32 0.0, %v1852
    %v1854 = vpop.f32.mrf.mxu0
    %1855 = vdwg.mxu0
    %1856 = vmatpush.bf16.msra.mxu0 %v923
    %1857 = vmatpush.bf16.msra.mxu0 %v919
    %1858 = vmatpush.bf16.msra.mxu0 %v915
    %1859 = vmatpush.bf16.msra.mxu0 %v911
    %1860 = vmatpush.bf16.msra.mxu0 %v907
    %1861 = vmatpush.bf16.msra.mxu0 %v903
    %1862 = vmatpush.bf16.msra.mxu0 %v899
    %1863 = vmatpush.bf16.msra.mxu0 %v895
    %1864 = vmatmul.bf16.gmra.mxu0 %v1829
    %v1865 = vpop.f32.mrf.mxu0
    %v1866 = vadd.f32 0.0, %v1865
    %v1867 = vpop.f32.mrf.mxu0
    %1868 = vdwg.mxu0
    %v1869 = vadd.f32 %v1826, %v1840
    %v1870 = vadd.f32 %v1827, %v1853
    %v1871 = vadd.f32 %v1828, %v1866
    %v1872 = vxor.u32 %v1869, 2147483648
    %v1873 = vmul.f32 %v1872, 1.442695
    %v1874 = vpow.pop %v1873
    %v1875 = vadd.f32 %v1874, 1.0
    %v1876 = vrcp.pop %v1875
    %v1877 = vmul.f32 %v1875, %v1876
    %v1878 = vsub.f32 1.0, %v1877
    %v1879 = vmul.f32 %v1876, %v1878
    %v1880 = vadd.f32 %v1876, %v1879
    %vm1881 = vweird.f32 %v1875
    %vm1882 = vweird.f32 %v1876
    %vm1883 = vmor %vm1881, %vm1882
    %v1884 = vsel %vm1883, %v1876, %v1880
    %v1885 = vand.u32 2147483647, %v1875
    %vm1886 = vcmp.eq.f32.partialorder %v1885, 8.507059e+37
    %v1887 = vand.u32 %v1875, 2147483648
    %v1888 = vor.u32 1.1754944e-38, %v1887
    %v1889 = vsel %vm1886, %v1888, %v1884
    %v1890 = vmul.f32 1.0, %v1889
    %v1891 = vxor.u32 %v1870, 2147483648
    %v1892 = vmul.f32 %v1891, 1.442695
    %v1893 = vpow.pop %v1892
    %v1894 = vadd.f32 %v1893, 1.0
    %v1895 = vrcp.pop %v1894
    %v1896 = vmul.f32 %v1894, %v1895
    %v1897 = vsub.f32 1.0, %v1896
    %v1898 = vmul.f32 %v1895, %v1897
    %v1899 = vadd.f32 %v1895, %v1898
    %vm1900 = vweird.f32 %v1894
    %vm1901 = vweird.f32 %v1895
    %vm1902 = vmor %vm1900, %vm1901
    %v1903 = vsel %vm1902, %v1895, %v1899
    %v1904 = vand.u32 2147483647, %v1894
    %vm1905 = vcmp.eq.f32.partialorder %v1904, 8.507059e+37
    %v1906 = vand.u32 %v1894, 2147483648
    %v1907 = vor.u32 1.1754944e-38, %v1906
    %v1908 = vsel %vm1905, %v1907, %v1903
    %v1909 = vmul.f32 1.0, %v1908
    %v1910 = vtanh.pop %v1871
    %v1911 = vmul.f32 %v1909, %v1823
    %v1912 = vmul.f32 %v1890, %v1910
    %v1913 = vadd.f32 %v1911, %v1912
    %vm1914 = vcmask 1041408
    %v1915 = vsel %vm1914, %v1913, 0.0
    %v1916 = vrot.slane %v1915, 4
    %v1917 = vadd.f32 %v1915, %v1916
    %v1918 = vrot.slane %v1917, 2
    %v1919 = vadd.f32 %v1917, %v1918
    %v1920 = vrot.slane %v1919, 1
    %v1921 = vadd.f32 %v1919, %v1920
    %v1922 = vrcp.pop 2.0
    %v1923 = vmul.f32 2.0, %v1922
    %v1924 = vsub.f32 1.0, %v1923
    %v1925 = vmul.f32 %v1922, %v1924
    %v1926 = vadd.f32 %v1922, %v1925
    %vm1927 = vweird.f32 %v1922
    %v1928 = vsel %vm1927, %v1922, %v1926
    %v1929 = vmul.f32 %v1921, %v1928
    %v1930 = vsub.f32 %v1913, %v1929
    %v1931 = vmul.f32 %v1930, %v1930
    %v1932 = vsel %vm1914, %v1931, 0.0
    %v1933 = vrot.slane %v1932, 4
    %v1934 = vadd.f32 %v1932, %v1933
    %v1935 = vrot.slane %v1934, 2
    %v1936 = vadd.f32 %v1934, %v1935
    %v1937 = vrot.slane %v1936, 1
    %v1938 = vadd.f32 %v1936, %v1937
    %v1939 = vmul.f32 %v1938, %v1928
    %v1940 = vadd.f32 %v1939, 1e-05
    %v1941 = vrsqrt.pop %v1940
    %v1942 = vmul.f32 %v1941, %v1940
    %v1943 = vmul.f32 %v1942, %v1941
    %v1944 = vmul.f32 0.5, %v1943
    %v1945 = vsub.f32 1.5, %v1944
    %v1946 = vmul.f32 %v1941, %v1945
    %vm1947 = vweird.f32 %v1940
    %vm1948 = vweird.f32 %v1941
    %vm1949 = vmor %vm1947, %vm1948
    %v1950 = vsel %vm1949, %v1941, %v1946
    %v1951 = vmul.f32 %v1930, %v1950
    %v1952 = vld [vmem:[%s6] sm:$0x1]
    %v1954 = vperm.slane %v1952, 0
    %v1956 = vmul.f32 %v1951, %v1954
    %v1957 = vld [vmem:[%s7] sm:$0x1]
    %v1959 = vperm.slane %v1957, 0
    %v1961 = vadd.f32 %v1956, %v1959
    %v1962 = vmul.f32 %v1961, %v1961
    %1963 = vadd.xlane.f32.xlu0 %v1962
    %v1964 = vpop.xlane.xlu0 %1963
    %v1965 = vmax.f32 %v1964, 1e-24
    %v1966 = vrsqrt.pop %v1965
    %v1967 = vmul.f32 %v1966, %v1965
    %v1968 = vmul.f32 %v1967, %v1966
    %v1969 = vmul.f32 0.5, %v1968
    %v1970 = vsub.f32 1.5, %v1969
    %v1971 = vmul.f32 %v1966, %v1970
    %vm1972 = vweird.f32 %v1965
    %vm1973 = vweird.f32 %v1966
    %vm1974 = vmor %vm1972, %vm1973
    %v1975 = vsel %vm1974, %v1966, %v1971
    %v1976 = vmul.f32 %v1961, %v1975
    %v1977 = vpack.c.bf16 %v1976, %v1976
    %v1978 = vld [vmem:[%s8] sm:$0xff]
    %v1979 = vld [vmem:[%s8 + $0x8] sm:$0xff]
    %v1980 = vld [vmem:[%s8 + $0x10] sm:$0xff]
    %v1981 = vld [vmem:[%s8 + $0x18] sm:$0xff]
    %v1982 = vld [vmem:[%s8 + $0x20] sm:$0xff]
    %v1983 = vld [vmem:[%s8 + $0x28] sm:$0xff]
    %v1984 = vld [vmem:[%s8 + $0x30] sm:$0xff]
    %v1985 = vld [vmem:[%s8 + $0x38] sm:$0xff]
    %v1986 = vld [vmem:[%s8 + $0x40] sm:$0xff]
    %v1987 = vld [vmem:[%s8 + $0x48] sm:$0xff]
    %v1988 = vld [vmem:[%s8 + $0x50] sm:$0xff]
    %v1989 = vld [vmem:[%s8 + $0x58] sm:$0xff]
    %v1990 = vld [vmem:[%s8 + $0x60] sm:$0xff]
    %v1991 = vld [vmem:[%s8 + $0x68] sm:$0xff]
    %v1992 = vld [vmem:[%s8 + $0x70] sm:$0xff]
    %v1993 = vld [vmem:[%s8 + $0x78] sm:$0xff]
    %v1994 = vld [vmem:[%s9] sm:$0x3]
    %v1996 = vperm.slane %v1994, 0
    %v1997 = vperm.slane %v1994, 1
    %v2016 = vunpack.c.l.b16 %v1978
    %v2017 = vunpack.c.h.b16 %v1978
    %v2018 = vunpack.c.l.b16 %v1979
    %v2019 = vunpack.c.h.b16 %v1979
    %v2020 = vunpack.c.l.b16 %v1980
    %v2021 = vunpack.c.h.b16 %v1980
    %v2022 = vunpack.c.l.b16 %v1981
    %v2023 = vunpack.c.h.b16 %v1981
    %v2024 = vunpack.c.l.b16 %v1982
    %v2025 = vunpack.c.h.b16 %v1982
    %v2026 = vunpack.c.l.b16 %v1983
    %v2027 = vunpack.c.h.b16 %v1983
    %v2028 = vunpack.c.l.b16 %v1984
    %v2029 = vunpack.c.h.b16 %v1984
    %v2030 = vunpack.c.l.b16 %v1985
    %v2031 = vunpack.c.h.b16 %v1985
    %v2032 = vunpack.c.l.b16 %v1986
    %v2033 = vunpack.c.h.b16 %v1986
    %v2034 = vunpack.c.l.b16 %v1987
    %v2035 = vunpack.c.h.b16 %v1987
    %v2036 = vunpack.c.l.b16 %v1988
    %v2037 = vunpack.c.h.b16 %v1988
    %v2038 = vunpack.c.l.b16 %v1989
    %v2039 = vunpack.c.h.b16 %v1989
    %v2040 = vunpack.c.l.b16 %v1990
    %v2041 = vunpack.c.h.b16 %v1990
    %v2042 = vunpack.c.l.b16 %v1991
    %v2043 = vunpack.c.h.b16 %v1991
    %v2044 = vunpack.c.l.b16 %v1992
    %v2045 = vunpack.c.h.b16 %v1992
    %v2046 = vunpack.c.l.b16 %v1993
    %v2047 = vunpack.c.h.b16 %v1993
    %v2048 = vpack.c.b16 %v2018, %v2016
    %v2049 = vpack.c.b16 %v2019, %v2017
    %v2050 = vpack.c.b16 %v2022, %v2020
    %v2051 = vpack.c.b16 %v2023, %v2021
    %v2052 = vpack.c.b16 %v2026, %v2024
    %v2053 = vpack.c.b16 %v2027, %v2025
    %v2054 = vpack.c.b16 %v2030, %v2028
    %v2055 = vpack.c.b16 %v2031, %v2029
    %v2056 = vpack.c.b16 %v2034, %v2032
    %v2057 = vpack.c.b16 %v2035, %v2033
    %v2058 = vpack.c.b16 %v2038, %v2036
    %v2059 = vpack.c.b16 %v2039, %v2037
    %v2060 = vpack.c.b16 %v2042, %v2040
    %v2061 = vpack.c.b16 %v2043, %v2041
    %v2062 = vpack.c.b16 %v2046, %v2044
    %v2063 = vpack.c.b16 %v2047, %v2045
    %2080 = vmatpush.bf16.msra.mxu0 %v2062
    %2081 = vmatpush.bf16.msra.mxu0 %v2060
    %2082 = vmatpush.bf16.msra.mxu0 %v2058
    %2083 = vmatpush.bf16.msra.mxu0 %v2056
    %2084 = vmatpush.bf16.msra.mxu0 %v2054
    %2085 = vmatpush.bf16.msra.mxu0 %v2052
    %2086 = vmatpush.bf16.msra.mxu0 %v2050
    %2087 = vmatpush.bf16.msra.mxu0 %v2048
    %2088 = vmatmul.bf16.gmra.mxu0 %v1977
    %v2089 = vpop.f32.mrf.mxu0
    %v2090 = vadd.f32 %v1996, %v2089
    %v2091 = vpop.f32.mrf.mxu0
    %2092 = vdwg.mxu0
    %2093 = vmatpush.bf16.msra.mxu0 %v2063
    %2094 = vmatpush.bf16.msra.mxu0 %v2061
    %2095 = vmatpush.bf16.msra.mxu0 %v2059
    %2096 = vmatpush.bf16.msra.mxu0 %v2057
    %2097 = vmatpush.bf16.msra.mxu0 %v2055
    %2098 = vmatpush.bf16.msra.mxu0 %v2053
    %2099 = vmatpush.bf16.msra.mxu0 %v2051
    %2100 = vmatpush.bf16.msra.mxu0 %v2049
    %2101 = vmatmul.bf16.gmra.mxu0 %v1977
    %v2102 = vpop.f32.mrf.mxu0
    %v2103 = vadd.f32 %v1997, %v2102
    %v2104 = vpop.f32.mrf.mxu0
    %2105 = vdwg.mxu0
    %v2106 = vmax.f32 %v2090, 0.0
    %v2107 = vmax.f32 %v2103, 0.0
    %v2108 = vsel %vm1914, %v2106, 0.0
    %v2109 = vrot.slane %v2108, 4
    %v2110 = vadd.f32 %v2108, %v2109
    %v2111 = vrot.slane %v2110, 2
    %v2112 = vadd.f32 %v2110, %v2111
    %v2113 = vrot.slane %v2112, 1
    %v2114 = vadd.f32 %v2112, %v2113
    %v2115 = vsel %vm1914, %v2107, 0.0
    %v2116 = vrot.slane %v2115, 4
    %v2117 = vadd.f32 %v2115, %v2116
    %v2118 = vrot.slane %v2117, 2
    %v2119 = vadd.f32 %v2117, %v2118
    %v2120 = vrot.slane %v2119, 1
    %v2121 = vadd.f32 %v2119, %v2120
    %v2122 = vmul.f32 %v2114, %v1928
    %v2123 = vmul.f32 %v2121, %v1928
    %v2124 = vsub.f32 %v2106, %v2122
    %v2125 = vsub.f32 %v2107, %v2123
    %v2126 = vmul.f32 %v2124, %v2124
    %v2127 = vmul.f32 %v2125, %v2125
    %v2128 = vsel %vm1914, %v2126, 0.0
    %v2129 = vrot.slane %v2128, 4
    %v2130 = vadd.f32 %v2128, %v2129
    %v2131 = vrot.slane %v2130, 2
    %v2132 = vadd.f32 %v2130, %v2131
    %v2133 = vrot.slane %v2132, 1
    %v2134 = vadd.f32 %v2132, %v2133
    %v2135 = vsel %vm1914, %v2127, 0.0
    %v2136 = vrot.slane %v2135, 4
    %v2137 = vadd.f32 %v2135, %v2136
    %v2138 = vrot.slane %v2137, 2
    %v2139 = vadd.f32 %v2137, %v2138
    %v2140 = vrot.slane %v2139, 1
    %v2141 = vadd.f32 %v2139, %v2140
    %v2142 = vmul.f32 %v2134, %v1928
    %v2143 = vmul.f32 %v2141, %v1928
    %v2144 = vadd.f32 %v2142, 1e-05
    %v2145 = vadd.f32 %v2143, 1e-05
    %v2146 = vrsqrt.pop %v2144
    %v2147 = vmul.f32 %v2146, %v2144
    %v2148 = vmul.f32 %v2147, %v2146
    %v2149 = vmul.f32 0.5, %v2148
    %v2150 = vsub.f32 1.5, %v2149
    %v2151 = vmul.f32 %v2146, %v2150
    %vm2152 = vweird.f32 %v2144
    %vm2153 = vweird.f32 %v2146
    %vm2154 = vmor %vm2152, %vm2153
    %v2155 = vsel %vm2154, %v2146, %v2151
    %v2156 = vrsqrt.pop %v2145
    %v2157 = vmul.f32 %v2156, %v2145
    %v2158 = vmul.f32 %v2157, %v2156
    %v2159 = vmul.f32 0.5, %v2158
    %v2160 = vsub.f32 1.5, %v2159
    %v2161 = vmul.f32 %v2156, %v2160
    %vm2162 = vweird.f32 %v2145
    %vm2163 = vweird.f32 %v2156
    %vm2164 = vmor %vm2162, %vm2163
    %v2165 = vsel %vm2164, %v2156, %v2161
    %v2166 = vmul.f32 %v2124, %v2155
    %v2167 = vmul.f32 %v2125, %v2165
    %v2168 = vld [vmem:[%s10] sm:$0x3]
    %v2170 = vperm.slane %v2168, 0
    %v2171 = vperm.slane %v2168, 1
    %v2174 = vmul.f32 %v2166, %v2170
    %v2175 = vmul.f32 %v2167, %v2171
    %v2176 = vld [vmem:[%s11] sm:$0x3]
    %v2178 = vperm.slane %v2176, 0
    %v2179 = vperm.slane %v2176, 1
    %v2182 = vadd.f32 %v2174, %v2178
    %v2183 = vadd.f32 %v2175, %v2179
    %2184 = vst [vmem:[%s12] sm:$0xff] %v2182
    %2185 = vst [vmem:[%s13] sm:$0xff] %v2183
    // Predicated region
    $region58: #{reaction_encoder_forward.4} parent=1 // pred_check
      _
    $region59: #{reaction_encoder_forward.4} parent=1 // pred_check_branch
      %2187 = sbr.rel (0) target = $region61
    $region60: #{reaction_encoder_forward.4} parent=1 // pred_region
      _
    $region61: #{reaction_encoder_forward.4} parent=1 // pred_fallthru
      _
    // Predicated region
    $region62: #{reaction_encoder_forward.4} parent=1 // pred_check
      _
    $region63: #{reaction_encoder_forward.4} parent=1 // pred_check_branch
      %2189 = sbr.rel (0) target = $region65
    $region64: #{reaction_encoder_forward.4} parent=1 // pred_region
      _
    $region65: #{reaction_encoder_forward.4} parent=1 // pred_fallthru
      _
    // Predicated region
    $region66: #{reaction_encoder_forward.4} parent=1 // pred_check
      _
    $region67: #{reaction_encoder_forward.4} parent=1 // pred_check_branch
      %2191 = sbr.rel (0) target = $region69
    $region68: #{reaction_encoder_forward.4} parent=1 // pred_region
      _
    $region69: #{reaction_encoder_forward.4} parent=1 // pred_fallthru
      _
    // Predicated region
    $region70: #{reaction_encoder_forward.4} parent=1 // pred_check
      _
    $region71: #{reaction_encoder_forward.4} parent=1 // pred_check_branch
      %2193 = sbr.rel (0) target = $region73
    $region72: #{reaction_encoder_forward.4} parent=1 // pred_region
      _
    $region73: #{reaction_encoder_forward.4} parent=1 // pred_fallthru
      _
    %2194 = vsyncpa [#allocation4], 1
    %2195 = vsyncpa [#allocation6], 1

// kernel: reaction_encoder_forward.5
$region0: #{reaction_encoder_forward.5}
  #allocation0 [shape = 'u32[]', space=smem, size = 0x4, offset = 0x4, fixed_abs, tag = 'smem constant byte address 0x4 - core index']
  #allocation1 [shape = 'u32[72,128]{1,0:T(1,128)}', space=vmem, size = 0x9000, scoped, tag = 'internal scratch']
  #allocation2 [shape = 'f32[8,8,512]{2,1,0:T(8,128)}', space=vmem, size = 0x20000, scoped, tag = 'scratch operand']
  #allocation3 [shape = 'f32[8,8,128]{2,1,0:T(8,128)}', space=vmem, size = 0x8000, scoped, tag = 'scratch operand']
  %s0 = inlined_call_operand.vmem [shape: f32[8,8,128], index: 0, kind: input, shape index: {}]
  %s1 = inlined_call_operand.vmem [shape: bf16[128,512], index: 1, kind: input, shape index: {}]
  %s2 = inlined_call_operand.vmem [shape: f32[1,512], index: 2, kind: input, shape index: {}]
  %s3 = inlined_call_operand.vmem [shape: bf16[128,512], index: 3, kind: input, shape index: {}]
  %s4 = inlined_call_operand.vmem [shape: f32[8,128], index: 4, kind: input, shape index: {}]
  %s5 = inlined_call_operand.vmem [shape: f32[8,128], index: 5, kind: input, shape index: {}]
  %s6 = inlined_call_operand.vmem [shape: f32[1,128], index: 6, kind: input, shape index: {}]
  %s7 = inlined_call_operand.vmem [shape: f32[1,128], index: 7, kind: input, shape index: {}]
  %s8 = inlined_call_operand.vmem [shape: bf16[128,128], index: 8, kind: input, shape index: {}]
  %s9 = inlined_call_operand.vmem [shape: f32[1,128], index: 9, kind: input, shape index: {}]
  %s10 = inlined_call_operand.vmem [shape: f32[64,128], index: 10, kind: output, shape index: {}]
  %s11 = sld [smem:[#allocation0]]
  $region50: #{reaction_encoder_forward.5} parent=0
    _
  %s13 = ssub.s32 1, %s11
  %s14 = scalar_select 0, %s13, %s11
  // Predicated region
  $region2: #{reaction_encoder_forward.5} parent=0 // pred_check
    _
  $region3: #{reaction_encoder_forward.5} parent=0 // pred_check_branch
    %16 = sbr.rel (0) target = $region5
  $region4: #{reaction_encoder_forward.5} parent=0 // pred_region
    _
  $region5: #{reaction_encoder_forward.5} parent=0 // pred_fallthru
    _
  // Predicated region
  $region6: #{reaction_encoder_forward.5} parent=0 // pred_check
    _
  $region7: #{reaction_encoder_forward.5} parent=0 // pred_check_branch
    %18 = sbr.rel (0) target = $region9
  $region8: #{reaction_encoder_forward.5} parent=0 // pred_region
    _
  $region9: #{reaction_encoder_forward.5} parent=0 // pred_fallthru
    _
  // Predicated region
  $region10: #{reaction_encoder_forward.5} parent=0 // pred_check
    _
  $region11: #{reaction_encoder_forward.5} parent=0 // pred_check_branch
    %20 = sbr.rel (0) target = $region13
  $region12: #{reaction_encoder_forward.5} parent=0 // pred_region
    _
  $region13: #{reaction_encoder_forward.5} parent=0 // pred_fallthru
    _
  // Predicated region
  $region14: #{reaction_encoder_forward.5} parent=0 // pred_check
    _
  $region15: #{reaction_encoder_forward.5} parent=0 // pred_check_branch
    %22 = sbr.rel (0) target = $region17
  $region16: #{reaction_encoder_forward.5} parent=0 // pred_region
    _
  $region17: #{reaction_encoder_forward.5} parent=0 // pred_fallthru
    _
  // Predicated region
  $region18: #{reaction_encoder_forward.5} parent=0 // pred_check
    _
  $region19: #{reaction_encoder_forward.5} parent=0 // pred_check_branch
    %24 = sbr.rel (0) target = $region21
  $region20: #{reaction_encoder_forward.5} parent=0 // pred_region
    _
  $region21: #{reaction_encoder_forward.5} parent=0 // pred_fallthru
    _
  // Predicated region
  $region22: #{reaction_encoder_forward.5} parent=0 // pred_check
    _
  $region23: #{reaction_encoder_forward.5} parent=0 // pred_check_branch
    %26 = sbr.rel (0) target = $region25
  $region24: #{reaction_encoder_forward.5} parent=0 // pred_region
    _
  $region25: #{reaction_encoder_forward.5} parent=0 // pred_fallthru
    _
  // Predicated region
  $region26: #{reaction_encoder_forward.5} parent=0 // pred_check
    _
  $region27: #{reaction_encoder_forward.5} parent=0 // pred_check_branch
    %28 = sbr.rel (0) target = $region29
  $region28: #{reaction_encoder_forward.5} parent=0 // pred_region
    _
  $region29: #{reaction_encoder_forward.5} parent=0 // pred_fallthru
    _
  // Predicated region
  $region30: #{reaction_encoder_forward.5} parent=0 // pred_check
    _
  $region31: #{reaction_encoder_forward.5} parent=0 // pred_check_branch
    %30 = sbr.rel (0) target = $region33
  $region32: #{reaction_encoder_forward.5} parent=0 // pred_region
    _
  $region33: #{reaction_encoder_forward.5} parent=0 // pred_fallthru
    _
  // Predicated region
  $region34: #{reaction_encoder_forward.5} parent=0 // pred_check
    _
  $region35: #{reaction_encoder_forward.5} parent=0 // pred_check_branch
    %32 = sbr.rel (0) target = $region37
  $region36: #{reaction_encoder_forward.5} parent=0 // pred_region
    _
  $region37: #{reaction_encoder_forward.5} parent=0 // pred_fallthru
    _
  // Predicated region
  $region38: #{reaction_encoder_forward.5} parent=0 // pred_check
    _
  $region39: #{reaction_encoder_forward.5} parent=0 // pred_check_branch
    %34 = sbr.rel (0) target = $region41
  $region40: #{reaction_encoder_forward.5} parent=0 // pred_region
    _
  $region41: #{reaction_encoder_forward.5} parent=0 // pred_fallthru
    _
  %v35 = vld [vmem:[%s0] sm:$0xff]
  %v36 = vld [vmem:[%s0 + $0x8] sm:$0xff]
  %v37 = vld [vmem:[%s0 + $0x10] sm:$0xff]
  %v38 = vld [vmem:[%s0 + $0x18] sm:$0xff]
  %v39 = vld [vmem:[%s0 + $0x20] sm:$0xff]
  %v40 = vld [vmem:[%s0 + $0x28] sm:$0xff]
  %v41 = vld [vmem:[%s0 + $0x30] sm:$0xff]
  %v42 = vld [vmem:[%s0 + $0x38] sm:$0xff]
  %v43 = vpack.c.bf16 %v36, %v35
  %v44 = vpack.c.bf16 %v38, %v37
  %v45 = vpack.c.bf16 %v40, %v39
  %v46 = vpack.c.bf16 %v42, %v41
  %v47 = vld [vmem:[%s1] sm:$0xff]
  %v48 = vld [vmem:[%s1 + $0x8] sm:$0xff]
  %v49 = vld [vmem:[%s1 + $0x10] sm:$0xff]
  %v50 = vld [vmem:[%s1 + $0x18] sm:$0xff]
  %v51 = vld [vmem:[%s1 + $0x20] sm:$0xff]
  %v52 = vld [vmem:[%s1 + $0x28] sm:$0xff]
  %v53 = vld [vmem:[%s1 + $0x30] sm:$0xff]
  %v54 = vld [vmem:[%s1 + $0x38] sm:$0xff]
  %v55 = vld [vmem:[%s1 + $0x40] sm:$0xff]
  %v56 = vld [vmem:[%s1 + $0x48] sm:$0xff]
  %v57 = vld [vmem:[%s1 + $0x50] sm:$0xff]
  %v58 = vld [vmem:[%s1 + $0x58] sm:$0xff]
  %v59 = vld [vmem:[%s1 + $0x60] sm:$0xff]
  %v60 = vld [vmem:[%s1 + $0x68] sm:$0xff]
  %v61 = vld [vmem:[%s1 + $0x70] sm:$0xff]
  %v62 = vld [vmem:[%s1 + $0x78] sm:$0xff]
  %v63 = vld [vmem:[%s1 + $0x80] sm:$0xff]
  %v64 = vld [vmem:[%s1 + $0x88] sm:$0xff]
  %v65 = vld [vmem:[%s1 + $0x90] sm:$0xff]
  %v66 = vld [vmem:[%s1 + $0x98] sm:$0xff]
  %v67 = vld [vmem:[%s1 + $0xa0] sm:$0xff]
  %v68 = vld [vmem:[%s1 + $0xa8] sm:$0xff]
  %v69 = vld [vmem:[%s1 + $0xb0] sm:$0xff]
  %v70 = vld [vmem:[%s1 + $0xb8] sm:$0xff]
  %v71 = vld [vmem:[%s1 + $0xc0] sm:$0xff]
  %v72 = vld [vmem:[%s1 + $0xc8] sm:$0xff]
  %v73 = vld [vmem:[%s1 + $0xd0] sm:$0xff]
  %v74 = vld [vmem:[%s1 + $0xd8] sm:$0xff]
  %v75 = vld [vmem:[%s1 + $0xe0] sm:$0xff]
  %v76 = vld [vmem:[%s1 + $0xe8] sm:$0xff]
  %v77 = vld [vmem:[%s1 + $0xf0] sm:$0xff]
  %v78 = vld [vmem:[%s1 + $0xf8] sm:$0xff]
  %v79 = vld [vmem:[%s2] sm:$0xf]
  %v81 = vperm.slane %v79, 0
  %v82 = vperm.slane %v79, 1
  %v83 = vperm.slane %v79, 2
  %v84 = vperm.slane %v79, 3
  %v121 = vunpack.c.l.b16 %v47
  %v122 = vunpack.c.h.b16 %v47
  %v123 = vunpack.c.l.b16 %v48
  %v124 = vunpack.c.h.b16 %v48
  %v125 = vunpack.c.l.b16 %v49
  %v126 = vunpack.c.h.b16 %v49
  %v127 = vunpack.c.l.b16 %v50
  %v128 = vunpack.c.h.b16 %v50
  %v129 = vunpack.c.l.b16 %v51
  %v130 = vunpack.c.h.b16 %v51
  %v131 = vunpack.c.l.b16 %v52
  %v132 = vunpack.c.h.b16 %v52
  %v133 = vunpack.c.l.b16 %v53
  %v134 = vunpack.c.h.b16 %v53
  %v135 = vunpack.c.l.b16 %v54
  %v136 = vunpack.c.h.b16 %v54
  %v137 = vunpack.c.l.b16 %v55
  %v138 = vunpack.c.h.b16 %v55
  %v139 = vunpack.c.l.b16 %v56
  %v140 = vunpack.c.h.b16 %v56
  %v141 = vunpack.c.l.b16 %v57
  %v142 = vunpack.c.h.b16 %v57
  %v143 = vunpack.c.l.b16 %v58
  %v144 = vunpack.c.h.b16 %v58
  %v145 = vunpack.c.l.b16 %v59
  %v146 = vunpack.c.h.b16 %v59
  %v147 = vunpack.c.l.b16 %v60
  %v148 = vunpack.c.h.b16 %v60
  %v149 = vunpack.c.l.b16 %v61
  %v150 = vunpack.c.h.b16 %v61
  %v151 = vunpack.c.l.b16 %v62
  %v152 = vunpack.c.h.b16 %v62
  %v153 = vunpack.c.l.b16 %v63
  %v154 = vunpack.c.h.b16 %v63
  %v155 = vunpack.c.l.b16 %v64
  %v156 = vunpack.c.h.b16 %v64
  %v157 = vunpack.c.l.b16 %v65
  %v158 = vunpack.c.h.b16 %v65
  %v159 = vunpack.c.l.b16 %v66
  %v160 = vunpack.c.h.b16 %v66
  %v161 = vunpack.c.l.b16 %v67
  %v162 = vunpack.c.h.b16 %v67
  %v163 = vunpack.c.l.b16 %v68
  %v164 = vunpack.c.h.b16 %v68
  %v165 = vunpack.c.l.b16 %v69
  %v166 = vunpack.c.h.b16 %v69
  %v167 = vunpack.c.l.b16 %v70
  %v168 = vunpack.c.h.b16 %v70
  %v169 = vunpack.c.l.b16 %v71
  %v170 = vunpack.c.h.b16 %v71
  %v171 = vunpack.c.l.b16 %v72
  %v172 = vunpack.c.h.b16 %v72
  %v173 = vunpack.c.l.b16 %v73
  %v174 = vunpack.c.h.b16 %v73
  %v175 = vunpack.c.l.b16 %v74
  %v176 = vunpack.c.h.b16 %v74
  %v177 = vunpack.c.l.b16 %v75
  %v178 = vunpack.c.h.b16 %v75
  %v179 = vunpack.c.l.b16 %v76
  %v180 = vunpack.c.h.b16 %v76
  %v181 = vunpack.c.l.b16 %v77
  %v182 = vunpack.c.h.b16 %v77
  %v183 = vunpack.c.l.b16 %v78
  %v184 = vunpack.c.h.b16 %v78
  %v185 = vpack.c.b16 %v125, %v121
  %v186 = vpack.c.b16 %v126, %v122
  %v187 = vpack.c.b16 %v127, %v123
  %v188 = vpack.c.b16 %v128, %v124
  %v189 = vpack.c.b16 %v133, %v129
  %v190 = vpack.c.b16 %v134, %v130
  %v191 = vpack.c.b16 %v135, %v131
  %v192 = vpack.c.b16 %v136, %v132
  %v193 = vpack.c.b16 %v141, %v137
  %v194 = vpack.c.b16 %v142, %v138
  %v195 = vpack.c.b16 %v143, %v139
  %v196 = vpack.c.b16 %v144, %v140
  %v197 = vpack.c.b16 %v149, %v145
  %v198 = vpack.c.b16 %v150, %v146
  %v199 = vpack.c.b16 %v151, %v147
  %v200 = vpack.c.b16 %v152, %v148
  %v201 = vpack.c.b16 %v157, %v153
  %v202 = vpack.c.b16 %v158, %v154
  %v203 = vpack.c.b16 %v159, %v155
  %v204 = vpack.c.b16 %v160, %v156
  %v205 = vpack.c.b16 %v165, %v161
  %v206 = vpack.c.b16 %v166, %v162
  %v207 = vpack.c.b16 %v167, %v163
  %v208 = vpack.c.b16 %v168, %v164
  %v209 = vpack.c.b16 %v173, %v169
  %v210 = vpack.c.b16 %v174, %v170
  %v211 = vpack.c.b16 %v175, %v171
  %v212 = vpack.c.b16 %v176, %v172
  %v213 = vpack.c.b16 %v181, %v177
  %v214 = vpack.c.b16 %v182, %v178
  %v215 = vpack.c.b16 %v183, %v179
  %v216 = vpack.c.b16 %v184, %v180
  %249 = vmatpush.bf16.msra.mxu0 %v213
  %250 = vmatpush.bf16.msra.mxu0 %v209
  %251 = vmatpush.bf16.msra.mxu0 %v205
  %252 = vmatpush.bf16.msra.mxu0 %v201
  %253 = vmatpush.bf16.msra.mxu0 %v197
  %254 = vmatpush.bf16.msra.mxu0 %v193
  %255 = vmatpush.bf16.msra.mxu0 %v189
  %256 = vmatpush.bf16.msra.mxu0 %v185
  %257 = vmatmul.bf16.gmra.mxu0 %v43
  %v258 = vpop.f32.mrf.mxu0
  %v259 = vadd.f32 %v81, %v258
  %v260 = vpop.f32.mrf.mxu0
  %v261 = vadd.f32 %v81, %v260
  %262 = vmatmul.bf16.gmra.mxu0 %v44
  %v263 = vpop.f32.mrf.mxu0
  %v264 = vadd.f32 %v81, %v263
  %v265 = vpop.f32.mrf.mxu0
  %v266 = vadd.f32 %v81, %v265
  %267 = vmatmul.bf16.gmra.mxu0 %v45
  %v268 = vpop.f32.mrf.mxu0
  %v269 = vadd.f32 %v81, %v268
  %v270 = vpop.f32.mrf.mxu0
  %v271 = vadd.f32 %v81, %v270
  %272 = vmatmul.bf16.gmra.mxu0 %v46
  %v273 = vpop.f32.mrf.mxu0
  %v274 = vadd.f32 %v81, %v273
  %v275 = vpop.f32.mrf.mxu0
  %v276 = vadd.f32 %v81, %v275
  %277 = vdwg.mxu0
  %278 = vmatpush.bf16.msra.mxu0 %v214
  %279 = vmatpush.bf16.msra.mxu0 %v210
  %280 = vmatpush.bf16.msra.mxu0 %v206
  %281 = vmatpush.bf16.msra.mxu0 %v202
  %282 = vmatpush.bf16.msra.mxu0 %v198
  %283 = vmatpush.bf16.msra.mxu0 %v194
  %284 = vmatpush.bf16.msra.mxu0 %v190
  %285 = vmatpush.bf16.msra.mxu0 %v186
  %286 = vmatmul.bf16.gmra.mxu0 %v43
  %v287 = vpop.f32.mrf.mxu0
  %v288 = vadd.f32 %v82, %v287
  %v289 = vpop.f32.mrf.mxu0
  %v290 = vadd.f32 %v82, %v289
  %291 = vmatmul.bf16.gmra.mxu0 %v44
  %v292 = vpop.f32.mrf.mxu0
  %v293 = vadd.f32 %v82, %v292
  %v294 = vpop.f32.mrf.mxu0
  %v295 = vadd.f32 %v82, %v294
  %296 = vmatmul.bf16.gmra.mxu0 %v45
  %v297 = vpop.f32.mrf.mxu0
  %v298 = vadd.f32 %v82, %v297
  %v299 = vpop.f32.mrf.mxu0
  %v300 = vadd.f32 %v82, %v299
  %301 = vmatmul.bf16.gmra.mxu0 %v46
  %v302 = vpop.f32.mrf.mxu0
  %v303 = vadd.f32 %v82, %v302
  %v304 = vpop.f32.mrf.mxu0
  %v305 = vadd.f32 %v82, %v304
  %306 = vdwg.mxu0
  %307 = vmatpush.bf16.msra.mxu0 %v215
  %308 = vmatpush.bf16.msra.mxu0 %v211
  %309 = vmatpush.bf16.msra.mxu0 %v207
  %310 = vmatpush.bf16.msra.mxu0 %v203
  %311 = vmatpush.bf16.msra.mxu0 %v199
  %312 = vmatpush.bf16.msra.mxu0 %v195
  %313 = vmatpush.bf16.msra.mxu0 %v191
  %314 = vmatpush.bf16.msra.mxu0 %v187
  %315 = vmatmul.bf16.gmra.mxu0 %v43
  %v316 = vpop.f32.mrf.mxu0
  %v317 = vadd.f32 %v83, %v316
  %v318 = vpop.f32.mrf.mxu0
  %v319 = vadd.f32 %v83, %v318
  %320 = vmatmul.bf16.gmra.mxu0 %v44
  %v321 = vpop.f32.mrf.mxu0
  %v322 = vadd.f32 %v83, %v321
  %v323 = vpop.f32.mrf.mxu0
  %v324 = vadd.f32 %v83, %v323
  %325 = vmatmul.bf16.gmra.mxu0 %v45
  %v326 = vpop.f32.mrf.mxu0
  %v327 = vadd.f32 %v83, %v326
  %v328 = vpop.f32.mrf.mxu0
  %v329 = vadd.f32 %v83, %v328
  %330 = vmatmul.bf16.gmra.mxu0 %v46
  %v331 = vpop.f32.mrf.mxu0
  %v332 = vadd.f32 %v83, %v331
  %v333 = vpop.f32.mrf.mxu0
  %v334 = vadd.f32 %v83, %v333
  %335 = vdwg.mxu0
  %336 = vmatpush.bf16.msra.mxu0 %v216
  %337 = vmatpush.bf16.msra.mxu0 %v212
  %338 = vmatpush.bf16.msra.mxu0 %v208
  %339 = vmatpush.bf16.msra.mxu0 %v204
  %340 = vmatpush.bf16.msra.mxu0 %v200
  %341 = vmatpush.bf16.msra.mxu0 %v196
  %342 = vmatpush.bf16.msra.mxu0 %v192
  %343 = vmatpush.bf16.msra.mxu0 %v188
  %344 = vmatmul.bf16.gmra.mxu0 %v43
  %v345 = vpop.f32.mrf.mxu0
  %v346 = vadd.f32 %v84, %v345
  %v347 = vpop.f32.mrf.mxu0
  %v348 = vadd.f32 %v84, %v347
  %349 = vmatmul.bf16.gmra.mxu0 %v44
  %v350 = vpop.f32.mrf.mxu0
  %v351 = vadd.f32 %v84, %v350
  %v352 = vpop.f32.mrf.mxu0
  %v353 = vadd.f32 %v84, %v352
  %354 = vmatmul.bf16.gmra.mxu0 %v45
  %v355 = vpop.f32.mrf.mxu0
  %v356 = vadd.f32 %v84, %v355
  %v357 = vpop.f32.mrf.mxu0
  %v358 = vadd.f32 %v84, %v357
  %359 = vmatmul.bf16.gmra.mxu0 %v46
  %v360 = vpop.f32.mrf.mxu0
  %v361 = vadd.f32 %v84, %v360
  %v362 = vpop.f32.mrf.mxu0
  %v363 = vadd.f32 %v84, %v362
  %364 = vdwg.mxu0
  %365 = vst [vmem:[#allocation2] sm:$0xff] %v259
  %366 = vst [vmem:[#allocation2 + $0x8] sm:$0xff] %v288
  %367 = vst [vmem:[#allocation2 + $0x10] sm:$0xff] %v317
  %368 = vst [vmem:[#allocation2 + $0x18] sm:$0xff] %v346
  %369 = vst [vmem:[#allocation2 + $0x20] sm:$0xff] %v261
  %370 = vst [vmem:[#allocation2 + $0x28] sm:$0xff] %v290
  %371 = vst [vmem:[#allocation2 + $0x30] sm:$0xff] %v319
  %372 = vst [vmem:[#allocation2 + $0x38] sm:$0xff] %v348
  %373 = vst [vmem:[#allocation2 + $0x40] sm:$0xff] %v264
  %374 = vst [vmem:[#allocation2 + $0x48] sm:$0xff] %v293
  %375 = vst [vmem:[#allocation2 + $0x50] sm:$0xff] %v322
  %376 = vst [vmem:[#allocation2 + $0x58] sm:$0xff] %v351
  %377 = vst [vmem:[#allocation2 + $0x60] sm:$0xff] %v266
  %378 = vst [vmem:[#allocation2 + $0x68] sm:$0xff] %v295
  %379 = vst [vmem:[#allocation2 + $0x70] sm:$0xff] %v324
  %380 = vst [vmem:[#allocation2 + $0x78] sm:$0xff] %v353
  %381 = vst [vmem:[#allocation2 + $0x80] sm:$0xff] %v269
  %382 = vst [vmem:[#allocation2 + $0x88] sm:$0xff] %v298
  %383 = vst [vmem:[#allocation2 + $0x90] sm:$0xff] %v327
  %384 = vst [vmem:[#allocation2 + $0x98] sm:$0xff] %v356
  %385 = vst [vmem:[#allocation2 + $0xa0] sm:$0xff] %v271
  %386 = vst [vmem:[#allocation2 + $0xa8] sm:$0xff] %v300
  %387 = vst [vmem:[#allocation2 + $0xb0] sm:$0xff] %v329
  %388 = vst [vmem:[#allocation2 + $0xb8] sm:$0xff] %v358
  %389 = vst [vmem:[#allocation2 + $0xc0] sm:$0xff] %v274
  %390 = vst [vmem:[#allocation2 + $0xc8] sm:$0xff] %v303
  %391 = vst [vmem:[#allocation2 + $0xd0] sm:$0xff] %v332
  %392 = vst [vmem:[#allocation2 + $0xd8] sm:$0xff] %v361
  %393 = vst [vmem:[#allocation2 + $0xe0] sm:$0xff] %v276
  %394 = vst [vmem:[#allocation2 + $0xe8] sm:$0xff] %v305
  %395 = vst [vmem:[#allocation2 + $0xf0] sm:$0xff] %v334
  %396 = vst [vmem:[#allocation2 + $0xf8] sm:$0xff] %v363
  %v397 = vld [vmem:[%s4] sm:$0xff]
  %v398 = vld [vmem:[%s5] sm:$0xff]
  %v399 = vld [vmem:[#allocation2] sm:$0xff]
  %v400 = vld [vmem:[#allocation2 + $0x8] sm:$0xff]
  %v401 = vld [vmem:[#allocation2 + $0x10] sm:$0xff]
  %v402 = vld [vmem:[#allocation2 + $0x18] sm:$0xff]
  %v403 = vpack.c.bf16 %v397, %v397
  %v404 = vld [vmem:[%s3] sm:$0xff]
  %v405 = vld [vmem:[%s3 + $0x8] sm:$0xff]
  %v406 = vld [vmem:[%s3 + $0x10] sm:$0xff]
  %v407 = vld [vmem:[%s3 + $0x18] sm:$0xff]
  %v408 = vld [vmem:[%s3 + $0x20] sm:$0xff]
  %v409 = vld [vmem:[%s3 + $0x28] sm:$0xff]
  %v410 = vld [vmem:[%s3 + $0x30] sm:$0xff]
  %v411 = vld [vmem:[%s3 + $0x38] sm:$0xff]
  %v412 = vld [vmem:[%s3 + $0x40] sm:$0xff]
  %v413 = vld [vmem:[%s3 + $0x48] sm:$0xff]
  %v414 = vld [vmem:[%s3 + $0x50] sm:$0xff]
  %v415 = vld [vmem:[%s3 + $0x58] sm:$0xff]
  %v416 = vld [vmem:[%s3 + $0x60] sm:$0xff]
  %v417 = vld [vmem:[%s3 + $0x68] sm:$0xff]
  %v418 = vld [vmem:[%s3 + $0x70] sm:$0xff]
  %v419 = vld [vmem:[%s3 + $0x78] sm:$0xff]
  %v420 = vld [vmem:[%s3 + $0x80] sm:$0xff]
  %v421 = vld [vmem:[%s3 + $0x88] sm:$0xff]
  %v422 = vld [vmem:[%s3 + $0x90] sm:$0xff]
  %v423 = vld [vmem:[%s3 + $0x98] sm:$0xff]
  %v424 = vld [vmem:[%s3 + $0xa0] sm:$0xff]
  %v425 = vld [vmem:[%s3 + $0xa8] sm:$0xff]
  %v426 = vld [vmem:[%s3 + $0xb0] sm:$0xff]
  %v427 = vld [vmem:[%s3 + $0xb8] sm:$0xff]
  %v428 = vld [vmem:[%s3 + $0xc0] sm:$0xff]
  %v429 = vld [vmem:[%s3 + $0xc8] sm:$0xff]
  %v430 = vld [vmem:[%s3 + $0xd0] sm:$0xff]
  %v431 = vld [vmem:[%s3 + $0xd8] sm:$0xff]
  %v432 = vld [vmem:[%s3 + $0xe0] sm:$0xff]
  %v433 = vld [vmem:[%s3 + $0xe8] sm:$0xff]
  %v434 = vld [vmem:[%s3 + $0xf0] sm:$0xff]
  %v435 = vld [vmem:[%s3 + $0xf8] sm:$0xff]
  %v468 = vunpack.c.l.b16 %v404
  %v469 = vunpack.c.h.b16 %v404
  %v470 = vunpack.c.l.b16 %v405
  %v471 = vunpack.c.h.b16 %v405
  %v472 = vunpack.c.l.b16 %v406
  %v473 = vunpack.c.h.b16 %v406
  %v474 = vunpack.c.l.b16 %v407
  %v475 = vunpack.c.h.b16 %v407
  %v476 = vunpack.c.l.b16 %v408
  %v477 = vunpack.c.h.b16 %v408
  %v478 = vunpack.c.l.b16 %v409
  %v479 = vunpack.c.h.b16 %v409
  %v480 = vunpack.c.l.b16 %v410
  %v481 = vunpack.c.h.b16 %v410
  %v482 = vunpack.c.l.b16 %v411
  %v483 = vunpack.c.h.b16 %v411
  %v484 = vunpack.c.l.b16 %v412
  %v485 = vunpack.c.h.b16 %v412
  %v486 = vunpack.c.l.b16 %v413
  %v487 = vunpack.c.h.b16 %v413
  %v488 = vunpack.c.l.b16 %v414
  %v489 = vunpack.c.h.b16 %v414
  %v490 = vunpack.c.l.b16 %v415
  %v491 = vunpack.c.h.b16 %v415
  %v492 = vunpack.c.l.b16 %v416
  %v493 = vunpack.c.h.b16 %v416
  %v494 = vunpack.c.l.b16 %v417
  %v495 = vunpack.c.h.b16 %v417
  %v496 = vunpack.c.l.b16 %v418
  %v497 = vunpack.c.h.b16 %v418
  %v498 = vunpack.c.l.b16 %v419
  %v499 = vunpack.c.h.b16 %v419
  %v500 = vunpack.c.l.b16 %v420
  %v501 = vunpack.c.h.b16 %v420
  %v502 = vunpack.c.l.b16 %v421
  %v503 = vunpack.c.h.b16 %v421
  %v504 = vunpack.c.l.b16 %v422
  %v505 = vunpack.c.h.b16 %v422
  %v506 = vunpack.c.l.b16 %v423
  %v507 = vunpack.c.h.b16 %v423
  %v508 = vunpack.c.l.b16 %v424
  %v509 = vunpack.c.h.b16 %v424
  %v510 = vunpack.c.l.b16 %v425
  %v511 = vunpack.c.h.b16 %v425
  %v512 = vunpack.c.l.b16 %v426
  %v513 = vunpack.c.h.b16 %v426
  %v514 = vunpack.c.l.b16 %v427
  %v515 = vunpack.c.h.b16 %v427
  %v516 = vunpack.c.l.b16 %v428
  %v517 = vunpack.c.h.b16 %v428
  %v518 = vunpack.c.l.b16 %v429
  %v519 = vunpack.c.h.b16 %v429
  %v520 = vunpack.c.l.b16 %v430
  %v521 = vunpack.c.h.b16 %v430
  %v522 = vunpack.c.l.b16 %v431
  %v523 = vunpack.c.h.b16 %v431
  %v524 = vunpack.c.l.b16 %v432
  %v525 = vunpack.c.h.b16 %v432
  %v526 = vunpack.c.l.b16 %v433
  %v527 = vunpack.c.h.b16 %v433
  %v528 = vunpack.c.l.b16 %v434
  %v529 = vunpack.c.h.b16 %v434
  %v530 = vunpack.c.l.b16 %v435
  %v531 = vunpack.c.h.b16 %v435
  %v532 = vpack.c.b16 %v472, %v468
  %v533 = vpack.c.b16 %v473, %v469
  %v534 = vpack.c.b16 %v474, %v470
  %v535 = vpack.c.b16 %v475, %v471
  %v536 = vpack.c.b16 %v480, %v476
  %v537 = vpack.c.b16 %v481, %v477
  %v538 = vpack.c.b16 %v482, %v478
  %v539 = vpack.c.b16 %v483, %v479
  %v540 = vpack.c.b16 %v488, %v484
  %v541 = vpack.c.b16 %v489, %v485
  %v542 = vpack.c.b16 %v490, %v486
  %v543 = vpack.c.b16 %v491, %v487
  %v544 = vpack.c.b16 %v496, %v492
  %v545 = vpack.c.b16 %v497, %v493
  %v546 = vpack.c.b16 %v498, %v494
  %v547 = vpack.c.b16 %v499, %v495
  %v548 = vpack.c.b16 %v504, %v500
  %v549 = vpack.c.b16 %v505, %v501
  %v550 = vpack.c.b16 %v506, %v502
  %v551 = vpack.c.b16 %v507, %v503
  %v552 = vpack.c.b16 %v512, %v508
  %v553 = vpack.c.b16 %v513, %v509
  %v554 = vpack.c.b16 %v514, %v510
  %v555 = vpack.c.b16 %v515, %v511
  %v556 = vpack.c.b16 %v520, %v516
  %v557 = vpack.c.b16 %v521, %v517
  %v558 = vpack.c.b16 %v522, %v518
  %v559 = vpack.c.b16 %v523, %v519
  %v560 = vpack.c.b16 %v528, %v524
  %v561 = vpack.c.b16 %v529, %v525
  %v562 = vpack.c.b16 %v530, %v526
  %v563 = vpack.c.b16 %v531, %v527
  %596 = vmatpush.bf16.msra.mxu0 %v560
  %597 = vmatpush.bf16.msra.mxu0 %v556
  %598 = vmatpush.bf16.msra.mxu0 %v552
  %599 = vmatpush.bf16.msra.mxu0 %v548
  %600 = vmatpush.bf16.msra.mxu0 %v544
  %601 = vmatpush.bf16.msra.mxu0 %v540
  %602 = vmatpush.bf16.msra.mxu0 %v536
  %603 = vmatpush.bf16.msra.mxu0 %v532
  %604 = vmatmul.bf16.gmra.mxu0 %v403
  %v605 = vpop.f32.mrf.mxu0
  %v606 = vadd.f32 0.0, %v605
  %v607 = vpop.f32.mrf.mxu0
  %608 = vdwg.mxu0
  %609 = vmatpush.bf16.msra.mxu0 %v561
  %610 = vmatpush.bf16.msra.mxu0 %v557
  %611 = vmatpush.bf16.msra.mxu0 %v553
  %612 = vmatpush.bf16.msra.mxu0 %v549
  %613 = vmatpush.bf16.msra.mxu0 %v545
  %614 = vmatpush.bf16.msra.mxu0 %v541
  %615 = vmatpush.bf16.msra.mxu0 %v537
  %616 = vmatpush.bf16.msra.mxu0 %v533
  %617 = vmatmul.bf16.gmra.mxu0 %v403
  %v618 = vpop.f32.mrf.mxu0
  %v619 = vadd.f32 0.0, %v618
  %v620 = vpop.f32.mrf.mxu0
  %621 = vdwg.mxu0
  %622 = vmatpush.bf16.msra.mxu0 %v562
  %623 = vmatpush.bf16.msra.mxu0 %v558
  %624 = vmatpush.bf16.msra.mxu0 %v554
  %625 = vmatpush.bf16.msra.mxu0 %v550
  %626 = vmatpush.bf16.msra.mxu0 %v546
  %627 = vmatpush.bf16.msra.mxu0 %v542
  %628 = vmatpush.bf16.msra.mxu0 %v538
  %629 = vmatpush.bf16.msra.mxu0 %v534
  %630 = vmatmul.bf16.gmra.mxu0 %v403
  %v631 = vpop.f32.mrf.mxu0
  %v632 = vadd.f32 0.0, %v631
  %v633 = vpop.f32.mrf.mxu0
  %634 = vdwg.mxu0
  %635 = vmatpush.bf16.msra.mxu0 %v563
  %636 = vmatpush.bf16.msra.mxu0 %v559
  %637 = vmatpush.bf16.msra.mxu0 %v555
  %638 = vmatpush.bf16.msra.mxu0 %v551
  %639 = vmatpush.bf16.msra.mxu0 %v547
  %640 = vmatpush.bf16.msra.mxu0 %v543
  %641 = vmatpush.bf16.msra.mxu0 %v539
  %642 = vmatpush.bf16.msra.mxu0 %v535
  %643 = vmatmul.bf16.gmra.mxu0 %v403
  %v644 = vpop.f32.mrf.mxu0
  %v645 = vadd.f32 0.0, %v644
  %v646 = vpop.f32.mrf.mxu0
  %647 = vdwg.mxu0
  %v648 = vadd.f32 %v399, %v606
  %v649 = vadd.f32 %v400, %v619
  %v650 = vadd.f32 %v401, %v632
  %v651 = vadd.f32 %v402, %v645
  %v652 = vxor.u32 %v648, 2147483648
  %v653 = vmul.f32 %v652, 1.442695
  %v654 = vpow.pop %v653
  %v655 = vadd.f32 %v654, 1.0
  %v656 = vrcp.pop %v655
  %v657 = vmul.f32 %v655, %v656
  %v658 = vsub.f32 1.0, %v657
  %v659 = vmul.f32 %v656, %v658
  %v660 = vadd.f32 %v656, %v659
  %vm661 = vweird.f32 %v655
  %vm662 = vweird.f32 %v656
  %vm663 = vmor %vm661, %vm662
  %v664 = vsel %vm663, %v656, %v660
  %v665 = vand.u32 2147483647, %v655
  %vm666 = vcmp.eq.f32.partialorder %v665, 8.507059e+37
  %v667 = vand.u32 %v655, 2147483648
  %v668 = vor.u32 1.1754944e-38, %v667
  %v669 = vsel %vm666, %v668, %v664
  %v670 = vmul.f32 1.0, %v669
  %v671 = vxor.u32 %v649, 2147483648
  %v672 = vmul.f32 %v671, 1.442695
  %v673 = vpow.pop %v672
  %v674 = vadd.f32 %v673, 1.0
  %v675 = vrcp.pop %v674
  %v676 = vmul.f32 %v674, %v675
  %v677 = vsub.f32 1.0, %v676
  %v678 = vmul.f32 %v675, %v677
  %v679 = vadd.f32 %v675, %v678
  %vm680 = vweird.f32 %v674
  %vm681 = vweird.f32 %v675
  %vm682 = vmor %vm680, %vm681
  %v683 = vsel %vm682, %v675, %v679
  %v684 = vand.u32 2147483647, %v674
  %vm685 = vcmp.eq.f32.partialorder %v684, 8.507059e+37
  %v686 = vand.u32 %v674, 2147483648
  %v687 = vor.u32 1.1754944e-38, %v686
  %v688 = vsel %vm685, %v687, %v683
  %v689 = vmul.f32 1.0, %v688
  %v690 = vtanh.pop %v650
  %v691 = vxor.u32 %v651, 2147483648
  %v692 = vmul.f32 %v691, 1.442695
  %v693 = vpow.pop %v692
  %v694 = vadd.f32 %v693, 1.0
  %v695 = vrcp.pop %v694
  %v696 = vmul.f32 %v694, %v695
  %v697 = vsub.f32 1.0, %v696
  %v698 = vmul.f32 %v695, %v697
  %v699 = vadd.f32 %v695, %v698
  %vm700 = vweird.f32 %v694
  %vm701 = vweird.f32 %v695
  %vm702 = vmor %vm700, %vm701
  %v703 = vsel %vm702, %v695, %v699
  %v704 = vand.u32 2147483647, %v694
  %vm705 = vcmp.eq.f32.partialorder %v704, 8.507059e+37
  %v706 = vand.u32 %v694, 2147483648
  %v707 = vor.u32 1.1754944e-38, %v706
  %v708 = vsel %vm705, %v707, %v703
  %v709 = vmul.f32 1.0, %v708
  %v710 = vmul.f32 %v689, %v398
  %v711 = vmul.f32 %v670, %v690
  %v712 = vadd.f32 %v710, %v711
  %v713 = vtanh.pop %v712
  %v714 = vmul.f32 %v709, %v713
  %715 = vst [vmem:[#allocation3] sm:$0xff] %v714
  %s716 = scalar_lea.vmem [#allocation2], 32
  %v717 = vld [vmem:[%s716] sm:$0xff]
  %v718 = vld [vmem:[%s716 + $0x8] sm:$0xff]
  %v719 = vld [vmem:[%s716 + $0x10] sm:$0xff]
  %v720 = vld [vmem:[%s716 + $0x18] sm:$0xff]
  %v721 = vpack.c.bf16 %v714, %v714
  %v722 = vld [vmem:[%s3] sm:$0xff]
  %v723 = vld [vmem:[%s3 + $0x8] sm:$0xff]
  %v724 = vld [vmem:[%s3 + $0x10] sm:$0xff]
  %v725 = vld [vmem:[%s3 + $0x18] sm:$0xff]
  %v726 = vld [vmem:[%s3 + $0x20] sm:$0xff]
  %v727 = vld [vmem:[%s3 + $0x28] sm:$0xff]
  %v728 = vld [vmem:[%s3 + $0x30] sm:$0xff]
  %v729 = vld [vmem:[%s3 + $0x38] sm:$0xff]
  %v730 = vld [vmem:[%s3 + $0x40] sm:$0xff]
  %v731 = vld [vmem:[%s3 + $0x48] sm:$0xff]
  %v732 = vld [vmem:[%s3 + $0x50] sm:$0xff]
  %v733 = vld [vmem:[%s3 + $0x58] sm:$0xff]
  %v734 = vld [vmem:[%s3 + $0x60] sm:$0xff]
  %v735 = vld [vmem:[%s3 + $0x68] sm:$0xff]
  %v736 = vld [vmem:[%s3 + $0x70] sm:$0xff]
  %v737 = vld [vmem:[%s3 + $0x78] sm:$0xff]
  %v738 = vld [vmem:[%s3 + $0x80] sm:$0xff]
  %v739 = vld [vmem:[%s3 + $0x88] sm:$0xff]
  %v740 = vld [vmem:[%s3 + $0x90] sm:$0xff]
  %v741 = vld [vmem:[%s3 + $0x98] sm:$0xff]
  %v742 = vld [vmem:[%s3 + $0xa0] sm:$0xff]
  %v743 = vld [vmem:[%s3 + $0xa8] sm:$0xff]
  %v744 = vld [vmem:[%s3 + $0xb0] sm:$0xff]
  %v745 = vld [vmem:[%s3 + $0xb8] sm:$0xff]
  %v746 = vld [vmem:[%s3 + $0xc0] sm:$0xff]
  %v747 = vld [vmem:[%s3 + $0xc8] sm:$0xff]
  %v748 = vld [vmem:[%s3 + $0xd0] sm:$0xff]
  %v749 = vld [vmem:[%s3 + $0xd8] sm:$0xff]
  %v750 = vld [vmem:[%s3 + $0xe0] sm:$0xff]
  %v751 = vld [vmem:[%s3 + $0xe8] sm:$0xff]
  %v752 = vld [vmem:[%s3 + $0xf0] sm:$0xff]
  %v753 = vld [vmem:[%s3 + $0xf8] sm:$0xff]
  %v786 = vunpack.c.l.b16 %v722
  %v787 = vunpack.c.h.b16 %v722
  %v788 = vunpack.c.l.b16 %v723
  %v789 = vunpack.c.h.b16 %v723
  %v790 = vunpack.c.l.b16 %v724
  %v791 = vunpack.c.h.b16 %v724
  %v792 = vunpack.c.l.b16 %v725
  %v793 = vunpack.c.h.b16 %v725
  %v794 = vunpack.c.l.b16 %v726
  %v795 = vunpack.c.h.b16 %v726
  %v796 = vunpack.c.l.b16 %v727
  %v797 = vunpack.c.h.b16 %v727
  %v798 = vunpack.c.l.b16 %v728
  %v799 = vunpack.c.h.b16 %v728
  %v800 = vunpack.c.l.b16 %v729
  %v801 = vunpack.c.h.b16 %v729
  %v802 = vunpack.c.l.b16 %v730
  %v803 = vunpack.c.h.b16 %v730
  %v804 = vunpack.c.l.b16 %v731
  %v805 = vunpack.c.h.b16 %v731
  %v806 = vunpack.c.l.b16 %v732
  %v807 = vunpack.c.h.b16 %v732
  %v808 = vunpack.c.l.b16 %v733
  %v809 = vunpack.c.h.b16 %v733
  %v810 = vunpack.c.l.b16 %v734
  %v811 = vunpack.c.h.b16 %v734
  %v812 = vunpack.c.l.b16 %v735
  %v813 = vunpack.c.h.b16 %v735
  %v814 = vunpack.c.l.b16 %v736
  %v815 = vunpack.c.h.b16 %v736
  %v816 = vunpack.c.l.b16 %v737
  %v817 = vunpack.c.h.b16 %v737
  %v818 = vunpack.c.l.b16 %v738
  %v819 = vunpack.c.h.b16 %v738
  %v820 = vunpack.c.l.b16 %v739
  %v821 = vunpack.c.h.b16 %v739
  %v822 = vunpack.c.l.b16 %v740
  %v823 = vunpack.c.h.b16 %v740
  %v824 = vunpack.c.l.b16 %v741
  %v825 = vunpack.c.h.b16 %v741
  %v826 = vunpack.c.l.b16 %v742
  %v827 = vunpack.c.h.b16 %v742
  %v828 = vunpack.c.l.b16 %v743
  %v829 = vunpack.c.h.b16 %v743
  %v830 = vunpack.c.l.b16 %v744
  %v831 = vunpack.c.h.b16 %v744
  %v832 = vunpack.c.l.b16 %v745
  %v833 = vunpack.c.h.b16 %v745
  %v834 = vunpack.c.l.b16 %v746
  %v835 = vunpack.c.h.b16 %v746
  %v836 = vunpack.c.l.b16 %v747
  %v837 = vunpack.c.h.b16 %v747
  %v838 = vunpack.c.l.b16 %v748
  %v839 = vunpack.c.h.b16 %v748
  %v840 = vunpack.c.l.b16 %v749
  %v841 = vunpack.c.h.b16 %v749
  %v842 = vunpack.c.l.b16 %v750
  %v843 = vunpack.c.h.b16 %v750
  %v844 = vunpack.c.l.b16 %v751
  %v845 = vunpack.c.h.b16 %v751
  %v846 = vunpack.c.l.b16 %v752
  %v847 = vunpack.c.h.b16 %v752
  %v848 = vunpack.c.l.b16 %v753
  %v849 = vunpack.c.h.b16 %v753
  %v850 = vpack.c.b16 %v790, %v786
  %v851 = vpack.c.b16 %v791, %v787
  %v852 = vpack.c.b16 %v792, %v788
  %v853 = vpack.c.b16 %v793, %v789
  %v854 = vpack.c.b16 %v798, %v794
  %v855 = vpack.c.b16 %v799, %v795
  %v856 = vpack.c.b16 %v800, %v796
  %v857 = vpack.c.b16 %v801, %v797
  %v858 = vpack.c.b16 %v806, %v802
  %v859 = vpack.c.b16 %v807, %v803
  %v860 = vpack.c.b16 %v808, %v804
  %v861 = vpack.c.b16 %v809, %v805
  %v862 = vpack.c.b16 %v814, %v810
  %v863 = vpack.c.b16 %v815, %v811
  %v864 = vpack.c.b16 %v816, %v812
  %v865 = vpack.c.b16 %v817, %v813
  %v866 = vpack.c.b16 %v822, %v818
  %v867 = vpack.c.b16 %v823, %v819
  %v868 = vpack.c.b16 %v824, %v820
  %v869 = vpack.c.b16 %v825, %v821
  %v870 = vpack.c.b16 %v830, %v826
  %v871 = vpack.c.b16 %v831, %v827
  %v872 = vpack.c.b16 %v832, %v828
  %v873 = vpack.c.b16 %v833, %v829
  %v874 = vpack.c.b16 %v838, %v834
  %v875 = vpack.c.b16 %v839, %v835
  %v876 = vpack.c.b16 %v840, %v836
  %v877 = vpack.c.b16 %v841, %v837
  %v878 = vpack.c.b16 %v846, %v842
  %v879 = vpack.c.b16 %v847, %v843
  %v880 = vpack.c.b16 %v848, %v844
  %v881 = vpack.c.b16 %v849, %v845
  %914 = vmatpush.bf16.msra.mxu0 %v878
  %915 = vmatpush.bf16.msra.mxu0 %v874
  %916 = vmatpush.bf16.msra.mxu0 %v870
  %917 = vmatpush.bf16.msra.mxu0 %v866
  %918 = vmatpush.bf16.msra.mxu0 %v862
  %919 = vmatpush.bf16.msra.mxu0 %v858
  %920 = vmatpush.bf16.msra.mxu0 %v854
  %921 = vmatpush.bf16.msra.mxu0 %v850
  %922 = vmatmul.bf16.gmra.mxu0 %v721
  %v923 = vpop.f32.mrf.mxu0
  %v924 = vadd.f32 0.0, %v923
  %v925 = vpop.f32.mrf.mxu0
  %926 = vdwg.mxu0
  %927 = vmatpush.bf16.msra.mxu0 %v879
  %928 = vmatpush.bf16.msra.mxu0 %v875
  %929 = vmatpush.bf16.msra.mxu0 %v871
  %930 = vmatpush.bf16.msra.mxu0 %v867
  %931 = vmatpush.bf16.msra.mxu0 %v863
  %932 = vmatpush.bf16.msra.mxu0 %v859
  %933 = vmatpush.bf16.msra.mxu0 %v855
  %934 = vmatpush.bf16.msra.mxu0 %v851
  %935 = vmatmul.bf16.gmra.mxu0 %v721
  %v936 = vpop.f32.mrf.mxu0
  %v937 = vadd.f32 0.0, %v936
  %v938 = vpop.f32.mrf.mxu0
  %939 = vdwg.mxu0
  %940 = vmatpush.bf16.msra.mxu0 %v880
  %941 = vmatpush.bf16.msra.mxu0 %v876
  %942 = vmatpush.bf16.msra.mxu0 %v872
  %943 = vmatpush.bf16.msra.mxu0 %v868
  %944 = vmatpush.bf16.msra.mxu0 %v864
  %945 = vmatpush.bf16.msra.mxu0 %v860
  %946 = vmatpush.bf16.msra.mxu0 %v856
  %947 = vmatpush.bf16.msra.mxu0 %v852
  %948 = vmatmul.bf16.gmra.mxu0 %v721
  %v949 = vpop.f32.mrf.mxu0
  %v950 = vadd.f32 0.0, %v949
  %v951 = vpop.f32.mrf.mxu0
  %952 = vdwg.mxu0
  %953 = vmatpush.bf16.msra.mxu0 %v881
  %954 = vmatpush.bf16.msra.mxu0 %v877
  %955 = vmatpush.bf16.msra.mxu0 %v873
  %956 = vmatpush.bf16.msra.mxu0 %v869
  %957 = vmatpush.bf16.msra.mxu0 %v865
  %958 = vmatpush.bf16.msra.mxu0 %v861
  %959 = vmatpush.bf16.msra.mxu0 %v857
  %960 = vmatpush.bf16.msra.mxu0 %v853
  %961 = vmatmul.bf16.gmra.mxu0 %v721
  %v962 = vpop.f32.mrf.mxu0
  %v963 = vadd.f32 0.0, %v962
  %v964 = vpop.f32.mrf.mxu0
  %965 = vdwg.mxu0
  %v966 = vadd.f32 %v717, %v924
  %v967 = vadd.f32 %v718, %v937
  %v968 = vadd.f32 %v719, %v950
  %v969 = vadd.f32 %v720, %v963
  %v970 = vxor.u32 %v966, 2147483648
  %v971 = vmul.f32 %v970, 1.442695
  %v972 = vpow.pop %v971
  %v973 = vadd.f32 %v972, 1.0
  %v974 = vrcp.pop %v973
  %v975 = vmul.f32 %v973, %v974
  %v976 = vsub.f32 1.0, %v975
  %v977 = vmul.f32 %v974, %v976
  %v978 = vadd.f32 %v974, %v977
  %vm979 = vweird.f32 %v973
  %vm980 = vweird.f32 %v974
  %vm981 = vmor %vm979, %vm980
  %v982 = vsel %vm981, %v974, %v978
  %v983 = vand.u32 2147483647, %v973
  %vm984 = vcmp.eq.f32.partialorder %v983, 8.507059e+37
  %v985 = vand.u32 %v973, 2147483648
  %v986 = vor.u32 1.1754944e-38, %v985
  %v987 = vsel %vm984, %v986, %v982
  %v988 = vmul.f32 1.0, %v987
  %v989 = vxor.u32 %v967, 2147483648
  %v990 = vmul.f32 %v989, 1.442695
  %v991 = vpow.pop %v990
  %v992 = vadd.f32 %v991, 1.0
  %v993 = vrcp.pop %v992
  %v994 = vmul.f32 %v992, %v993
  %v995 = vsub.f32 1.0, %v994
  %v996 = vmul.f32 %v993, %v995
  %v997 = vadd.f32 %v993, %v996
  %vm998 = vweird.f32 %v992
  %vm999 = vweird.f32 %v993
  %vm1000 = vmor %vm998, %vm999
  %v1001 = vsel %vm1000, %v993, %v997
  %v1002 = vand.u32 2147483647, %v992
  %vm1003 = vcmp.eq.f32.partialorder %v1002, 8.507059e+37
  %v1004 = vand.u32 %v992, 2147483648
  %v1005 = vor.u32 1.1754944e-38, %v1004
  %v1006 = vsel %vm1003, %v1005, %v1001
  %v1007 = vmul.f32 1.0, %v1006
  %v1008 = vtanh.pop %v968
  %v1009 = vxor.u32 %v969, 2147483648
  %v1010 = vmul.f32 %v1009, 1.442695
  %v1011 = vpow.pop %v1010
  %v1012 = vadd.f32 %v1011, 1.0
  %v1013 = vrcp.pop %v1012
  %v1014 = vmul.f32 %v1012, %v1013
  %v1015 = vsub.f32 1.0, %v1014
  %v1016 = vmul.f32 %v1013, %v1015
  %v1017 = vadd.f32 %v1013, %v1016
  %vm1018 = vweird.f32 %v1012
  %vm1019 = vweird.f32 %v1013
  %vm1020 = vmor %vm1018, %vm1019
  %v1021 = vsel %vm1020, %v1013, %v1017
  %v1022 = vand.u32 2147483647, %v1012
  %vm1023 = vcmp.eq.f32.partialorder %v1022, 8.507059e+37
  %v1024 = vand.u32 %v1012, 2147483648
  %v1025 = vor.u32 1.1754944e-38, %v1024
  %v1026 = vsel %vm1023, %v1025, %v1021
  %v1027 = vmul.f32 1.0, %v1026
  %v1028 = vmul.f32 %v1007, %v712
  %v1029 = vmul.f32 %v988, %v1008
  %v1030 = vadd.f32 %v1028, %v1029
  %v1031 = vtanh.pop %v1030
  %v1032 = vmul.f32 %v1027, %v1031
  %s1033 = scalar_lea.vmem [#allocation3], 8
  %1034 = vst [vmem:[%s1033] sm:$0xff] %v1032
  %s1035 = scalar_lea.vmem [#allocation2], 64
  %v1036 = vld [vmem:[%s1035] sm:$0xff]
  %v1037 = vld [vmem:[%s1035 + $0x8] sm:$0xff]
  %v1038 = vld [vmem:[%s1035 + $0x10] sm:$0xff]
  %v1039 = vld [vmem:[%s1035 + $0x18] sm:$0xff]
  %v1040 = vpack.c.bf16 %v1032, %v1032
  %v1041 = vld [vmem:[%s3] sm:$0xff]
  %v1042 = vld [vmem:[%s3 + $0x8] sm:$0xff]
  %v1043 = vld [vmem:[%s3 + $0x10] sm:$0xff]
  %v1044 = vld [vmem:[%s3 + $0x18] sm:$0xff]
  %v1045 = vld [vmem:[%s3 + $0x20] sm:$0xff]
  %v1046 = vld [vmem:[%s3 + $0x28] sm:$0xff]
  %v1047 = vld [vmem:[%s3 + $0x30] sm:$0xff]
  %v1048 = vld [vmem:[%s3 + $0x38] sm:$0xff]
  %v1049 = vld [vmem:[%s3 + $0x40] sm:$0xff]
  %v1050 = vld [vmem:[%s3 + $0x48] sm:$0xff]
  %v1051 = vld [vmem:[%s3 + $0x50] sm:$0xff]
  %v1052 = vld [vmem:[%s3 + $0x58] sm:$0xff]
  %v1053 = vld [vmem:[%s3 + $0x60] sm:$0xff]
  %v1054 = vld [vmem:[%s3 + $0x68] sm:$0xff]
  %v1055 = vld [vmem:[%s3 + $0x70] sm:$0xff]
  %v1056 = vld [vmem:[%s3 + $0x78] sm:$0xff]
  %v1057 = vld [vmem:[%s3 + $0x80] sm:$0xff]
  %v1058 = vld [vmem:[%s3 + $0x88] sm:$0xff]
  %v1059 = vld [vmem:[%s3 + $0x90] sm:$0xff]
  %v1060 = vld [vmem:[%s3 + $0x98] sm:$0xff]
  %v1061 = vld [vmem:[%s3 + $0xa0] sm:$0xff]
  %v1062 = vld [vmem:[%s3 + $0xa8] sm:$0xff]
  %v1063 = vld [vmem:[%s3 + $0xb0] sm:$0xff]
  %v1064 = vld [vmem:[%s3 + $0xb8] sm:$0xff]
  %v1065 = vld [vmem:[%s3 + $0xc0] sm:$0xff]
  %v1066 = vld [vmem:[%s3 + $0xc8] sm:$0xff]
  %v1067 = vld [vmem:[%s3 + $0xd0] sm:$0xff]
  %v1068 = vld [vmem:[%s3 + $0xd8] sm:$0xff]
  %v1069 = vld [vmem:[%s3 + $0xe0] sm:$0xff]
  %v1070 = vld [vmem:[%s3 + $0xe8] sm:$0xff]
  %v1071 = vld [vmem:[%s3 + $0xf0] sm:$0xff]
  %v1072 = vld [vmem:[%s3 + $0xf8] sm:$0xff]
  %v1105 = vunpack.c.l.b16 %v1041
  %v1106 = vunpack.c.h.b16 %v1041
  %v1107 = vunpack.c.l.b16 %v1042
  %v1108 = vunpack.c.h.b16 %v1042
  %v1109 = vunpack.c.l.b16 %v1043
  %v1110 = vunpack.c.h.b16 %v1043
  %v1111 = vunpack.c.l.b16 %v1044
  %v1112 = vunpack.c.h.b16 %v1044
  %v1113 = vunpack.c.l.b16 %v1045
  %v1114 = vunpack.c.h.b16 %v1045
  %v1115 = vunpack.c.l.b16 %v1046
  %v1116 = vunpack.c.h.b16 %v1046
  %v1117 = vunpack.c.l.b16 %v1047
  %v1118 = vunpack.c.h.b16 %v1047
  %v1119 = vunpack.c.l.b16 %v1048
  %v1120 = vunpack.c.h.b16 %v1048
  %v1121 = vunpack.c.l.b16 %v1049
  %v1122 = vunpack.c.h.b16 %v1049
  %v1123 = vunpack.c.l.b16 %v1050
  %v1124 = vunpack.c.h.b16 %v1050
  %v1125 = vunpack.c.l.b16 %v1051
  %v1126 = vunpack.c.h.b16 %v1051
  %v1127 = vunpack.c.l.b16 %v1052
  %v1128 = vunpack.c.h.b16 %v1052
  %v1129 = vunpack.c.l.b16 %v1053
  %v1130 = vunpack.c.h.b16 %v1053
  %v1131 = vunpack.c.l.b16 %v1054
  %v1132 = vunpack.c.h.b16 %v1054
  %v1133 = vunpack.c.l.b16 %v1055
  %v1134 = vunpack.c.h.b16 %v1055
  %v1135 = vunpack.c.l.b16 %v1056
  %v1136 = vunpack.c.h.b16 %v1056
  %v1137 = vunpack.c.l.b16 %v1057
  %v1138 = vunpack.c.h.b16 %v1057
  %v1139 = vunpack.c.l.b16 %v1058
  %v1140 = vunpack.c.h.b16 %v1058
  %v1141 = vunpack.c.l.b16 %v1059
  %v1142 = vunpack.c.h.b16 %v1059
  %v1143 = vunpack.c.l.b16 %v1060
  %v1144 = vunpack.c.h.b16 %v1060
  %v1145 = vunpack.c.l.b16 %v1061
  %v1146 = vunpack.c.h.b16 %v1061
  %v1147 = vunpack.c.l.b16 %v1062
  %v1148 = vunpack.c.h.b16 %v1062
  %v1149 = vunpack.c.l.b16 %v1063
  %v1150 = vunpack.c.h.b16 %v1063
  %v1151 = vunpack.c.l.b16 %v1064
  %v1152 = vunpack.c.h.b16 %v1064
  %v1153 = vunpack.c.l.b16 %v1065
  %v1154 = vunpack.c.h.b16 %v1065
  %v1155 = vunpack.c.l.b16 %v1066
  %v1156 = vunpack.c.h.b16 %v1066
  %v1157 = vunpack.c.l.b16 %v1067
  %v1158 = vunpack.c.h.b16 %v1067
  %v1159 = vunpack.c.l.b16 %v1068
  %v1160 = vunpack.c.h.b16 %v1068
  %v1161 = vunpack.c.l.b16 %v1069
  %v1162 = vunpack.c.h.b16 %v1069
  %v1163 = vunpack.c.l.b16 %v1070
  %v1164 = vunpack.c.h.b16 %v1070
  %v1165 = vunpack.c.l.b16 %v1071
  %v1166 = vunpack.c.h.b16 %v1071
  %v1167 = vunpack.c.l.b16 %v1072
  %v1168 = vunpack.c.h.b16 %v1072
  %v1169 = vpack.c.b16 %v1109, %v1105
  %v1170 = vpack.c.b16 %v1110, %v1106
  %v1171 = vpack.c.b16 %v1111, %v1107
  %v1172 = vpack.c.b16 %v1112, %v1108
  %v1173 = vpack.c.b16 %v1117, %v1113
  %v1174 = vpack.c.b16 %v1118, %v1114
  %v1175 = vpack.c.b16 %v1119, %v1115
  %v1176 = vpack.c.b16 %v1120, %v1116
  %v1177 = vpack.c.b16 %v1125, %v1121
  %v1178 = vpack.c.b16 %v1126, %v1122
  %v1179 = vpack.c.b16 %v1127, %v1123
  %v1180 = vpack.c.b16 %v1128, %v1124
  %v1181 = vpack.c.b16 %v1133, %v1129
  %v1182 = vpack.c.b16 %v1134, %v1130
  %v1183 = vpack.c.b16 %v1135, %v1131
  %v1184 = vpack.c.b16 %v1136, %v1132
  %v1185 = vpack.c.b16 %v1141, %v1137
  %v1186 = vpack.c.b16 %v1142, %v1138
  %v1187 = vpack.c.b16 %v1143, %v1139
  %v1188 = vpack.c.b16 %v1144, %v1140
  %v1189 = vpack.c.b16 %v1149, %v1145
  %v1190 = vpack.c.b16 %v1150, %v1146
  %v1191 = vpack.c.b16 %v1151, %v1147
  %v1192 = vpack.c.b16 %v1152, %v1148
  %v1193 = vpack.c.b16 %v1157, %v1153
  %v1194 = vpack.c.b16 %v1158, %v1154
  %v1195 = vpack.c.b16 %v1159, %v1155
  %v1196 = vpack.c.b16 %v1160, %v1156
  %v1197 = vpack.c.b16 %v1165, %v1161
  %v1198 = vpack.c.b16 %v1166, %v1162
  %v1199 = vpack.c.b16 %v1167, %v1163
  %v1200 = vpack.c.b16 %v1168, %v1164
  %1233 = vmatpush.bf16.msra.mxu0 %v1197
  %1234 = vmatpush.bf16.msra.mxu0 %v1193
  %1235 = vmatpush.bf16.msra.mxu0 %v1189
  %1236 = vmatpush.bf16.msra.mxu0 %v1185
  %1237 = vmatpush.bf16.msra.mxu0 %v1181
  %1238 = vmatpush.bf16.msra.mxu0 %v1177
  %1239 = vmatpush.bf16.msra.mxu0 %v1173
  %1240 = vmatpush.bf16.msra.mxu0 %v1169
  %1241 = vmatmul.bf16.gmra.mxu0 %v1040
  %v1242 = vpop.f32.mrf.mxu0
  %v1243 = vadd.f32 0.0, %v1242
  %v1244 = vpop.f32.mrf.mxu0
  %1245 = vdwg.mxu0
  %1246 = vmatpush.bf16.msra.mxu0 %v1198
  %1247 = vmatpush.bf16.msra.mxu0 %v1194
  %1248 = vmatpush.bf16.msra.mxu0 %v1190
  %1249 = vmatpush.bf16.msra.mxu0 %v1186
  %1250 = vmatpush.bf16.msra.mxu0 %v1182
  %1251 = vmatpush.bf16.msra.mxu0 %v1178
  %1252 = vmatpush.bf16.msra.mxu0 %v1174
  %1253 = vmatpush.bf16.msra.mxu0 %v1170
  %1254 = vmatmul.bf16.gmra.mxu0 %v1040
  %v1255 = vpop.f32.mrf.mxu0
  %v1256 = vadd.f32 0.0, %v1255
  %v1257 = vpop.f32.mrf.mxu0
  %1258 = vdwg.mxu0
  %1259 = vmatpush.bf16.msra.mxu0 %v1199
  %1260 = vmatpush.bf16.msra.mxu0 %v1195
  %1261 = vmatpush.bf16.msra.mxu0 %v1191
  %1262 = vmatpush.bf16.msra.mxu0 %v1187
  %1263 = vmatpush.bf16.msra.mxu0 %v1183
  %1264 = vmatpush.bf16.msra.mxu0 %v1179
  %1265 = vmatpush.bf16.msra.mxu0 %v1175
  %1266 = vmatpush.bf16.msra.mxu0 %v1171
  %1267 = vmatmul.bf16.gmra.mxu0 %v1040
  %v1268 = vpop.f32.mrf.mxu0
  %v1269 = vadd.f32 0.0, %v1268
  %v1270 = vpop.f32.mrf.mxu0
  %1271 = vdwg.mxu0
  %1272 = vmatpush.bf16.msra.mxu0 %v1200
  %1273 = vmatpush.bf16.msra.mxu0 %v1196
  %1274 = vmatpush.bf16.msra.mxu0 %v1192
  %1275 = vmatpush.bf16.msra.mxu0 %v1188
  %1276 = vmatpush.bf16.msra.mxu0 %v1184
  %1277 = vmatpush.bf16.msra.mxu0 %v1180
  %1278 = vmatpush.bf16.msra.mxu0 %v1176
  %1279 = vmatpush.bf16.msra.mxu0 %v1172
  %1280 = vmatmul.bf16.gmra.mxu0 %v1040
  %v1281 = vpop.f32.mrf.mxu0
  %v1282 = vadd.f32 0.0, %v1281
  %v1283 = vpop.f32.mrf.mxu0
  %1284 = vdwg.mxu0
  %v1285 = vadd.f32 %v1036, %v1243
  %v1286 = vadd.f32 %v1037, %v1256
  %v1287 = vadd.f32 %v1038, %v1269
  %v1288 = vadd.f32 %v1039, %v1282
  %v1289 = vxor.u32 %v1285, 2147483648
  %v1290 = vmul.f32 %v1289, 1.442695
  %v1291 = vpow.pop %v1290
  %v1292 = vadd.f32 %v1291, 1.0
  %v1293 = vrcp.pop %v1292
  %v1294 = vmul.f32 %v1292, %v1293
  %v1295 = vsub.f32 1.0, %v1294
  %v1296 = vmul.f32 %v1293, %v1295
  %v1297 = vadd.f32 %v1293, %v1296
  %vm1298 = vweird.f32 %v1292
  %vm1299 = vweird.f32 %v1293
  %vm1300 = vmor %vm1298, %vm1299
  %v1301 = vsel %vm1300, %v1293, %v1297
  %v1302 = vand.u32 2147483647, %v1292
  %vm1303 = vcmp.eq.f32.partialorder %v1302, 8.507059e+37
  %v1304 = vand.u32 %v1292, 2147483648
  %v1305 = vor.u32 1.1754944e-38, %v1304
  %v1306 = vsel %vm1303, %v1305, %v1301
  %v1307 = vmul.f32 1.0, %v1306
  %v1308 = vxor.u32 %v1286, 2147483648
  %v1309 = vmul.f32 %v1308, 1.442695
  %v1310 = vpow.pop %v1309
  %v1311 = vadd.f32 %v1310, 1.0
  %v1312 = vrcp.pop %v1311
  %v1313 = vmul.f32 %v1311, %v1312
  %v1314 = vsub.f32 1.0, %v1313
  %v1315 = vmul.f32 %v1312, %v1314
  %v1316 = vadd.f32 %v1312, %v1315
  %vm1317 = vweird.f32 %v1311
  %vm1318 = vweird.f32 %v1312
  %vm1319 = vmor %vm1317, %vm1318
  %v1320 = vsel %vm1319, %v1312, %v1316
  %v1321 = vand.u32 2147483647, %v1311
  %vm1322 = vcmp.eq.f32.partialorder %v1321, 8.507059e+37
  %v1323 = vand.u32 %v1311, 2147483648
  %v1324 = vor.u32 1.1754944e-38, %v1323
  %v1325 = vsel %vm1322, %v1324, %v1320
  %v1326 = vmul.f32 1.0, %v1325
  %v1327 = vtanh.pop %v1287
  %v1328 = vxor.u32 %v1288, 2147483648
  %v1329 = vmul.f32 %v1328, 1.442695
  %v1330 = vpow.pop %v1329
  %v1331 = vadd.f32 %v1330, 1.0
  %v1332 = vrcp.pop %v1331
  %v1333 = vmul.f32 %v1331, %v1332
  %v1334 = vsub.f32 1.0, %v1333
  %v1335 = vmul.f32 %v1332, %v1334
  %v1336 = vadd.f32 %v1332, %v1335
  %vm1337 = vweird.f32 %v1331
  %vm1338 = vweird.f32 %v1332
  %vm1339 = vmor %vm1337, %vm1338
  %v1340 = vsel %vm1339, %v1332, %v1336
  %v1341 = vand.u32 2147483647, %v1331
  %vm1342 = vcmp.eq.f32.partialorder %v1341, 8.507059e+37
  %v1343 = vand.u32 %v1331, 2147483648
  %v1344 = vor.u32 1.1754944e-38, %v1343
  %v1345 = vsel %vm1342, %v1344, %v1340
  %v1346 = vmul.f32 1.0, %v1345
  %v1347 = vmul.f32 %v1326, %v1030
  %v1348 = vmul.f32 %v1307, %v1327
  %v1349 = vadd.f32 %v1347, %v1348
  %v1350 = vtanh.pop %v1349
  %v1351 = vmul.f32 %v1346, %v1350
  %s1352 = scalar_lea.vmem [#allocation3], 16
  %1353 = vst [vmem:[%s1352] sm:$0xff] %v1351
  %s1354 = scalar_lea.vmem [#allocation2], 96
  %v1355 = vld [vmem:[%s1354] sm:$0xff]
  %v1356 = vld [vmem:[%s1354 + $0x8] sm:$0xff]
  %v1357 = vld [vmem:[%s1354 + $0x10] sm:$0xff]
  %v1358 = vld [vmem:[%s1354 + $0x18] sm:$0xff]
  %v1359 = vpack.c.bf16 %v1351, %v1351
  %v1360 = vld [vmem:[%s3] sm:$0xff]
  %v1361 = vld [vmem:[%s3 + $0x8] sm:$0xff]
  %v1362 = vld [vmem:[%s3 + $0x10] sm:$0xff]
  %v1363 = vld [vmem:[%s3 + $0x18] sm:$0xff]
  %v1364 = vld [vmem:[%s3 + $0x20] sm:$0xff]
  %v1365 = vld [vmem:[%s3 + $0x28] sm:$0xff]
  %v1366 = vld [vmem:[%s3 + $0x30] sm:$0xff]
  %v1367 = vld [vmem:[%s3 + $0x38] sm:$0xff]
  %v1368 = vld [vmem:[%s3 + $0x40] sm:$0xff]
  %v1369 = vld [vmem:[%s3 + $0x48] sm:$0xff]
  %v1370 = vld [vmem:[%s3 + $0x50] sm:$0xff]
  %v1371 = vld [vmem:[%s3 + $0x58] sm:$0xff]
  %v1372 = vld [vmem:[%s3 + $0x60] sm:$0xff]
  %v1373 = vld [vmem:[%s3 + $0x68] sm:$0xff]
  %v1374 = vld [vmem:[%s3 + $0x70] sm:$0xff]
  %v1375 = vld [vmem:[%s3 + $0x78] sm:$0xff]
  %v1376 = vld [vmem:[%s3 + $0x80] sm:$0xff]
  %v1377 = vld [vmem:[%s3 + $0x88] sm:$0xff]
  %v1378 = vld [vmem:[%s3 + $0x90] sm:$0xff]
  %v1379 = vld [vmem:[%s3 + $0x98] sm:$0xff]
  %v1380 = vld [vmem:[%s3 + $0xa0] sm:$0xff]
  %v1381 = vld [vmem:[%s3 + $0xa8] sm:$0xff]
  %v1382 = vld [vmem:[%s3 + $0xb0] sm:$0xff]
  %v1383 = vld [vmem:[%s3 + $0xb8] sm:$0xff]
  %v1384 = vld [vmem:[%s3 + $0xc0] sm:$0xff]
  %v1385 = vld [vmem:[%s3 + $0xc8] sm:$0xff]
  %v1386 = vld [vmem:[%s3 + $0xd0] sm:$0xff]
  %v1387 = vld [vmem:[%s3 + $0xd8] sm:$0xff]
  %v1388 = vld [vmem:[%s3 + $0xe0] sm:$0xff]
  %v1389 = vld [vmem:[%s3 + $0xe8] sm:$0xff]
  %v1390 = vld [vmem:[%s3 + $0xf0] sm:$0xff]
  %v1391 = vld [vmem:[%s3 + $0xf8] sm:$0xff]
  %v1424 = vunpack.c.l.b16 %v1360
  %v1425 = vunpack.c.h.b16 %v1360
  %v1426 = vunpack.c.l.b16 %v1361
  %v1427 = vunpack.c.h.b16 %v1361
  %v1428 = vunpack.c.l.b16 %v1362
  %v1429 = vunpack.c.h.b16 %v1362
  %v1430 = vunpack.c.l.b16 %v1363
  %v1431 = vunpack.c.h.b16 %v1363
  %v1432 = vunpack.c.l.b16 %v1364
  %v1433 = vunpack.c.h.b16 %v1364
  %v1434 = vunpack.c.l.b16 %v1365
  %v1435 = vunpack.c.h.b16 %v1365
  %v1436 = vunpack.c.l.b16 %v1366
  %v1437 = vunpack.c.h.b16 %v1366
  %v1438 = vunpack.c.l.b16 %v1367
  %v1439 = vunpack.c.h.b16 %v1367
  %v1440 = vunpack.c.l.b16 %v1368
  %v1441 = vunpack.c.h.b16 %v1368
  %v1442 = vunpack.c.l.b16 %v1369
  %v1443 = vunpack.c.h.b16 %v1369
  %v1444 = vunpack.c.l.b16 %v1370
  %v1445 = vunpack.c.h.b16 %v1370
  %v1446 = vunpack.c.l.b16 %v1371
  %v1447 = vunpack.c.h.b16 %v1371
  %v1448 = vunpack.c.l.b16 %v1372
  %v1449 = vunpack.c.h.b16 %v1372
  %v1450 = vunpack.c.l.b16 %v1373
  %v1451 = vunpack.c.h.b16 %v1373
  %v1452 = vunpack.c.l.b16 %v1374
  %v1453 = vunpack.c.h.b16 %v1374
  %v1454 = vunpack.c.l.b16 %v1375
  %v1455 = vunpack.c.h.b16 %v1375
  %v1456 = vunpack.c.l.b16 %v1376
  %v1457 = vunpack.c.h.b16 %v1376
  %v1458 = vunpack.c.l.b16 %v1377
  %v1459 = vunpack.c.h.b16 %v1377
  %v1460 = vunpack.c.l.b16 %v1378
  %v1461 = vunpack.c.h.b16 %v1378
  %v1462 = vunpack.c.l.b16 %v1379
  %v1463 = vunpack.c.h.b16 %v1379
  %v1464 = vunpack.c.l.b16 %v1380
  %v1465 = vunpack.c.h.b16 %v1380
  %v1466 = vunpack.c.l.b16 %v1381
  %v1467 = vunpack.c.h.b16 %v1381
  %v1468 = vunpack.c.l.b16 %v1382
  %v1469 = vunpack.c.h.b16 %v1382
  %v1470 = vunpack.c.l.b16 %v1383
  %v1471 = vunpack.c.h.b16 %v1383
  %v1472 = vunpack.c.l.b16 %v1384
  %v1473 = vunpack.c.h.b16 %v1384
  %v1474 = vunpack.c.l.b16 %v1385
  %v1475 = vunpack.c.h.b16 %v1385
  %v1476 = vunpack.c.l.b16 %v1386
  %v1477 = vunpack.c.h.b16 %v1386
  %v1478 = vunpack.c.l.b16 %v1387
  %v1479 = vunpack.c.h.b16 %v1387
  %v1480 = vunpack.c.l.b16 %v1388
  %v1481 = vunpack.c.h.b16 %v1388
  %v1482 = vunpack.c.l.b16 %v1389
  %v1483 = vunpack.c.h.b16 %v1389
  %v1484 = vunpack.c.l.b16 %v1390
  %v1485 = vunpack.c.h.b16 %v1390
  %v1486 = vunpack.c.l.b16 %v1391
  %v1487 = vunpack.c.h.b16 %v1391
  %v1488 = vpack.c.b16 %v1428, %v1424
  %v1489 = vpack.c.b16 %v1429, %v1425
  %v1490 = vpack.c.b16 %v1430, %v1426
  %v1491 = vpack.c.b16 %v1431, %v1427
  %v1492 = vpack.c.b16 %v1436, %v1432
  %v1493 = vpack.c.b16 %v1437, %v1433
  %v1494 = vpack.c.b16 %v1438, %v1434
  %v1495 = vpack.c.b16 %v1439, %v1435
  %v1496 = vpack.c.b16 %v1444, %v1440
  %v1497 = vpack.c.b16 %v1445, %v1441
  %v1498 = vpack.c.b16 %v1446, %v1442
  %v1499 = vpack.c.b16 %v1447, %v1443
  %v1500 = vpack.c.b16 %v1452, %v1448
  %v1501 = vpack.c.b16 %v1453, %v1449
  %v1502 = vpack.c.b16 %v1454, %v1450
  %v1503 = vpack.c.b16 %v1455, %v1451
  %v1504 = vpack.c.b16 %v1460, %v1456
  %v1505 = vpack.c.b16 %v1461, %v1457
  %v1506 = vpack.c.b16 %v1462, %v1458
  %v1507 = vpack.c.b16 %v1463, %v1459
  %v1508 = vpack.c.b16 %v1468, %v1464
  %v1509 = vpack.c.b16 %v1469, %v1465
  %v1510 = vpack.c.b16 %v1470, %v1466
  %v1511 = vpack.c.b16 %v1471, %v1467
  %v1512 = vpack.c.b16 %v1476, %v1472
  %v1513 = vpack.c.b16 %v1477, %v1473
  %v1514 = vpack.c.b16 %v1478, %v1474
  %v1515 = vpack.c.b16 %v1479, %v1475
  %v1516 = vpack.c.b16 %v1484, %v1480
  %v1517 = vpack.c.b16 %v1485, %v1481
  %v1518 = vpack.c.b16 %v1486, %v1482
  %v1519 = vpack.c.b16 %v1487, %v1483
  %1552 = vmatpush.bf16.msra.mxu0 %v1516
  %1553 = vmatpush.bf16.msra.mxu0 %v1512
  %1554 = vmatpush.bf16.msra.mxu0 %v1508
  %1555 = vmatpush.bf16.msra.mxu0 %v1504
  %1556 = vmatpush.bf16.msra.mxu0 %v1500
  %1557 = vmatpush.bf16.msra.mxu0 %v1496
  %1558 = vmatpush.bf16.msra.mxu0 %v1492
  %1559 = vmatpush.bf16.msra.mxu0 %v1488
  %1560 = vmatmul.bf16.gmra.mxu0 %v1359
  %v1561 = vpop.f32.mrf.mxu0
  %v1562 = vadd.f32 0.0, %v1561
  %v1563 = vpop.f32.mrf.mxu0
  %1564 = vdwg.mxu0
  %1565 = vmatpush.bf16.msra.mxu0 %v1517
  %1566 = vmatpush.bf16.msra.mxu0 %v1513
  %1567 = vmatpush.bf16.msra.mxu0 %v1509
  %1568 = vmatpush.bf16.msra.mxu0 %v1505
  %1569 = vmatpush.bf16.msra.mxu0 %v1501
  %1570 = vmatpush.bf16.msra.mxu0 %v1497
  %1571 = vmatpush.bf16.msra.mxu0 %v1493
  %1572 = vmatpush.bf16.msra.mxu0 %v1489
  %1573 = vmatmul.bf16.gmra.mxu0 %v1359
  %v1574 = vpop.f32.mrf.mxu0
  %v1575 = vadd.f32 0.0, %v1574
  %v1576 = vpop.f32.mrf.mxu0
  %1577 = vdwg.mxu0
  %1578 = vmatpush.bf16.msra.mxu0 %v1518
  %1579 = vmatpush.bf16.msra.mxu0 %v1514
  %1580 = vmatpush.bf16.msra.mxu0 %v1510
  %1581 = vmatpush.bf16.msra.mxu0 %v1506
  %1582 = vmatpush.bf16.msra.mxu0 %v1502
  %1583 = vmatpush.bf16.msra.mxu0 %v1498
  %1584 = vmatpush.bf16.msra.mxu0 %v1494
  %1585 = vmatpush.bf16.msra.mxu0 %v1490
  %1586 = vmatmul.bf16.gmra.mxu0 %v1359
  %v1587 = vpop.f32.mrf.mxu0
  %v1588 = vadd.f32 0.0, %v1587
  %v1589 = vpop.f32.mrf.mxu0
  %1590 = vdwg.mxu0
  %1591 = vmatpush.bf16.msra.mxu0 %v1519
  %1592 = vmatpush.bf16.msra.mxu0 %v1515
  %1593 = vmatpush.bf16.msra.mxu0 %v1511
  %1594 = vmatpush.bf16.msra.mxu0 %v1507
  %1595 = vmatpush.bf16.msra.mxu0 %v1503
  %1596 = vmatpush.bf16.msra.mxu0 %v1499
  %1597 = vmatpush.bf16.msra.mxu0 %v1495
  %1598 = vmatpush.bf16.msra.mxu0 %v1491
  %1599 = vmatmul.bf16.gmra.mxu0 %v1359
  %v1600 = vpop.f32.mrf.mxu0
  %v1601 = vadd.f32 0.0, %v1600
  %v1602 = vpop.f32.mrf.mxu0
  %1603 = vdwg.mxu0
  %v1604 = vadd.f32 %v1355, %v1562
  %v1605 = vadd.f32 %v1356, %v1575
  %v1606 = vadd.f32 %v1357, %v1588
  %v1607 = vadd.f32 %v1358, %v1601
  %v1608 = vxor.u32 %v1604, 2147483648
  %v1609 = vmul.f32 %v1608, 1.442695
  %v1610 = vpow.pop %v1609
  %v1611 = vadd.f32 %v1610, 1.0
  %v1612 = vrcp.pop %v1611
  %v1613 = vmul.f32 %v1611, %v1612
  %v1614 = vsub.f32 1.0, %v1613
  %v1615 = vmul.f32 %v1612, %v1614
  %v1616 = vadd.f32 %v1612, %v1615
  %vm1617 = vweird.f32 %v1611
  %vm1618 = vweird.f32 %v1612
  %vm1619 = vmor %vm1617, %vm1618
  %v1620 = vsel %vm1619, %v1612, %v1616
  %v1621 = vand.u32 2147483647, %v1611
  %vm1622 = vcmp.eq.f32.partialorder %v1621, 8.507059e+37
  %v1623 = vand.u32 %v1611, 2147483648
  %v1624 = vor.u32 1.1754944e-38, %v1623
  %v1625 = vsel %vm1622, %v1624, %v1620
  %v1626 = vmul.f32 1.0, %v1625
  %v1627 = vxor.u32 %v1605, 2147483648
  %v1628 = vmul.f32 %v1627, 1.442695
  %v1629 = vpow.pop %v1628
  %v1630 = vadd.f32 %v1629, 1.0
  %v1631 = vrcp.pop %v1630
  %v1632 = vmul.f32 %v1630, %v1631
  %v1633 = vsub.f32 1.0, %v1632
  %v1634 = vmul.f32 %v1631, %v1633
  %v1635 = vadd.f32 %v1631, %v1634
  %vm1636 = vweird.f32 %v1630
  %vm1637 = vweird.f32 %v1631
  %vm1638 = vmor %vm1636, %vm1637
  %v1639 = vsel %vm1638, %v1631, %v1635
  %v1640 = vand.u32 2147483647, %v1630
  %vm1641 = vcmp.eq.f32.partialorder %v1640, 8.507059e+37
  %v1642 = vand.u32 %v1630, 2147483648
  %v1643 = vor.u32 1.1754944e-38, %v1642
  %v1644 = vsel %vm1641, %v1643, %v1639
  %v1645 = vmul.f32 1.0, %v1644
  %v1646 = vtanh.pop %v1606
  %v1647 = vxor.u32 %v1607, 2147483648
  %v1648 = vmul.f32 %v1647, 1.442695
  %v1649 = vpow.pop %v1648
  %v1650 = vadd.f32 %v1649, 1.0
  %v1651 = vrcp.pop %v1650
  %v1652 = vmul.f32 %v1650, %v1651
  %v1653 = vsub.f32 1.0, %v1652
  %v1654 = vmul.f32 %v1651, %v1653
  %v1655 = vadd.f32 %v1651, %v1654
  %vm1656 = vweird.f32 %v1650
  %vm1657 = vweird.f32 %v1651
  %vm1658 = vmor %vm1656, %vm1657
  %v1659 = vsel %vm1658, %v1651, %v1655
  %v1660 = vand.u32 2147483647, %v1650
  %vm1661 = vcmp.eq.f32.partialorder %v1660, 8.507059e+37
  %v1662 = vand.u32 %v1650, 2147483648
  %v1663 = vor.u32 1.1754944e-38, %v1662
  %v1664 = vsel %vm1661, %v1663, %v1659
  %v1665 = vmul.f32 1.0, %v1664
  %v1666 = vmul.f32 %v1645, %v1349
  %v1667 = vmul.f32 %v1626, %v1646
  %v1668 = vadd.f32 %v1666, %v1667
  %v1669 = vtanh.pop %v1668
  %v1670 = vmul.f32 %v1665, %v1669
  %s1671 = scalar_lea.vmem [#allocation3], 24
  %1672 = vst [vmem:[%s1671] sm:$0xff] %v1670
  %s1673 = scalar_lea.vmem [#allocation2], 128
  %v1674 = vld [vmem:[%s1673] sm:$0xff]
  %v1675 = vld [vmem:[%s1673 + $0x8] sm:$0xff]
  %v1676 = vld [vmem:[%s1673 + $0x10] sm:$0xff]
  %v1677 = vld [vmem:[%s1673 + $0x18] sm:$0xff]
  %v1678 = vpack.c.bf16 %v1670, %v1670
  %v1679 = vld [vmem:[%s3] sm:$0xff]
  %v1680 = vld [vmem:[%s3 + $0x8] sm:$0xff]
  %v1681 = vld [vmem:[%s3 + $0x10] sm:$0xff]
  %v1682 = vld [vmem:[%s3 + $0x18] sm:$0xff]
  %v1683 = vld [vmem:[%s3 + $0x20] sm:$0xff]
  %v1684 = vld [vmem:[%s3 + $0x28] sm:$0xff]
  %v1685 = vld [vmem:[%s3 + $0x30] sm:$0xff]
  %v1686 = vld [vmem:[%s3 + $0x38] sm:$0xff]
  %v1687 = vld [vmem:[%s3 + $0x40] sm:$0xff]
  %v1688 = vld [vmem:[%s3 + $0x48] sm:$0xff]
  %v1689 = vld [vmem:[%s3 + $0x50] sm:$0xff]
  %v1690 = vld [vmem:[%s3 + $0x58] sm:$0xff]
  %v1691 = vld [vmem:[%s3 + $0x60] sm:$0xff]
  %v1692 = vld [vmem:[%s3 + $0x68] sm:$0xff]
  %v1693 = vld [vmem:[%s3 + $0x70] sm:$0xff]
  %v1694 = vld [vmem:[%s3 + $0x78] sm:$0xff]
  %v1695 = vld [vmem:[%s3 + $0x80] sm:$0xff]
  %v1696 = vld [vmem:[%s3 + $0x88] sm:$0xff]
  %v1697 = vld [vmem:[%s3 + $0x90] sm:$0xff]
  %v1698 = vld [vmem:[%s3 + $0x98] sm:$0xff]
  %v1699 = vld [vmem:[%s3 + $0xa0] sm:$0xff]
  %v1700 = vld [vmem:[%s3 + $0xa8] sm:$0xff]
  %v1701 = vld [vmem:[%s3 + $0xb0] sm:$0xff]
  %v1702 = vld [vmem:[%s3 + $0xb8] sm:$0xff]
  %v1703 = vld [vmem:[%s3 + $0xc0] sm:$0xff]
  %v1704 = vld [vmem:[%s3 + $0xc8] sm:$0xff]
  %v1705 = vld [vmem:[%s3 + $0xd0] sm:$0xff]
  %v1706 = vld [vmem:[%s3 + $0xd8] sm:$0xff]
  %v1707 = vld [vmem:[%s3 + $0xe0] sm:$0xff]
  %v1708 = vld [vmem:[%s3 + $0xe8] sm:$0xff]
  %v1709 = vld [vmem:[%s3 + $0xf0] sm:$0xff]
  %v1710 = vld [vmem:[%s3 + $0xf8] sm:$0xff]
  %v1743 = vunpack.c.l.b16 %v1679
  %v1744 = vunpack.c.h.b16 %v1679
  %v1745 = vunpack.c.l.b16 %v1680
  %v1746 = vunpack.c.h.b16 %v1680
  %v1747 = vunpack.c.l.b16 %v1681
  %v1748 = vunpack.c.h.b16 %v1681
  %v1749 = vunpack.c.l.b16 %v1682
  %v1750 = vunpack.c.h.b16 %v1682
  %v1751 = vunpack.c.l.b16 %v1683
  %v1752 = vunpack.c.h.b16 %v1683
  %v1753 = vunpack.c.l.b16 %v1684
  %v1754 = vunpack.c.h.b16 %v1684
  %v1755 = vunpack.c.l.b16 %v1685
  %v1756 = vunpack.c.h.b16 %v1685
  %v1757 = vunpack.c.l.b16 %v1686
  %v1758 = vunpack.c.h.b16 %v1686
  %v1759 = vunpack.c.l.b16 %v1687
  %v1760 = vunpack.c.h.b16 %v1687
  %v1761 = vunpack.c.l.b16 %v1688
  %v1762 = vunpack.c.h.b16 %v1688
  %v1763 = vunpack.c.l.b16 %v1689
  %v1764 = vunpack.c.h.b16 %v1689
  %v1765 = vunpack.c.l.b16 %v1690
  %v1766 = vunpack.c.h.b16 %v1690
  %v1767 = vunpack.c.l.b16 %v1691
  %v1768 = vunpack.c.h.b16 %v1691
  %v1769 = vunpack.c.l.b16 %v1692
  %v1770 = vunpack.c.h.b16 %v1692
  %v1771 = vunpack.c.l.b16 %v1693
  %v1772 = vunpack.c.h.b16 %v1693
  %v1773 = vunpack.c.l.b16 %v1694
  %v1774 = vunpack.c.h.b16 %v1694
  %v1775 = vunpack.c.l.b16 %v1695
  %v1776 = vunpack.c.h.b16 %v1695
  %v1777 = vunpack.c.l.b16 %v1696
  %v1778 = vunpack.c.h.b16 %v1696
  %v1779 = vunpack.c.l.b16 %v1697
  %v1780 = vunpack.c.h.b16 %v1697
  %v1781 = vunpack.c.l.b16 %v1698
  %v1782 = vunpack.c.h.b16 %v1698
  %v1783 = vunpack.c.l.b16 %v1699
  %v1784 = vunpack.c.h.b16 %v1699
  %v1785 = vunpack.c.l.b16 %v1700
  %v1786 = vunpack.c.h.b16 %v1700
  %v1787 = vunpack.c.l.b16 %v1701
  %v1788 = vunpack.c.h.b16 %v1701
  %v1789 = vunpack.c.l.b16 %v1702
  %v1790 = vunpack.c.h.b16 %v1702
  %v1791 = vunpack.c.l.b16 %v1703
  %v1792 = vunpack.c.h.b16 %v1703
  %v1793 = vunpack.c.l.b16 %v1704
  %v1794 = vunpack.c.h.b16 %v1704
  %v1795 = vunpack.c.l.b16 %v1705
  %v1796 = vunpack.c.h.b16 %v1705
  %v1797 = vunpack.c.l.b16 %v1706
  %v1798 = vunpack.c.h.b16 %v1706
  %v1799 = vunpack.c.l.b16 %v1707
  %v1800 = vunpack.c.h.b16 %v1707
  %v1801 = vunpack.c.l.b16 %v1708
  %v1802 = vunpack.c.h.b16 %v1708
  %v1803 = vunpack.c.l.b16 %v1709
  %v1804 = vunpack.c.h.b16 %v1709
  %v1805 = vunpack.c.l.b16 %v1710
  %v1806 = vunpack.c.h.b16 %v1710
  %v1807 = vpack.c.b16 %v1747, %v1743
  %v1808 = vpack.c.b16 %v1748, %v1744
  %v1809 = vpack.c.b16 %v1749, %v1745
  %v1810 = vpack.c.b16 %v1750, %v1746
  %v1811 = vpack.c.b16 %v1755, %v1751
  %v1812 = vpack.c.b16 %v1756, %v1752
  %v1813 = vpack.c.b16 %v1757, %v1753
  %v1814 = vpack.c.b16 %v1758, %v1754
  %v1815 = vpack.c.b16 %v1763, %v1759
  %v1816 = vpack.c.b16 %v1764, %v1760
  %v1817 = vpack.c.b16 %v1765, %v1761
  %v1818 = vpack.c.b16 %v1766, %v1762
  %v1819 = vpack.c.b16 %v1771, %v1767
  %v1820 = vpack.c.b16 %v1772, %v1768
  %v1821 = vpack.c.b16 %v1773, %v1769
  %v1822 = vpack.c.b16 %v1774, %v1770
  %v1823 = vpack.c.b16 %v1779, %v1775
  %v1824 = vpack.c.b16 %v1780, %v1776
  %v1825 = vpack.c.b16 %v1781, %v1777
  %v1826 = vpack.c.b16 %v1782, %v1778
  %v1827 = vpack.c.b16 %v1787, %v1783
  %v1828 = vpack.c.b16 %v1788, %v1784
  %v1829 = vpack.c.b16 %v1789, %v1785
  %v1830 = vpack.c.b16 %v1790, %v1786
  %v1831 = vpack.c.b16 %v1795, %v1791
  %v1832 = vpack.c.b16 %v1796, %v1792
  %v1833 = vpack.c.b16 %v1797, %v1793
  %v1834 = vpack.c.b16 %v1798, %v1794
  %v1835 = vpack.c.b16 %v1803, %v1799
  %v1836 = vpack.c.b16 %v1804, %v1800
  %v1837 = vpack.c.b16 %v1805, %v1801
  %v1838 = vpack.c.b16 %v1806, %v1802
  %1871 = vmatpush.bf16.msra.mxu0 %v1835
  %1872 = vmatpush.bf16.msra.mxu0 %v1831
  %1873 = vmatpush.bf16.msra.mxu0 %v1827
  %1874 = vmatpush.bf16.msra.mxu0 %v1823
  %1875 = vmatpush.bf16.msra.mxu0 %v1819
  %1876 = vmatpush.bf16.msra.mxu0 %v1815
  %1877 = vmatpush.bf16.msra.mxu0 %v1811
  %1878 = vmatpush.bf16.msra.mxu0 %v1807
  %1879 = vmatmul.bf16.gmra.mxu0 %v1678
  %v1880 = vpop.f32.mrf.mxu0
  %v1881 = vadd.f32 0.0, %v1880
  %v1882 = vpop.f32.mrf.mxu0
  %1883 = vdwg.mxu0
  %1884 = vmatpush.bf16.msra.mxu0 %v1836
  %1885 = vmatpush.bf16.msra.mxu0 %v1832
  %1886 = vmatpush.bf16.msra.mxu0 %v1828
  %1887 = vmatpush.bf16.msra.mxu0 %v1824
  %1888 = vmatpush.bf16.msra.mxu0 %v1820
  %1889 = vmatpush.bf16.msra.mxu0 %v1816
  %1890 = vmatpush.bf16.msra.mxu0 %v1812
  %1891 = vmatpush.bf16.msra.mxu0 %v1808
  %1892 = vmatmul.bf16.gmra.mxu0 %v1678
  %v1893 = vpop.f32.mrf.mxu0
  %v1894 = vadd.f32 0.0, %v1893
  %v1895 = vpop.f32.mrf.mxu0
  %1896 = vdwg.mxu0
  %1897 = vmatpush.bf16.msra.mxu0 %v1837
  %1898 = vmatpush.bf16.msra.mxu0 %v1833
  %1899 = vmatpush.bf16.msra.mxu0 %v1829
  %1900 = vmatpush.bf16.msra.mxu0 %v1825
  %1901 = vmatpush.bf16.msra.mxu0 %v1821
  %1902 = vmatpush.bf16.msra.mxu0 %v1817
  %1903 = vmatpush.bf16.msra.mxu0 %v1813
  %1904 = vmatpush.bf16.msra.mxu0 %v1809
  %1905 = vmatmul.bf16.gmra.mxu0 %v1678
  %v1906 = vpop.f32.mrf.mxu0
  %v1907 = vadd.f32 0.0, %v1906
  %v1908 = vpop.f32.mrf.mxu0
  %1909 = vdwg.mxu0
  %1910 = vmatpush.bf16.msra.mxu0 %v1838
  %1911 = vmatpush.bf16.msra.mxu0 %v1834
  %1912 = vmatpush.bf16.msra.mxu0 %v1830
  %1913 = vmatpush.bf16.msra.mxu0 %v1826
  %1914 = vmatpush.bf16.msra.mxu0 %v1822
  %1915 = vmatpush.bf16.msra.mxu0 %v1818
  %1916 = vmatpush.bf16.msra.mxu0 %v1814
  %1917 = vmatpush.bf16.msra.mxu0 %v1810
  %1918 = vmatmul.bf16.gmra.mxu0 %v1678
  %v1919 = vpop.f32.mrf.mxu0
  %v1920 = vadd.f32 0.0, %v1919
  %v1921 = vpop.f32.mrf.mxu0
  %1922 = vdwg.mxu0
  %v1923 = vadd.f32 %v1674, %v1881
  %v1924 = vadd.f32 %v1675, %v1894
  %v1925 = vadd.f32 %v1676, %v1907
  %v1926 = vadd.f32 %v1677, %v1920
  %v1927 = vxor.u32 %v1923, 2147483648
  %v1928 = vmul.f32 %v1927, 1.442695
  %v1929 = vpow.pop %v1928
  %v1930 = vadd.f32 %v1929, 1.0
  %v1931 = vrcp.pop %v1930
  %v1932 = vmul.f32 %v1930, %v1931
  %v1933 = vsub.f32 1.0, %v1932
  %v1934 = vmul.f32 %v1931, %v1933
  %v1935 = vadd.f32 %v1931, %v1934
  %vm1936 = vweird.f32 %v1930
  %vm1937 = vweird.f32 %v1931
  %vm1938 = vmor %vm1936, %vm1937
  %v1939 = vsel %vm1938, %v1931, %v1935
  %v1940 = vand.u32 2147483647, %v1930
  %vm1941 = vcmp.eq.f32.partialorder %v1940, 8.507059e+37
  %v1942 = vand.u32 %v1930, 2147483648
  %v1943 = vor.u32 1.1754944e-38, %v1942
  %v1944 = vsel %vm1941, %v1943, %v1939
  %v1945 = vmul.f32 1.0, %v1944
  %v1946 = vxor.u32 %v1924, 2147483648
  %v1947 = vmul.f32 %v1946, 1.442695
  %v1948 = vpow.pop %v1947
  %v1949 = vadd.f32 %v1948, 1.0
  %v1950 = vrcp.pop %v1949
  %v1951 = vmul.f32 %v1949, %v1950
  %v1952 = vsub.f32 1.0, %v1951
  %v1953 = vmul.f32 %v1950, %v1952
  %v1954 = vadd.f32 %v1950, %v1953
  %vm1955 = vweird.f32 %v1949
  %vm1956 = vweird.f32 %v1950
  %vm1957 = vmor %vm1955, %vm1956
  %v1958 = vsel %vm1957, %v1950, %v1954
  %v1959 = vand.u32 2147483647, %v1949
  %vm1960 = vcmp.eq.f32.partialorder %v1959, 8.507059e+37
  %v1961 = vand.u32 %v1949, 2147483648
  %v1962 = vor.u32 1.1754944e-38, %v1961
  %v1963 = vsel %vm1960, %v1962, %v1958
  %v1964 = vmul.f32 1.0, %v1963
  %v1965 = vtanh.pop %v1925
  %v1966 = vxor.u32 %v1926, 2147483648
  %v1967 = vmul.f32 %v1966, 1.442695
  %v1968 = vpow.pop %v1967
  %v1969 = vadd.f32 %v1968, 1.0
  %v1970 = vrcp.pop %v1969
  %v1971 = vmul.f32 %v1969, %v1970
  %v1972 = vsub.f32 1.0, %v1971
  %v1973 = vmul.f32 %v1970, %v1972
  %v1974 = vadd.f32 %v1970, %v1973
  %vm1975 = vweird.f32 %v1969
  %vm1976 = vweird.f32 %v1970
  %vm1977 = vmor %vm1975, %vm1976
  %v1978 = vsel %vm1977, %v1970, %v1974
  %v1979 = vand.u32 2147483647, %v1969
  %vm1980 = vcmp.eq.f32.partialorder %v1979, 8.507059e+37
  %v1981 = vand.u32 %v1969, 2147483648
  %v1982 = vor.u32 1.1754944e-38, %v1981
  %v1983 = vsel %vm1980, %v1982, %v1978
  %v1984 = vmul.f32 1.0, %v1983
  %v1985 = vmul.f32 %v1964, %v1668
  %v1986 = vmul.f32 %v1945, %v1965
  %v1987 = vadd.f32 %v1985, %v1986
  %v1988 = vtanh.pop %v1987
  %v1989 = vmul.f32 %v1984, %v1988
  %s1990 = scalar_lea.vmem [#allocation3], 32
  %1991 = vst [vmem:[%s1990] sm:$0xff] %v1989
  %s1992 = scalar_lea.vmem [#allocation2], 160
  %v1993 = vld [vmem:[%s1992] sm:$0xff]
  %v1994 = vld [vmem:[%s1992 + $0x8] sm:$0xff]
  %v1995 = vld [vmem:[%s1992 + $0x10] sm:$0xff]
  %v1996 = vld [vmem:[%s1992 + $0x18] sm:$0xff]
  %v1997 = vpack.c.bf16 %v1989, %v1989
  %v1998 = vld [vmem:[%s3] sm:$0xff]
  %v1999 = vld [vmem:[%s3 + $0x8] sm:$0xff]
  %v2000 = vld [vmem:[%s3 + $0x10] sm:$0xff]
  %v2001 = vld [vmem:[%s3 + $0x18] sm:$0xff]
  %v2002 = vld [vmem:[%s3 + $0x20] sm:$0xff]
  %v2003 = vld [vmem:[%s3 + $0x28] sm:$0xff]
  %v2004 = vld [vmem:[%s3 + $0x30] sm:$0xff]
  %v2005 = vld [vmem:[%s3 + $0x38] sm:$0xff]
  %v2006 = vld [vmem:[%s3 + $0x40] sm:$0xff]
  %v2007 = vld [vmem:[%s3 + $0x48] sm:$0xff]
  %v2008 = vld [vmem:[%s3 + $0x50] sm:$0xff]
  %v2009 = vld [vmem:[%s3 + $0x58] sm:$0xff]
  %v2010 = vld [vmem:[%s3 + $0x60] sm:$0xff]
  %v2011 = vld [vmem:[%s3 + $0x68] sm:$0xff]
  %v2012 = vld [vmem:[%s3 + $0x70] sm:$0xff]
  %v2013 = vld [vmem:[%s3 + $0x78] sm:$0xff]
  %v2014 = vld [vmem:[%s3 + $0x80] sm:$0xff]
  %v2015 = vld [vmem:[%s3 + $0x88] sm:$0xff]
  %v2016 = vld [vmem:[%s3 + $0x90] sm:$0xff]
  %v2017 = vld [vmem:[%s3 + $0x98] sm:$0xff]
  %v2018 = vld [vmem:[%s3 + $0xa0] sm:$0xff]
  %v2019 = vld [vmem:[%s3 + $0xa8] sm:$0xff]
  %v2020 = vld [vmem:[%s3 + $0xb0] sm:$0xff]
  %v2021 = vld [vmem:[%s3 + $0xb8] sm:$0xff]
  %v2022 = vld [vmem:[%s3 + $0xc0] sm:$0xff]
  %v2023 = vld [vmem:[%s3 + $0xc8] sm:$0xff]
  %v2024 = vld [vmem:[%s3 + $0xd0] sm:$0xff]
  %v2025 = vld [vmem:[%s3 + $0xd8] sm:$0xff]
  %v2026 = vld [vmem:[%s3 + $0xe0] sm:$0xff]
  %v2027 = vld [vmem:[%s3 + $0xe8] sm:$0xff]
  %v2028 = vld [vmem:[%s3 + $0xf0] sm:$0xff]
  %v2029 = vld [vmem:[%s3 + $0xf8] sm:$0xff]
  %v2062 = vunpack.c.l.b16 %v1998
  %v2063 = vunpack.c.h.b16 %v1998
  %v2064 = vunpack.c.l.b16 %v1999
  %v2065 = vunpack.c.h.b16 %v1999
  %v2066 = vunpack.c.l.b16 %v2000
  %v2067 = vunpack.c.h.b16 %v2000
  %v2068 = vunpack.c.l.b16 %v2001
  %v2069 = vunpack.c.h.b16 %v2001
  %v2070 = vunpack.c.l.b16 %v2002
  %v2071 = vunpack.c.h.b16 %v2002
  %v2072 = vunpack.c.l.b16 %v2003
  %v2073 = vunpack.c.h.b16 %v2003
  %v2074 = vunpack.c.l.b16 %v2004
  %v2075 = vunpack.c.h.b16 %v2004
  %v2076 = vunpack.c.l.b16 %v2005
  %v2077 = vunpack.c.h.b16 %v2005
  %v2078 = vunpack.c.l.b16 %v2006
  %v2079 = vunpack.c.h.b16 %v2006
  %v2080 = vunpack.c.l.b16 %v2007
  %v2081 = vunpack.c.h.b16 %v2007
  %v2082 = vunpack.c.l.b16 %v2008
  %v2083 = vunpack.c.h.b16 %v2008
  %v2084 = vunpack.c.l.b16 %v2009
  %v2085 = vunpack.c.h.b16 %v2009
  %v2086 = vunpack.c.l.b16 %v2010
  %v2087 = vunpack.c.h.b16 %v2010
  %v2088 = vunpack.c.l.b16 %v2011
  %v2089 = vunpack.c.h.b16 %v2011
  %v2090 = vunpack.c.l.b16 %v2012
  %v2091 = vunpack.c.h.b16 %v2012
  %v2092 = vunpack.c.l.b16 %v2013
  %v2093 = vunpack.c.h.b16 %v2013
  %v2094 = vunpack.c.l.b16 %v2014
  %v2095 = vunpack.c.h.b16 %v2014
  %v2096 = vunpack.c.l.b16 %v2015
  %v2097 = vunpack.c.h.b16 %v2015
  %v2098 = vunpack.c.l.b16 %v2016
  %v2099 = vunpack.c.h.b16 %v2016
  %v2100 = vunpack.c.l.b16 %v2017
  %v2101 = vunpack.c.h.b16 %v2017
  %v2102 = vunpack.c.l.b16 %v2018
  %v2103 = vunpack.c.h.b16 %v2018
  %v2104 = vunpack.c.l.b16 %v2019
  %v2105 = vunpack.c.h.b16 %v2019
  %v2106 = vunpack.c.l.b16 %v2020
  %v2107 = vunpack.c.h.b16 %v2020
  %v2108 = vunpack.c.l.b16 %v2021
  %v2109 = vunpack.c.h.b16 %v2021
  %v2110 = vunpack.c.l.b16 %v2022
  %v2111 = vunpack.c.h.b16 %v2022
  %v2112 = vunpack.c.l.b16 %v2023
  %v2113 = vunpack.c.h.b16 %v2023
  %v2114 = vunpack.c.l.b16 %v2024
  %v2115 = vunpack.c.h.b16 %v2024
  %v2116 = vunpack.c.l.b16 %v2025
  %v2117 = vunpack.c.h.b16 %v2025
  %v2118 = vunpack.c.l.b16 %v2026
  %v2119 = vunpack.c.h.b16 %v2026
  %v2120 = vunpack.c.l.b16 %v2027
  %v2121 = vunpack.c.h.b16 %v2027
  %v2122 = vunpack.c.l.b16 %v2028
  %v2123 = vunpack.c.h.b16 %v2028
  %v2124 = vunpack.c.l.b16 %v2029
  %v2125 = vunpack.c.h.b16 %v2029
  %v2126 = vpack.c.b16 %v2066, %v2062
  %v2127 = vpack.c.b16 %v2067, %v2063
  %v2128 = vpack.c.b16 %v2068, %v2064
  %v2129 = vpack.c.b16 %v2069, %v2065
  %v2130 = vpack.c.b16 %v2074, %v2070
  %v2131 = vpack.c.b16 %v2075, %v2071
  %v2132 = vpack.c.b16 %v2076, %v2072
  %v2133 = vpack.c.b16 %v2077, %v2073
  %v2134 = vpack.c.b16 %v2082, %v2078
  %v2135 = vpack.c.b16 %v2083, %v2079
  %v2136 = vpack.c.b16 %v2084, %v2080
  %v2137 = vpack.c.b16 %v2085, %v2081
  %v2138 = vpack.c.b16 %v2090, %v2086
  %v2139 = vpack.c.b16 %v2091, %v2087
  %v2140 = vpack.c.b16 %v2092, %v2088
  %v2141 = vpack.c.b16 %v2093, %v2089
  %v2142 = vpack.c.b16 %v2098, %v2094
  %v2143 = vpack.c.b16 %v2099, %v2095
  %v2144 = vpack.c.b16 %v2100, %v2096
  %v2145 = vpack.c.b16 %v2101, %v2097
  %v2146 = vpack.c.b16 %v2106, %v2102
  %v2147 = vpack.c.b16 %v2107, %v2103
  %v2148 = vpack.c.b16 %v2108, %v2104
  %v2149 = vpack.c.b16 %v2109, %v2105
  %v2150 = vpack.c.b16 %v2114, %v2110
  %v2151 = vpack.c.b16 %v2115, %v2111
  %v2152 = vpack.c.b16 %v2116, %v2112
  %v2153 = vpack.c.b16 %v2117, %v2113
  %v2154 = vpack.c.b16 %v2122, %v2118
  %v2155 = vpack.c.b16 %v2123, %v2119
  %v2156 = vpack.c.b16 %v2124, %v2120
  %v2157 = vpack.c.b16 %v2125, %v2121
  %2190 = vmatpush.bf16.msra.mxu0 %v2154
  %2191 = vmatpush.bf16.msra.mxu0 %v2150
  %2192 = vmatpush.bf16.msra.mxu0 %v2146
  %2193 = vmatpush.bf16.msra.mxu0 %v2142
  %2194 = vmatpush.bf16.msra.mxu0 %v2138
  %2195 = vmatpush.bf16.msra.mxu0 %v2134
  %2196 = vmatpush.bf16.msra.mxu0 %v2130
  %2197 = vmatpush.bf16.msra.mxu0 %v2126
  %2198 = vmatmul.bf16.gmra.mxu0 %v1997
  %v2199 = vpop.f32.mrf.mxu0
  %v2200 = vadd.f32 0.0, %v2199
  %v2201 = vpop.f32.mrf.mxu0
  %2202 = vdwg.mxu0
  %2203 = vmatpush.bf16.msra.mxu0 %v2155
  %2204 = vmatpush.bf16.msra.mxu0 %v2151
  %2205 = vmatpush.bf16.msra.mxu0 %v2147
  %2206 = vmatpush.bf16.msra.mxu0 %v2143
  %2207 = vmatpush.bf16.msra.mxu0 %v2139
  %2208 = vmatpush.bf16.msra.mxu0 %v2135
  %2209 = vmatpush.bf16.msra.mxu0 %v2131
  %2210 = vmatpush.bf16.msra.mxu0 %v2127
  %2211 = vmatmul.bf16.gmra.mxu0 %v1997
  %v2212 = vpop.f32.mrf.mxu0
  %v2213 = vadd.f32 0.0, %v2212
  %v2214 = vpop.f32.mrf.mxu0
  %2215 = vdwg.mxu0
  %2216 = vmatpush.bf16.msra.mxu0 %v2156
  %2217 = vmatpush.bf16.msra.mxu0 %v2152
  %2218 = vmatpush.bf16.msra.mxu0 %v2148
  %2219 = vmatpush.bf16.msra.mxu0 %v2144
  %2220 = vmatpush.bf16.msra.mxu0 %v2140
  %2221 = vmatpush.bf16.msra.mxu0 %v2136
  %2222 = vmatpush.bf16.msra.mxu0 %v2132
  %2223 = vmatpush.bf16.msra.mxu0 %v2128
  %2224 = vmatmul.bf16.gmra.mxu0 %v1997
  %v2225 = vpop.f32.mrf.mxu0
  %v2226 = vadd.f32 0.0, %v2225
  %v2227 = vpop.f32.mrf.mxu0
  %2228 = vdwg.mxu0
  %2229 = vmatpush.bf16.msra.mxu0 %v2157
  %2230 = vmatpush.bf16.msra.mxu0 %v2153
  %2231 = vmatpush.bf16.msra.mxu0 %v2149
  %2232 = vmatpush.bf16.msra.mxu0 %v2145
  %2233 = vmatpush.bf16.msra.mxu0 %v2141
  %2234 = vmatpush.bf16.msra.mxu0 %v2137
  %2235 = vmatpush.bf16.msra.mxu0 %v2133
  %2236 = vmatpush.bf16.msra.mxu0 %v2129
  %2237 = vmatmul.bf16.gmra.mxu0 %v1997
  %v2238 = vpop.f32.mrf.mxu0
  %v2239 = vadd.f32 0.0, %v2238
  %v2240 = vpop.f32.mrf.mxu0
  %2241 = vdwg.mxu0
  %v2242 = vadd.f32 %v1993, %v2200
  %v2243 = vadd.f32 %v1994, %v2213
  %v2244 = vadd.f32 %v1995, %v2226
  %v2245 = vadd.f32 %v1996, %v2239
  %v2246 = vxor.u32 %v2242, 2147483648
  %v2247 = vmul.f32 %v2246, 1.442695
  %v2248 = vpow.pop %v2247
  %v2249 = vadd.f32 %v2248, 1.0
  %v2250 = vrcp.pop %v2249
  %v2251 = vmul.f32 %v2249, %v2250
  %v2252 = vsub.f32 1.0, %v2251
  %v2253 = vmul.f32 %v2250, %v2252
  %v2254 = vadd.f32 %v2250, %v2253
  %vm2255 = vweird.f32 %v2249
  %vm2256 = vweird.f32 %v2250
  %vm2257 = vmor %vm2255, %vm2256
  %v2258 = vsel %vm2257, %v2250, %v2254
  %v2259 = vand.u32 2147483647, %v2249
  %vm2260 = vcmp.eq.f32.partialorder %v2259, 8.507059e+37
  %v2261 = vand.u32 %v2249, 2147483648
  %v2262 = vor.u32 1.1754944e-38, %v2261
  %v2263 = vsel %vm2260, %v2262, %v2258
  %v2264 = vmul.f32 1.0, %v2263
  %v2265 = vxor.u32 %v2243, 2147483648
  %v2266 = vmul.f32 %v2265, 1.442695
  %v2267 = vpow.pop %v2266
  %v2268 = vadd.f32 %v2267, 1.0
  %v2269 = vrcp.pop %v2268
  %v2270 = vmul.f32 %v2268, %v2269
  %v2271 = vsub.f32 1.0, %v2270
  %v2272 = vmul.f32 %v2269, %v2271
  %v2273 = vadd.f32 %v2269, %v2272
  %vm2274 = vweird.f32 %v2268
  %vm2275 = vweird.f32 %v2269
  %vm2276 = vmor %vm2274, %vm2275
  %v2277 = vsel %vm2276, %v2269, %v2273
  %v2278 = vand.u32 2147483647, %v2268
  %vm2279 = vcmp.eq.f32.partialorder %v2278, 8.507059e+37
  %v2280 = vand.u32 %v2268, 2147483648
  %v2281 = vor.u32 1.1754944e-38, %v2280
  %v2282 = vsel %vm2279, %v2281, %v2277
  %v2283 = vmul.f32 1.0, %v2282
  %v2284 = vtanh.pop %v2244
  %v2285 = vxor.u32 %v2245, 2147483648
  %v2286 = vmul.f32 %v2285, 1.442695
  %v2287 = vpow.pop %v2286
  %v2288 = vadd.f32 %v2287, 1.0
  %v2289 = vrcp.pop %v2288
  %v2290 = vmul.f32 %v2288, %v2289
  %v2291 = vsub.f32 1.0, %v2290
  %v2292 = vmul.f32 %v2289, %v2291
  %v2293 = vadd.f32 %v2289, %v2292
  %vm2294 = vweird.f32 %v2288
  %vm2295 = vweird.f32 %v2289
  %vm2296 = vmor %vm2294, %vm2295
  %v2297 = vsel %vm2296, %v2289, %v2293
  %v2298 = vand.u32 2147483647, %v2288
  %vm2299 = vcmp.eq.f32.partialorder %v2298, 8.507059e+37
  %v2300 = vand.u32 %v2288, 2147483648
  %v2301 = vor.u32 1.1754944e-38, %v2300
  %v2302 = vsel %vm2299, %v2301, %v2297
  %v2303 = vmul.f32 1.0, %v2302
  %v2304 = vmul.f32 %v2283, %v1987
  %v2305 = vmul.f32 %v2264, %v2284
  %v2306 = vadd.f32 %v2304, %v2305
  %v2307 = vtanh.pop %v2306
  %v2308 = vmul.f32 %v2303, %v2307
  %s2309 = scalar_lea.vmem [#allocation3], 40
  %2310 = vst [vmem:[%s2309] sm:$0xff] %v2308
  %s2311 = scalar_lea.vmem [#allocation2], 192
  %v2312 = vld [vmem:[%s2311] sm:$0xff]
  %v2313 = vld [vmem:[%s2311 + $0x8] sm:$0xff]
  %v2314 = vld [vmem:[%s2311 + $0x10] sm:$0xff]
  %v2315 = vld [vmem:[%s2311 + $0x18] sm:$0xff]
  %v2316 = vpack.c.bf16 %v2308, %v2308
  %v2317 = vld [vmem:[%s3] sm:$0xff]
  %v2318 = vld [vmem:[%s3 + $0x8] sm:$0xff]
  %v2319 = vld [vmem:[%s3 + $0x10] sm:$0xff]
  %v2320 = vld [vmem:[%s3 + $0x18] sm:$0xff]
  %v2321 = vld [vmem:[%s3 + $0x20] sm:$0xff]
  %v2322 = vld [vmem:[%s3 + $0x28] sm:$0xff]
  %v2323 = vld [vmem:[%s3 + $0x30] sm:$0xff]
  %v2324 = vld [vmem:[%s3 + $0x38] sm:$0xff]
  %v2325 = vld [vmem:[%s3 + $0x40] sm:$0xff]
  %v2326 = vld [vmem:[%s3 + $0x48] sm:$0xff]
  %v2327 = vld [vmem:[%s3 + $0x50] sm:$0xff]
  %v2328 = vld [vmem:[%s3 + $0x58] sm:$0xff]
  %v2329 = vld [vmem:[%s3 + $0x60] sm:$0xff]
  %v2330 = vld [vmem:[%s3 + $0x68] sm:$0xff]
  %v2331 = vld [vmem:[%s3 + $0x70] sm:$0xff]
  %v2332 = vld [vmem:[%s3 + $0x78] sm:$0xff]
  %v2333 = vld [vmem:[%s3 + $0x80] sm:$0xff]
  %v2334 = vld [vmem:[%s3 + $0x88] sm:$0xff]
  %v2335 = vld [vmem:[%s3 + $0x90] sm:$0xff]
  %v2336 = vld [vmem:[%s3 + $0x98] sm:$0xff]
  %v2337 = vld [vmem:[%s3 + $0xa0] sm:$0xff]
  %v2338 = vld [vmem:[%s3 + $0xa8] sm:$0xff]
  %v2339 = vld [vmem:[%s3 + $0xb0] sm:$0xff]
  %v2340 = vld [vmem:[%s3 + $0xb8] sm:$0xff]
  %v2341 = vld [vmem:[%s3 + $0xc0] sm:$0xff]
  %v2342 = vld [vmem:[%s3 + $0xc8] sm:$0xff]
  %v2343 = vld [vmem:[%s3 + $0xd0] sm:$0xff]
  %v2344 = vld [vmem:[%s3 + $0xd8] sm:$0xff]
  %v2345 = vld [vmem:[%s3 + $0xe0] sm:$0xff]
  %v2346 = vld [vmem:[%s3 + $0xe8] sm:$0xff]
  %v2347 = vld [vmem:[%s3 + $0xf0] sm:$0xff]
  %v2348 = vld [vmem:[%s3 + $0xf8] sm:$0xff]
  %v2381 = vunpack.c.l.b16 %v2317
  %v2382 = vunpack.c.h.b16 %v2317
  %v2383 = vunpack.c.l.b16 %v2318
  %v2384 = vunpack.c.h.b16 %v2318
  %v2385 = vunpack.c.l.b16 %v2319
  %v2386 = vunpack.c.h.b16 %v2319
  %v2387 = vunpack.c.l.b16 %v2320
  %v2388 = vunpack.c.h.b16 %v2320
  %v2389 = vunpack.c.l.b16 %v2321
  %v2390 = vunpack.c.h.b16 %v2321
  %v2391 = vunpack.c.l.b16 %v2322
  %v2392 = vunpack.c.h.b16 %v2322
  %v2393 = vunpack.c.l.b16 %v2323
  %v2394 = vunpack.c.h.b16 %v2323
  %v2395 = vunpack.c.l.b16 %v2324
  %v2396 = vunpack.c.h.b16 %v2324
  %v2397 = vunpack.c.l.b16 %v2325
  %v2398 = vunpack.c.h.b16 %v2325
  %v2399 = vunpack.c.l.b16 %v2326
  %v2400 = vunpack.c.h.b16 %v2326
  %v2401 = vunpack.c.l.b16 %v2327
  %v2402 = vunpack.c.h.b16 %v2327
  %v2403 = vunpack.c.l.b16 %v2328
  %v2404 = vunpack.c.h.b16 %v2328
  %v2405 = vunpack.c.l.b16 %v2329
  %v2406 = vunpack.c.h.b16 %v2329
  %v2407 = vunpack.c.l.b16 %v2330
  %v2408 = vunpack.c.h.b16 %v2330
  %v2409 = vunpack.c.l.b16 %v2331
  %v2410 = vunpack.c.h.b16 %v2331
  %v2411 = vunpack.c.l.b16 %v2332
  %v2412 = vunpack.c.h.b16 %v2332
  %v2413 = vunpack.c.l.b16 %v2333
  %v2414 = vunpack.c.h.b16 %v2333
  %v2415 = vunpack.c.l.b16 %v2334
  %v2416 = vunpack.c.h.b16 %v2334
  %v2417 = vunpack.c.l.b16 %v2335
  %v2418 = vunpack.c.h.b16 %v2335
  %v2419 = vunpack.c.l.b16 %v2336
  %v2420 = vunpack.c.h.b16 %v2336
  %v2421 = vunpack.c.l.b16 %v2337
  %v2422 = vunpack.c.h.b16 %v2337
  %v2423 = vunpack.c.l.b16 %v2338
  %v2424 = vunpack.c.h.b16 %v2338
  %v2425 = vunpack.c.l.b16 %v2339
  %v2426 = vunpack.c.h.b16 %v2339
  %v2427 = vunpack.c.l.b16 %v2340
  %v2428 = vunpack.c.h.b16 %v2340
  %v2429 = vunpack.c.l.b16 %v2341
  %v2430 = vunpack.c.h.b16 %v2341
  %v2431 = vunpack.c.l.b16 %v2342
  %v2432 = vunpack.c.h.b16 %v2342
  %v2433 = vunpack.c.l.b16 %v2343
  %v2434 = vunpack.c.h.b16 %v2343
  %v2435 = vunpack.c.l.b16 %v2344
  %v2436 = vunpack.c.h.b16 %v2344
  %v2437 = vunpack.c.l.b16 %v2345
  %v2438 = vunpack.c.h.b16 %v2345
  %v2439 = vunpack.c.l.b16 %v2346
  %v2440 = vunpack.c.h.b16 %v2346
  %v2441 = vunpack.c.l.b16 %v2347
  %v2442 = vunpack.c.h.b16 %v2347
  %v2443 = vunpack.c.l.b16 %v2348
  %v2444 = vunpack.c.h.b16 %v2348
  %v2445 = vpack.c.b16 %v2385, %v2381
  %v2446 = vpack.c.b16 %v2386, %v2382
  %v2447 = vpack.c.b16 %v2387, %v2383
  %v2448 = vpack.c.b16 %v2388, %v2384
  %v2449 = vpack.c.b16 %v2393, %v2389
  %v2450 = vpack.c.b16 %v2394, %v2390
  %v2451 = vpack.c.b16 %v2395, %v2391
  %v2452 = vpack.c.b16 %v2396, %v2392
  %v2453 = vpack.c.b16 %v2401, %v2397
  %v2454 = vpack.c.b16 %v2402, %v2398
  %v2455 = vpack.c.b16 %v2403, %v2399
  %v2456 = vpack.c.b16 %v2404, %v2400
  %v2457 = vpack.c.b16 %v2409, %v2405
  %v2458 = vpack.c.b16 %v2410, %v2406
  %v2459 = vpack.c.b16 %v2411, %v2407
  %v2460 = vpack.c.b16 %v2412, %v2408
  %v2461 = vpack.c.b16 %v2417, %v2413
  %v2462 = vpack.c.b16 %v2418, %v2414
  %v2463 = vpack.c.b16 %v2419, %v2415
  %v2464 = vpack.c.b16 %v2420, %v2416
  %v2465 = vpack.c.b16 %v2425, %v2421
  %v2466 = vpack.c.b16 %v2426, %v2422
  %v2467 = vpack.c.b16 %v2427, %v2423
  %v2468 = vpack.c.b16 %v2428, %v2424
  %v2469 = vpack.c.b16 %v2433, %v2429
  %v2470 = vpack.c.b16 %v2434, %v2430
  %v2471 = vpack.c.b16 %v2435, %v2431
  %v2472 = vpack.c.b16 %v2436, %v2432
  %v2473 = vpack.c.b16 %v2441, %v2437
  %v2474 = vpack.c.b16 %v2442, %v2438
  %v2475 = vpack.c.b16 %v2443, %v2439
  %v2476 = vpack.c.b16 %v2444, %v2440
  %2509 = vmatpush.bf16.msra.mxu0 %v2473
  %2510 = vmatpush.bf16.msra.mxu0 %v2469
  %2511 = vmatpush.bf16.msra.mxu0 %v2465
  %2512 = vmatpush.bf16.msra.mxu0 %v2461
  %2513 = vmatpush.bf16.msra.mxu0 %v2457
  %2514 = vmatpush.bf16.msra.mxu0 %v2453
  %2515 = vmatpush.bf16.msra.mxu0 %v2449
  %2516 = vmatpush.bf16.msra.mxu0 %v2445
  %2517 = vmatmul.bf16.gmra.mxu0 %v2316
  %v2518 = vpop.f32.mrf.mxu0
  %v2519 = vadd.f32 0.0, %v2518
  %v2520 = vpop.f32.mrf.mxu0
  %2521 = vdwg.mxu0
  %2522 = vmatpush.bf16.msra.mxu0 %v2474
  %2523 = vmatpush.bf16.msra.mxu0 %v2470
  %2524 = vmatpush.bf16.msra.mxu0 %v2466
  %2525 = vmatpush.bf16.msra.mxu0 %v2462
  %2526 = vmatpush.bf16.msra.mxu0 %v2458
  %2527 = vmatpush.bf16.msra.mxu0 %v2454
  %2528 = vmatpush.bf16.msra.mxu0 %v2450
  %2529 = vmatpush.bf16.msra.mxu0 %v2446
  %2530 = vmatmul.bf16.gmra.mxu0 %v2316
  %v2531 = vpop.f32.mrf.mxu0
  %v2532 = vadd.f32 0.0, %v2531
  %v2533 = vpop.f32.mrf.mxu0
  %2534 = vdwg.mxu0
  %2535 = vmatpush.bf16.msra.mxu0 %v2475
  %2536 = vmatpush.bf16.msra.mxu0 %v2471
  %2537 = vmatpush.bf16.msra.mxu0 %v2467
  %2538 = vmatpush.bf16.msra.mxu0 %v2463
  %2539 = vmatpush.bf16.msra.mxu0 %v2459
  %2540 = vmatpush.bf16.msra.mxu0 %v2455
  %2541 = vmatpush.bf16.msra.mxu0 %v2451
  %2542 = vmatpush.bf16.msra.mxu0 %v2447
  %2543 = vmatmul.bf16.gmra.mxu0 %v2316
  %v2544 = vpop.f32.mrf.mxu0
  %v2545 = vadd.f32 0.0, %v2544
  %v2546 = vpop.f32.mrf.mxu0
  %2547 = vdwg.mxu0
  %2548 = vmatpush.bf16.msra.mxu0 %v2476
  %2549 = vmatpush.bf16.msra.mxu0 %v2472
  %2550 = vmatpush.bf16.msra.mxu0 %v2468
  %2551 = vmatpush.bf16.msra.mxu0 %v2464
  %2552 = vmatpush.bf16.msra.mxu0 %v2460
  %2553 = vmatpush.bf16.msra.mxu0 %v2456
  %2554 = vmatpush.bf16.msra.mxu0 %v2452
  %2555 = vmatpush.bf16.msra.mxu0 %v2448
  %2556 = vmatmul.bf16.gmra.mxu0 %v2316
  %v2557 = vpop.f32.mrf.mxu0
  %v2558 = vadd.f32 0.0, %v2557
  %v2559 = vpop.f32.mrf.mxu0
  %2560 = vdwg.mxu0
  %v2561 = vadd.f32 %v2312, %v2519
  %v2562 = vadd.f32 %v2313, %v2532
  %v2563 = vadd.f32 %v2314, %v2545
  %v2564 = vadd.f32 %v2315, %v2558
  %v2565 = vxor.u32 %v2561, 2147483648
  %v2566 = vmul.f32 %v2565, 1.442695
  %v2567 = vpow.pop %v2566
  %v2568 = vadd.f32 %v2567, 1.0
  %v2569 = vrcp.pop %v2568
  %v2570 = vmul.f32 %v2568, %v2569
  %v2571 = vsub.f32 1.0, %v2570
  %v2572 = vmul.f32 %v2569, %v2571
  %v2573 = vadd.f32 %v2569, %v2572
  %vm2574 = vweird.f32 %v2568
  %vm2575 = vweird.f32 %v2569
  %vm2576 = vmor %vm2574, %vm2575
  %v2577 = vsel %vm2576, %v2569, %v2573
  %v2578 = vand.u32 2147483647, %v2568
  %vm2579 = vcmp.eq.f32.partialorder %v2578, 8.507059e+37
  %v2580 = vand.u32 %v2568, 2147483648
  %v2581 = vor.u32 1.1754944e-38, %v2580
  %v2582 = vsel %vm2579, %v2581, %v2577
  %v2583 = vmul.f32 1.0, %v2582
  %v2584 = vxor.u32 %v2562, 2147483648
  %v2585 = vmul.f32 %v2584, 1.442695
  %v2586 = vpow.pop %v2585
  %v2587 = vadd.f32 %v2586, 1.0
  %v2588 = vrcp.pop %v2587
  %v2589 = vmul.f32 %v2587, %v2588
  %v2590 = vsub.f32 1.0, %v2589
  %v2591 = vmul.f32 %v2588, %v2590
  %v2592 = vadd.f32 %v2588, %v2591
  %vm2593 = vweird.f32 %v2587
  %vm2594 = vweird.f32 %v2588
  %vm2595 = vmor %vm2593, %vm2594
  %v2596 = vsel %vm2595, %v2588, %v2592
  %v2597 = vand.u32 2147483647, %v2587
  %vm2598 = vcmp.eq.f32.partialorder %v2597, 8.507059e+37
  %v2599 = vand.u32 %v2587, 2147483648
  %v2600 = vor.u32 1.1754944e-38, %v2599
  %v2601 = vsel %vm2598, %v2600, %v2596
  %v2602 = vmul.f32 1.0, %v2601
  %v2603 = vtanh.pop %v2563
  %v2604 = vxor.u32 %v2564, 2147483648
  %v2605 = vmul.f32 %v2604, 1.442695
  %v2606 = vpow.pop %v2605
  %v2607 = vadd.f32 %v2606, 1.0
  %v2608 = vrcp.pop %v2607
  %v2609 = vmul.f32 %v2607, %v2608
  %v2610 = vsub.f32 1.0, %v2609
  %v2611 = vmul.f32 %v2608, %v2610
  %v2612 = vadd.f32 %v2608, %v2611
  %vm2613 = vweird.f32 %v2607
  %vm2614 = vweird.f32 %v2608
  %vm2615 = vmor %vm2613, %vm2614
  %v2616 = vsel %vm2615, %v2608, %v2612
  %v2617 = vand.u32 2147483647, %v2607
  %vm2618 = vcmp.eq.f32.partialorder %v2617, 8.507059e+37
  %v2619 = vand.u32 %v2607, 2147483648
  %v2620 = vor.u32 1.1754944e-38, %v2619
  %v2621 = vsel %vm2618, %v2620, %v2616
  %v2622 = vmul.f32 1.0, %v2621
  %v2623 = vmul.f32 %v2602, %v2306
  %v2624 = vmul.f32 %v2583, %v2603
  %v2625 = vadd.f32 %v2623, %v2624
  %v2626 = vtanh.pop %v2625
  %v2627 = vmul.f32 %v2622, %v2626
  %s2628 = scalar_lea.vmem [#allocation3], 48
  %2629 = vst [vmem:[%s2628] sm:$0xff] %v2627
  %s2630 = scalar_lea.vmem [#allocation2], 224
  %v2631 = vld [vmem:[%s2630] sm:$0xff]
  %v2632 = vld [vmem:[%s2630 + $0x8] sm:$0xff]
  %v2633 = vld [vmem:[%s2630 + $0x10] sm:$0xff]
  %v2634 = vld [vmem:[%s2630 + $0x18] sm:$0xff]
  %v2635 = vpack.c.bf16 %v2627, %v2627
  %v2636 = vld [vmem:[%s3] sm:$0xff]
  %v2637 = vld [vmem:[%s3 + $0x8] sm:$0xff]
  %v2638 = vld [vmem:[%s3 + $0x10] sm:$0xff]
  %v2639 = vld [vmem:[%s3 + $0x18] sm:$0xff]
  %v2640 = vld [vmem:[%s3 + $0x20] sm:$0xff]
  %v2641 = vld [vmem:[%s3 + $0x28] sm:$0xff]
  %v2642 = vld [vmem:[%s3 + $0x30] sm:$0xff]
  %v2643 = vld [vmem:[%s3 + $0x38] sm:$0xff]
  %v2644 = vld [vmem:[%s3 + $0x40] sm:$0xff]
  %v2645 = vld [vmem:[%s3 + $0x48] sm:$0xff]
  %v2646 = vld [vmem:[%s3 + $0x50] sm:$0xff]
  %v2647 = vld [vmem:[%s3 + $0x58] sm:$0xff]
  %v2648 = vld [vmem:[%s3 + $0x60] sm:$0xff]
  %v2649 = vld [vmem:[%s3 + $0x68] sm:$0xff]
  %v2650 = vld [vmem:[%s3 + $0x70] sm:$0xff]
  %v2651 = vld [vmem:[%s3 + $0x78] sm:$0xff]
  %v2652 = vld [vmem:[%s3 + $0x80] sm:$0xff]
  %v2653 = vld [vmem:[%s3 + $0x88] sm:$0xff]
  %v2654 = vld [vmem:[%s3 + $0x90] sm:$0xff]
  %v2655 = vld [vmem:[%s3 + $0x98] sm:$0xff]
  %v2656 = vld [vmem:[%s3 + $0xa0] sm:$0xff]
  %v2657 = vld [vmem:[%s3 + $0xa8] sm:$0xff]
  %v2658 = vld [vmem:[%s3 + $0xb0] sm:$0xff]
  %v2659 = vld [vmem:[%s3 + $0xb8] sm:$0xff]
  %v2660 = vld [vmem:[%s3 + $0xc0] sm:$0xff]
  %v2661 = vld [vmem:[%s3 + $0xc8] sm:$0xff]
  %v2662 = vld [vmem:[%s3 + $0xd0] sm:$0xff]
  %v2663 = vld [vmem:[%s3 + $0xd8] sm:$0xff]
  %v2664 = vld [vmem:[%s3 + $0xe0] sm:$0xff]
  %v2665 = vld [vmem:[%s3 + $0xe8] sm:$0xff]
  %v2666 = vld [vmem:[%s3 + $0xf0] sm:$0xff]
  %v2667 = vld [vmem:[%s3 + $0xf8] sm:$0xff]
  %v2700 = vunpack.c.l.b16 %v2636
  %v2701 = vunpack.c.h.b16 %v2636
  %v2702 = vunpack.c.l.b16 %v2637
  %v2703 = vunpack.c.h.b16 %v2637
  %v2704 = vunpack.c.l.b16 %v2638
  %v2705 = vunpack.c.h.b16 %v2638
  %v2706 = vunpack.c.l.b16 %v2639
  %v2707 = vunpack.c.h.b16 %v2639
  %v2708 = vunpack.c.l.b16 %v2640
  %v2709 = vunpack.c.h.b16 %v2640
  %v2710 = vunpack.c.l.b16 %v2641
  %v2711 = vunpack.c.h.b16 %v2641
  %v2712 = vunpack.c.l.b16 %v2642
  %v2713 = vunpack.c.h.b16 %v2642
  %v2714 = vunpack.c.l.b16 %v2643
  %v2715 = vunpack.c.h.b16 %v2643
  %v2716 = vunpack.c.l.b16 %v2644
  %v2717 = vunpack.c.h.b16 %v2644
  %v2718 = vunpack.c.l.b16 %v2645
  %v2719 = vunpack.c.h.b16 %v2645
  %v2720 = vunpack.c.l.b16 %v2646
  %v2721 = vunpack.c.h.b16 %v2646
  %v2722 = vunpack.c.l.b16 %v2647
  %v2723 = vunpack.c.h.b16 %v2647
  %v2724 = vunpack.c.l.b16 %v2648
  %v2725 = vunpack.c.h.b16 %v2648
  %v2726 = vunpack.c.l.b16 %v2649
  %v2727 = vunpack.c.h.b16 %v2649
  %v2728 = vunpack.c.l.b16 %v2650
  %v2729 = vunpack.c.h.b16 %v2650
  %v2730 = vunpack.c.l.b16 %v2651
  %v2731 = vunpack.c.h.b16 %v2651
  %v2732 = vunpack.c.l.b16 %v2652
  %v2733 = vunpack.c.h.b16 %v2652
  %v2734 = vunpack.c.l.b16 %v2653
  %v2735 = vunpack.c.h.b16 %v2653
  %v2736 = vunpack.c.l.b16 %v2654
  %v2737 = vunpack.c.h.b16 %v2654
  %v2738 = vunpack.c.l.b16 %v2655
  %v2739 = vunpack.c.h.b16 %v2655
  %v2740 = vunpack.c.l.b16 %v2656
  %v2741 = vunpack.c.h.b16 %v2656
  %v2742 = vunpack.c.l.b16 %v2657
  %v2743 = vunpack.c.h.b16 %v2657
  %v2744 = vunpack.c.l.b16 %v2658
  %v2745 = vunpack.c.h.b16 %v2658
  %v2746 = vunpack.c.l.b16 %v2659
  %v2747 = vunpack.c.h.b16 %v2659
  %v2748 = vunpack.c.l.b16 %v2660
  %v2749 = vunpack.c.h.b16 %v2660
  %v2750 = vunpack.c.l.b16 %v2661
  %v2751 = vunpack.c.h.b16 %v2661
  %v2752 = vunpack.c.l.b16 %v2662
  %v2753 = vunpack.c.h.b16 %v2662
  %v2754 = vunpack.c.l.b16 %v2663
  %v2755 = vunpack.c.h.b16 %v2663
  %v2756 = vunpack.c.l.b16 %v2664
  %v2757 = vunpack.c.h.b16 %v2664
  %v2758 = vunpack.c.l.b16 %v2665
  %v2759 = vunpack.c.h.b16 %v2665
  %v2760 = vunpack.c.l.b16 %v2666
  %v2761 = vunpack.c.h.b16 %v2666
  %v2762 = vunpack.c.l.b16 %v2667
  %v2763 = vunpack.c.h.b16 %v2667
  %v2764 = vpack.c.b16 %v2704, %v2700
  %v2765 = vpack.c.b16 %v2705, %v2701
  %v2766 = vpack.c.b16 %v2706, %v2702
  %v2767 = vpack.c.b16 %v2707, %v2703
  %v2768 = vpack.c.b16 %v2712, %v2708
  %v2769 = vpack.c.b16 %v2713, %v2709
  %v2770 = vpack.c.b16 %v2714, %v2710
  %v2771 = vpack.c.b16 %v2715, %v2711
  %v2772 = vpack.c.b16 %v2720, %v2716
  %v2773 = vpack.c.b16 %v2721, %v2717
  %v2774 = vpack.c.b16 %v2722, %v2718
  %v2775 = vpack.c.b16 %v2723, %v2719
  %v2776 = vpack.c.b16 %v2728, %v2724
  %v2777 = vpack.c.b16 %v2729, %v2725
  %v2778 = vpack.c.b16 %v2730, %v2726
  %v2779 = vpack.c.b16 %v2731, %v2727
  %v2780 = vpack.c.b16 %v2736, %v2732
  %v2781 = vpack.c.b16 %v2737, %v2733
  %v2782 = vpack.c.b16 %v2738, %v2734
  %v2783 = vpack.c.b16 %v2739, %v2735
  %v2784 = vpack.c.b16 %v2744, %v2740
  %v2785 = vpack.c.b16 %v2745, %v2741
  %v2786 = vpack.c.b16 %v2746, %v2742
  %v2787 = vpack.c.b16 %v2747, %v2743
  %v2788 = vpack.c.b16 %v2752, %v2748
  %v2789 = vpack.c.b16 %v2753, %v2749
  %v2790 = vpack.c.b16 %v2754, %v2750
  %v2791 = vpack.c.b16 %v2755, %v2751
  %v2792 = vpack.c.b16 %v2760, %v2756
  %v2793 = vpack.c.b16 %v2761, %v2757
  %v2794 = vpack.c.b16 %v2762, %v2758
  %v2795 = vpack.c.b16 %v2763, %v2759
  %2828 = vmatpush.bf16.msra.mxu0 %v2792
  %2829 = vmatpush.bf16.msra.mxu0 %v2788
  %2830 = vmatpush.bf16.msra.mxu0 %v2784
  %2831 = vmatpush.bf16.msra.mxu0 %v2780
  %2832 = vmatpush.bf16.msra.mxu0 %v2776
  %2833 = vmatpush.bf16.msra.mxu0 %v2772
  %2834 = vmatpush.bf16.msra.mxu0 %v2768
  %2835 = vmatpush.bf16.msra.mxu0 %v2764
  %2836 = vmatmul.bf16.gmra.mxu0 %v2635
  %v2837 = vpop.f32.mrf.mxu0
  %v2838 = vadd.f32 0.0, %v2837
  %v2839 = vpop.f32.mrf.mxu0
  %2840 = vdwg.mxu0
  %2841 = vmatpush.bf16.msra.mxu0 %v2793
  %2842 = vmatpush.bf16.msra.mxu0 %v2789
  %2843 = vmatpush.bf16.msra.mxu0 %v2785
  %2844 = vmatpush.bf16.msra.mxu0 %v2781
  %2845 = vmatpush.bf16.msra.mxu0 %v2777
  %2846 = vmatpush.bf16.msra.mxu0 %v2773
  %2847 = vmatpush.bf16.msra.mxu0 %v2769
  %2848 = vmatpush.bf16.msra.mxu0 %v2765
  %2849 = vmatmul.bf16.gmra.mxu0 %v2635
  %v2850 = vpop.f32.mrf.mxu0
  %v2851 = vadd.f32 0.0, %v2850
  %v2852 = vpop.f32.mrf.mxu0
  %2853 = vdwg.mxu0
  %2854 = vmatpush.bf16.msra.mxu0 %v2794
  %2855 = vmatpush.bf16.msra.mxu0 %v2790
  %2856 = vmatpush.bf16.msra.mxu0 %v2786
  %2857 = vmatpush.bf16.msra.mxu0 %v2782
  %2858 = vmatpush.bf16.msra.mxu0 %v2778
  %2859 = vmatpush.bf16.msra.mxu0 %v2774
  %2860 = vmatpush.bf16.msra.mxu0 %v2770
  %2861 = vmatpush.bf16.msra.mxu0 %v2766
  %2862 = vmatmul.bf16.gmra.mxu0 %v2635
  %v2863 = vpop.f32.mrf.mxu0
  %v2864 = vadd.f32 0.0, %v2863
  %v2865 = vpop.f32.mrf.mxu0
  %2866 = vdwg.mxu0
  %2867 = vmatpush.bf16.msra.mxu0 %v2795
  %2868 = vmatpush.bf16.msra.mxu0 %v2791
  %2869 = vmatpush.bf16.msra.mxu0 %v2787
  %2870 = vmatpush.bf16.msra.mxu0 %v2783
  %2871 = vmatpush.bf16.msra.mxu0 %v2779
  %2872 = vmatpush.bf16.msra.mxu0 %v2775
  %2873 = vmatpush.bf16.msra.mxu0 %v2771
  %2874 = vmatpush.bf16.msra.mxu0 %v2767
  %2875 = vmatmul.bf16.gmra.mxu0 %v2635
  %v2876 = vpop.f32.mrf.mxu0
  %v2877 = vadd.f32 0.0, %v2876
  %v2878 = vpop.f32.mrf.mxu0
  %2879 = vdwg.mxu0
  %v2880 = vadd.f32 %v2631, %v2838
  %v2881 = vadd.f32 %v2632, %v2851
  %v2882 = vadd.f32 %v2633, %v2864
  %v2883 = vadd.f32 %v2634, %v2877
  %v2884 = vxor.u32 %v2880, 2147483648
  %v2885 = vmul.f32 %v2884, 1.442695
  %v2886 = vpow.pop %v2885
  %v2887 = vadd.f32 %v2886, 1.0
  %v2888 = vrcp.pop %v2887
  %v2889 = vmul.f32 %v2887, %v2888
  %v2890 = vsub.f32 1.0, %v2889
  %v2891 = vmul.f32 %v2888, %v2890
  %v2892 = vadd.f32 %v2888, %v2891
  %vm2893 = vweird.f32 %v2887
  %vm2894 = vweird.f32 %v2888
  %vm2895 = vmor %vm2893, %vm2894
  %v2896 = vsel %vm2895, %v2888, %v2892
  %v2897 = vand.u32 2147483647, %v2887
  %vm2898 = vcmp.eq.f32.partialorder %v2897, 8.507059e+37
  %v2899 = vand.u32 %v2887, 2147483648
  %v2900 = vor.u32 1.1754944e-38, %v2899
  %v2901 = vsel %vm2898, %v2900, %v2896
  %v2902 = vmul.f32 1.0, %v2901
  %v2903 = vxor.u32 %v2881, 2147483648
  %v2904 = vmul.f32 %v2903, 1.442695
  %v2905 = vpow.pop %v2904
  %v2906 = vadd.f32 %v2905, 1.0
  %v2907 = vrcp.pop %v2906
  %v2908 = vmul.f32 %v2906, %v2907
  %v2909 = vsub.f32 1.0, %v2908
  %v2910 = vmul.f32 %v2907, %v2909
  %v2911 = vadd.f32 %v2907, %v2910
  %vm2912 = vweird.f32 %v2906
  %vm2913 = vweird.f32 %v2907
  %vm2914 = vmor %vm2912, %vm2913
  %v2915 = vsel %vm2914, %v2907, %v2911
  %v2916 = vand.u32 2147483647, %v2906
  %vm2917 = vcmp.eq.f32.partialorder %v2916, 8.507059e+37
  %v2918 = vand.u32 %v2906, 2147483648
  %v2919 = vor.u32 1.1754944e-38, %v2918
  %v2920 = vsel %vm2917, %v2919, %v2915
  %v2921 = vmul.f32 1.0, %v2920
  %v2922 = vtanh.pop %v2882
  %v2923 = vxor.u32 %v2883, 2147483648
  %v2924 = vmul.f32 %v2923, 1.442695
  %v2925 = vpow.pop %v2924
  %v2926 = vadd.f32 %v2925, 1.0
  %v2927 = vrcp.pop %v2926
  %v2928 = vmul.f32 %v2926, %v2927
  %v2929 = vsub.f32 1.0, %v2928
  %v2930 = vmul.f32 %v2927, %v2929
  %v2931 = vadd.f32 %v2927, %v2930
  %vm2932 = vweird.f32 %v2926
  %vm2933 = vweird.f32 %v2927
  %vm2934 = vmor %vm2932, %vm2933
  %v2935 = vsel %vm2934, %v2927, %v2931
  %v2936 = vand.u32 2147483647, %v2926
  %vm2937 = vcmp.eq.f32.partialorder %v2936, 8.507059e+37
  %v2938 = vand.u32 %v2926, 2147483648
  %v2939 = vor.u32 1.1754944e-38, %v2938
  %v2940 = vsel %vm2937, %v2939, %v2935
  %v2941 = vmul.f32 1.0, %v2940
  %v2942 = vmul.f32 %v2921, %v2625
  %v2943 = vmul.f32 %v2902, %v2922
  %v2944 = vadd.f32 %v2942, %v2943
  %v2945 = vtanh.pop %v2944
  %v2946 = vmul.f32 %v2941, %v2945
  %s2947 = scalar_lea.vmem [#allocation3], 56
  %2948 = vst [vmem:[%s2947] sm:$0xff] %v2946
  %v2949 = vld [vmem:[#allocation3] sm:$0xff]
  %v2950 = vld [vmem:[#allocation3 + $0x8] sm:$0xff]
  %v2951 = vld [vmem:[#allocation3 + $0x10] sm:$0xff]
  %v2952 = vld [vmem:[#allocation3 + $0x18] sm:$0xff]
  %v2953 = vld [vmem:[#allocation3 + $0x20] sm:$0xff]
  %v2954 = vld [vmem:[#allocation3 + $0x28] sm:$0xff]
  %v2955 = vld [vmem:[#allocation3 + $0x30] sm:$0xff]
  %v2956 = vld [vmem:[#allocation3 + $0x38] sm:$0xff]
  %v2957 = vlaneseq
  %v2958 = vshrl.u32 %v2957, 7
  %vm2959 = vcmp.lt.s32.totalorder %v2958, 2
  %v2960 = vsel %vm2959, 1, 0
  %v2961 = vcvt.s32.f32 %v2960
  %v2962 = vmul.f32 %v2949, %v2961
  %v2963 = vmul.f32 %v2950, %v2961
  %v2964 = vmul.f32 %v2951, %v2961
  %v2965 = vmul.f32 %v2952, %v2961
  %v2966 = vmul.f32 %v2953, %v2961
  %v2967 = vmul.f32 %v2954, %v2961
  %v2968 = vmul.f32 %v2955, %v2961
  %v2969 = vmul.f32 %v2956, %v2961
  %v2970 = vadd.f32 %v2962, %v2963
  %v2971 = vadd.f32 %v2970, %v2964
  %v2972 = vadd.f32 %v2971, %v2965
  %v2973 = vadd.f32 %v2972, %v2966
  %v2974 = vadd.f32 %v2973, %v2967
  %v2975 = vadd.f32 %v2974, %v2968
  %v2976 = vadd.f32 %v2975, %v2969
  %v2977 = vrot.slane %v2976, 4
  %v2978 = vadd.f32 %v2976, %v2977
  %v2979 = vrot.slane %v2978, 2
  %v2980 = vadd.f32 %v2978, %v2979
  %v2981 = vrot.slane %v2980, 1
  %v2982 = vadd.f32 %v2980, %v2981
  %v2983 = vrcp.pop 16.0
  %v2984 = vmul.f32 16.0, %v2983
  %v2985 = vsub.f32 1.0, %v2984
  %v2986 = vmul.f32 %v2983, %v2985
  %v2987 = vadd.f32 %v2983, %v2986
  %vm2988 = vweird.f32 %v2983
  %v2989 = vsel %vm2988, %v2983, %v2987
  %v2990 = vmul.f32 %v2982, %v2989
  %v2991 = vsub.f32 %v2949, %v2990
  %v2992 = vsub.f32 %v2950, %v2990
  %v2993 = vsub.f32 %v2951, %v2990
  %v2994 = vsub.f32 %v2952, %v2990
  %v2995 = vsub.f32 %v2953, %v2990
  %v2996 = vsub.f32 %v2954, %v2990
  %v2997 = vsub.f32 %v2955, %v2990
  %v2998 = vsub.f32 %v2956, %v2990
  %v2999 = vmul.f32 %v2991, %v2961
  %v3000 = vmul.f32 %v2992, %v2961
  %v3001 = vmul.f32 %v2993, %v2961
  %v3002 = vmul.f32 %v2994, %v2961
  %v3003 = vmul.f32 %v2995, %v2961
  %v3004 = vmul.f32 %v2996, %v2961
  %v3005 = vmul.f32 %v2997, %v2961
  %v3006 = vmul.f32 %v2998, %v2961
  %v3007 = vmul.f32 %v2999, %v2999
  %v3008 = vmul.f32 %v3000, %v3000
  %v3009 = vmul.f32 %v3001, %v3001
  %v3010 = vmul.f32 %v3002, %v3002
  %v3011 = vmul.f32 %v3003, %v3003
  %v3012 = vmul.f32 %v3004, %v3004
  %v3013 = vmul.f32 %v3005, %v3005
  %v3014 = vmul.f32 %v3006, %v3006
  %v3015 = vadd.f32 %v3007, %v3008
  %v3016 = vadd.f32 %v3015, %v3009
  %v3017 = vadd.f32 %v3016, %v3010
  %v3018 = vadd.f32 %v3017, %v3011
  %v3019 = vadd.f32 %v3018, %v3012
  %v3020 = vadd.f32 %v3019, %v3013
  %v3021 = vadd.f32 %v3020, %v3014
  %v3022 = vrot.slane %v3021, 4
  %v3023 = vadd.f32 %v3021, %v3022
  %v3024 = vrot.slane %v3023, 2
  %v3025 = vadd.f32 %v3023, %v3024
  %v3026 = vrot.slane %v3025, 1
  %v3027 = vadd.f32 %v3025, %v3026
  %v3028 = vmul.f32 %v3027, %v2989
  %v3029 = vadd.f32 %v3028, 1e-05
  %v3030 = vrsqrt.pop %v3029
  %v3031 = vmul.f32 %v3030, %v3029
  %v3032 = vmul.f32 %v3031, %v3030
  %v3033 = vmul.f32 0.5, %v3032
  %v3034 = vsub.f32 1.5, %v3033
  %v3035 = vmul.f32 %v3030, %v3034
  %vm3036 = vweird.f32 %v3029
  %vm3037 = vweird.f32 %v3030
  %vm3038 = vmor %vm3036, %vm3037
  %v3039 = vsel %vm3038, %v3030, %v3035
  %v3040 = vmul.f32 %v2991, %v3039
  %v3041 = vmul.f32 %v2992, %v3039
  %v3042 = vmul.f32 %v2993, %v3039
  %v3043 = vmul.f32 %v2994, %v3039
  %v3044 = vmul.f32 %v2995, %v3039
  %v3045 = vmul.f32 %v2996, %v3039
  %v3046 = vmul.f32 %v2997, %v3039
  %v3047 = vmul.f32 %v2998, %v3039
  %v3048 = vld [vmem:[%s6] sm:$0x1]
  %v3050 = vperm.slane %v3048, 0
  %v3052 = vmul.f32 %v3040, %v3050
  %v3053 = vmul.f32 %v3041, %v3050
  %v3054 = vmul.f32 %v3042, %v3050
  %v3055 = vmul.f32 %v3043, %v3050
  %v3056 = vmul.f32 %v3044, %v3050
  %v3057 = vmul.f32 %v3045, %v3050
  %v3058 = vmul.f32 %v3046, %v3050
  %v3059 = vmul.f32 %v3047, %v3050
  %v3060 = vld [vmem:[%s7] sm:$0x1]
  %v3062 = vperm.slane %v3060, 0
  %v3064 = vadd.f32 %v3052, %v3062
  %v3065 = vadd.f32 %v3053, %v3062
  %v3066 = vadd.f32 %v3054, %v3062
  %v3067 = vadd.f32 %v3055, %v3062
  %v3068 = vadd.f32 %v3056, %v3062
  %v3069 = vadd.f32 %v3057, %v3062
  %v3070 = vadd.f32 %v3058, %v3062
  %v3071 = vadd.f32 %v3059, %v3062
  %v3072 = vpack.c.bf16 %v3065, %v3064
  %v3073 = vpack.c.bf16 %v3067, %v3066
  %v3074 = vpack.c.bf16 %v3069, %v3068
  %v3075 = vpack.c.bf16 %v3071, %v3070
  %v3076 = vld [vmem:[%s8] sm:$0xf]
  %v3077 = vld [vmem:[%s8 + $0x4] sm:$0xf]
  %v3078 = vld [vmem:[%s8 + $0x8] sm:$0xf]
  %v3079 = vld [vmem:[%s8 + $0xc] sm:$0xf]
  %v3080 = vld [vmem:[%s8 + $0x10] sm:$0xf]
  %v3081 = vld [vmem:[%s8 + $0x14] sm:$0xf]
  %v3082 = vld [vmem:[%s8 + $0x18] sm:$0xf]
  %v3083 = vld [vmem:[%s8 + $0x1c] sm:$0xf]
  %v3084 = vld [vmem:[%s8 + $0x20] sm:$0xf]
  %v3085 = vld [vmem:[%s8 + $0x24] sm:$0xf]
  %v3086 = vld [vmem:[%s8 + $0x28] sm:$0xf]
  %v3087 = vld [vmem:[%s8 + $0x2c] sm:$0xf]
  %v3088 = vld [vmem:[%s8 + $0x30] sm:$0xf]
  %v3089 = vld [vmem:[%s8 + $0x34] sm:$0xf]
  %v3090 = vld [vmem:[%s8 + $0x38] sm:$0xf]
  %v3091 = vld [vmem:[%s8 + $0x3c] sm:$0xf]
  %v3092 = vld [vmem:[%s9] sm:$0x1]
  %v3094 = vperm.slane %v3092, 0
  %v3112 = vunpack.c.l.b16 %v3076
  %v3113 = vunpack.c.l.b16 %v3077
  %v3114 = vunpack.c.l.b16 %v3078
  %v3115 = vunpack.c.l.b16 %v3079
  %v3116 = vunpack.c.l.b16 %v3080
  %v3117 = vunpack.c.l.b16 %v3081
  %v3118 = vunpack.c.l.b16 %v3082
  %v3119 = vunpack.c.l.b16 %v3083
  %v3120 = vunpack.c.l.b16 %v3084
  %v3121 = vunpack.c.l.b16 %v3085
  %v3122 = vunpack.c.l.b16 %v3086
  %v3123 = vunpack.c.l.b16 %v3087
  %v3124 = vunpack.c.l.b16 %v3088
  %v3125 = vunpack.c.l.b16 %v3089
  %v3126 = vunpack.c.l.b16 %v3090
  %v3127 = vunpack.c.l.b16 %v3091
  %v3128 = vpack.c.b16 %v3113, %v3112
  %v3129 = vpack.c.b16 %v3115, %v3114
  %v3130 = vpack.c.b16 %v3117, %v3116
  %v3131 = vpack.c.b16 %v3119, %v3118
  %v3132 = vpack.c.b16 %v3121, %v3120
  %v3133 = vpack.c.b16 %v3123, %v3122
  %v3134 = vpack.c.b16 %v3125, %v3124
  %v3135 = vpack.c.b16 %v3127, %v3126
  %3144 = vmatpush.bf16.msra.mxu0 %v3135
  %3145 = vmatpush.bf16.msra.mxu0 %v3134
  %3146 = vmatpush.bf16.msra.mxu0 %v3133
  %3147 = vmatpush.bf16.msra.mxu0 %v3132
  %3148 = vmatpush.bf16.msra.mxu0 %v3131
  %3149 = vmatpush.bf16.msra.mxu0 %v3130
  %3150 = vmatpush.bf16.msra.mxu0 %v3129
  %3151 = vmatpush.bf16.msra.mxu0 %v3128
  %3152 = vmatmul.bf16.gmra.mxu0 %v3072
  %v3153 = vpop.f32.mrf.mxu0
  %v3154 = vadd.f32 %v3094, %v3153
  %v3155 = vpop.f32.mrf.mxu0
  %v3156 = vadd.f32 %v3094, %v3155
  %3157 = vmatmul.bf16.gmra.mxu0 %v3073
  %v3158 = vpop.f32.mrf.mxu0
  %v3159 = vadd.f32 %v3094, %v3158
  %v3160 = vpop.f32.mrf.mxu0
  %v3161 = vadd.f32 %v3094, %v3160
  %3162 = vmatmul.bf16.gmra.mxu0 %v3074
  %v3163 = vpop.f32.mrf.mxu0
  %v3164 = vadd.f32 %v3094, %v3163
  %v3165 = vpop.f32.mrf.mxu0
  %v3166 = vadd.f32 %v3094, %v3165
  %3167 = vmatmul.bf16.gmra.mxu0 %v3075
  %v3168 = vpop.f32.mrf.mxu0
  %v3169 = vadd.f32 %v3094, %v3168
  %v3170 = vpop.f32.mrf.mxu0
  %v3171 = vadd.f32 %v3094, %v3170
  %3172 = vdwg.mxu0
  %v3173 = vmax.f32 %v3154, 0.0
  %v3174 = vmax.f32 %v3156, 0.0
  %v3175 = vmax.f32 %v3159, 0.0
  %v3176 = vmax.f32 %v3161, 0.0
  %v3177 = vmax.f32 %v3164, 0.0
  %v3178 = vmax.f32 %v3166, 0.0
  %v3179 = vmax.f32 %v3169, 0.0
  %v3180 = vmax.f32 %v3171, 0.0
  %3181 = vst [vmem:[%s10] sm:$0xff] %v3173
  %3182 = vst [vmem:[%s10 + $0x8] sm:$0xff] %v3174
  %3183 = vst [vmem:[%s10 + $0x10] sm:$0xff] %v3175
  %3184 = vst [vmem:[%s10 + $0x18] sm:$0xff] %v3176
  %3185 = vst [vmem:[%s10 + $0x20] sm:$0xff] %v3177
  %3186 = vst [vmem:[%s10 + $0x28] sm:$0xff] %v3178
  %3187 = vst [vmem:[%s10 + $0x30] sm:$0xff] %v3179
  %3188 = vst [vmem:[%s10 + $0x38] sm:$0xff] %v3180
  // Predicated region
  $region42: #{reaction_encoder_forward.5} parent=0 // pred_check
    _
  $region43: #{reaction_encoder_forward.5} parent=0 // pred_check_branch
    %3190 = sbr.rel (0) target = $region45
  $region44: #{reaction_encoder_forward.5} parent=0 // pred_region
    _
  $region45: #{reaction_encoder_forward.5} parent=0 // pred_fallthru
    _
  // Predicated region
  $region46: #{reaction_encoder_forward.5} parent=0 // pred_check
    _
  $region47: #{reaction_encoder_forward.5} parent=0 // pred_check_branch
    %3192 = sbr.rel (0) target = $region49
  $region48: #{reaction_encoder_forward.5} parent=0 // pred_region
    _
  $region49: #{reaction_encoder_forward.5} parent=0 // pred_fallthru
    _

// kernel: reaction_encoder_forward.3
$region0: #{reaction_encoder_forward.3}
  #allocation0 [shape = 'u32[]', space=smem, size = 0x4, offset = 0x4, fixed_abs, tag = 'smem constant byte address 0x4 - core index']
  #allocation1 [shape = 'u32[72,128]{1,0:T(1,128)}', space=vmem, size = 0x9000, scoped, tag = 'internal scratch']
  #allocation2 [shape = 'f32[8,8,512]{2,1,0:T(8,128)}', space=vmem, size = 0x20000, scoped, tag = 'scratch operand']
  %s0 = inlined_call_operand.vmem [shape: f32[8,8,128], index: 0, kind: input, shape index: {}]
  %s1 = inlined_call_operand.vmem [shape: bf16[128,1024], index: 1, kind: input, shape index: {}]
  %s2 = inlined_call_operand.vmem [shape: f32[1,1024], index: 2, kind: input, shape index: {}]
  %s3 = inlined_call_operand.hbm [shape: bf16[128,1024], index: 3, kind: input, shape index: {}]
  %s4 = inlined_call_operand.vmem [shape: f32[2,8,128], index: 4, kind: input, shape index: {}]
  %s5 = inlined_call_operand.vmem [shape: f32[2,8,128], index: 5, kind: input, shape index: {}]
  %s6 = inlined_call_operand.vmem [shape: f32[8,8,256], index: 6, kind: output, shape index: {}]
  %s7 = sld [smem:[#allocation0]]
  $region118: #{reaction_encoder_forward.3} parent=0
    _
  %s9 = ssub.s32 1, %s7
  %s10 = scalar_select 0, %s9, %s7
  $region1: #{reaction_encoder_forward.3} parent=0
    #allocation3 [shape = 'u8[262144]{0}', space=vmem, size = 0x40000, scoped, tag = 'input window, operand 1']
    #allocation4 [shape = 'u8[262144]{0}', space=vmem, size = 0x40000, scoped, tag = 'input window, operand 3']
    #allocation5 [shape = 's32[2]{0}', space=sflag, size = 0x8, scoped, tag = 'scoped memory for reaction_encoder_forward.3']
    #allocation6 [shape = 'u8[65536]{0}', space=vmem, size = 0x10000, scoped, tag = 'output window, operand 0']
    %11 = vsyncpa [#allocation5], 0
    %s12 = scalar_lea.sflag [#allocation5], 1
    %13 = vsyncpa %s12, 0
    loop: start=0, step=1, limit=4
    $region2: #{reaction_encoder_forward.3} parent=1 // loop_pre_header
      _
    $region3: #{reaction_encoder_forward.3} parent=1 // loop_header
      %s15 = sphi 0, %s19
      %p16 = scmp.ge.s32.totalorder %s15, 4
      %s23 = sphi 0, %s23
      %s25 = sphi 0, %s23
      %s26 = sphi 0, %s25
      %s40 = sphi 0, %s26
      %s46 = sphi 0, %s48
      %s49 = sphi 0, %s46
      %s50 = sphi 0, %s49
      %s66 = sphi 0, %s50
      %s72 = sphi 0, %s74
      %s75 = sphi 0, %s72
      %s76 = sphi 0, %s75
      %s92 = sphi 0, %s76
      %s98 = sphi 0, %s100
      %s101 = sphi 0, %s98
      %s102 = sphi 0, %s101
      %s118 = sphi 0, %s102
      %s124 = sphi 0, %s126
      %s127 = sphi 0, %s124
      %s128 = sphi 0, %s127
      %s144 = sphi 0, %s128
      %s150 = sphi 0, %s152
      %s153 = sphi 0, %s150
      %s154 = sphi 0, %s153
      %s170 = sphi 0, %s154
      %s176 = sphi 0, %s178
      %s179 = sphi 0, %s176
      %s180 = sphi 0, %s179
      %s196 = sphi 0, %s180
    $region4: #{reaction_encoder_forward.3} parent=1 // loop_header_branch
      %18 = sbr.rel (%p16) target = $region8
    $region5: #{reaction_encoder_forward.3} parent=1 // loop_body
      %s20 = ssub.s32 %s15, 1
      %s21 = ssub.s32 %s15, 2
      %s22 = sadd.s32 %s15, 1
      %s24 = sadd.s32 %s23, 1
      %p27 = scmp.eq.s32.totalorder %s15, 1
      %p28 = scmp.ne.s32.totalorder %s23, %s25
      %p29 = scmp.eq.s32.totalorder %s15, 0
      %p30 = por %p28, %p29
      %p31 = scmp.ne.s32.totalorder %s23, %s25
      %p32 = scmp.eq.s32.totalorder %s20, 1
      %p33 = por %p31, %p32
      %p34 = scmp.ne.s32.totalorder %s25, %s26
      %p35 = scmp.eq.s32.totalorder %s20, 0
      %p36 = por %p34, %p35
      %p37 = scmp.ne.s32.totalorder %s25, %s26
      %p38 = scmp.eq.s32.totalorder %s21, 1
      %p39 = por %p37, %p38
      %p41 = scmp.ne.s32.totalorder %s26, %s40
      %p42 = scmp.eq.s32.totalorder %s21, 0
      %p43 = por %p41, %p42
      %s44 = ssub.s32 %s15, %s22
      %p45 = scmp.eq.s32.totalorder %s44, 0
      %s47 = sadd.s32 %s46, 1
      %s48 = scalar_select %p45, %s46, %s47
      %p51 = pneg %p45
      %p52 = scmp.eq.s32.totalorder %s15, 1
      %p53 = por %p51, %p52
      %p54 = scmp.ne.s32.totalorder %s46, %s49
      %p55 = scmp.eq.s32.totalorder %s15, 0
      %p56 = por %p54, %p55
      %p57 = scmp.ne.s32.totalorder %s46, %s49
      %p58 = scmp.eq.s32.totalorder %s20, 1
      %p59 = por %p57, %p58
      %p60 = scmp.ne.s32.totalorder %s49, %s50
      %p61 = scmp.eq.s32.totalorder %s20, 0
      %p62 = por %p60, %p61
      %p63 = scmp.ne.s32.totalorder %s49, %s50
      %p64 = scmp.eq.s32.totalorder %s21, 1
      %p65 = por %p63, %p64
      %p67 = scmp.ne.s32.totalorder %s50, %s66
      %p68 = scmp.eq.s32.totalorder %s21, 0
      %p69 = por %p67, %p68
      %s70 = ssub.s32 %s15, %s22
      %p71 = scmp.eq.s32.totalorder %s70, 0
      %s73 = sadd.s32 %s72, 1
      %s74 = scalar_select %p71, %s72, %s73
      %p77 = pneg %p71
      %p78 = scmp.eq.s32.totalorder %s15, 1
      %p79 = por %p77, %p78
      %p80 = scmp.ne.s32.totalorder %s72, %s75
      %p81 = scmp.eq.s32.totalorder %s15, 0
      %p82 = por %p80, %p81
      %p83 = scmp.ne.s32.totalorder %s72, %s75
      %p84 = scmp.eq.s32.totalorder %s20, 1
      %p85 = por %p83, %p84
      %p86 = scmp.ne.s32.totalorder %s75, %s76
      %p87 = scmp.eq.s32.totalorder %s20, 0
      %p88 = por %p86, %p87
      %p89 = scmp.ne.s32.totalorder %s75, %s76
      %p90 = scmp.eq.s32.totalorder %s21, 1
      %p91 = por %p89, %p90
      %p93 = scmp.ne.s32.totalorder %s76, %s92
      %p94 = scmp.eq.s32.totalorder %s21, 0
      %p95 = por %p93, %p94
      %s96 = ssub.s32 %s15, %s22
      %p97 = scmp.eq.s32.totalorder %s96, 0
      %s99 = sadd.s32 %s98, 1
      %s100 = scalar_select %p97, %s98, %s99
      %p103 = pneg %p97
      %p104 = scmp.eq.s32.totalorder %s15, 1
      %p105 = por %p103, %p104
      %p106 = scmp.ne.s32.totalorder %s98, %s101
      %p107 = scmp.eq.s32.totalorder %s15, 0
      %p108 = por %p106, %p107
      %p109 = scmp.ne.s32.totalorder %s98, %s101
      %p110 = scmp.eq.s32.totalorder %s20, 1
      %p111 = por %p109, %p110
      %p112 = scmp.ne.s32.totalorder %s101, %s102
      %p113 = scmp.eq.s32.totalorder %s20, 0
      %p114 = por %p112, %p113
      %p115 = scmp.ne.s32.totalorder %s101, %s102
      %p116 = scmp.eq.s32.totalorder %s21, 1
      %p117 = por %p115, %p116
      %p119 = scmp.ne.s32.totalorder %s102, %s118
      %p120 = scmp.eq.s32.totalorder %s21, 0
      %p121 = por %p119, %p120
      %s122 = ssub.s32 %s15, %s22
      %p123 = scmp.eq.s32.totalorder %s122, 0
      %s125 = sadd.s32 %s124, 1
      %s126 = scalar_select %p123, %s124, %s125
      %p129 = pneg %p123
      %p130 = scmp.eq.s32.totalorder %s15, 1
      %p131 = por %p129, %p130
      %p132 = scmp.ne.s32.totalorder %s124, %s127
      %p133 = scmp.eq.s32.totalorder %s15, 0
      %p134 = por %p132, %p133
      %p135 = scmp.ne.s32.totalorder %s124, %s127
      %p136 = scmp.eq.s32.totalorder %s20, 1
      %p137 = por %p135, %p136
      %p138 = scmp.ne.s32.totalorder %s127, %s128
      %p139 = scmp.eq.s32.totalorder %s20, 0
      %p140 = por %p138, %p139
      %p141 = scmp.ne.s32.totalorder %s127, %s128
      %p142 = scmp.eq.s32.totalorder %s21, 1
      %p143 = por %p141, %p142
      %p145 = scmp.ne.s32.totalorder %s128, %s144
      %p146 = scmp.eq.s32.totalorder %s21, 0
      %p147 = por %p145, %p146
      %s148 = ssub.s32 %s15, %s22
      %p149 = scmp.eq.s32.totalorder %s148, 0
      %s151 = sadd.s32 %s150, 1
      %s152 = scalar_select %p149, %s150, %s151
      %p155 = pneg %p149
      %p156 = scmp.eq.s32.totalorder %s15, 1
      %p157 = por %p155, %p156
      %p158 = scmp.ne.s32.totalorder %s150, %s153
      %p159 = scmp.eq.s32.totalorder %s15, 0
      %p160 = por %p158, %p159
      %p161 = scmp.ne.s32.totalorder %s150, %s153
      %p162 = scmp.eq.s32.totalorder %s20, 1
      %p163 = por %p161, %p162
      %p164 = scmp.ne.s32.totalorder %s153, %s154
      %p165 = scmp.eq.s32.totalorder %s20, 0
      %p166 = por %p164, %p165
      %p167 = scmp.ne.s32.totalorder %s153, %s154
      %p168 = scmp.eq.s32.totalorder %s21, 1
      %p169 = por %p167, %p168
      %p171 = scmp.ne.s32.totalorder %s154, %s170
      %p172 = scmp.eq.s32.totalorder %s21, 0
      %p173 = por %p171, %p172
      %s174 = ssub.s32 %s15, %s22
      %p175 = scmp.eq.s32.totalorder %s174, 0
      %s177 = sadd.s32 %s176, 1
      %s178 = scalar_select %p175, %s176, %s177
      %p181 = pneg %p175
      %p182 = scmp.eq.s32.totalorder %s15, 1
      %p183 = por %p181, %p182
      %p184 = scmp.ne.s32.totalorder %s176, %s179
      %p185 = scmp.eq.s32.totalorder %s15, 0
      %p186 = por %p184, %p185
      %p187 = scmp.ne.s32.totalorder %s176, %s179
      %p188 = scmp.eq.s32.totalorder %s20, 1
      %p189 = por %p187, %p188
      %p190 = scmp.ne.s32.totalorder %s179, %s180
      %p191 = scmp.eq.s32.totalorder %s20, 0
      %p192 = por %p190, %p191
      %p193 = scmp.ne.s32.totalorder %s179, %s180
      %p194 = scmp.eq.s32.totalorder %s21, 1
      %p195 = por %p193, %p194
      %p197 = scmp.ne.s32.totalorder %s180, %s196
      %p198 = scmp.eq.s32.totalorder %s21, 0
      %p199 = por %p197, %p198
      %p200 = scmp.le.s32.totalorder 1, %s15
      %p201 = scmp.lt.s32.totalorder %s15, 3
      %p202 = pnand %p200, %p201
      %p203 = pneg %p202
      // Predicated region
      $region9: #{reaction_encoder_forward.3} parent=5 // pred_check
        _
      $region10: #{reaction_encoder_forward.3} parent=5 // pred_check_branch
        %205 = sbr.rel (%p202) target = $region12
      $region11: #{reaction_encoder_forward.3} parent=5 // pred_region
        %s206 = ssub.s32 %s15, 1
        // Predicated region
        $region13: #{reaction_encoder_forward.3} parent=11 // pred_check
          %p207 = pneg %p36
        $region14: #{reaction_encoder_forward.3} parent=11 // pred_check_branch
          %209 = sbr.rel (%p207) target = $region16
        $region15: #{reaction_encoder_forward.3} parent=11 // pred_region
          _
        $region16: #{reaction_encoder_forward.3} parent=11 // pred_fallthru
          _
      $region12: #{reaction_encoder_forward.3} parent=5 // pred_fallthru
        _
      %p210 = scmp.lt.s32.totalorder %s15, 2
      // Predicated region
      $region17: #{reaction_encoder_forward.3} parent=5 // pred_check
        %p211 = pneg %p210
      $region18: #{reaction_encoder_forward.3} parent=5 // pred_check_branch
        %213 = sbr.rel (%p211) target = $region20
      $region19: #{reaction_encoder_forward.3} parent=5 // pred_region
        // Predicated region
        $region21: #{reaction_encoder_forward.3} parent=19 // pred_check
          %p214 = pneg %p56
        $region22: #{reaction_encoder_forward.3} parent=19 // pred_check_branch
          %216 = sbr.rel (%p214) target = $region24
        $region23: #{reaction_encoder_forward.3} parent=19 // pred_region
          %s217 = sand.u32 %s46, 1
          %s218 = sand.u32 %s46, 1
          %s219 = smul.addr %s218, 256
          %s220 = scalar_lea.vmem [#allocation3], %s219
          %s221 = smul.u32 4, %s15
          %s222 = smul.addr %s221, 4
          %s223 = scalar_lea.vmem %s1, %s222
          // Predicated region
          $region25: #{reaction_encoder_forward.3} parent=23 // pred_check
            _
          $region26: #{reaction_encoder_forward.3} parent=23 // pred_check_branch
            %225 = sbr.rel (0) target = $region28
          $region27: #{reaction_encoder_forward.3} parent=23 // pred_region
            // Predicated region
            $region29: #{reaction_encoder_forward.3} parent=27 // pred_check
              _
            $region30: #{reaction_encoder_forward.3} parent=27 // pred_check_branch
              %227 = sbr.rel (0) target = $region32
            $region31: #{reaction_encoder_forward.3} parent=27 // pred_region
              loop: start=0, step=1, limit=1
              $region33: #{reaction_encoder_forward.3} parent=31 // loop_pre_header
                _
              $region34: #{reaction_encoder_forward.3} parent=31 // loop_header
                %s229 = sphi 0, %s233
                %p230 = scmp.ge.s32.totalorder %s229, 1
                %s234 = sphi %s223, %s223
                %s235 = sphi %s220, %s220
              $region35: #{reaction_encoder_forward.3} parent=31 // loop_header_branch
                %232 = sbr.rel (%p230) target = $region39
              $region36: #{reaction_encoder_forward.3} parent=31 // loop_body
                %v236 = vld [vmem:[%s234] sm:$0xff]
                %237 = vst [vmem:[%s235] sm:$0xff] %v236
                %v238 = vld [vmem:[%s234 + $0x8] sm:$0xff]
                %239 = vst [vmem:[%s235 + $0x8] sm:$0xff] %v238
                %v240 = vld [vmem:[%s234 + $0x20] sm:$0xff]
                %241 = vst [vmem:[%s235 + $0x10] sm:$0xff] %v240
                %v242 = vld [vmem:[%s234 + $0x28] sm:$0xff]
                %243 = vst [vmem:[%s235 + $0x18] sm:$0xff] %v242
                %v244 = vld [vmem:[%s234 + $0x40] sm:$0xff]
                %245 = vst [vmem:[%s235 + $0x20] sm:$0xff] %v244
                %v246 = vld [vmem:[%s234 + $0x48] sm:$0xff]
                %247 = vst [vmem:[%s235 + $0x28] sm:$0xff] %v246
                %v248 = vld [vmem:[%s234 + $0x60] sm:$0xff]
                %249 = vst [vmem:[%s235 + $0x30] sm:$0xff] %v248
                %v250 = vld [vmem:[%s234 + $0x68] sm:$0xff]
                %251 = vst [vmem:[%s235 + $0x38] sm:$0xff] %v250
                %v252 = vld [vmem:[%s234 + $0x80] sm:$0xff]
                %253 = vst [vmem:[%s235 + $0x40] sm:$0xff] %v252
                %v254 = vld [vmem:[%s234 + $0x88] sm:$0xff]
                %255 = vst [vmem:[%s235 + $0x48] sm:$0xff] %v254
                %v256 = vld [vmem:[%s234 + $0xa0] sm:$0xff]
                %257 = vst [vmem:[%s235 + $0x50] sm:$0xff] %v256
                %v258 = vld [vmem:[%s234 + $0xa8] sm:$0xff]
                %259 = vst [vmem:[%s235 + $0x58] sm:$0xff] %v258
                %v260 = vld [vmem:[%s234 + $0xc0] sm:$0xff]
                %261 = vst [vmem:[%s235 + $0x60] sm:$0xff] %v260
                %v262 = vld [vmem:[%s234 + $0xc8] sm:$0xff]
                %263 = vst [vmem:[%s235 + $0x68] sm:$0xff] %v262
                %v264 = vld [vmem:[%s234 + $0xe0] sm:$0xff]
                %265 = vst [vmem:[%s235 + $0x70] sm:$0xff] %v264
                %v266 = vld [vmem:[%s234 + $0xe8] sm:$0xff]
                %267 = vst [vmem:[%s235 + $0x78] sm:$0xff] %v266
                %v268 = vld [vmem:[%s234 + $0x100] sm:$0xff]
                %269 = vst [vmem:[%s235 + $0x80] sm:$0xff] %v268
                %v270 = vld [vmem:[%s234 + $0x108] sm:$0xff]
                %271 = vst [vmem:[%s235 + $0x88] sm:$0xff] %v270
                %v272 = vld [vmem:[%s234 + $0x120] sm:$0xff]
                %273 = vst [vmem:[%s235 + $0x90] sm:$0xff] %v272
                %v274 = vld [vmem:[%s234 + $0x128] sm:$0xff]
                %275 = vst [vmem:[%s235 + $0x98] sm:$0xff] %v274
                %v276 = vld [vmem:[%s234 + $0x140] sm:$0xff]
                %277 = vst [vmem:[%s235 + $0xa0] sm:$0xff] %v276
                %v278 = vld [vmem:[%s234 + $0x148] sm:$0xff]
                %279 = vst [vmem:[%s235 + $0xa8] sm:$0xff] %v278
                %v280 = vld [vmem:[%s234 + $0x160] sm:$0xff]
                %281 = vst [vmem:[%s235 + $0xb0] sm:$0xff] %v280
                %v282 = vld [vmem:[%s234 + $0x168] sm:$0xff]
                %283 = vst [vmem:[%s235 + $0xb8] sm:$0xff] %v282
                %v284 = vld [vmem:[%s234 + $0x180] sm:$0xff]
                %285 = vst [vmem:[%s235 + $0xc0] sm:$0xff] %v284
                %v286 = vld [vmem:[%s234 + $0x188] sm:$0xff]
                %287 = vst [vmem:[%s235 + $0xc8] sm:$0xff] %v286
                %v288 = vld [vmem:[%s234 + $0x1a0] sm:$0xff]
                %289 = vst [vmem:[%s235 + $0xd0] sm:$0xff] %v288
                %v290 = vld [vmem:[%s234 + $0x1a8] sm:$0xff]
                %291 = vst [vmem:[%s235 + $0xd8] sm:$0xff] %v290
                %v292 = vld [vmem:[%s234 + $0x1c0] sm:$0xff]
                %293 = vst [vmem:[%s235 + $0xe0] sm:$0xff] %v292
                %v294 = vld [vmem:[%s234 + $0x1c8] sm:$0xff]
                %295 = vst [vmem:[%s235 + $0xe8] sm:$0xff] %v294
                %v296 = vld [vmem:[%s234 + $0x1e0] sm:$0xff]
                %297 = vst [vmem:[%s235 + $0xf0] sm:$0xff] %v296
                %v298 = vld [vmem:[%s234 + $0x1e8] sm:$0xff]
                %299 = vst [vmem:[%s235 + $0xf8] sm:$0xff] %v298
              $region37: #{reaction_encoder_forward.3} parent=31 // loop_footer
                %s233 = sadd.s32 1, %s229
              $region38: #{reaction_encoder_forward.3} parent=31 // loop_footer_branch
                %228 = sbr.rel target = $region34
              $region39: #{reaction_encoder_forward.3} parent=31 // loop_exit
                _
            $region32: #{reaction_encoder_forward.3} parent=27 // pred_fallthru
              _
            // Predicated region
            $region40: #{reaction_encoder_forward.3} parent=27 // pred_check
              _
            $region41: #{reaction_encoder_forward.3} parent=27 // pred_check_branch
              %301 = sbr.rel target = $region43
            $region42: #{reaction_encoder_forward.3} parent=27 // pred_region
              _
            $region43: #{reaction_encoder_forward.3} parent=27 // pred_fallthru
              _
          $region28: #{reaction_encoder_forward.3} parent=23 // pred_fallthru
            _
          %302 = vnop
        $region24: #{reaction_encoder_forward.3} parent=19 // pred_fallthru
          _
        // Predicated region
        $region44: #{reaction_encoder_forward.3} parent=19 // pred_check
          %p303 = pneg %p82
        $region45: #{reaction_encoder_forward.3} parent=19 // pred_check_branch
          %305 = sbr.rel (%p303) target = $region47
        $region46: #{reaction_encoder_forward.3} parent=19 // pred_region
          %s306 = smul.u32 4, %s15
          %p307 = scmp.lt.s32.totalorder %s306, 7
          %s308 = scalar_select %p307, %s306, 7
          %s309 = scalar_lea.vmem %s2, %s308
          %s310 = smul.u32 4, %s15
        $region47: #{reaction_encoder_forward.3} parent=19 // pred_fallthru
          _
        // Predicated region
        $region48: #{reaction_encoder_forward.3} parent=19 // pred_check
          %p311 = pneg %p108
        $region49: #{reaction_encoder_forward.3} parent=19 // pred_check_branch
          %313 = sbr.rel (%p311) target = $region51
        $region50: #{reaction_encoder_forward.3} parent=19 // pred_region
          %s314 = sand.u32 %s98, 1
          %s315 = scalar_lea.sflag [#allocation5], %s314
          %s316 = sand.u32 %s98, 1
          %s317 = smul.addr %s316, 256
          %s318 = scalar_lea.vmem [#allocation4], %s317
          %s319 = smul.u32 4, %s15
          %321 = vsyncadd %s315, 0
          %s322 = smul.addr %s319, 4
          %s323 = scalar_lea.hbm %s3, %s322
          %s324 = sshll.u32 %s323, 4
          %s325 = int_to_ptr.hbm [resolvable:$true] %s324
          %s326 = sshll.u32 %s318, 4
          %s327 = int_to_ptr.vmem [resolvable:$true] %s326
          %332 = dma.hbm_to_vmem [thread:$0]  %s325, 4096, %s327, %s315, 512, 256, 16
        $region51: #{reaction_encoder_forward.3} parent=19 // pred_fallthru
          _
        // Predicated region
        $region52: #{reaction_encoder_forward.3} parent=19 // pred_check
          %p333 = pneg %p134
        $region53: #{reaction_encoder_forward.3} parent=19 // pred_check_branch
          %335 = sbr.rel (%p333) target = $region55
        $region54: #{reaction_encoder_forward.3} parent=19 // pred_region
          %p336 = scmp.lt.s32.totalorder %s15, 1
          %s337 = scalar_select %p336, %s15, 1
          %s338 = smul.addr %s337, 8
          %s339 = scalar_lea.vmem %s4, %s338
        $region55: #{reaction_encoder_forward.3} parent=19 // pred_fallthru
          _
        // Predicated region
        $region56: #{reaction_encoder_forward.3} parent=19 // pred_check
          %p340 = pneg %p160
        $region57: #{reaction_encoder_forward.3} parent=19 // pred_check_branch
          %342 = sbr.rel (%p340) target = $region59
        $region58: #{reaction_encoder_forward.3} parent=19 // pred_region
          %p343 = scmp.lt.s32.totalorder %s15, 1
          %s344 = scalar_select %p343, %s15, 1
          %s345 = smul.addr %s344, 8
          %s346 = scalar_lea.vmem %s5, %s345
        $region59: #{reaction_encoder_forward.3} parent=19 // pred_fallthru
          _
      $region20: #{reaction_encoder_forward.3} parent=5 // pred_fallthru
        _
      %p347 = scmp.le.s32.totalorder 1, %s15
      %p348 = scmp.lt.s32.totalorder %s15, 3
      %p349 = pnand %p347, %p348
      %p350 = pneg %p349
      // Predicated region
      $region60: #{reaction_encoder_forward.3} parent=5 // pred_check
        _
      $region61: #{reaction_encoder_forward.3} parent=5 // pred_check_branch
        %352 = sbr.rel (%p349) target = $region63
      $region62: #{reaction_encoder_forward.3} parent=5 // pred_region
        %s353 = ssub.s32 %s15, 1
        %s354 = sand.u32 %s49, 1
        %s355 = sand.u32 %s49, 1
        %s356 = smul.addr %s355, 256
        %s357 = scalar_lea.vmem [#allocation3], %s356
        // Predicated region
        $region64: #{reaction_encoder_forward.3} parent=62 // pred_check
          %p358 = pneg %p62
        $region65: #{reaction_encoder_forward.3} parent=62 // pred_check_branch
          %360 = sbr.rel (%p358) target = $region67
        $region66: #{reaction_encoder_forward.3} parent=62 // pred_region
          _
        $region67: #{reaction_encoder_forward.3} parent=62 // pred_fallthru
          _
        %s361 = sand.u32 %s101, 1
        %s362 = scalar_lea.sflag [#allocation5], %s361
        %s363 = sand.u32 %s101, 1
        %s364 = smul.addr %s363, 256
        %s365 = scalar_lea.vmem [#allocation4], %s364
        // Predicated region
        $region68: #{reaction_encoder_forward.3} parent=62 // pred_check
          %p366 = pneg %p114
        $region69: #{reaction_encoder_forward.3} parent=62 // pred_check_branch
          %368 = sbr.rel (%p366) target = $region71
        $region70: #{reaction_encoder_forward.3} parent=62 // pred_region
          %370 = dma.done %s362, 4096
        $region71: #{reaction_encoder_forward.3} parent=62 // pred_fallthru
          _
        %p371 = pneg %p36
        %p372 = pneg %p33
        %s373 = sand.u32 %s49, 1
        %s374 = sand.u32 %s49, 1
        %s375 = smul.addr %s374, 256
        %s376 = scalar_lea.vmem [#allocation3], %s375
        %p377 = pneg %p62
        %p378 = pneg %p59
        %s379 = smul.u32 4, %s20
        %p380 = scmp.lt.s32.totalorder %s379, 7
        %s381 = scalar_select %p380, %s379, 7
        %s382 = scalar_lea.vmem %s2, %s381
        %p383 = pneg %p88
        %p384 = pneg %p85
        %s385 = sand.u32 %s101, 1
        %s386 = scalar_lea.sflag [#allocation5], %s385
        %s387 = sand.u32 %s101, 1
        %s388 = smul.addr %s387, 256
        %s389 = scalar_lea.vmem [#allocation4], %s388
        %p390 = pneg %p114
        %p391 = pneg %p111
        %p392 = scmp.lt.s32.totalorder %s20, 1
        %s393 = scalar_select %p392, %s20, 1
        %s394 = smul.addr %s393, 8
        %s395 = scalar_lea.vmem %s4, %s394
        %p396 = pneg %p140
        %p397 = pneg %p137
        %p398 = scmp.lt.s32.totalorder %s20, 1
        %s399 = scalar_select %p398, %s20, 1
        %s400 = smul.addr %s399, 8
        %s401 = scalar_lea.vmem %s5, %s400
        %p402 = pneg %p166
        %p403 = pneg %p163
        %p404 = pneg %p192
        %p405 = pneg %p189
        %s406 = sand.u32 %s179, 1
        %s407 = sand.u32 %s179, 1
        %s408 = smul.addr %s407, 64
        %s409 = scalar_lea.vmem [#allocation6], %s408
        %s410 = smul.u32 4, %s20
        %s411 = smul.u32 4, %s20
        %p412 = scmp.lt.s32.totalorder %s411, 7
        %s413 = scalar_select %p412, %s411, 7
        %s414 = scalar_lea.vmem %s2, %s413
        %s415 = smul.u32 4, %s20
        %s416 = smul.u32 4, %s20
        %p417 = scmp.lt.s32.totalorder %s20, 1
        %s418 = scalar_select %p417, %s20, 1
        %s419 = smul.addr %s418, 8
        %s420 = scalar_lea.vmem %s4, %s419
        %p421 = scmp.lt.s32.totalorder %s20, 1
        %s422 = scalar_select %p421, %s20, 1
        %s423 = smul.addr %s422, 8
        %s424 = scalar_lea.vmem %s5, %s423
        %v425 = vld [vmem:[%s0] sm:$0xff]
        %v426 = vld [vmem:[%s0 + $0x8] sm:$0xff]
        %v427 = vld [vmem:[%s0 + $0x10] sm:$0xff]
        %v428 = vld [vmem:[%s0 + $0x18] sm:$0xff]
        %v429 = vld [vmem:[%s0 + $0x20] sm:$0xff]
        %v430 = vld [vmem:[%s0 + $0x28] sm:$0xff]
        %v431 = vld [vmem:[%s0 + $0x30] sm:$0xff]
        %v432 = vld [vmem:[%s0 + $0x38] sm:$0xff]
        %v433 = vpack.c.bf16 %v426, %v425
        %v434 = vpack.c.bf16 %v428, %v427
        %v435 = vpack.c.bf16 %v430, %v429
        %v436 = vpack.c.bf16 %v432, %v431
        %v437 = vld [vmem:[%s357] sm:$0xff]
        %v438 = vld [vmem:[%s357 + $0x8] sm:$0xff]
        %v439 = vld [vmem:[%s357 + $0x10] sm:$0xff]
        %v440 = vld [vmem:[%s357 + $0x18] sm:$0xff]
        %v441 = vld [vmem:[%s357 + $0x20] sm:$0xff]
        %v442 = vld [vmem:[%s357 + $0x28] sm:$0xff]
        %v443 = vld [vmem:[%s357 + $0x30] sm:$0xff]
        %v444 = vld [vmem:[%s357 + $0x38] sm:$0xff]
        %v445 = vld [vmem:[%s357 + $0x40] sm:$0xff]
        %v446 = vld [vmem:[%s357 + $0x48] sm:$0xff]
        %v447 = vld [vmem:[%s357 + $0x50] sm:$0xff]
        %v448 = vld [vmem:[%s357 + $0x58] sm:$0xff]
        %v449 = vld [vmem:[%s357 + $0x60] sm:$0xff]
        %v450 = vld [vmem:[%s357 + $0x68] sm:$0xff]
        %v451 = vld [vmem:[%s357 + $0x70] sm:$0xff]
        %v452 = vld [vmem:[%s357 + $0x78] sm:$0xff]
        %v453 = vld [vmem:[%s357 + $0x80] sm:$0xff]
        %v454 = vld [vmem:[%s357 + $0x88] sm:$0xff]
        %v455 = vld [vmem:[%s357 + $0x90] sm:$0xff]
        %v456 = vld [vmem:[%s357 + $0x98] sm:$0xff]
        %v457 = vld [vmem:[%s357 + $0xa0] sm:$0xff]
        %v458 = vld [vmem:[%s357 + $0xa8] sm:$0xff]
        %v459 = vld [vmem:[%s357 + $0xb0] sm:$0xff]
        %v460 = vld [vmem:[%s357 + $0xb8] sm:$0xff]
        %v461 = vld [vmem:[%s357 + $0xc0] sm:$0xff]
        %v462 = vld [vmem:[%s357 + $0xc8] sm:$0xff]
        %v463 = vld [vmem:[%s357 + $0xd0] sm:$0xff]
        %v464 = vld [vmem:[%s357 + $0xd8] sm:$0xff]
        %v465 = vld [vmem:[%s357 + $0xe0] sm:$0xff]
        %v466 = vld [vmem:[%s357 + $0xe8] sm:$0xff]
        %v467 = vld [vmem:[%s357 + $0xf0] sm:$0xff]
        %v468 = vld [vmem:[%s357 + $0xf8] sm:$0xff]
        %v469 = vld [vmem:[%s414] sm:$0xf]
        %v471 = vperm.slane %v469, 0
        %v472 = vperm.slane %v469, 1
        %v473 = vperm.slane %v469, 2
        %v474 = vperm.slane %v469, 3
        %v511 = vunpack.c.l.b16 %v437
        %v512 = vunpack.c.h.b16 %v437
        %v513 = vunpack.c.l.b16 %v438
        %v514 = vunpack.c.h.b16 %v438
        %v515 = vunpack.c.l.b16 %v439
        %v516 = vunpack.c.h.b16 %v439
        %v517 = vunpack.c.l.b16 %v440
        %v518 = vunpack.c.h.b16 %v440
        %v519 = vunpack.c.l.b16 %v441
        %v520 = vunpack.c.h.b16 %v441
        %v521 = vunpack.c.l.b16 %v442
        %v522 = vunpack.c.h.b16 %v442
        %v523 = vunpack.c.l.b16 %v443
        %v524 = vunpack.c.h.b16 %v443
        %v525 = vunpack.c.l.b16 %v444
        %v526 = vunpack.c.h.b16 %v444
        %v527 = vunpack.c.l.b16 %v445
        %v528 = vunpack.c.h.b16 %v445
        %v529 = vunpack.c.l.b16 %v446
        %v530 = vunpack.c.h.b16 %v446
        %v531 = vunpack.c.l.b16 %v447
        %v532 = vunpack.c.h.b16 %v447
        %v533 = vunpack.c.l.b16 %v448
        %v534 = vunpack.c.h.b16 %v448
        %v535 = vunpack.c.l.b16 %v449
        %v536 = vunpack.c.h.b16 %v449
        %v537 = vunpack.c.l.b16 %v450
        %v538 = vunpack.c.h.b16 %v450
        %v539 = vunpack.c.l.b16 %v451
        %v540 = vunpack.c.h.b16 %v451
        %v541 = vunpack.c.l.b16 %v452
        %v542 = vunpack.c.h.b16 %v452
        %v543 = vunpack.c.l.b16 %v453
        %v544 = vunpack.c.h.b16 %v453
        %v545 = vunpack.c.l.b16 %v454
        %v546 = vunpack.c.h.b16 %v454
        %v547 = vunpack.c.l.b16 %v455
        %v548 = vunpack.c.h.b16 %v455
        %v549 = vunpack.c.l.b16 %v456
        %v550 = vunpack.c.h.b16 %v456
        %v551 = vunpack.c.l.b16 %v457
        %v552 = vunpack.c.h.b16 %v457
        %v553 = vunpack.c.l.b16 %v458
        %v554 = vunpack.c.h.b16 %v458
        %v555 = vunpack.c.l.b16 %v459
        %v556 = vunpack.c.h.b16 %v459
        %v557 = vunpack.c.l.b16 %v460
        %v558 = vunpack.c.h.b16 %v460
        %v559 = vunpack.c.l.b16 %v461
        %v560 = vunpack.c.h.b16 %v461
        %v561 = vunpack.c.l.b16 %v462
        %v562 = vunpack.c.h.b16 %v462
        %v563 = vunpack.c.l.b16 %v463
        %v564 = vunpack.c.h.b16 %v463
        %v565 = vunpack.c.l.b16 %v464
        %v566 = vunpack.c.h.b16 %v464
        %v567 = vunpack.c.l.b16 %v465
        %v568 = vunpack.c.h.b16 %v465
        %v569 = vunpack.c.l.b16 %v466
        %v570 = vunpack.c.h.b16 %v466
        %v571 = vunpack.c.l.b16 %v467
        %v572 = vunpack.c.h.b16 %v467
        %v573 = vunpack.c.l.b16 %v468
        %v574 = vunpack.c.h.b16 %v468
        %v575 = vpack.c.b16 %v515, %v511
        %v576 = vpack.c.b16 %v516, %v512
        %v577 = vpack.c.b16 %v517, %v513
        %v578 = vpack.c.b16 %v518, %v514
        %v579 = vpack.c.b16 %v523, %v519
        %v580 = vpack.c.b16 %v524, %v520
        %v581 = vpack.c.b16 %v525, %v521
        %v582 = vpack.c.b16 %v526, %v522
        %v583 = vpack.c.b16 %v531, %v527
        %v584 = vpack.c.b16 %v532, %v528
        %v585 = vpack.c.b16 %v533, %v529
        %v586 = vpack.c.b16 %v534, %v530
        %v587 = vpack.c.b16 %v539, %v535
        %v588 = vpack.c.b16 %v540, %v536
        %v589 = vpack.c.b16 %v541, %v537
        %v590 = vpack.c.b16 %v542, %v538
        %v591 = vpack.c.b16 %v547, %v543
        %v592 = vpack.c.b16 %v548, %v544
        %v593 = vpack.c.b16 %v549, %v545
        %v594 = vpack.c.b16 %v550, %v546
        %v595 = vpack.c.b16 %v555, %v551
        %v596 = vpack.c.b16 %v556, %v552
        %v597 = vpack.c.b16 %v557, %v553
        %v598 = vpack.c.b16 %v558, %v554
        %v599 = vpack.c.b16 %v563, %v559
        %v600 = vpack.c.b16 %v564, %v560
        %v601 = vpack.c.b16 %v565, %v561
        %v602 = vpack.c.b16 %v566, %v562
        %v603 = vpack.c.b16 %v571, %v567
        %v604 = vpack.c.b16 %v572, %v568
        %v605 = vpack.c.b16 %v573, %v569
        %v606 = vpack.c.b16 %v574, %v570
        %639 = vmatpush.bf16.msra.mxu0 %v603
        %640 = vmatpush.bf16.msra.mxu0 %v599
        %641 = vmatpush.bf16.msra.mxu0 %v595
        %642 = vmatpush.bf16.msra.mxu0 %v591
        %643 = vmatpush.bf16.msra.mxu0 %v587
        %644 = vmatpush.bf16.msra.mxu0 %v583
        %645 = vmatpush.bf16.msra.mxu0 %v579
        %646 = vmatpush.bf16.msra.mxu0 %v575
        %647 = vmatmul.bf16.gmra.mxu0 %v433
        %v648 = vpop.f32.mrf.mxu0
        %v649 = vadd.f32 %v471, %v648
        %v650 = vpop.f32.mrf.mxu0
        %v651 = vadd.f32 %v471, %v650
        %652 = vmatmul.bf16.gmra.mxu0 %v434
        %v653 = vpop.f32.mrf.mxu0
        %v654 = vadd.f32 %v471, %v653
        %v655 = vpop.f32.mrf.mxu0
        %v656 = vadd.f32 %v471, %v655
        %657 = vmatmul.bf16.gmra.mxu0 %v435
        %v658 = vpop.f32.mrf.mxu0
        %v659 = vadd.f32 %v471, %v658
        %v660 = vpop.f32.mrf.mxu0
        %v661 = vadd.f32 %v471, %v660
        %662 = vmatmul.bf16.gmra.mxu0 %v436
        %v663 = vpop.f32.mrf.mxu0
        %v664 = vadd.f32 %v471, %v663
        %v665 = vpop.f32.mrf.mxu0
        %v666 = vadd.f32 %v471, %v665
        %667 = vdwg.mxu0
        %668 = vmatpush.bf16.msra.mxu0 %v604
        %669 = vmatpush.bf16.msra.mxu0 %v600
        %670 = vmatpush.bf16.msra.mxu0 %v596
        %671 = vmatpush.bf16.msra.mxu0 %v592
        %672 = vmatpush.bf16.msra.mxu0 %v588
        %673 = vmatpush.bf16.msra.mxu0 %v584
        %674 = vmatpush.bf16.msra.mxu0 %v580
        %675 = vmatpush.bf16.msra.mxu0 %v576
        %676 = vmatmul.bf16.gmra.mxu0 %v433
        %v677 = vpop.f32.mrf.mxu0
        %v678 = vadd.f32 %v472, %v677
        %v679 = vpop.f32.mrf.mxu0
        %v680 = vadd.f32 %v472, %v679
        %681 = vmatmul.bf16.gmra.mxu0 %v434
        %v682 = vpop.f32.mrf.mxu0
        %v683 = vadd.f32 %v472, %v682
        %v684 = vpop.f32.mrf.mxu0
        %v685 = vadd.f32 %v472, %v684
        %686 = vmatmul.bf16.gmra.mxu0 %v435
        %v687 = vpop.f32.mrf.mxu0
        %v688 = vadd.f32 %v472, %v687
        %v689 = vpop.f32.mrf.mxu0
        %v690 = vadd.f32 %v472, %v689
        %691 = vmatmul.bf16.gmra.mxu0 %v436
        %v692 = vpop.f32.mrf.mxu0
        %v693 = vadd.f32 %v472, %v692
        %v694 = vpop.f32.mrf.mxu0
        %v695 = vadd.f32 %v472, %v694
        %696 = vdwg.mxu0
        %697 = vmatpush.bf16.msra.mxu0 %v605
        %698 = vmatpush.bf16.msra.mxu0 %v601
        %699 = vmatpush.bf16.msra.mxu0 %v597
        %700 = vmatpush.bf16.msra.mxu0 %v593
        %701 = vmatpush.bf16.msra.mxu0 %v589
        %702 = vmatpush.bf16.msra.mxu0 %v585
        %703 = vmatpush.bf16.msra.mxu0 %v581
        %704 = vmatpush.bf16.msra.mxu0 %v577
        %705 = vmatmul.bf16.gmra.mxu0 %v433
        %v706 = vpop.f32.mrf.mxu0
        %v707 = vadd.f32 %v473, %v706
        %v708 = vpop.f32.mrf.mxu0
        %v709 = vadd.f32 %v473, %v708
        %710 = vmatmul.bf16.gmra.mxu0 %v434
        %v711 = vpop.f32.mrf.mxu0
        %v712 = vadd.f32 %v473, %v711
        %v713 = vpop.f32.mrf.mxu0
        %v714 = vadd.f32 %v473, %v713
        %715 = vmatmul.bf16.gmra.mxu0 %v435
        %v716 = vpop.f32.mrf.mxu0
        %v717 = vadd.f32 %v473, %v716
        %v718 = vpop.f32.mrf.mxu0
        %v719 = vadd.f32 %v473, %v718
        %720 = vmatmul.bf16.gmra.mxu0 %v436
        %v721 = vpop.f32.mrf.mxu0
        %v722 = vadd.f32 %v473, %v721
        %v723 = vpop.f32.mrf.mxu0
        %v724 = vadd.f32 %v473, %v723
        %725 = vdwg.mxu0
        %726 = vmatpush.bf16.msra.mxu0 %v606
        %727 = vmatpush.bf16.msra.mxu0 %v602
        %728 = vmatpush.bf16.msra.mxu0 %v598
        %729 = vmatpush.bf16.msra.mxu0 %v594
        %730 = vmatpush.bf16.msra.mxu0 %v590
        %731 = vmatpush.bf16.msra.mxu0 %v586
        %732 = vmatpush.bf16.msra.mxu0 %v582
        %733 = vmatpush.bf16.msra.mxu0 %v578
        %734 = vmatmul.bf16.gmra.mxu0 %v433
        %v735 = vpop.f32.mrf.mxu0
        %v736 = vadd.f32 %v474, %v735
        %v737 = vpop.f32.mrf.mxu0
        %v738 = vadd.f32 %v474, %v737
        %739 = vmatmul.bf16.gmra.mxu0 %v434
        %v740 = vpop.f32.mrf.mxu0
        %v741 = vadd.f32 %v474, %v740
        %v742 = vpop.f32.mrf.mxu0
        %v743 = vadd.f32 %v474, %v742
        %744 = vmatmul.bf16.gmra.mxu0 %v435
        %v745 = vpop.f32.mrf.mxu0
        %v746 = vadd.f32 %v474, %v745
        %v747 = vpop.f32.mrf.mxu0
        %v748 = vadd.f32 %v474, %v747
        %749 = vmatmul.bf16.gmra.mxu0 %v436
        %v750 = vpop.f32.mrf.mxu0
        %v751 = vadd.f32 %v474, %v750
        %v752 = vpop.f32.mrf.mxu0
        %v753 = vadd.f32 %v474, %v752
        %754 = vdwg.mxu0
        %755 = vst [vmem:[#allocation2] sm:$0xff] %v649
        %756 = vst [vmem:[#allocation2 + $0x8] sm:$0xff] %v678
        %757 = vst [vmem:[#allocation2 + $0x10] sm:$0xff] %v707
        %758 = vst [vmem:[#allocation2 + $0x18] sm:$0xff] %v736
        %759 = vst [vmem:[#allocation2 + $0x20] sm:$0xff] %v651
        %760 = vst [vmem:[#allocation2 + $0x28] sm:$0xff] %v680
        %761 = vst [vmem:[#allocation2 + $0x30] sm:$0xff] %v709
        %762 = vst [vmem:[#allocation2 + $0x38] sm:$0xff] %v738
        %763 = vst [vmem:[#allocation2 + $0x40] sm:$0xff] %v654
        %764 = vst [vmem:[#allocation2 + $0x48] sm:$0xff] %v683
        %765 = vst [vmem:[#allocation2 + $0x50] sm:$0xff] %v712
        %766 = vst [vmem:[#allocation2 + $0x58] sm:$0xff] %v741
        %767 = vst [vmem:[#allocation2 + $0x60] sm:$0xff] %v656
        %768 = vst [vmem:[#allocation2 + $0x68] sm:$0xff] %v685
        %769 = vst [vmem:[#allocation2 + $0x70] sm:$0xff] %v714
        %770 = vst [vmem:[#allocation2 + $0x78] sm:$0xff] %v743
        %771 = vst [vmem:[#allocation2 + $0x80] sm:$0xff] %v659
        %772 = vst [vmem:[#allocation2 + $0x88] sm:$0xff] %v688
        %773 = vst [vmem:[#allocation2 + $0x90] sm:$0xff] %v717
        %774 = vst [vmem:[#allocation2 + $0x98] sm:$0xff] %v746
        %775 = vst [vmem:[#allocation2 + $0xa0] sm:$0xff] %v661
        %776 = vst [vmem:[#allocation2 + $0xa8] sm:$0xff] %v690
        %777 = vst [vmem:[#allocation2 + $0xb0] sm:$0xff] %v719
        %778 = vst [vmem:[#allocation2 + $0xb8] sm:$0xff] %v748
        %779 = vst [vmem:[#allocation2 + $0xc0] sm:$0xff] %v664
        %780 = vst [vmem:[#allocation2 + $0xc8] sm:$0xff] %v693
        %781 = vst [vmem:[#allocation2 + $0xd0] sm:$0xff] %v722
        %782 = vst [vmem:[#allocation2 + $0xd8] sm:$0xff] %v751
        %783 = vst [vmem:[#allocation2 + $0xe0] sm:$0xff] %v666
        %784 = vst [vmem:[#allocation2 + $0xe8] sm:$0xff] %v695
        %785 = vst [vmem:[#allocation2 + $0xf0] sm:$0xff] %v724
        %786 = vst [vmem:[#allocation2 + $0xf8] sm:$0xff] %v753
        %v787 = vld [vmem:[%s420] sm:$0xff]
        %v788 = vld [vmem:[%s424] sm:$0xff]
        %p789 = scmp.eq.s32.totalorder %s20, 0
        %s790 = scalar_select %p789, 0, 7
        %s791 = smul.u32 %s790, 4
        %s792 = smul.addr %s791, 8
        %s793 = scalar_lea.vmem [#allocation2], %s792
        %v794 = vld [vmem:[%s793] sm:$0xff]
        %v795 = vld [vmem:[%s793 + $0x8] sm:$0xff]
        %v796 = vld [vmem:[%s793 + $0x10] sm:$0xff]
        %v797 = vld [vmem:[%s793 + $0x18] sm:$0xff]
        %v798 = vpack.c.bf16 %v787, %v787
        %v799 = vld [vmem:[%s365] sm:$0xff]
        %v800 = vld [vmem:[%s365 + $0x8] sm:$0xff]
        %v801 = vld [vmem:[%s365 + $0x10] sm:$0xff]
        %v802 = vld [vmem:[%s365 + $0x18] sm:$0xff]
        %v803 = vld [vmem:[%s365 + $0x20] sm:$0xff]
        %v804 = vld [vmem:[%s365 + $0x28] sm:$0xff]
        %v805 = vld [vmem:[%s365 + $0x30] sm:$0xff]
        %v806 = vld [vmem:[%s365 + $0x38] sm:$0xff]
        %v807 = vld [vmem:[%s365 + $0x40] sm:$0xff]
        %v808 = vld [vmem:[%s365 + $0x48] sm:$0xff]
        %v809 = vld [vmem:[%s365 + $0x50] sm:$0xff]
        %v810 = vld [vmem:[%s365 + $0x58] sm:$0xff]
        %v811 = vld [vmem:[%s365 + $0x60] sm:$0xff]
        %v812 = vld [vmem:[%s365 + $0x68] sm:$0xff]
        %v813 = vld [vmem:[%s365 + $0x70] sm:$0xff]
        %v814 = vld [vmem:[%s365 + $0x78] sm:$0xff]
        %v815 = vld [vmem:[%s365 + $0x80] sm:$0xff]
        %v816 = vld [vmem:[%s365 + $0x88] sm:$0xff]
        %v817 = vld [vmem:[%s365 + $0x90] sm:$0xff]
        %v818 = vld [vmem:[%s365 + $0x98] sm:$0xff]
        %v819 = vld [vmem:[%s365 + $0xa0] sm:$0xff]
        %v820 = vld [vmem:[%s365 + $0xa8] sm:$0xff]
        %v821 = vld [vmem:[%s365 + $0xb0] sm:$0xff]
        %v822 = vld [vmem:[%s365 + $0xb8] sm:$0xff]
        %v823 = vld [vmem:[%s365 + $0xc0] sm:$0xff]
        %v824 = vld [vmem:[%s365 + $0xc8] sm:$0xff]
        %v825 = vld [vmem:[%s365 + $0xd0] sm:$0xff]
        %v826 = vld [vmem:[%s365 + $0xd8] sm:$0xff]
        %v827 = vld [vmem:[%s365 + $0xe0] sm:$0xff]
        %v828 = vld [vmem:[%s365 + $0xe8] sm:$0xff]
        %v829 = vld [vmem:[%s365 + $0xf0] sm:$0xff]
        %v830 = vld [vmem:[%s365 + $0xf8] sm:$0xff]
        %v863 = vunpack.c.l.b16 %v799
        %v864 = vunpack.c.h.b16 %v799
        %v865 = vunpack.c.l.b16 %v800
        %v866 = vunpack.c.h.b16 %v800
        %v867 = vunpack.c.l.b16 %v801
        %v868 = vunpack.c.h.b16 %v801
        %v869 = vunpack.c.l.b16 %v802
        %v870 = vunpack.c.h.b16 %v802
        %v871 = vunpack.c.l.b16 %v803
        %v872 = vunpack.c.h.b16 %v803
        %v873 = vunpack.c.l.b16 %v804
        %v874 = vunpack.c.h.b16 %v804
        %v875 = vunpack.c.l.b16 %v805
        %v876 = vunpack.c.h.b16 %v805
        %v877 = vunpack.c.l.b16 %v806
        %v878 = vunpack.c.h.b16 %v806
        %v879 = vunpack.c.l.b16 %v807
        %v880 = vunpack.c.h.b16 %v807
        %v881 = vunpack.c.l.b16 %v808
        %v882 = vunpack.c.h.b16 %v808
        %v883 = vunpack.c.l.b16 %v809
        %v884 = vunpack.c.h.b16 %v809
        %v885 = vunpack.c.l.b16 %v810
        %v886 = vunpack.c.h.b16 %v810
        %v887 = vunpack.c.l.b16 %v811
        %v888 = vunpack.c.h.b16 %v811
        %v889 = vunpack.c.l.b16 %v812
        %v890 = vunpack.c.h.b16 %v812
        %v891 = vunpack.c.l.b16 %v813
        %v892 = vunpack.c.h.b16 %v813
        %v893 = vunpack.c.l.b16 %v814
        %v894 = vunpack.c.h.b16 %v814
        %v895 = vunpack.c.l.b16 %v815
        %v896 = vunpack.c.h.b16 %v815
        %v897 = vunpack.c.l.b16 %v816
        %v898 = vunpack.c.h.b16 %v816
        %v899 = vunpack.c.l.b16 %v817
        %v900 = vunpack.c.h.b16 %v817
        %v901 = vunpack.c.l.b16 %v818
        %v902 = vunpack.c.h.b16 %v818
        %v903 = vunpack.c.l.b16 %v819
        %v904 = vunpack.c.h.b16 %v819
        %v905 = vunpack.c.l.b16 %v820
        %v906 = vunpack.c.h.b16 %v820
        %v907 = vunpack.c.l.b16 %v821
        %v908 = vunpack.c.h.b16 %v821
        %v909 = vunpack.c.l.b16 %v822
        %v910 = vunpack.c.h.b16 %v822
        %v911 = vunpack.c.l.b16 %v823
        %v912 = vunpack.c.h.b16 %v823
        %v913 = vunpack.c.l.b16 %v824
        %v914 = vunpack.c.h.b16 %v824
        %v915 = vunpack.c.l.b16 %v825
        %v916 = vunpack.c.h.b16 %v825
        %v917 = vunpack.c.l.b16 %v826
        %v918 = vunpack.c.h.b16 %v826
        %v919 = vunpack.c.l.b16 %v827
        %v920 = vunpack.c.h.b16 %v827
        %v921 = vunpack.c.l.b16 %v828
        %v922 = vunpack.c.h.b16 %v828
        %v923 = vunpack.c.l.b16 %v829
        %v924 = vunpack.c.h.b16 %v829
        %v925 = vunpack.c.l.b16 %v830
        %v926 = vunpack.c.h.b16 %v830
        %v927 = vpack.c.b16 %v867, %v863
        %v928 = vpack.c.b16 %v868, %v864
        %v929 = vpack.c.b16 %v869, %v865
        %v930 = vpack.c.b16 %v870, %v866
        %v931 = vpack.c.b16 %v875, %v871
        %v932 = vpack.c.b16 %v876, %v872
        %v933 = vpack.c.b16 %v877, %v873
        %v934 = vpack.c.b16 %v878, %v874
        %v935 = vpack.c.b16 %v883, %v879
        %v936 = vpack.c.b16 %v884, %v880
        %v937 = vpack.c.b16 %v885, %v881
        %v938 = vpack.c.b16 %v886, %v882
        %v939 = vpack.c.b16 %v891, %v887
        %v940 = vpack.c.b16 %v892, %v888
        %v941 = vpack.c.b16 %v893, %v889
        %v942 = vpack.c.b16 %v894, %v890
        %v943 = vpack.c.b16 %v899, %v895
        %v944 = vpack.c.b16 %v900, %v896
        %v945 = vpack.c.b16 %v901, %v897
        %v946 = vpack.c.b16 %v902, %v898
        %v947 = vpack.c.b16 %v907, %v903
        %v948 = vpack.c.b16 %v908, %v904
        %v949 = vpack.c.b16 %v909, %v905
        %v950 = vpack.c.b16 %v910, %v906
        %v951 = vpack.c.b16 %v915, %v911
        %v952 = vpack.c.b16 %v916, %v912
        %v953 = vpack.c.b16 %v917, %v913
        %v954 = vpack.c.b16 %v918, %v914
        %v955 = vpack.c.b16 %v923, %v919
        %v956 = vpack.c.b16 %v924, %v920
        %v957 = vpack.c.b16 %v925, %v921
        %v958 = vpack.c.b16 %v926, %v922
        %991 = vmatpush.bf16.msra.mxu0 %v955
        %992 = vmatpush.bf16.msra.mxu0 %v951
        %993 = vmatpush.bf16.msra.mxu0 %v947
        %994 = vmatpush.bf16.msra.mxu0 %v943
        %995 = vmatpush.bf16.msra.mxu0 %v939
        %996 = vmatpush.bf16.msra.mxu0 %v935
        %997 = vmatpush.bf16.msra.mxu0 %v931
        %998 = vmatpush.bf16.msra.mxu0 %v927
        %999 = vmatmul.bf16.gmra.mxu0 %v798
        %v1000 = vpop.f32.mrf.mxu0
        %v1001 = vadd.f32 0.0, %v1000
        %v1002 = vpop.f32.mrf.mxu0
        %1003 = vdwg.mxu0
        %1004 = vmatpush.bf16.msra.mxu0 %v956
        %1005 = vmatpush.bf16.msra.mxu0 %v952
        %1006 = vmatpush.bf16.msra.mxu0 %v948
        %1007 = vmatpush.bf16.msra.mxu0 %v944
        %1008 = vmatpush.bf16.msra.mxu0 %v940
        %1009 = vmatpush.bf16.msra.mxu0 %v936
        %1010 = vmatpush.bf16.msra.mxu0 %v932
        %1011 = vmatpush.bf16.msra.mxu0 %v928
        %1012 = vmatmul.bf16.gmra.mxu0 %v798
        %v1013 = vpop.f32.mrf.mxu0
        %v1014 = vadd.f32 0.0, %v1013
        %v1015 = vpop.f32.mrf.mxu0
        %1016 = vdwg.mxu0
        %1017 = vmatpush.bf16.msra.mxu0 %v957
        %1018 = vmatpush.bf16.msra.mxu0 %v953
        %1019 = vmatpush.bf16.msra.mxu0 %v949
        %1020 = vmatpush.bf16.msra.mxu0 %v945
        %1021 = vmatpush.bf16.msra.mxu0 %v941
        %1022 = vmatpush.bf16.msra.mxu0 %v937
        %1023 = vmatpush.bf16.msra.mxu0 %v933
        %1024 = vmatpush.bf16.msra.mxu0 %v929
        %1025 = vmatmul.bf16.gmra.mxu0 %v798
        %v1026 = vpop.f32.mrf.mxu0
        %v1027 = vadd.f32 0.0, %v1026
        %v1028 = vpop.f32.mrf.mxu0
        %1029 = vdwg.mxu0
        %1030 = vmatpush.bf16.msra.mxu0 %v958
        %1031 = vmatpush.bf16.msra.mxu0 %v954
        %1032 = vmatpush.bf16.msra.mxu0 %v950
        %1033 = vmatpush.bf16.msra.mxu0 %v946
        %1034 = vmatpush.bf16.msra.mxu0 %v942
        %1035 = vmatpush.bf16.msra.mxu0 %v938
        %1036 = vmatpush.bf16.msra.mxu0 %v934
        %1037 = vmatpush.bf16.msra.mxu0 %v930
        %1038 = vmatmul.bf16.gmra.mxu0 %v798
        %v1039 = vpop.f32.mrf.mxu0
        %v1040 = vadd.f32 0.0, %v1039
        %v1041 = vpop.f32.mrf.mxu0
        %1042 = vdwg.mxu0
        %v1043 = vadd.f32 %v794, %v1001
        %v1044 = vadd.f32 %v795, %v1014
        %v1045 = vadd.f32 %v796, %v1027
        %v1046 = vadd.f32 %v797, %v1040
        %v1047 = vxor.u32 %v1043, 2147483648
        %v1048 = vmul.f32 %v1047, 1.442695
        %v1049 = vpow.pop %v1048
        %v1050 = vadd.f32 %v1049, 1.0
        %v1051 = vrcp.pop %v1050
        %v1052 = vmul.f32 %v1050, %v1051
        %v1053 = vsub.f32 1.0, %v1052
        %v1054 = vmul.f32 %v1051, %v1053
        %v1055 = vadd.f32 %v1051, %v1054
        %vm1056 = vweird.f32 %v1050
        %vm1057 = vweird.f32 %v1051
        %vm1058 = vmor %vm1056, %vm1057
        %v1059 = vsel %vm1058, %v1051, %v1055
        %v1060 = vand.u32 2147483647, %v1050
        %vm1061 = vcmp.eq.f32.partialorder %v1060, 8.507059e+37
        %v1062 = vand.u32 %v1050, 2147483648
        %v1063 = vor.u32 1.1754944e-38, %v1062
        %v1064 = vsel %vm1061, %v1063, %v1059
        %v1065 = vmul.f32 1.0, %v1064
        %v1066 = vxor.u32 %v1044, 2147483648
        %v1067 = vmul.f32 %v1066, 1.442695
        %v1068 = vpow.pop %v1067
        %v1069 = vadd.f32 %v1068, 1.0
        %v1070 = vrcp.pop %v1069
        %v1071 = vmul.f32 %v1069, %v1070
        %v1072 = vsub.f32 1.0, %v1071
        %v1073 = vmul.f32 %v1070, %v1072
        %v1074 = vadd.f32 %v1070, %v1073
        %vm1075 = vweird.f32 %v1069
        %vm1076 = vweird.f32 %v1070
        %vm1077 = vmor %vm1075, %vm1076
        %v1078 = vsel %vm1077, %v1070, %v1074
        %v1079 = vand.u32 2147483647, %v1069
        %vm1080 = vcmp.eq.f32.partialorder %v1079, 8.507059e+37
        %v1081 = vand.u32 %v1069, 2147483648
        %v1082 = vor.u32 1.1754944e-38, %v1081
        %v1083 = vsel %vm1080, %v1082, %v1078
        %v1084 = vmul.f32 1.0, %v1083
        %v1085 = vtanh.pop %v1045
        %v1086 = vxor.u32 %v1046, 2147483648
        %v1087 = vmul.f32 %v1086, 1.442695
        %v1088 = vpow.pop %v1087
        %v1089 = vadd.f32 %v1088, 1.0
        %v1090 = vrcp.pop %v1089
        %v1091 = vmul.f32 %v1089, %v1090
        %v1092 = vsub.f32 1.0, %v1091
        %v1093 = vmul.f32 %v1090, %v1092
        %v1094 = vadd.f32 %v1090, %v1093
        %vm1095 = vweird.f32 %v1089
        %vm1096 = vweird.f32 %v1090
        %vm1097 = vmor %vm1095, %vm1096
        %v1098 = vsel %vm1097, %v1090, %v1094
        %v1099 = vand.u32 2147483647, %v1089
        %vm1100 = vcmp.eq.f32.partialorder %v1099, 8.507059e+37
        %v1101 = vand.u32 %v1089, 2147483648
        %v1102 = vor.u32 1.1754944e-38, %v1101
        %v1103 = vsel %vm1100, %v1102, %v1098
        %v1104 = vmul.f32 1.0, %v1103
        %v1105 = vmul.f32 %v1084, %v788
        %v1106 = vmul.f32 %v1065, %v1085
        %v1107 = vadd.f32 %v1105, %v1106
        %v1108 = vtanh.pop %v1107
        %v1109 = vmul.f32 %v1104, %v1108
        %s1110 = smul.u32 %s790, 8
        %s1111 = scalar_lea.vmem %s409, %s1110 [#allocation6]
        %1112 = vst [vmem:[%s1111] sm:$0xff] %v1109
        %s1113 = scalar_select %p789, 1, 6
        %s1114 = smul.u32 %s1113, 4
        %s1115 = smul.addr %s1114, 8
        %s1116 = scalar_lea.vmem [#allocation2], %s1115
        %v1117 = vld [vmem:[%s1116] sm:$0xff]
        %v1118 = vld [vmem:[%s1116 + $0x8] sm:$0xff]
        %v1119 = vld [vmem:[%s1116 + $0x10] sm:$0xff]
        %v1120 = vld [vmem:[%s1116 + $0x18] sm:$0xff]
        %v1121 = vpack.c.bf16 %v1109, %v1109
        %v1122 = vld [vmem:[%s365] sm:$0xff]
        %v1123 = vld [vmem:[%s365 + $0x8] sm:$0xff]
        %v1124 = vld [vmem:[%s365 + $0x10] sm:$0xff]
        %v1125 = vld [vmem:[%s365 + $0x18] sm:$0xff]
        %v1126 = vld [vmem:[%s365 + $0x20] sm:$0xff]
        %v1127 = vld [vmem:[%s365 + $0x28] sm:$0xff]
        %v1128 = vld [vmem:[%s365 + $0x30] sm:$0xff]
        %v1129 = vld [vmem:[%s365 + $0x38] sm:$0xff]
        %v1130 = vld [vmem:[%s365 + $0x40] sm:$0xff]
        %v1131 = vld [vmem:[%s365 + $0x48] sm:$0xff]
        %v1132 = vld [vmem:[%s365 + $0x50] sm:$0xff]
        %v1133 = vld [vmem:[%s365 + $0x58] sm:$0xff]
        %v1134 = vld [vmem:[%s365 + $0x60] sm:$0xff]
        %v1135 = vld [vmem:[%s365 + $0x68] sm:$0xff]
        %v1136 = vld [vmem:[%s365 + $0x70] sm:$0xff]
        %v1137 = vld [vmem:[%s365 + $0x78] sm:$0xff]
        %v1138 = vld [vmem:[%s365 + $0x80] sm:$0xff]
        %v1139 = vld [vmem:[%s365 + $0x88] sm:$0xff]
        %v1140 = vld [vmem:[%s365 + $0x90] sm:$0xff]
        %v1141 = vld [vmem:[%s365 + $0x98] sm:$0xff]
        %v1142 = vld [vmem:[%s365 + $0xa0] sm:$0xff]
        %v1143 = vld [vmem:[%s365 + $0xa8] sm:$0xff]
        %v1144 = vld [vmem:[%s365 + $0xb0] sm:$0xff]
        %v1145 = vld [vmem:[%s365 + $0xb8] sm:$0xff]
        %v1146 = vld [vmem:[%s365 + $0xc0] sm:$0xff]
        %v1147 = vld [vmem:[%s365 + $0xc8] sm:$0xff]
        %v1148 = vld [vmem:[%s365 + $0xd0] sm:$0xff]
        %v1149 = vld [vmem:[%s365 + $0xd8] sm:$0xff]
        %v1150 = vld [vmem:[%s365 + $0xe0] sm:$0xff]
        %v1151 = vld [vmem:[%s365 + $0xe8] sm:$0xff]
        %v1152 = vld [vmem:[%s365 + $0xf0] sm:$0xff]
        %v1153 = vld [vmem:[%s365 + $0xf8] sm:$0xff]
        %v1186 = vunpack.c.l.b16 %v1122
        %v1187 = vunpack.c.h.b16 %v1122
        %v1188 = vunpack.c.l.b16 %v1123
        %v1189 = vunpack.c.h.b16 %v1123
        %v1190 = vunpack.c.l.b16 %v1124
        %v1191 = vunpack.c.h.b16 %v1124
        %v1192 = vunpack.c.l.b16 %v1125
        %v1193 = vunpack.c.h.b16 %v1125
        %v1194 = vunpack.c.l.b16 %v1126
        %v1195 = vunpack.c.h.b16 %v1126
        %v1196 = vunpack.c.l.b16 %v1127
        %v1197 = vunpack.c.h.b16 %v1127
        %v1198 = vunpack.c.l.b16 %v1128
        %v1199 = vunpack.c.h.b16 %v1128
        %v1200 = vunpack.c.l.b16 %v1129
        %v1201 = vunpack.c.h.b16 %v1129
        %v1202 = vunpack.c.l.b16 %v1130
        %v1203 = vunpack.c.h.b16 %v1130
        %v1204 = vunpack.c.l.b16 %v1131
        %v1205 = vunpack.c.h.b16 %v1131
        %v1206 = vunpack.c.l.b16 %v1132
        %v1207 = vunpack.c.h.b16 %v1132
        %v1208 = vunpack.c.l.b16 %v1133
        %v1209 = vunpack.c.h.b16 %v1133
        %v1210 = vunpack.c.l.b16 %v1134
        %v1211 = vunpack.c.h.b16 %v1134
        %v1212 = vunpack.c.l.b16 %v1135
        %v1213 = vunpack.c.h.b16 %v1135
        %v1214 = vunpack.c.l.b16 %v1136
        %v1215 = vunpack.c.h.b16 %v1136
        %v1216 = vunpack.c.l.b16 %v1137
        %v1217 = vunpack.c.h.b16 %v1137
        %v1218 = vunpack.c.l.b16 %v1138
        %v1219 = vunpack.c.h.b16 %v1138
        %v1220 = vunpack.c.l.b16 %v1139
        %v1221 = vunpack.c.h.b16 %v1139
        %v1222 = vunpack.c.l.b16 %v1140
        %v1223 = vunpack.c.h.b16 %v1140
        %v1224 = vunpack.c.l.b16 %v1141
        %v1225 = vunpack.c.h.b16 %v1141
        %v1226 = vunpack.c.l.b16 %v1142
        %v1227 = vunpack.c.h.b16 %v1142
        %v1228 = vunpack.c.l.b16 %v1143
        %v1229 = vunpack.c.h.b16 %v1143
        %v1230 = vunpack.c.l.b16 %v1144
        %v1231 = vunpack.c.h.b16 %v1144
        %v1232 = vunpack.c.l.b16 %v1145
        %v1233 = vunpack.c.h.b16 %v1145
        %v1234 = vunpack.c.l.b16 %v1146
        %v1235 = vunpack.c.h.b16 %v1146
        %v1236 = vunpack.c.l.b16 %v1147
        %v1237 = vunpack.c.h.b16 %v1147
        %v1238 = vunpack.c.l.b16 %v1148
        %v1239 = vunpack.c.h.b16 %v1148
        %v1240 = vunpack.c.l.b16 %v1149
        %v1241 = vunpack.c.h.b16 %v1149
        %v1242 = vunpack.c.l.b16 %v1150
        %v1243 = vunpack.c.h.b16 %v1150
        %v1244 = vunpack.c.l.b16 %v1151
        %v1245 = vunpack.c.h.b16 %v1151
        %v1246 = vunpack.c.l.b16 %v1152
        %v1247 = vunpack.c.h.b16 %v1152
        %v1248 = vunpack.c.l.b16 %v1153
        %v1249 = vunpack.c.h.b16 %v1153
        %v1250 = vpack.c.b16 %v1190, %v1186
        %v1251 = vpack.c.b16 %v1191, %v1187
        %v1252 = vpack.c.b16 %v1192, %v1188
        %v1253 = vpack.c.b16 %v1193, %v1189
        %v1254 = vpack.c.b16 %v1198, %v1194
        %v1255 = vpack.c.b16 %v1199, %v1195
        %v1256 = vpack.c.b16 %v1200, %v1196
        %v1257 = vpack.c.b16 %v1201, %v1197
        %v1258 = vpack.c.b16 %v1206, %v1202
        %v1259 = vpack.c.b16 %v1207, %v1203
        %v1260 = vpack.c.b16 %v1208, %v1204
        %v1261 = vpack.c.b16 %v1209, %v1205
        %v1262 = vpack.c.b16 %v1214, %v1210
        %v1263 = vpack.c.b16 %v1215, %v1211
        %v1264 = vpack.c.b16 %v1216, %v1212
        %v1265 = vpack.c.b16 %v1217, %v1213
        %v1266 = vpack.c.b16 %v1222, %v1218
        %v1267 = vpack.c.b16 %v1223, %v1219
        %v1268 = vpack.c.b16 %v1224, %v1220
        %v1269 = vpack.c.b16 %v1225, %v1221
        %v1270 = vpack.c.b16 %v1230, %v1226
        %v1271 = vpack.c.b16 %v1231, %v1227
        %v1272 = vpack.c.b16 %v1232, %v1228
        %v1273 = vpack.c.b16 %v1233, %v1229
        %v1274 = vpack.c.b16 %v1238, %v1234
        %v1275 = vpack.c.b16 %v1239, %v1235
        %v1276 = vpack.c.b16 %v1240, %v1236
        %v1277 = vpack.c.b16 %v1241, %v1237
        %v1278 = vpack.c.b16 %v1246, %v1242
        %v1279 = vpack.c.b16 %v1247, %v1243
        %v1280 = vpack.c.b16 %v1248, %v1244
        %v1281 = vpack.c.b16 %v1249, %v1245
        %1314 = vmatpush.bf16.msra.mxu0 %v1278
        %1315 = vmatpush.bf16.msra.mxu0 %v1274
        %1316 = vmatpush.bf16.msra.mxu0 %v1270
        %1317 = vmatpush.bf16.msra.mxu0 %v1266
        %1318 = vmatpush.bf16.msra.mxu0 %v1262
        %1319 = vmatpush.bf16.msra.mxu0 %v1258
        %1320 = vmatpush.bf16.msra.mxu0 %v1254
        %1321 = vmatpush.bf16.msra.mxu0 %v1250
        %1322 = vmatmul.bf16.gmra.mxu0 %v1121
        %v1323 = vpop.f32.mrf.mxu0
        %v1324 = vadd.f32 0.0, %v1323
        %v1325 = vpop.f32.mrf.mxu0
        %1326 = vdwg.mxu0
        %1327 = vmatpush.bf16.msra.mxu0 %v1279
        %1328 = vmatpush.bf16.msra.mxu0 %v1275
        %1329 = vmatpush.bf16.msra.mxu0 %v1271
        %1330 = vmatpush.bf16.msra.mxu0 %v1267
        %1331 = vmatpush.bf16.msra.mxu0 %v1263
        %1332 = vmatpush.bf16.msra.mxu0 %v1259
        %1333 = vmatpush.bf16.msra.mxu0 %v1255
        %1334 = vmatpush.bf16.msra.mxu0 %v1251
        %1335 = vmatmul.bf16.gmra.mxu0 %v1121
        %v1336 = vpop.f32.mrf.mxu0
        %v1337 = vadd.f32 0.0, %v1336
        %v1338 = vpop.f32.mrf.mxu0
        %1339 = vdwg.mxu0
        %1340 = vmatpush.bf16.msra.mxu0 %v1280
        %1341 = vmatpush.bf16.msra.mxu0 %v1276
        %1342 = vmatpush.bf16.msra.mxu0 %v1272
        %1343 = vmatpush.bf16.msra.mxu0 %v1268
        %1344 = vmatpush.bf16.msra.mxu0 %v1264
        %1345 = vmatpush.bf16.msra.mxu0 %v1260
        %1346 = vmatpush.bf16.msra.mxu0 %v1256
        %1347 = vmatpush.bf16.msra.mxu0 %v1252
        %1348 = vmatmul.bf16.gmra.mxu0 %v1121
        %v1349 = vpop.f32.mrf.mxu0
        %v1350 = vadd.f32 0.0, %v1349
        %v1351 = vpop.f32.mrf.mxu0
        %1352 = vdwg.mxu0
        %1353 = vmatpush.bf16.msra.mxu0 %v1281
        %1354 = vmatpush.bf16.msra.mxu0 %v1277
        %1355 = vmatpush.bf16.msra.mxu0 %v1273
        %1356 = vmatpush.bf16.msra.mxu0 %v1269
        %1357 = vmatpush.bf16.msra.mxu0 %v1265
        %1358 = vmatpush.bf16.msra.mxu0 %v1261
        %1359 = vmatpush.bf16.msra.mxu0 %v1257
        %1360 = vmatpush.bf16.msra.mxu0 %v1253
        %1361 = vmatmul.bf16.gmra.mxu0 %v1121
        %v1362 = vpop.f32.mrf.mxu0
        %v1363 = vadd.f32 0.0, %v1362
        %v1364 = vpop.f32.mrf.mxu0
        %1365 = vdwg.mxu0
        %v1366 = vadd.f32 %v1117, %v1324
        %v1367 = vadd.f32 %v1118, %v1337
        %v1368 = vadd.f32 %v1119, %v1350
        %v1369 = vadd.f32 %v1120, %v1363
        %v1370 = vxor.u32 %v1366, 2147483648
        %v1371 = vmul.f32 %v1370, 1.442695
        %v1372 = vpow.pop %v1371
        %v1373 = vadd.f32 %v1372, 1.0
        %v1374 = vrcp.pop %v1373
        %v1375 = vmul.f32 %v1373, %v1374
        %v1376 = vsub.f32 1.0, %v1375
        %v1377 = vmul.f32 %v1374, %v1376
        %v1378 = vadd.f32 %v1374, %v1377
        %vm1379 = vweird.f32 %v1373
        %vm1380 = vweird.f32 %v1374
        %vm1381 = vmor %vm1379, %vm1380
        %v1382 = vsel %vm1381, %v1374, %v1378
        %v1383 = vand.u32 2147483647, %v1373
        %vm1384 = vcmp.eq.f32.partialorder %v1383, 8.507059e+37
        %v1385 = vand.u32 %v1373, 2147483648
        %v1386 = vor.u32 1.1754944e-38, %v1385
        %v1387 = vsel %vm1384, %v1386, %v1382
        %v1388 = vmul.f32 1.0, %v1387
        %v1389 = vxor.u32 %v1367, 2147483648
        %v1390 = vmul.f32 %v1389, 1.442695
        %v1391 = vpow.pop %v1390
        %v1392 = vadd.f32 %v1391, 1.0
        %v1393 = vrcp.pop %v1392
        %v1394 = vmul.f32 %v1392, %v1393
        %v1395 = vsub.f32 1.0, %v1394
        %v1396 = vmul.f32 %v1393, %v1395
        %v1397 = vadd.f32 %v1393, %v1396
        %vm1398 = vweird.f32 %v1392
        %vm1399 = vweird.f32 %v1393
        %vm1400 = vmor %vm1398, %vm1399
        %v1401 = vsel %vm1400, %v1393, %v1397
        %v1402 = vand.u32 2147483647, %v1392
        %vm1403 = vcmp.eq.f32.partialorder %v1402, 8.507059e+37
        %v1404 = vand.u32 %v1392, 2147483648
        %v1405 = vor.u32 1.1754944e-38, %v1404
        %v1406 = vsel %vm1403, %v1405, %v1401
        %v1407 = vmul.f32 1.0, %v1406
        %v1408 = vtanh.pop %v1368
        %v1409 = vxor.u32 %v1369, 2147483648
        %v1410 = vmul.f32 %v1409, 1.442695
        %v1411 = vpow.pop %v1410
        %v1412 = vadd.f32 %v1411, 1.0
        %v1413 = vrcp.pop %v1412
        %v1414 = vmul.f32 %v1412, %v1413
        %v1415 = vsub.f32 1.0, %v1414
        %v1416 = vmul.f32 %v1413, %v1415
        %v1417 = vadd.f32 %v1413, %v1416
        %vm1418 = vweird.f32 %v1412
        %vm1419 = vweird.f32 %v1413
        %vm1420 = vmor %vm1418, %vm1419
        %v1421 = vsel %vm1420, %v1413, %v1417
        %v1422 = vand.u32 2147483647, %v1412
        %vm1423 = vcmp.eq.f32.partialorder %v1422, 8.507059e+37
        %v1424 = vand.u32 %v1412, 2147483648
        %v1425 = vor.u32 1.1754944e-38, %v1424
        %v1426 = vsel %vm1423, %v1425, %v1421
        %v1427 = vmul.f32 1.0, %v1426
        %v1428 = vmul.f32 %v1407, %v1107
        %v1429 = vmul.f32 %v1388, %v1408
        %v1430 = vadd.f32 %v1428, %v1429
        %v1431 = vtanh.pop %v1430
        %v1432 = vmul.f32 %v1427, %v1431
        %s1433 = smul.u32 %s1113, 8
        %s1434 = scalar_lea.vmem %s409, %s1433 [#allocation6]
        %1435 = vst [vmem:[%s1434] sm:$0xff] %v1432
        %s1436 = scalar_select %p789, 2, 5
        %s1437 = smul.u32 %s1436, 4
        %s1438 = smul.addr %s1437, 8
        %s1439 = scalar_lea.vmem [#allocation2], %s1438
        %v1440 = vld [vmem:[%s1439] sm:$0xff]
        %v1441 = vld [vmem:[%s1439 + $0x8] sm:$0xff]
        %v1442 = vld [vmem:[%s1439 + $0x10] sm:$0xff]
        %v1443 = vld [vmem:[%s1439 + $0x18] sm:$0xff]
        %v1444 = vpack.c.bf16 %v1432, %v1432
        %v1445 = vld [vmem:[%s365] sm:$0xff]
        %v1446 = vld [vmem:[%s365 + $0x8] sm:$0xff]
        %v1447 = vld [vmem:[%s365 + $0x10] sm:$0xff]
        %v1448 = vld [vmem:[%s365 + $0x18] sm:$0xff]
        %v1449 = vld [vmem:[%s365 + $0x20] sm:$0xff]
        %v1450 = vld [vmem:[%s365 + $0x28] sm:$0xff]
        %v1451 = vld [vmem:[%s365 + $0x30] sm:$0xff]
        %v1452 = vld [vmem:[%s365 + $0x38] sm:$0xff]
        %v1453 = vld [vmem:[%s365 + $0x40] sm:$0xff]
        %v1454 = vld [vmem:[%s365 + $0x48] sm:$0xff]
        %v1455 = vld [vmem:[%s365 + $0x50] sm:$0xff]
        %v1456 = vld [vmem:[%s365 + $0x58] sm:$0xff]
        %v1457 = vld [vmem:[%s365 + $0x60] sm:$0xff]
        %v1458 = vld [vmem:[%s365 + $0x68] sm:$0xff]
        %v1459 = vld [vmem:[%s365 + $0x70] sm:$0xff]
        %v1460 = vld [vmem:[%s365 + $0x78] sm:$0xff]
        %v1461 = vld [vmem:[%s365 + $0x80] sm:$0xff]
        %v1462 = vld [vmem:[%s365 + $0x88] sm:$0xff]
        %v1463 = vld [vmem:[%s365 + $0x90] sm:$0xff]
        %v1464 = vld [vmem:[%s365 + $0x98] sm:$0xff]
        %v1465 = vld [vmem:[%s365 + $0xa0] sm:$0xff]
        %v1466 = vld [vmem:[%s365 + $0xa8] sm:$0xff]
        %v1467 = vld [vmem:[%s365 + $0xb0] sm:$0xff]
        %v1468 = vld [vmem:[%s365 + $0xb8] sm:$0xff]
        %v1469 = vld [vmem:[%s365 + $0xc0] sm:$0xff]
        %v1470 = vld [vmem:[%s365 + $0xc8] sm:$0xff]
        %v1471 = vld [vmem:[%s365 + $0xd0] sm:$0xff]
        %v1472 = vld [vmem:[%s365 + $0xd8] sm:$0xff]
        %v1473 = vld [vmem:[%s365 + $0xe0] sm:$0xff]
        %v1474 = vld [vmem:[%s365 + $0xe8] sm:$0xff]
        %v1475 = vld [vmem:[%s365 + $0xf0] sm:$0xff]
        %v1476 = vld [vmem:[%s365 + $0xf8] sm:$0xff]
        %v1509 = vunpack.c.l.b16 %v1445
        %v1510 = vunpack.c.h.b16 %v1445
        %v1511 = vunpack.c.l.b16 %v1446
        %v1512 = vunpack.c.h.b16 %v1446
        %v1513 = vunpack.c.l.b16 %v1447
        %v1514 = vunpack.c.h.b16 %v1447
        %v1515 = vunpack.c.l.b16 %v1448
        %v1516 = vunpack.c.h.b16 %v1448
        %v1517 = vunpack.c.l.b16 %v1449
        %v1518 = vunpack.c.h.b16 %v1449
        %v1519 = vunpack.c.l.b16 %v1450
        %v1520 = vunpack.c.h.b16 %v1450
        %v1521 = vunpack.c.l.b16 %v1451
        %v1522 = vunpack.c.h.b16 %v1451
        %v1523 = vunpack.c.l.b16 %v1452
        %v1524 = vunpack.c.h.b16 %v1452
        %v1525 = vunpack.c.l.b16 %v1453
        %v1526 = vunpack.c.h.b16 %v1453
        %v1527 = vunpack.c.l.b16 %v1454
        %v1528 = vunpack.c.h.b16 %v1454
        %v1529 = vunpack.c.l.b16 %v1455
        %v1530 = vunpack.c.h.b16 %v1455
        %v1531 = vunpack.c.l.b16 %v1456
        %v1532 = vunpack.c.h.b16 %v1456
        %v1533 = vunpack.c.l.b16 %v1457
        %v1534 = vunpack.c.h.b16 %v1457
        %v1535 = vunpack.c.l.b16 %v1458
        %v1536 = vunpack.c.h.b16 %v1458
        %v1537 = vunpack.c.l.b16 %v1459
        %v1538 = vunpack.c.h.b16 %v1459
        %v1539 = vunpack.c.l.b16 %v1460
        %v1540 = vunpack.c.h.b16 %v1460
        %v1541 = vunpack.c.l.b16 %v1461
        %v1542 = vunpack.c.h.b16 %v1461
        %v1543 = vunpack.c.l.b16 %v1462
        %v1544 = vunpack.c.h.b16 %v1462
        %v1545 = vunpack.c.l.b16 %v1463
        %v1546 = vunpack.c.h.b16 %v1463
        %v1547 = vunpack.c.l.b16 %v1464
        %v1548 = vunpack.c.h.b16 %v1464
        %v1549 = vunpack.c.l.b16 %v1465
        %v1550 = vunpack.c.h.b16 %v1465
        %v1551 = vunpack.c.l.b16 %v1466
        %v1552 = vunpack.c.h.b16 %v1466
        %v1553 = vunpack.c.l.b16 %v1467
        %v1554 = vunpack.c.h.b16 %v1467
        %v1555 = vunpack.c.l.b16 %v1468
        %v1556 = vunpack.c.h.b16 %v1468
        %v1557 = vunpack.c.l.b16 %v1469
        %v1558 = vunpack.c.h.b16 %v1469
        %v1559 = vunpack.c.l.b16 %v1470
        %v1560 = vunpack.c.h.b16 %v1470
        %v1561 = vunpack.c.l.b16 %v1471
        %v1562 = vunpack.c.h.b16 %v1471
        %v1563 = vunpack.c.l.b16 %v1472
        %v1564 = vunpack.c.h.b16 %v1472
        %v1565 = vunpack.c.l.b16 %v1473
        %v1566 = vunpack.c.h.b16 %v1473
        %v1567 = vunpack.c.l.b16 %v1474
        %v1568 = vunpack.c.h.b16 %v1474
        %v1569 = vunpack.c.l.b16 %v1475
        %v1570 = vunpack.c.h.b16 %v1475
        %v1571 = vunpack.c.l.b16 %v1476
        %v1572 = vunpack.c.h.b16 %v1476
        %v1573 = vpack.c.b16 %v1513, %v1509
        %v1574 = vpack.c.b16 %v1514, %v1510
        %v1575 = vpack.c.b16 %v1515, %v1511
        %v1576 = vpack.c.b16 %v1516, %v1512
        %v1577 = vpack.c.b16 %v1521, %v1517
        %v1578 = vpack.c.b16 %v1522, %v1518
        %v1579 = vpack.c.b16 %v1523, %v1519
        %v1580 = vpack.c.b16 %v1524, %v1520
        %v1581 = vpack.c.b16 %v1529, %v1525
        %v1582 = vpack.c.b16 %v1530, %v1526
        %v1583 = vpack.c.b16 %v1531, %v1527
        %v1584 = vpack.c.b16 %v1532, %v1528
        %v1585 = vpack.c.b16 %v1537, %v1533
        %v1586 = vpack.c.b16 %v1538, %v1534
        %v1587 = vpack.c.b16 %v1539, %v1535
        %v1588 = vpack.c.b16 %v1540, %v1536
        %v1589 = vpack.c.b16 %v1545, %v1541
        %v1590 = vpack.c.b16 %v1546, %v1542
        %v1591 = vpack.c.b16 %v1547, %v1543
        %v1592 = vpack.c.b16 %v1548, %v1544
        %v1593 = vpack.c.b16 %v1553, %v1549
        %v1594 = vpack.c.b16 %v1554, %v1550
        %v1595 = vpack.c.b16 %v1555, %v1551
        %v1596 = vpack.c.b16 %v1556, %v1552
        %v1597 = vpack.c.b16 %v1561, %v1557
        %v1598 = vpack.c.b16 %v1562, %v1558
        %v1599 = vpack.c.b16 %v1563, %v1559
        %v1600 = vpack.c.b16 %v1564, %v1560
        %v1601 = vpack.c.b16 %v1569, %v1565
        %v1602 = vpack.c.b16 %v1570, %v1566
        %v1603 = vpack.c.b16 %v1571, %v1567
        %v1604 = vpack.c.b16 %v1572, %v1568
        %1637 = vmatpush.bf16.msra.mxu0 %v1601
        %1638 = vmatpush.bf16.msra.mxu0 %v1597
        %1639 = vmatpush.bf16.msra.mxu0 %v1593
        %1640 = vmatpush.bf16.msra.mxu0 %v1589
        %1641 = vmatpush.bf16.msra.mxu0 %v1585
        %1642 = vmatpush.bf16.msra.mxu0 %v1581
        %1643 = vmatpush.bf16.msra.mxu0 %v1577
        %1644 = vmatpush.bf16.msra.mxu0 %v1573
        %1645 = vmatmul.bf16.gmra.mxu0 %v1444
        %v1646 = vpop.f32.mrf.mxu0
        %v1647 = vadd.f32 0.0, %v1646
        %v1648 = vpop.f32.mrf.mxu0
        %1649 = vdwg.mxu0
        %1650 = vmatpush.bf16.msra.mxu0 %v1602
        %1651 = vmatpush.bf16.msra.mxu0 %v1598
        %1652 = vmatpush.bf16.msra.mxu0 %v1594
        %1653 = vmatpush.bf16.msra.mxu0 %v1590
        %1654 = vmatpush.bf16.msra.mxu0 %v1586
        %1655 = vmatpush.bf16.msra.mxu0 %v1582
        %1656 = vmatpush.bf16.msra.mxu0 %v1578
        %1657 = vmatpush.bf16.msra.mxu0 %v1574
        %1658 = vmatmul.bf16.gmra.mxu0 %v1444
        %v1659 = vpop.f32.mrf.mxu0
        %v1660 = vadd.f32 0.0, %v1659
        %v1661 = vpop.f32.mrf.mxu0
        %1662 = vdwg.mxu0
        %1663 = vmatpush.bf16.msra.mxu0 %v1603
        %1664 = vmatpush.bf16.msra.mxu0 %v1599
        %1665 = vmatpush.bf16.msra.mxu0 %v1595
        %1666 = vmatpush.bf16.msra.mxu0 %v1591
        %1667 = vmatpush.bf16.msra.mxu0 %v1587
        %1668 = vmatpush.bf16.msra.mxu0 %v1583
        %1669 = vmatpush.bf16.msra.mxu0 %v1579
        %1670 = vmatpush.bf16.msra.mxu0 %v1575
        %1671 = vmatmul.bf16.gmra.mxu0 %v1444
        %v1672 = vpop.f32.mrf.mxu0
        %v1673 = vadd.f32 0.0, %v1672
        %v1674 = vpop.f32.mrf.mxu0
        %1675 = vdwg.mxu0
        %1676 = vmatpush.bf16.msra.mxu0 %v1604
        %1677 = vmatpush.bf16.msra.mxu0 %v1600
        %1678 = vmatpush.bf16.msra.mxu0 %v1596
        %1679 = vmatpush.bf16.msra.mxu0 %v1592
        %1680 = vmatpush.bf16.msra.mxu0 %v1588
        %1681 = vmatpush.bf16.msra.mxu0 %v1584
        %1682 = vmatpush.bf16.msra.mxu0 %v1580
        %1683 = vmatpush.bf16.msra.mxu0 %v1576
        %1684 = vmatmul.bf16.gmra.mxu0 %v1444
        %v1685 = vpop.f32.mrf.mxu0
        %v1686 = vadd.f32 0.0, %v1685
        %v1687 = vpop.f32.mrf.mxu0
        %1688 = vdwg.mxu0
        %v1689 = vadd.f32 %v1440, %v1647
        %v1690 = vadd.f32 %v1441, %v1660
        %v1691 = vadd.f32 %v1442, %v1673
        %v1692 = vadd.f32 %v1443, %v1686
        %v1693 = vxor.u32 %v1689, 2147483648
        %v1694 = vmul.f32 %v1693, 1.442695
        %v1695 = vpow.pop %v1694
        %v1696 = vadd.f32 %v1695, 1.0
        %v1697 = vrcp.pop %v1696
        %v1698 = vmul.f32 %v1696, %v1697
        %v1699 = vsub.f32 1.0, %v1698
        %v1700 = vmul.f32 %v1697, %v1699
        %v1701 = vadd.f32 %v1697, %v1700
        %vm1702 = vweird.f32 %v1696
        %vm1703 = vweird.f32 %v1697
        %vm1704 = vmor %vm1702, %vm1703
        %v1705 = vsel %vm1704, %v1697, %v1701
        %v1706 = vand.u32 2147483647, %v1696
        %vm1707 = vcmp.eq.f32.partialorder %v1706, 8.507059e+37
        %v1708 = vand.u32 %v1696, 2147483648
        %v1709 = vor.u32 1.1754944e-38, %v1708
        %v1710 = vsel %vm1707, %v1709, %v1705
        %v1711 = vmul.f32 1.0, %v1710
        %v1712 = vxor.u32 %v1690, 2147483648
        %v1713 = vmul.f32 %v1712, 1.442695
        %v1714 = vpow.pop %v1713
        %v1715 = vadd.f32 %v1714, 1.0
        %v1716 = vrcp.pop %v1715
        %v1717 = vmul.f32 %v1715, %v1716
        %v1718 = vsub.f32 1.0, %v1717
        %v1719 = vmul.f32 %v1716, %v1718
        %v1720 = vadd.f32 %v1716, %v1719
        %vm1721 = vweird.f32 %v1715
        %vm1722 = vweird.f32 %v1716
        %vm1723 = vmor %vm1721, %vm1722
        %v1724 = vsel %vm1723, %v1716, %v1720
        %v1725 = vand.u32 2147483647, %v1715
        %vm1726 = vcmp.eq.f32.partialorder %v1725, 8.507059e+37
        %v1727 = vand.u32 %v1715, 2147483648
        %v1728 = vor.u32 1.1754944e-38, %v1727
        %v1729 = vsel %vm1726, %v1728, %v1724
        %v1730 = vmul.f32 1.0, %v1729
        %v1731 = vtanh.pop %v1691
        %v1732 = vxor.u32 %v1692, 2147483648
        %v1733 = vmul.f32 %v1732, 1.442695
        %v1734 = vpow.pop %v1733
        %v1735 = vadd.f32 %v1734, 1.0
        %v1736 = vrcp.pop %v1735
        %v1737 = vmul.f32 %v1735, %v1736
        %v1738 = vsub.f32 1.0, %v1737
        %v1739 = vmul.f32 %v1736, %v1738
        %v1740 = vadd.f32 %v1736, %v1739
        %vm1741 = vweird.f32 %v1735
        %vm1742 = vweird.f32 %v1736
        %vm1743 = vmor %vm1741, %vm1742
        %v1744 = vsel %vm1743, %v1736, %v1740
        %v1745 = vand.u32 2147483647, %v1735
        %vm1746 = vcmp.eq.f32.partialorder %v1745, 8.507059e+37
        %v1747 = vand.u32 %v1735, 2147483648
        %v1748 = vor.u32 1.1754944e-38, %v1747
        %v1749 = vsel %vm1746, %v1748, %v1744
        %v1750 = vmul.f32 1.0, %v1749
        %v1751 = vmul.f32 %v1730, %v1430
        %v1752 = vmul.f32 %v1711, %v1731
        %v1753 = vadd.f32 %v1751, %v1752
        %v1754 = vtanh.pop %v1753
        %v1755 = vmul.f32 %v1750, %v1754
        %s1756 = smul.u32 %s1436, 8
        %s1757 = scalar_lea.vmem %s409, %s1756 [#allocation6]
        %1758 = vst [vmem:[%s1757] sm:$0xff] %v1755
        %s1759 = scalar_select %p789, 3, 4
        %s1760 = smul.u32 %s1759, 4
        %s1761 = smul.addr %s1760, 8
        %s1762 = scalar_lea.vmem [#allocation2], %s1761
        %v1763 = vld [vmem:[%s1762] sm:$0xff]
        %v1764 = vld [vmem:[%s1762 + $0x8] sm:$0xff]
        %v1765 = vld [vmem:[%s1762 + $0x10] sm:$0xff]
        %v1766 = vld [vmem:[%s1762 + $0x18] sm:$0xff]
        %v1767 = vpack.c.bf16 %v1755, %v1755
        %v1768 = vld [vmem:[%s365] sm:$0xff]
        %v1769 = vld [vmem:[%s365 + $0x8] sm:$0xff]
        %v1770 = vld [vmem:[%s365 + $0x10] sm:$0xff]
        %v1771 = vld [vmem:[%s365 + $0x18] sm:$0xff]
        %v1772 = vld [vmem:[%s365 + $0x20] sm:$0xff]
        %v1773 = vld [vmem:[%s365 + $0x28] sm:$0xff]
        %v1774 = vld [vmem:[%s365 + $0x30] sm:$0xff]
        %v1775 = vld [vmem:[%s365 + $0x38] sm:$0xff]
        %v1776 = vld [vmem:[%s365 + $0x40] sm:$0xff]
        %v1777 = vld [vmem:[%s365 + $0x48] sm:$0xff]
        %v1778 = vld [vmem:[%s365 + $0x50] sm:$0xff]
        %v1779 = vld [vmem:[%s365 + $0x58] sm:$0xff]
        %v1780 = vld [vmem:[%s365 + $0x60] sm:$0xff]
        %v1781 = vld [vmem:[%s365 + $0x68] sm:$0xff]
        %v1782 = vld [vmem:[%s365 + $0x70] sm:$0xff]
        %v1783 = vld [vmem:[%s365 + $0x78] sm:$0xff]
        %v1784 = vld [vmem:[%s365 + $0x80] sm:$0xff]
        %v1785 = vld [vmem:[%s365 + $0x88] sm:$0xff]
        %v1786 = vld [vmem:[%s365 + $0x90] sm:$0xff]
        %v1787 = vld [vmem:[%s365 + $0x98] sm:$0xff]
        %v1788 = vld [vmem:[%s365 + $0xa0] sm:$0xff]
        %v1789 = vld [vmem:[%s365 + $0xa8] sm:$0xff]
        %v1790 = vld [vmem:[%s365 + $0xb0] sm:$0xff]
        %v1791 = vld [vmem:[%s365 + $0xb8] sm:$0xff]
        %v1792 = vld [vmem:[%s365 + $0xc0] sm:$0xff]
        %v1793 = vld [vmem:[%s365 + $0xc8] sm:$0xff]
        %v1794 = vld [vmem:[%s365 + $0xd0] sm:$0xff]
        %v1795 = vld [vmem:[%s365 + $0xd8] sm:$0xff]
        %v1796 = vld [vmem:[%s365 + $0xe0] sm:$0xff]
        %v1797 = vld [vmem:[%s365 + $0xe8] sm:$0xff]
        %v1798 = vld [vmem:[%s365 + $0xf0] sm:$0xff]
        %v1799 = vld [vmem:[%s365 + $0xf8] sm:$0xff]
        %v1832 = vunpack.c.l.b16 %v1768
        %v1833 = vunpack.c.h.b16 %v1768
        %v1834 = vunpack.c.l.b16 %v1769
        %v1835 = vunpack.c.h.b16 %v1769
        %v1836 = vunpack.c.l.b16 %v1770
        %v1837 = vunpack.c.h.b16 %v1770
        %v1838 = vunpack.c.l.b16 %v1771
        %v1839 = vunpack.c.h.b16 %v1771
        %v1840 = vunpack.c.l.b16 %v1772
        %v1841 = vunpack.c.h.b16 %v1772
        %v1842 = vunpack.c.l.b16 %v1773
        %v1843 = vunpack.c.h.b16 %v1773
        %v1844 = vunpack.c.l.b16 %v1774
        %v1845 = vunpack.c.h.b16 %v1774
        %v1846 = vunpack.c.l.b16 %v1775
        %v1847 = vunpack.c.h.b16 %v1775
        %v1848 = vunpack.c.l.b16 %v1776
        %v1849 = vunpack.c.h.b16 %v1776
        %v1850 = vunpack.c.l.b16 %v1777
        %v1851 = vunpack.c.h.b16 %v1777
        %v1852 = vunpack.c.l.b16 %v1778
        %v1853 = vunpack.c.h.b16 %v1778
        %v1854 = vunpack.c.l.b16 %v1779
        %v1855 = vunpack.c.h.b16 %v1779
        %v1856 = vunpack.c.l.b16 %v1780
        %v1857 = vunpack.c.h.b16 %v1780
        %v1858 = vunpack.c.l.b16 %v1781
        %v1859 = vunpack.c.h.b16 %v1781
        %v1860 = vunpack.c.l.b16 %v1782
        %v1861 = vunpack.c.h.b16 %v1782
        %v1862 = vunpack.c.l.b16 %v1783
        %v1863 = vunpack.c.h.b16 %v1783
        %v1864 = vunpack.c.l.b16 %v1784
        %v1865 = vunpack.c.h.b16 %v1784
        %v1866 = vunpack.c.l.b16 %v1785
        %v1867 = vunpack.c.h.b16 %v1785
        %v1868 = vunpack.c.l.b16 %v1786
        %v1869 = vunpack.c.h.b16 %v1786
        %v1870 = vunpack.c.l.b16 %v1787
        %v1871 = vunpack.c.h.b16 %v1787
        %v1872 = vunpack.c.l.b16 %v1788
        %v1873 = vunpack.c.h.b16 %v1788
        %v1874 = vunpack.c.l.b16 %v1789
        %v1875 = vunpack.c.h.b16 %v1789
        %v1876 = vunpack.c.l.b16 %v1790
        %v1877 = vunpack.c.h.b16 %v1790
        %v1878 = vunpack.c.l.b16 %v1791
        %v1879 = vunpack.c.h.b16 %v1791
        %v1880 = vunpack.c.l.b16 %v1792
        %v1881 = vunpack.c.h.b16 %v1792
        %v1882 = vunpack.c.l.b16 %v1793
        %v1883 = vunpack.c.h.b16 %v1793
        %v1884 = vunpack.c.l.b16 %v1794
        %v1885 = vunpack.c.h.b16 %v1794
        %v1886 = vunpack.c.l.b16 %v1795
        %v1887 = vunpack.c.h.b16 %v1795
        %v1888 = vunpack.c.l.b16 %v1796
        %v1889 = vunpack.c.h.b16 %v1796
        %v1890 = vunpack.c.l.b16 %v1797
        %v1891 = vunpack.c.h.b16 %v1797
        %v1892 = vunpack.c.l.b16 %v1798
        %v1893 = vunpack.c.h.b16 %v1798
        %v1894 = vunpack.c.l.b16 %v1799
        %v1895 = vunpack.c.h.b16 %v1799
        %v1896 = vpack.c.b16 %v1836, %v1832
        %v1897 = vpack.c.b16 %v1837, %v1833
        %v1898 = vpack.c.b16 %v1838, %v1834
        %v1899 = vpack.c.b16 %v1839, %v1835
        %v1900 = vpack.c.b16 %v1844, %v1840
        %v1901 = vpack.c.b16 %v1845, %v1841
        %v1902 = vpack.c.b16 %v1846, %v1842
        %v1903 = vpack.c.b16 %v1847, %v1843
        %v1904 = vpack.c.b16 %v1852, %v1848
        %v1905 = vpack.c.b16 %v1853, %v1849
        %v1906 = vpack.c.b16 %v1854, %v1850
        %v1907 = vpack.c.b16 %v1855, %v1851
        %v1908 = vpack.c.b16 %v1860, %v1856
        %v1909 = vpack.c.b16 %v1861, %v1857
        %v1910 = vpack.c.b16 %v1862, %v1858
        %v1911 = vpack.c.b16 %v1863, %v1859
        %v1912 = vpack.c.b16 %v1868, %v1864
        %v1913 = vpack.c.b16 %v1869, %v1865
        %v1914 = vpack.c.b16 %v1870, %v1866
        %v1915 = vpack.c.b16 %v1871, %v1867
        %v1916 = vpack.c.b16 %v1876, %v1872
        %v1917 = vpack.c.b16 %v1877, %v1873
        %v1918 = vpack.c.b16 %v1878, %v1874
        %v1919 = vpack.c.b16 %v1879, %v1875
        %v1920 = vpack.c.b16 %v1884, %v1880
        %v1921 = vpack.c.b16 %v1885, %v1881
        %v1922 = vpack.c.b16 %v1886, %v1882
        %v1923 = vpack.c.b16 %v1887, %v1883
        %v1924 = vpack.c.b16 %v1892, %v1888
        %v1925 = vpack.c.b16 %v1893, %v1889
        %v1926 = vpack.c.b16 %v1894, %v1890
        %v1927 = vpack.c.b16 %v1895, %v1891
        %1960 = vmatpush.bf16.msra.mxu0 %v1924
        %1961 = vmatpush.bf16.msra.mxu0 %v1920
        %1962 = vmatpush.bf16.msra.mxu0 %v1916
        %1963 = vmatpush.bf16.msra.mxu0 %v1912
        %1964 = vmatpush.bf16.msra.mxu0 %v1908
        %1965 = vmatpush.bf16.msra.mxu0 %v1904
        %1966 = vmatpush.bf16.msra.mxu0 %v1900
        %1967 = vmatpush.bf16.msra.mxu0 %v1896
        %1968 = vmatmul.bf16.gmra.mxu0 %v1767
        %v1969 = vpop.f32.mrf.mxu0
        %v1970 = vadd.f32 0.0, %v1969
        %v1971 = vpop.f32.mrf.mxu0
        %1972 = vdwg.mxu0
        %1973 = vmatpush.bf16.msra.mxu0 %v1925
        %1974 = vmatpush.bf16.msra.mxu0 %v1921
        %1975 = vmatpush.bf16.msra.mxu0 %v1917
        %1976 = vmatpush.bf16.msra.mxu0 %v1913
        %1977 = vmatpush.bf16.msra.mxu0 %v1909
        %1978 = vmatpush.bf16.msra.mxu0 %v1905
        %1979 = vmatpush.bf16.msra.mxu0 %v1901
        %1980 = vmatpush.bf16.msra.mxu0 %v1897
        %1981 = vmatmul.bf16.gmra.mxu0 %v1767
        %v1982 = vpop.f32.mrf.mxu0
        %v1983 = vadd.f32 0.0, %v1982
        %v1984 = vpop.f32.mrf.mxu0
        %1985 = vdwg.mxu0
        %1986 = vmatpush.bf16.msra.mxu0 %v1926
        %1987 = vmatpush.bf16.msra.mxu0 %v1922
        %1988 = vmatpush.bf16.msra.mxu0 %v1918
        %1989 = vmatpush.bf16.msra.mxu0 %v1914
        %1990 = vmatpush.bf16.msra.mxu0 %v1910
        %1991 = vmatpush.bf16.msra.mxu0 %v1906
        %1992 = vmatpush.bf16.msra.mxu0 %v1902
        %1993 = vmatpush.bf16.msra.mxu0 %v1898
        %1994 = vmatmul.bf16.gmra.mxu0 %v1767
        %v1995 = vpop.f32.mrf.mxu0
        %v1996 = vadd.f32 0.0, %v1995
        %v1997 = vpop.f32.mrf.mxu0
        %1998 = vdwg.mxu0
        %1999 = vmatpush.bf16.msra.mxu0 %v1927
        %2000 = vmatpush.bf16.msra.mxu0 %v1923
        %2001 = vmatpush.bf16.msra.mxu0 %v1919
        %2002 = vmatpush.bf16.msra.mxu0 %v1915
        %2003 = vmatpush.bf16.msra.mxu0 %v1911
        %2004 = vmatpush.bf16.msra.mxu0 %v1907
        %2005 = vmatpush.bf16.msra.mxu0 %v1903
        %2006 = vmatpush.bf16.msra.mxu0 %v1899
        %2007 = vmatmul.bf16.gmra.mxu0 %v1767
        %v2008 = vpop.f32.mrf.mxu0
        %v2009 = vadd.f32 0.0, %v2008
        %v2010 = vpop.f32.mrf.mxu0
        %2011 = vdwg.mxu0
        %v2012 = vadd.f32 %v1763, %v1970
        %v2013 = vadd.f32 %v1764, %v1983
        %v2014 = vadd.f32 %v1765, %v1996
        %v2015 = vadd.f32 %v1766, %v2009
        %v2016 = vxor.u32 %v2012, 2147483648
        %v2017 = vmul.f32 %v2016, 1.442695
        %v2018 = vpow.pop %v2017
        %v2019 = vadd.f32 %v2018, 1.0
        %v2020 = vrcp.pop %v2019
        %v2021 = vmul.f32 %v2019, %v2020
        %v2022 = vsub.f32 1.0, %v2021
        %v2023 = vmul.f32 %v2020, %v2022
        %v2024 = vadd.f32 %v2020, %v2023
        %vm2025 = vweird.f32 %v2019
        %vm2026 = vweird.f32 %v2020
        %vm2027 = vmor %vm2025, %vm2026
        %v2028 = vsel %vm2027, %v2020, %v2024
        %v2029 = vand.u32 2147483647, %v2019
        %vm2030 = vcmp.eq.f32.partialorder %v2029, 8.507059e+37
        %v2031 = vand.u32 %v2019, 2147483648
        %v2032 = vor.u32 1.1754944e-38, %v2031
        %v2033 = vsel %vm2030, %v2032, %v2028
        %v2034 = vmul.f32 1.0, %v2033
        %v2035 = vxor.u32 %v2013, 2147483648
        %v2036 = vmul.f32 %v2035, 1.442695
        %v2037 = vpow.pop %v2036
        %v2038 = vadd.f32 %v2037, 1.0
        %v2039 = vrcp.pop %v2038
        %v2040 = vmul.f32 %v2038, %v2039
        %v2041 = vsub.f32 1.0, %v2040
        %v2042 = vmul.f32 %v2039, %v2041
        %v2043 = vadd.f32 %v2039, %v2042
        %vm2044 = vweird.f32 %v2038
        %vm2045 = vweird.f32 %v2039
        %vm2046 = vmor %vm2044, %vm2045
        %v2047 = vsel %vm2046, %v2039, %v2043
        %v2048 = vand.u32 2147483647, %v2038
        %vm2049 = vcmp.eq.f32.partialorder %v2048, 8.507059e+37
        %v2050 = vand.u32 %v2038, 2147483648
        %v2051 = vor.u32 1.1754944e-38, %v2050
        %v2052 = vsel %vm2049, %v2051, %v2047
        %v2053 = vmul.f32 1.0, %v2052
        %v2054 = vtanh.pop %v2014
        %v2055 = vxor.u32 %v2015, 2147483648
        %v2056 = vmul.f32 %v2055, 1.442695
        %v2057 = vpow.pop %v2056
        %v2058 = vadd.f32 %v2057, 1.0
        %v2059 = vrcp.pop %v2058
        %v2060 = vmul.f32 %v2058, %v2059
        %v2061 = vsub.f32 1.0, %v2060
        %v2062 = vmul.f32 %v2059, %v2061
        %v2063 = vadd.f32 %v2059, %v2062
        %vm2064 = vweird.f32 %v2058
        %vm2065 = vweird.f32 %v2059
        %vm2066 = vmor %vm2064, %vm2065
        %v2067 = vsel %vm2066, %v2059, %v2063
        %v2068 = vand.u32 2147483647, %v2058
        %vm2069 = vcmp.eq.f32.partialorder %v2068, 8.507059e+37
        %v2070 = vand.u32 %v2058, 2147483648
        %v2071 = vor.u32 1.1754944e-38, %v2070
        %v2072 = vsel %vm2069, %v2071, %v2067
        %v2073 = vmul.f32 1.0, %v2072
        %v2074 = vmul.f32 %v2053, %v1753
        %v2075 = vmul.f32 %v2034, %v2054
        %v2076 = vadd.f32 %v2074, %v2075
        %v2077 = vtanh.pop %v2076
        %v2078 = vmul.f32 %v2073, %v2077
        %s2079 = smul.u32 %s1759, 8
        %s2080 = scalar_lea.vmem %s409, %s2079 [#allocation6]
        %2081 = vst [vmem:[%s2080] sm:$0xff] %v2078
        %s2082 = scalar_select %p789, 4, 3
        %s2083 = smul.u32 %s2082, 4
        %s2084 = smul.addr %s2083, 8
        %s2085 = scalar_lea.vmem [#allocation2], %s2084
        %v2086 = vld [vmem:[%s2085] sm:$0xff]
        %v2087 = vld [vmem:[%s2085 + $0x8] sm:$0xff]
        %v2088 = vld [vmem:[%s2085 + $0x10] sm:$0xff]
        %v2089 = vld [vmem:[%s2085 + $0x18] sm:$0xff]
        %v2090 = vpack.c.bf16 %v2078, %v2078
        %v2091 = vld [vmem:[%s365] sm:$0xff]
        %v2092 = vld [vmem:[%s365 + $0x8] sm:$0xff]
        %v2093 = vld [vmem:[%s365 + $0x10] sm:$0xff]
        %v2094 = vld [vmem:[%s365 + $0x18] sm:$0xff]
        %v2095 = vld [vmem:[%s365 + $0x20] sm:$0xff]
        %v2096 = vld [vmem:[%s365 + $0x28] sm:$0xff]
        %v2097 = vld [vmem:[%s365 + $0x30] sm:$0xff]
        %v2098 = vld [vmem:[%s365 + $0x38] sm:$0xff]
        %v2099 = vld [vmem:[%s365 + $0x40] sm:$0xff]
        %v2100 = vld [vmem:[%s365 + $0x48] sm:$0xff]
        %v2101 = vld [vmem:[%s365 + $0x50] sm:$0xff]
        %v2102 = vld [vmem:[%s365 + $0x58] sm:$0xff]
        %v2103 = vld [vmem:[%s365 + $0x60] sm:$0xff]
        %v2104 = vld [vmem:[%s365 + $0x68] sm:$0xff]
        %v2105 = vld [vmem:[%s365 + $0x70] sm:$0xff]
        %v2106 = vld [vmem:[%s365 + $0x78] sm:$0xff]
        %v2107 = vld [vmem:[%s365 + $0x80] sm:$0xff]
        %v2108 = vld [vmem:[%s365 + $0x88] sm:$0xff]
        %v2109 = vld [vmem:[%s365 + $0x90] sm:$0xff]
        %v2110 = vld [vmem:[%s365 + $0x98] sm:$0xff]
        %v2111 = vld [vmem:[%s365 + $0xa0] sm:$0xff]
        %v2112 = vld [vmem:[%s365 + $0xa8] sm:$0xff]
        %v2113 = vld [vmem:[%s365 + $0xb0] sm:$0xff]
        %v2114 = vld [vmem:[%s365 + $0xb8] sm:$0xff]
        %v2115 = vld [vmem:[%s365 + $0xc0] sm:$0xff]
        %v2116 = vld [vmem:[%s365 + $0xc8] sm:$0xff]
        %v2117 = vld [vmem:[%s365 + $0xd0] sm:$0xff]
        %v2118 = vld [vmem:[%s365 + $0xd8] sm:$0xff]
        %v2119 = vld [vmem:[%s365 + $0xe0] sm:$0xff]
        %v2120 = vld [vmem:[%s365 + $0xe8] sm:$0xff]
        %v2121 = vld [vmem:[%s365 + $0xf0] sm:$0xff]
        %v2122 = vld [vmem:[%s365 + $0xf8] sm:$0xff]
        %v2155 = vunpack.c.l.b16 %v2091
        %v2156 = vunpack.c.h.b16 %v2091
        %v2157 = vunpack.c.l.b16 %v2092
        %v2158 = vunpack.c.h.b16 %v2092
        %v2159 = vunpack.c.l.b16 %v2093
        %v2160 = vunpack.c.h.b16 %v2093
        %v2161 = vunpack.c.l.b16 %v2094
        %v2162 = vunpack.c.h.b16 %v2094
        %v2163 = vunpack.c.l.b16 %v2095
        %v2164 = vunpack.c.h.b16 %v2095
        %v2165 = vunpack.c.l.b16 %v2096
        %v2166 = vunpack.c.h.b16 %v2096
        %v2167 = vunpack.c.l.b16 %v2097
        %v2168 = vunpack.c.h.b16 %v2097
        %v2169 = vunpack.c.l.b16 %v2098
        %v2170 = vunpack.c.h.b16 %v2098
        %v2171 = vunpack.c.l.b16 %v2099
        %v2172 = vunpack.c.h.b16 %v2099
        %v2173 = vunpack.c.l.b16 %v2100
        %v2174 = vunpack.c.h.b16 %v2100
        %v2175 = vunpack.c.l.b16 %v2101
        %v2176 = vunpack.c.h.b16 %v2101
        %v2177 = vunpack.c.l.b16 %v2102
        %v2178 = vunpack.c.h.b16 %v2102
        %v2179 = vunpack.c.l.b16 %v2103
        %v2180 = vunpack.c.h.b16 %v2103
        %v2181 = vunpack.c.l.b16 %v2104
        %v2182 = vunpack.c.h.b16 %v2104
        %v2183 = vunpack.c.l.b16 %v2105
        %v2184 = vunpack.c.h.b16 %v2105
        %v2185 = vunpack.c.l.b16 %v2106
        %v2186 = vunpack.c.h.b16 %v2106
        %v2187 = vunpack.c.l.b16 %v2107
        %v2188 = vunpack.c.h.b16 %v2107
        %v2189 = vunpack.c.l.b16 %v2108
        %v2190 = vunpack.c.h.b16 %v2108
        %v2191 = vunpack.c.l.b16 %v2109
        %v2192 = vunpack.c.h.b16 %v2109
        %v2193 = vunpack.c.l.b16 %v2110
        %v2194 = vunpack.c.h.b16 %v2110
        %v2195 = vunpack.c.l.b16 %v2111
        %v2196 = vunpack.c.h.b16 %v2111
        %v2197 = vunpack.c.l.b16 %v2112
        %v2198 = vunpack.c.h.b16 %v2112
        %v2199 = vunpack.c.l.b16 %v2113
        %v2200 = vunpack.c.h.b16 %v2113
        %v2201 = vunpack.c.l.b16 %v2114
        %v2202 = vunpack.c.h.b16 %v2114
        %v2203 = vunpack.c.l.b16 %v2115
        %v2204 = vunpack.c.h.b16 %v2115
        %v2205 = vunpack.c.l.b16 %v2116
        %v2206 = vunpack.c.h.b16 %v2116
        %v2207 = vunpack.c.l.b16 %v2117
        %v2208 = vunpack.c.h.b16 %v2117
        %v2209 = vunpack.c.l.b16 %v2118
        %v2210 = vunpack.c.h.b16 %v2118
        %v2211 = vunpack.c.l.b16 %v2119
        %v2212 = vunpack.c.h.b16 %v2119
        %v2213 = vunpack.c.l.b16 %v2120
        %v2214 = vunpack.c.h.b16 %v2120
        %v2215 = vunpack.c.l.b16 %v2121
        %v2216 = vunpack.c.h.b16 %v2121
        %v2217 = vunpack.c.l.b16 %v2122
        %v2218 = vunpack.c.h.b16 %v2122
        %v2219 = vpack.c.b16 %v2159, %v2155
        %v2220 = vpack.c.b16 %v2160, %v2156
        %v2221 = vpack.c.b16 %v2161, %v2157
        %v2222 = vpack.c.b16 %v2162, %v2158
        %v2223 = vpack.c.b16 %v2167, %v2163
        %v2224 = vpack.c.b16 %v2168, %v2164
        %v2225 = vpack.c.b16 %v2169, %v2165
        %v2226 = vpack.c.b16 %v2170, %v2166
        %v2227 = vpack.c.b16 %v2175, %v2171
        %v2228 = vpack.c.b16 %v2176, %v2172
        %v2229 = vpack.c.b16 %v2177, %v2173
        %v2230 = vpack.c.b16 %v2178, %v2174
        %v2231 = vpack.c.b16 %v2183, %v2179
        %v2232 = vpack.c.b16 %v2184, %v2180
        %v2233 = vpack.c.b16 %v2185, %v2181
        %v2234 = vpack.c.b16 %v2186, %v2182
        %v2235 = vpack.c.b16 %v2191, %v2187
        %v2236 = vpack.c.b16 %v2192, %v2188
        %v2237 = vpack.c.b16 %v2193, %v2189
        %v2238 = vpack.c.b16 %v2194, %v2190
        %v2239 = vpack.c.b16 %v2199, %v2195
        %v2240 = vpack.c.b16 %v2200, %v2196
        %v2241 = vpack.c.b16 %v2201, %v2197
        %v2242 = vpack.c.b16 %v2202, %v2198
        %v2243 = vpack.c.b16 %v2207, %v2203
        %v2244 = vpack.c.b16 %v2208, %v2204
        %v2245 = vpack.c.b16 %v2209, %v2205
        %v2246 = vpack.c.b16 %v2210, %v2206
        %v2247 = vpack.c.b16 %v2215, %v2211
        %v2248 = vpack.c.b16 %v2216, %v2212
        %v2249 = vpack.c.b16 %v2217, %v2213
        %v2250 = vpack.c.b16 %v2218, %v2214
        %2283 = vmatpush.bf16.msra.mxu0 %v2247
        %2284 = vmatpush.bf16.msra.mxu0 %v2243
        %2285 = vmatpush.bf16.msra.mxu0 %v2239
        %2286 = vmatpush.bf16.msra.mxu0 %v2235
        %2287 = vmatpush.bf16.msra.mxu0 %v2231
        %2288 = vmatpush.bf16.msra.mxu0 %v2227
        %2289 = vmatpush.bf16.msra.mxu0 %v2223
        %2290 = vmatpush.bf16.msra.mxu0 %v2219
        %2291 = vmatmul.bf16.gmra.mxu0 %v2090
        %v2292 = vpop.f32.mrf.mxu0
        %v2293 = vadd.f32 0.0, %v2292
        %v2294 = vpop.f32.mrf.mxu0
        %2295 = vdwg.mxu0
        %2296 = vmatpush.bf16.msra.mxu0 %v2248
        %2297 = vmatpush.bf16.msra.mxu0 %v2244
        %2298 = vmatpush.bf16.msra.mxu0 %v2240
        %2299 = vmatpush.bf16.msra.mxu0 %v2236
        %2300 = vmatpush.bf16.msra.mxu0 %v2232
        %2301 = vmatpush.bf16.msra.mxu0 %v2228
        %2302 = vmatpush.bf16.msra.mxu0 %v2224
        %2303 = vmatpush.bf16.msra.mxu0 %v2220
        %2304 = vmatmul.bf16.gmra.mxu0 %v2090
        %v2305 = vpop.f32.mrf.mxu0
        %v2306 = vadd.f32 0.0, %v2305
        %v2307 = vpop.f32.mrf.mxu0
        %2308 = vdwg.mxu0
        %2309 = vmatpush.bf16.msra.mxu0 %v2249
        %2310 = vmatpush.bf16.msra.mxu0 %v2245
        %2311 = vmatpush.bf16.msra.mxu0 %v2241
        %2312 = vmatpush.bf16.msra.mxu0 %v2237
        %2313 = vmatpush.bf16.msra.mxu0 %v2233
        %2314 = vmatpush.bf16.msra.mxu0 %v2229
        %2315 = vmatpush.bf16.msra.mxu0 %v2225
        %2316 = vmatpush.bf16.msra.mxu0 %v2221
        %2317 = vmatmul.bf16.gmra.mxu0 %v2090
        %v2318 = vpop.f32.mrf.mxu0
        %v2319 = vadd.f32 0.0, %v2318
        %v2320 = vpop.f32.mrf.mxu0
        %2321 = vdwg.mxu0
        %2322 = vmatpush.bf16.msra.mxu0 %v2250
        %2323 = vmatpush.bf16.msra.mxu0 %v2246
        %2324 = vmatpush.bf16.msra.mxu0 %v2242
        %2325 = vmatpush.bf16.msra.mxu0 %v2238
        %2326 = vmatpush.bf16.msra.mxu0 %v2234
        %2327 = vmatpush.bf16.msra.mxu0 %v2230
        %2328 = vmatpush.bf16.msra.mxu0 %v2226
        %2329 = vmatpush.bf16.msra.mxu0 %v2222
        %2330 = vmatmul.bf16.gmra.mxu0 %v2090
        %v2331 = vpop.f32.mrf.mxu0
        %v2332 = vadd.f32 0.0, %v2331
        %v2333 = vpop.f32.mrf.mxu0
        %2334 = vdwg.mxu0
        %v2335 = vadd.f32 %v2086, %v2293
        %v2336 = vadd.f32 %v2087, %v2306
        %v2337 = vadd.f32 %v2088, %v2319
        %v2338 = vadd.f32 %v2089, %v2332
        %v2339 = vxor.u32 %v2335, 2147483648
        %v2340 = vmul.f32 %v2339, 1.442695
        %v2341 = vpow.pop %v2340
        %v2342 = vadd.f32 %v2341, 1.0
        %v2343 = vrcp.pop %v2342
        %v2344 = vmul.f32 %v2342, %v2343
        %v2345 = vsub.f32 1.0, %v2344
        %v2346 = vmul.f32 %v2343, %v2345
        %v2347 = vadd.f32 %v2343, %v2346
        %vm2348 = vweird.f32 %v2342
        %vm2349 = vweird.f32 %v2343
        %vm2350 = vmor %vm2348, %vm2349
        %v2351 = vsel %vm2350, %v2343, %v2347
        %v2352 = vand.u32 2147483647, %v2342
        %vm2353 = vcmp.eq.f32.partialorder %v2352, 8.507059e+37
        %v2354 = vand.u32 %v2342, 2147483648
        %v2355 = vor.u32 1.1754944e-38, %v2354
        %v2356 = vsel %vm2353, %v2355, %v2351
        %v2357 = vmul.f32 1.0, %v2356
        %v2358 = vxor.u32 %v2336, 2147483648
        %v2359 = vmul.f32 %v2358, 1.442695
        %v2360 = vpow.pop %v2359
        %v2361 = vadd.f32 %v2360, 1.0
        %v2362 = vrcp.pop %v2361
        %v2363 = vmul.f32 %v2361, %v2362
        %v2364 = vsub.f32 1.0, %v2363
        %v2365 = vmul.f32 %v2362, %v2364
        %v2366 = vadd.f32 %v2362, %v2365
        %vm2367 = vweird.f32 %v2361
        %vm2368 = vweird.f32 %v2362
        %vm2369 = vmor %vm2367, %vm2368
        %v2370 = vsel %vm2369, %v2362, %v2366
        %v2371 = vand.u32 2147483647, %v2361
        %vm2372 = vcmp.eq.f32.partialorder %v2371, 8.507059e+37
        %v2373 = vand.u32 %v2361, 2147483648
        %v2374 = vor.u32 1.1754944e-38, %v2373
        %v2375 = vsel %vm2372, %v2374, %v2370
        %v2376 = vmul.f32 1.0, %v2375
        %v2377 = vtanh.pop %v2337
        %v2378 = vxor.u32 %v2338, 2147483648
        %v2379 = vmul.f32 %v2378, 1.442695
        %v2380 = vpow.pop %v2379
        %v2381 = vadd.f32 %v2380, 1.0
        %v2382 = vrcp.pop %v2381
        %v2383 = vmul.f32 %v2381, %v2382
        %v2384 = vsub.f32 1.0, %v2383
        %v2385 = vmul.f32 %v2382, %v2384
        %v2386 = vadd.f32 %v2382, %v2385
        %vm2387 = vweird.f32 %v2381
        %vm2388 = vweird.f32 %v2382
        %vm2389 = vmor %vm2387, %vm2388
        %v2390 = vsel %vm2389, %v2382, %v2386
        %v2391 = vand.u32 2147483647, %v2381
        %vm2392 = vcmp.eq.f32.partialorder %v2391, 8.507059e+37
        %v2393 = vand.u32 %v2381, 2147483648
        %v2394 = vor.u32 1.1754944e-38, %v2393
        %v2395 = vsel %vm2392, %v2394, %v2390
        %v2396 = vmul.f32 1.0, %v2395
        %v2397 = vmul.f32 %v2376, %v2076
        %v2398 = vmul.f32 %v2357, %v2377
        %v2399 = vadd.f32 %v2397, %v2398
        %v2400 = vtanh.pop %v2399
        %v2401 = vmul.f32 %v2396, %v2400
        %s2402 = smul.u32 %s2082, 8
        %s2403 = scalar_lea.vmem %s409, %s2402 [#allocation6]
        %2404 = vst [vmem:[%s2403] sm:$0xff] %v2401
        %s2405 = scalar_select %p789, 5, 2
        %s2406 = smul.u32 %s2405, 4
        %s2407 = smul.addr %s2406, 8
        %s2408 = scalar_lea.vmem [#allocation2], %s2407
        %v2409 = vld [vmem:[%s2408] sm:$0xff]
        %v2410 = vld [vmem:[%s2408 + $0x8] sm:$0xff]
        %v2411 = vld [vmem:[%s2408 + $0x10] sm:$0xff]
        %v2412 = vld [vmem:[%s2408 + $0x18] sm:$0xff]
        %v2413 = vpack.c.bf16 %v2401, %v2401
        %v2414 = vld [vmem:[%s365] sm:$0xff]
        %v2415 = vld [vmem:[%s365 + $0x8] sm:$0xff]
        %v2416 = vld [vmem:[%s365 + $0x10] sm:$0xff]
        %v2417 = vld [vmem:[%s365 + $0x18] sm:$0xff]
        %v2418 = vld [vmem:[%s365 + $0x20] sm:$0xff]
        %v2419 = vld [vmem:[%s365 + $0x28] sm:$0xff]
        %v2420 = vld [vmem:[%s365 + $0x30] sm:$0xff]
        %v2421 = vld [vmem:[%s365 + $0x38] sm:$0xff]
        %v2422 = vld [vmem:[%s365 + $0x40] sm:$0xff]
        %v2423 = vld [vmem:[%s365 + $0x48] sm:$0xff]
        %v2424 = vld [vmem:[%s365 + $0x50] sm:$0xff]
        %v2425 = vld [vmem:[%s365 + $0x58] sm:$0xff]
        %v2426 = vld [vmem:[%s365 + $0x60] sm:$0xff]
        %v2427 = vld [vmem:[%s365 + $0x68] sm:$0xff]
        %v2428 = vld [vmem:[%s365 + $0x70] sm:$0xff]
        %v2429 = vld [vmem:[%s365 + $0x78] sm:$0xff]
        %v2430 = vld [vmem:[%s365 + $0x80] sm:$0xff]
        %v2431 = vld [vmem:[%s365 + $0x88] sm:$0xff]
        %v2432 = vld [vmem:[%s365 + $0x90] sm:$0xff]
        %v2433 = vld [vmem:[%s365 + $0x98] sm:$0xff]
        %v2434 = vld [vmem:[%s365 + $0xa0] sm:$0xff]
        %v2435 = vld [vmem:[%s365 + $0xa8] sm:$0xff]
        %v2436 = vld [vmem:[%s365 + $0xb0] sm:$0xff]
        %v2437 = vld [vmem:[%s365 + $0xb8] sm:$0xff]
        %v2438 = vld [vmem:[%s365 + $0xc0] sm:$0xff]
        %v2439 = vld [vmem:[%s365 + $0xc8] sm:$0xff]
        %v2440 = vld [vmem:[%s365 + $0xd0] sm:$0xff]
        %v2441 = vld [vmem:[%s365 + $0xd8] sm:$0xff]
        %v2442 = vld [vmem:[%s365 + $0xe0] sm:$0xff]
        %v2443 = vld [vmem:[%s365 + $0xe8] sm:$0xff]
        %v2444 = vld [vmem:[%s365 + $0xf0] sm:$0xff]
        %v2445 = vld [vmem:[%s365 + $0xf8] sm:$0xff]
        %v2478 = vunpack.c.l.b16 %v2414
        %v2479 = vunpack.c.h.b16 %v2414
        %v2480 = vunpack.c.l.b16 %v2415
        %v2481 = vunpack.c.h.b16 %v2415
        %v2482 = vunpack.c.l.b16 %v2416
        %v2483 = vunpack.c.h.b16 %v2416
        %v2484 = vunpack.c.l.b16 %v2417
        %v2485 = vunpack.c.h.b16 %v2417
        %v2486 = vunpack.c.l.b16 %v2418
        %v2487 = vunpack.c.h.b16 %v2418
        %v2488 = vunpack.c.l.b16 %v2419
        %v2489 = vunpack.c.h.b16 %v2419
        %v2490 = vunpack.c.l.b16 %v2420
        %v2491 = vunpack.c.h.b16 %v2420
        %v2492 = vunpack.c.l.b16 %v2421
        %v2493 = vunpack.c.h.b16 %v2421
        %v2494 = vunpack.c.l.b16 %v2422
        %v2495 = vunpack.c.h.b16 %v2422
        %v2496 = vunpack.c.l.b16 %v2423
        %v2497 = vunpack.c.h.b16 %v2423
        %v2498 = vunpack.c.l.b16 %v2424
        %v2499 = vunpack.c.h.b16 %v2424
        %v2500 = vunpack.c.l.b16 %v2425
        %v2501 = vunpack.c.h.b16 %v2425
        %v2502 = vunpack.c.l.b16 %v2426
        %v2503 = vunpack.c.h.b16 %v2426
        %v2504 = vunpack.c.l.b16 %v2427
        %v2505 = vunpack.c.h.b16 %v2427
        %v2506 = vunpack.c.l.b16 %v2428
        %v2507 = vunpack.c.h.b16 %v2428
        %v2508 = vunpack.c.l.b16 %v2429
        %v2509 = vunpack.c.h.b16 %v2429
        %v2510 = vunpack.c.l.b16 %v2430
        %v2511 = vunpack.c.h.b16 %v2430
        %v2512 = vunpack.c.l.b16 %v2431
        %v2513 = vunpack.c.h.b16 %v2431
        %v2514 = vunpack.c.l.b16 %v2432
        %v2515 = vunpack.c.h.b16 %v2432
        %v2516 = vunpack.c.l.b16 %v2433
        %v2517 = vunpack.c.h.b16 %v2433
        %v2518 = vunpack.c.l.b16 %v2434
        %v2519 = vunpack.c.h.b16 %v2434
        %v2520 = vunpack.c.l.b16 %v2435
        %v2521 = vunpack.c.h.b16 %v2435
        %v2522 = vunpack.c.l.b16 %v2436
        %v2523 = vunpack.c.h.b16 %v2436
        %v2524 = vunpack.c.l.b16 %v2437
        %v2525 = vunpack.c.h.b16 %v2437
        %v2526 = vunpack.c.l.b16 %v2438
        %v2527 = vunpack.c.h.b16 %v2438
        %v2528 = vunpack.c.l.b16 %v2439
        %v2529 = vunpack.c.h.b16 %v2439
        %v2530 = vunpack.c.l.b16 %v2440
        %v2531 = vunpack.c.h.b16 %v2440
        %v2532 = vunpack.c.l.b16 %v2441
        %v2533 = vunpack.c.h.b16 %v2441
        %v2534 = vunpack.c.l.b16 %v2442
        %v2535 = vunpack.c.h.b16 %v2442
        %v2536 = vunpack.c.l.b16 %v2443
        %v2537 = vunpack.c.h.b16 %v2443
        %v2538 = vunpack.c.l.b16 %v2444
        %v2539 = vunpack.c.h.b16 %v2444
        %v2540 = vunpack.c.l.b16 %v2445
        %v2541 = vunpack.c.h.b16 %v2445
        %v2542 = vpack.c.b16 %v2482, %v2478
        %v2543 = vpack.c.b16 %v2483, %v2479
        %v2544 = vpack.c.b16 %v2484, %v2480
        %v2545 = vpack.c.b16 %v2485, %v2481
        %v2546 = vpack.c.b16 %v2490, %v2486
        %v2547 = vpack.c.b16 %v2491, %v2487
        %v2548 = vpack.c.b16 %v2492, %v2488
        %v2549 = vpack.c.b16 %v2493, %v2489
        %v2550 = vpack.c.b16 %v2498, %v2494
        %v2551 = vpack.c.b16 %v2499, %v2495
        %v2552 = vpack.c.b16 %v2500, %v2496
        %v2553 = vpack.c.b16 %v2501, %v2497
        %v2554 = vpack.c.b16 %v2506, %v2502
        %v2555 = vpack.c.b16 %v2507, %v2503
        %v2556 = vpack.c.b16 %v2508, %v2504
        %v2557 = vpack.c.b16 %v2509, %v2505
        %v2558 = vpack.c.b16 %v2514, %v2510
        %v2559 = vpack.c.b16 %v2515, %v2511
        %v2560 = vpack.c.b16 %v2516, %v2512
        %v2561 = vpack.c.b16 %v2517, %v2513
        %v2562 = vpack.c.b16 %v2522, %v2518
        %v2563 = vpack.c.b16 %v2523, %v2519
        %v2564 = vpack.c.b16 %v2524, %v2520
        %v2565 = vpack.c.b16 %v2525, %v2521
        %v2566 = vpack.c.b16 %v2530, %v2526
        %v2567 = vpack.c.b16 %v2531, %v2527
        %v2568 = vpack.c.b16 %v2532, %v2528
        %v2569 = vpack.c.b16 %v2533, %v2529
        %v2570 = vpack.c.b16 %v2538, %v2534
        %v2571 = vpack.c.b16 %v2539, %v2535
        %v2572 = vpack.c.b16 %v2540, %v2536
        %v2573 = vpack.c.b16 %v2541, %v2537
        %2606 = vmatpush.bf16.msra.mxu0 %v2570
        %2607 = vmatpush.bf16.msra.mxu0 %v2566
        %2608 = vmatpush.bf16.msra.mxu0 %v2562
        %2609 = vmatpush.bf16.msra.mxu0 %v2558
        %2610 = vmatpush.bf16.msra.mxu0 %v2554
        %2611 = vmatpush.bf16.msra.mxu0 %v2550
        %2612 = vmatpush.bf16.msra.mxu0 %v2546
        %2613 = vmatpush.bf16.msra.mxu0 %v2542
        %2614 = vmatmul.bf16.gmra.mxu0 %v2413
        %v2615 = vpop.f32.mrf.mxu0
        %v2616 = vadd.f32 0.0, %v2615
        %v2617 = vpop.f32.mrf.mxu0
        %2618 = vdwg.mxu0
        %2619 = vmatpush.bf16.msra.mxu0 %v2571
        %2620 = vmatpush.bf16.msra.mxu0 %v2567
        %2621 = vmatpush.bf16.msra.mxu0 %v2563
        %2622 = vmatpush.bf16.msra.mxu0 %v2559
        %2623 = vmatpush.bf16.msra.mxu0 %v2555
        %2624 = vmatpush.bf16.msra.mxu0 %v2551
        %2625 = vmatpush.bf16.msra.mxu0 %v2547
        %2626 = vmatpush.bf16.msra.mxu0 %v2543
        %2627 = vmatmul.bf16.gmra.mxu0 %v2413
        %v2628 = vpop.f32.mrf.mxu0
        %v2629 = vadd.f32 0.0, %v2628
        %v2630 = vpop.f32.mrf.mxu0
        %2631 = vdwg.mxu0
        %2632 = vmatpush.bf16.msra.mxu0 %v2572
        %2633 = vmatpush.bf16.msra.mxu0 %v2568
        %2634 = vmatpush.bf16.msra.mxu0 %v2564
        %2635 = vmatpush.bf16.msra.mxu0 %v2560
        %2636 = vmatpush.bf16.msra.mxu0 %v2556
        %2637 = vmatpush.bf16.msra.mxu0 %v2552
        %2638 = vmatpush.bf16.msra.mxu0 %v2548
        %2639 = vmatpush.bf16.msra.mxu0 %v2544
        %2640 = vmatmul.bf16.gmra.mxu0 %v2413
        %v2641 = vpop.f32.mrf.mxu0
        %v2642 = vadd.f32 0.0, %v2641
        %v2643 = vpop.f32.mrf.mxu0
        %2644 = vdwg.mxu0
        %2645 = vmatpush.bf16.msra.mxu0 %v2573
        %2646 = vmatpush.bf16.msra.mxu0 %v2569
        %2647 = vmatpush.bf16.msra.mxu0 %v2565
        %2648 = vmatpush.bf16.msra.mxu0 %v2561
        %2649 = vmatpush.bf16.msra.mxu0 %v2557
        %2650 = vmatpush.bf16.msra.mxu0 %v2553
        %2651 = vmatpush.bf16.msra.mxu0 %v2549
        %2652 = vmatpush.bf16.msra.mxu0 %v2545
        %2653 = vmatmul.bf16.gmra.mxu0 %v2413
        %v2654 = vpop.f32.mrf.mxu0
        %v2655 = vadd.f32 0.0, %v2654
        %v2656 = vpop.f32.mrf.mxu0
        %2657 = vdwg.mxu0
        %v2658 = vadd.f32 %v2409, %v2616
        %v2659 = vadd.f32 %v2410, %v2629
        %v2660 = vadd.f32 %v2411, %v2642
        %v2661 = vadd.f32 %v2412, %v2655
        %v2662 = vxor.u32 %v2658, 2147483648
        %v2663 = vmul.f32 %v2662, 1.442695
        %v2664 = vpow.pop %v2663
        %v2665 = vadd.f32 %v2664, 1.0
        %v2666 = vrcp.pop %v2665
        %v2667 = vmul.f32 %v2665, %v2666
        %v2668 = vsub.f32 1.0, %v2667
        %v2669 = vmul.f32 %v2666, %v2668
        %v2670 = vadd.f32 %v2666, %v2669
        %vm2671 = vweird.f32 %v2665
        %vm2672 = vweird.f32 %v2666
        %vm2673 = vmor %vm2671, %vm2672
        %v2674 = vsel %vm2673, %v2666, %v2670
        %v2675 = vand.u32 2147483647, %v2665
        %vm2676 = vcmp.eq.f32.partialorder %v2675, 8.507059e+37
        %v2677 = vand.u32 %v2665, 2147483648
        %v2678 = vor.u32 1.1754944e-38, %v2677
        %v2679 = vsel %vm2676, %v2678, %v2674
        %v2680 = vmul.f32 1.0, %v2679
        %v2681 = vxor.u32 %v2659, 2147483648
        %v2682 = vmul.f32 %v2681, 1.442695
        %v2683 = vpow.pop %v2682
        %v2684 = vadd.f32 %v2683, 1.0
        %v2685 = vrcp.pop %v2684
        %v2686 = vmul.f32 %v2684, %v2685
        %v2687 = vsub.f32 1.0, %v2686
        %v2688 = vmul.f32 %v2685, %v2687
        %v2689 = vadd.f32 %v2685, %v2688
        %vm2690 = vweird.f32 %v2684
        %vm2691 = vweird.f32 %v2685
        %vm2692 = vmor %vm2690, %vm2691
        %v2693 = vsel %vm2692, %v2685, %v2689
        %v2694 = vand.u32 2147483647, %v2684
        %vm2695 = vcmp.eq.f32.partialorder %v2694, 8.507059e+37
        %v2696 = vand.u32 %v2684, 2147483648
        %v2697 = vor.u32 1.1754944e-38, %v2696
        %v2698 = vsel %vm2695, %v2697, %v2693
        %v2699 = vmul.f32 1.0, %v2698
        %v2700 = vtanh.pop %v2660
        %v2701 = vxor.u32 %v2661, 2147483648
        %v2702 = vmul.f32 %v2701, 1.442695
        %v2703 = vpow.pop %v2702
        %v2704 = vadd.f32 %v2703, 1.0
        %v2705 = vrcp.pop %v2704
        %v2706 = vmul.f32 %v2704, %v2705
        %v2707 = vsub.f32 1.0, %v2706
        %v2708 = vmul.f32 %v2705, %v2707
        %v2709 = vadd.f32 %v2705, %v2708
        %vm2710 = vweird.f32 %v2704
        %vm2711 = vweird.f32 %v2705
        %vm2712 = vmor %vm2710, %vm2711
        %v2713 = vsel %vm2712, %v2705, %v2709
        %v2714 = vand.u32 2147483647, %v2704
        %vm2715 = vcmp.eq.f32.partialorder %v2714, 8.507059e+37
        %v2716 = vand.u32 %v2704, 2147483648
        %v2717 = vor.u32 1.1754944e-38, %v2716
        %v2718 = vsel %vm2715, %v2717, %v2713
        %v2719 = vmul.f32 1.0, %v2718
        %v2720 = vmul.f32 %v2699, %v2399
        %v2721 = vmul.f32 %v2680, %v2700
        %v2722 = vadd.f32 %v2720, %v2721
        %v2723 = vtanh.pop %v2722
        %v2724 = vmul.f32 %v2719, %v2723
        %s2725 = smul.u32 %s2405, 8
        %s2726 = scalar_lea.vmem %s409, %s2725 [#allocation6]
        %2727 = vst [vmem:[%s2726] sm:$0xff] %v2724
        %s2728 = scalar_select %p789, 6, 1
        %s2729 = smul.u32 %s2728, 4
        %s2730 = smul.addr %s2729, 8
        %s2731 = scalar_lea.vmem [#allocation2], %s2730
        %v2732 = vld [vmem:[%s2731] sm:$0xff]
        %v2733 = vld [vmem:[%s2731 + $0x8] sm:$0xff]
        %v2734 = vld [vmem:[%s2731 + $0x10] sm:$0xff]
        %v2735 = vld [vmem:[%s2731 + $0x18] sm:$0xff]
        %v2736 = vpack.c.bf16 %v2724, %v2724
        %v2737 = vld [vmem:[%s365] sm:$0xff]
        %v2738 = vld [vmem:[%s365 + $0x8] sm:$0xff]
        %v2739 = vld [vmem:[%s365 + $0x10] sm:$0xff]
        %v2740 = vld [vmem:[%s365 + $0x18] sm:$0xff]
        %v2741 = vld [vmem:[%s365 + $0x20] sm:$0xff]
        %v2742 = vld [vmem:[%s365 + $0x28] sm:$0xff]
        %v2743 = vld [vmem:[%s365 + $0x30] sm:$0xff]
        %v2744 = vld [vmem:[%s365 + $0x38] sm:$0xff]
        %v2745 = vld [vmem:[%s365 + $0x40] sm:$0xff]
        %v2746 = vld [vmem:[%s365 + $0x48] sm:$0xff]
        %v2747 = vld [vmem:[%s365 + $0x50] sm:$0xff]
        %v2748 = vld [vmem:[%s365 + $0x58] sm:$0xff]
        %v2749 = vld [vmem:[%s365 + $0x60] sm:$0xff]
        %v2750 = vld [vmem:[%s365 + $0x68] sm:$0xff]
        %v2751 = vld [vmem:[%s365 + $0x70] sm:$0xff]
        %v2752 = vld [vmem:[%s365 + $0x78] sm:$0xff]
        %v2753 = vld [vmem:[%s365 + $0x80] sm:$0xff]
        %v2754 = vld [vmem:[%s365 + $0x88] sm:$0xff]
        %v2755 = vld [vmem:[%s365 + $0x90] sm:$0xff]
        %v2756 = vld [vmem:[%s365 + $0x98] sm:$0xff]
        %v2757 = vld [vmem:[%s365 + $0xa0] sm:$0xff]
        %v2758 = vld [vmem:[%s365 + $0xa8] sm:$0xff]
        %v2759 = vld [vmem:[%s365 + $0xb0] sm:$0xff]
        %v2760 = vld [vmem:[%s365 + $0xb8] sm:$0xff]
        %v2761 = vld [vmem:[%s365 + $0xc0] sm:$0xff]
        %v2762 = vld [vmem:[%s365 + $0xc8] sm:$0xff]
        %v2763 = vld [vmem:[%s365 + $0xd0] sm:$0xff]
        %v2764 = vld [vmem:[%s365 + $0xd8] sm:$0xff]
        %v2765 = vld [vmem:[%s365 + $0xe0] sm:$0xff]
        %v2766 = vld [vmem:[%s365 + $0xe8] sm:$0xff]
        %v2767 = vld [vmem:[%s365 + $0xf0] sm:$0xff]
        %v2768 = vld [vmem:[%s365 + $0xf8] sm:$0xff]
        %v2801 = vunpack.c.l.b16 %v2737
        %v2802 = vunpack.c.h.b16 %v2737
        %v2803 = vunpack.c.l.b16 %v2738
        %v2804 = vunpack.c.h.b16 %v2738
        %v2805 = vunpack.c.l.b16 %v2739
        %v2806 = vunpack.c.h.b16 %v2739
        %v2807 = vunpack.c.l.b16 %v2740
        %v2808 = vunpack.c.h.b16 %v2740
        %v2809 = vunpack.c.l.b16 %v2741
        %v2810 = vunpack.c.h.b16 %v2741
        %v2811 = vunpack.c.l.b16 %v2742
        %v2812 = vunpack.c.h.b16 %v2742
        %v2813 = vunpack.c.l.b16 %v2743
        %v2814 = vunpack.c.h.b16 %v2743
        %v2815 = vunpack.c.l.b16 %v2744
        %v2816 = vunpack.c.h.b16 %v2744
        %v2817 = vunpack.c.l.b16 %v2745
        %v2818 = vunpack.c.h.b16 %v2745
        %v2819 = vunpack.c.l.b16 %v2746
        %v2820 = vunpack.c.h.b16 %v2746
        %v2821 = vunpack.c.l.b16 %v2747
        %v2822 = vunpack.c.h.b16 %v2747
        %v2823 = vunpack.c.l.b16 %v2748
        %v2824 = vunpack.c.h.b16 %v2748
        %v2825 = vunpack.c.l.b16 %v2749
        %v2826 = vunpack.c.h.b16 %v2749
        %v2827 = vunpack.c.l.b16 %v2750
        %v2828 = vunpack.c.h.b16 %v2750
        %v2829 = vunpack.c.l.b16 %v2751
        %v2830 = vunpack.c.h.b16 %v2751
        %v2831 = vunpack.c.l.b16 %v2752
        %v2832 = vunpack.c.h.b16 %v2752
        %v2833 = vunpack.c.l.b16 %v2753
        %v2834 = vunpack.c.h.b16 %v2753
        %v2835 = vunpack.c.l.b16 %v2754
        %v2836 = vunpack.c.h.b16 %v2754
        %v2837 = vunpack.c.l.b16 %v2755
        %v2838 = vunpack.c.h.b16 %v2755
        %v2839 = vunpack.c.l.b16 %v2756
        %v2840 = vunpack.c.h.b16 %v2756
        %v2841 = vunpack.c.l.b16 %v2757
        %v2842 = vunpack.c.h.b16 %v2757
        %v2843 = vunpack.c.l.b16 %v2758
        %v2844 = vunpack.c.h.b16 %v2758
        %v2845 = vunpack.c.l.b16 %v2759
        %v2846 = vunpack.c.h.b16 %v2759
        %v2847 = vunpack.c.l.b16 %v2760
        %v2848 = vunpack.c.h.b16 %v2760
        %v2849 = vunpack.c.l.b16 %v2761
        %v2850 = vunpack.c.h.b16 %v2761
        %v2851 = vunpack.c.l.b16 %v2762
        %v2852 = vunpack.c.h.b16 %v2762
        %v2853 = vunpack.c.l.b16 %v2763
        %v2854 = vunpack.c.h.b16 %v2763
        %v2855 = vunpack.c.l.b16 %v2764
        %v2856 = vunpack.c.h.b16 %v2764
        %v2857 = vunpack.c.l.b16 %v2765
        %v2858 = vunpack.c.h.b16 %v2765
        %v2859 = vunpack.c.l.b16 %v2766
        %v2860 = vunpack.c.h.b16 %v2766
        %v2861 = vunpack.c.l.b16 %v2767
        %v2862 = vunpack.c.h.b16 %v2767
        %v2863 = vunpack.c.l.b16 %v2768
        %v2864 = vunpack.c.h.b16 %v2768
        %v2865 = vpack.c.b16 %v2805, %v2801
        %v2866 = vpack.c.b16 %v2806, %v2802
        %v2867 = vpack.c.b16 %v2807, %v2803
        %v2868 = vpack.c.b16 %v2808, %v2804
        %v2869 = vpack.c.b16 %v2813, %v2809
        %v2870 = vpack.c.b16 %v2814, %v2810
        %v2871 = vpack.c.b16 %v2815, %v2811
        %v2872 = vpack.c.b16 %v2816, %v2812
        %v2873 = vpack.c.b16 %v2821, %v2817
        %v2874 = vpack.c.b16 %v2822, %v2818
        %v2875 = vpack.c.b16 %v2823, %v2819
        %v2876 = vpack.c.b16 %v2824, %v2820
        %v2877 = vpack.c.b16 %v2829, %v2825
        %v2878 = vpack.c.b16 %v2830, %v2826
        %v2879 = vpack.c.b16 %v2831, %v2827
        %v2880 = vpack.c.b16 %v2832, %v2828
        %v2881 = vpack.c.b16 %v2837, %v2833
        %v2882 = vpack.c.b16 %v2838, %v2834
        %v2883 = vpack.c.b16 %v2839, %v2835
        %v2884 = vpack.c.b16 %v2840, %v2836
        %v2885 = vpack.c.b16 %v2845, %v2841
        %v2886 = vpack.c.b16 %v2846, %v2842
        %v2887 = vpack.c.b16 %v2847, %v2843
        %v2888 = vpack.c.b16 %v2848, %v2844
        %v2889 = vpack.c.b16 %v2853, %v2849
        %v2890 = vpack.c.b16 %v2854, %v2850
        %v2891 = vpack.c.b16 %v2855, %v2851
        %v2892 = vpack.c.b16 %v2856, %v2852
        %v2893 = vpack.c.b16 %v2861, %v2857
        %v2894 = vpack.c.b16 %v2862, %v2858
        %v2895 = vpack.c.b16 %v2863, %v2859
        %v2896 = vpack.c.b16 %v2864, %v2860
        %2929 = vmatpush.bf16.msra.mxu0 %v2893
        %2930 = vmatpush.bf16.msra.mxu0 %v2889
        %2931 = vmatpush.bf16.msra.mxu0 %v2885
        %2932 = vmatpush.bf16.msra.mxu0 %v2881
        %2933 = vmatpush.bf16.msra.mxu0 %v2877
        %2934 = vmatpush.bf16.msra.mxu0 %v2873
        %2935 = vmatpush.bf16.msra.mxu0 %v2869
        %2936 = vmatpush.bf16.msra.mxu0 %v2865
        %2937 = vmatmul.bf16.gmra.mxu0 %v2736
        %v2938 = vpop.f32.mrf.mxu0
        %v2939 = vadd.f32 0.0, %v2938
        %v2940 = vpop.f32.mrf.mxu0
        %2941 = vdwg.mxu0
        %2942 = vmatpush.bf16.msra.mxu0 %v2894
        %2943 = vmatpush.bf16.msra.mxu0 %v2890
        %2944 = vmatpush.bf16.msra.mxu0 %v2886
        %2945 = vmatpush.bf16.msra.mxu0 %v2882
        %2946 = vmatpush.bf16.msra.mxu0 %v2878
        %2947 = vmatpush.bf16.msra.mxu0 %v2874
        %2948 = vmatpush.bf16.msra.mxu0 %v2870
        %2949 = vmatpush.bf16.msra.mxu0 %v2866
        %2950 = vmatmul.bf16.gmra.mxu0 %v2736
        %v2951 = vpop.f32.mrf.mxu0
        %v2952 = vadd.f32 0.0, %v2951
        %v2953 = vpop.f32.mrf.mxu0
        %2954 = vdwg.mxu0
        %2955 = vmatpush.bf16.msra.mxu0 %v2895
        %2956 = vmatpush.bf16.msra.mxu0 %v2891
        %2957 = vmatpush.bf16.msra.mxu0 %v2887
        %2958 = vmatpush.bf16.msra.mxu0 %v2883
        %2959 = vmatpush.bf16.msra.mxu0 %v2879
        %2960 = vmatpush.bf16.msra.mxu0 %v2875
        %2961 = vmatpush.bf16.msra.mxu0 %v2871
        %2962 = vmatpush.bf16.msra.mxu0 %v2867
        %2963 = vmatmul.bf16.gmra.mxu0 %v2736
        %v2964 = vpop.f32.mrf.mxu0
        %v2965 = vadd.f32 0.0, %v2964
        %v2966 = vpop.f32.mrf.mxu0
        %2967 = vdwg.mxu0
        %2968 = vmatpush.bf16.msra.mxu0 %v2896
        %2969 = vmatpush.bf16.msra.mxu0 %v2892
        %2970 = vmatpush.bf16.msra.mxu0 %v2888
        %2971 = vmatpush.bf16.msra.mxu0 %v2884
        %2972 = vmatpush.bf16.msra.mxu0 %v2880
        %2973 = vmatpush.bf16.msra.mxu0 %v2876
        %2974 = vmatpush.bf16.msra.mxu0 %v2872
        %2975 = vmatpush.bf16.msra.mxu0 %v2868
        %2976 = vmatmul.bf16.gmra.mxu0 %v2736
        %v2977 = vpop.f32.mrf.mxu0
        %v2978 = vadd.f32 0.0, %v2977
        %v2979 = vpop.f32.mrf.mxu0
        %2980 = vdwg.mxu0
        %v2981 = vadd.f32 %v2732, %v2939
        %v2982 = vadd.f32 %v2733, %v2952
        %v2983 = vadd.f32 %v2734, %v2965
        %v2984 = vadd.f32 %v2735, %v2978
        %v2985 = vxor.u32 %v2981, 2147483648
        %v2986 = vmul.f32 %v2985, 1.442695
        %v2987 = vpow.pop %v2986
        %v2988 = vadd.f32 %v2987, 1.0
        %v2989 = vrcp.pop %v2988
        %v2990 = vmul.f32 %v2988, %v2989
        %v2991 = vsub.f32 1.0, %v2990
        %v2992 = vmul.f32 %v2989, %v2991
        %v2993 = vadd.f32 %v2989, %v2992
        %vm2994 = vweird.f32 %v2988
        %vm2995 = vweird.f32 %v2989
        %vm2996 = vmor %vm2994, %vm2995
        %v2997 = vsel %vm2996, %v2989, %v2993
        %v2998 = vand.u32 2147483647, %v2988
        %vm2999 = vcmp.eq.f32.partialorder %v2998, 8.507059e+37
        %v3000 = vand.u32 %v2988, 2147483648
        %v3001 = vor.u32 1.1754944e-38, %v3000
        %v3002 = vsel %vm2999, %v3001, %v2997
        %v3003 = vmul.f32 1.0, %v3002
        %v3004 = vxor.u32 %v2982, 2147483648
        %v3005 = vmul.f32 %v3004, 1.442695
        %v3006 = vpow.pop %v3005
        %v3007 = vadd.f32 %v3006, 1.0
        %v3008 = vrcp.pop %v3007
        %v3009 = vmul.f32 %v3007, %v3008
        %v3010 = vsub.f32 1.0, %v3009
        %v3011 = vmul.f32 %v3008, %v3010
        %v3012 = vadd.f32 %v3008, %v3011
        %vm3013 = vweird.f32 %v3007
        %vm3014 = vweird.f32 %v3008
        %vm3015 = vmor %vm3013, %vm3014
        %v3016 = vsel %vm3015, %v3008, %v3012
        %v3017 = vand.u32 2147483647, %v3007
        %vm3018 = vcmp.eq.f32.partialorder %v3017, 8.507059e+37
        %v3019 = vand.u32 %v3007, 2147483648
        %v3020 = vor.u32 1.1754944e-38, %v3019
        %v3021 = vsel %vm3018, %v3020, %v3016
        %v3022 = vmul.f32 1.0, %v3021
        %v3023 = vtanh.pop %v2983
        %v3024 = vxor.u32 %v2984, 2147483648
        %v3025 = vmul.f32 %v3024, 1.442695
        %v3026 = vpow.pop %v3025
        %v3027 = vadd.f32 %v3026, 1.0
        %v3028 = vrcp.pop %v3027
        %v3029 = vmul.f32 %v3027, %v3028
        %v3030 = vsub.f32 1.0, %v3029
        %v3031 = vmul.f32 %v3028, %v3030
        %v3032 = vadd.f32 %v3028, %v3031
        %vm3033 = vweird.f32 %v3027
        %vm3034 = vweird.f32 %v3028
        %vm3035 = vmor %vm3033, %vm3034
        %v3036 = vsel %vm3035, %v3028, %v3032
        %v3037 = vand.u32 2147483647, %v3027
        %vm3038 = vcmp.eq.f32.partialorder %v3037, 8.507059e+37
        %v3039 = vand.u32 %v3027, 2147483648
        %v3040 = vor.u32 1.1754944e-38, %v3039
        %v3041 = vsel %vm3038, %v3040, %v3036
        %v3042 = vmul.f32 1.0, %v3041
        %v3043 = vmul.f32 %v3022, %v2722
        %v3044 = vmul.f32 %v3003, %v3023
        %v3045 = vadd.f32 %v3043, %v3044
        %v3046 = vtanh.pop %v3045
        %v3047 = vmul.f32 %v3042, %v3046
        %s3048 = smul.u32 %s2728, 8
        %s3049 = scalar_lea.vmem %s409, %s3048 [#allocation6]
        %3050 = vst [vmem:[%s3049] sm:$0xff] %v3047
        %s3051 = scalar_select %p789, 7, 0
        %s3052 = smul.u32 %s3051, 4
        %s3053 = smul.addr %s3052, 8
        %s3054 = scalar_lea.vmem [#allocation2], %s3053
        %v3055 = vld [vmem:[%s3054] sm:$0xff]
        %v3056 = vld [vmem:[%s3054 + $0x8] sm:$0xff]
        %v3057 = vld [vmem:[%s3054 + $0x10] sm:$0xff]
        %v3058 = vld [vmem:[%s3054 + $0x18] sm:$0xff]
        %v3059 = vpack.c.bf16 %v3047, %v3047
        %v3060 = vld [vmem:[%s365] sm:$0xff]
        %v3061 = vld [vmem:[%s365 + $0x8] sm:$0xff]
        %v3062 = vld [vmem:[%s365 + $0x10] sm:$0xff]
        %v3063 = vld [vmem:[%s365 + $0x18] sm:$0xff]
        %v3064 = vld [vmem:[%s365 + $0x20] sm:$0xff]
        %v3065 = vld [vmem:[%s365 + $0x28] sm:$0xff]
        %v3066 = vld [vmem:[%s365 + $0x30] sm:$0xff]
        %v3067 = vld [vmem:[%s365 + $0x38] sm:$0xff]
        %v3068 = vld [vmem:[%s365 + $0x40] sm:$0xff]
        %v3069 = vld [vmem:[%s365 + $0x48] sm:$0xff]
        %v3070 = vld [vmem:[%s365 + $0x50] sm:$0xff]
        %v3071 = vld [vmem:[%s365 + $0x58] sm:$0xff]
        %v3072 = vld [vmem:[%s365 + $0x60] sm:$0xff]
        %v3073 = vld [vmem:[%s365 + $0x68] sm:$0xff]
        %v3074 = vld [vmem:[%s365 + $0x70] sm:$0xff]
        %v3075 = vld [vmem:[%s365 + $0x78] sm:$0xff]
        %v3076 = vld [vmem:[%s365 + $0x80] sm:$0xff]
        %v3077 = vld [vmem:[%s365 + $0x88] sm:$0xff]
        %v3078 = vld [vmem:[%s365 + $0x90] sm:$0xff]
        %v3079 = vld [vmem:[%s365 + $0x98] sm:$0xff]
        %v3080 = vld [vmem:[%s365 + $0xa0] sm:$0xff]
        %v3081 = vld [vmem:[%s365 + $0xa8] sm:$0xff]
        %v3082 = vld [vmem:[%s365 + $0xb0] sm:$0xff]
        %v3083 = vld [vmem:[%s365 + $0xb8] sm:$0xff]
        %v3084 = vld [vmem:[%s365 + $0xc0] sm:$0xff]
        %v3085 = vld [vmem:[%s365 + $0xc8] sm:$0xff]
        %v3086 = vld [vmem:[%s365 + $0xd0] sm:$0xff]
        %v3087 = vld [vmem:[%s365 + $0xd8] sm:$0xff]
        %v3088 = vld [vmem:[%s365 + $0xe0] sm:$0xff]
        %v3089 = vld [vmem:[%s365 + $0xe8] sm:$0xff]
        %v3090 = vld [vmem:[%s365 + $0xf0] sm:$0xff]
        %v3091 = vld [vmem:[%s365 + $0xf8] sm:$0xff]
        %v3124 = vunpack.c.l.b16 %v3060
        %v3125 = vunpack.c.h.b16 %v3060
        %v3126 = vunpack.c.l.b16 %v3061
        %v3127 = vunpack.c.h.b16 %v3061
        %v3128 = vunpack.c.l.b16 %v3062
        %v3129 = vunpack.c.h.b16 %v3062
        %v3130 = vunpack.c.l.b16 %v3063
        %v3131 = vunpack.c.h.b16 %v3063
        %v3132 = vunpack.c.l.b16 %v3064
        %v3133 = vunpack.c.h.b16 %v3064
        %v3134 = vunpack.c.l.b16 %v3065
        %v3135 = vunpack.c.h.b16 %v3065
        %v3136 = vunpack.c.l.b16 %v3066
        %v3137 = vunpack.c.h.b16 %v3066
        %v3138 = vunpack.c.l.b16 %v3067
        %v3139 = vunpack.c.h.b16 %v3067
        %v3140 = vunpack.c.l.b16 %v3068
        %v3141 = vunpack.c.h.b16 %v3068
        %v3142 = vunpack.c.l.b16 %v3069
        %v3143 = vunpack.c.h.b16 %v3069
        %v3144 = vunpack.c.l.b16 %v3070
        %v3145 = vunpack.c.h.b16 %v3070
        %v3146 = vunpack.c.l.b16 %v3071
        %v3147 = vunpack.c.h.b16 %v3071
        %v3148 = vunpack.c.l.b16 %v3072
        %v3149 = vunpack.c.h.b16 %v3072
        %v3150 = vunpack.c.l.b16 %v3073
        %v3151 = vunpack.c.h.b16 %v3073
        %v3152 = vunpack.c.l.b16 %v3074
        %v3153 = vunpack.c.h.b16 %v3074
        %v3154 = vunpack.c.l.b16 %v3075
        %v3155 = vunpack.c.h.b16 %v3075
        %v3156 = vunpack.c.l.b16 %v3076
        %v3157 = vunpack.c.h.b16 %v3076
        %v3158 = vunpack.c.l.b16 %v3077
        %v3159 = vunpack.c.h.b16 %v3077
        %v3160 = vunpack.c.l.b16 %v3078
        %v3161 = vunpack.c.h.b16 %v3078
        %v3162 = vunpack.c.l.b16 %v3079
        %v3163 = vunpack.c.h.b16 %v3079
        %v3164 = vunpack.c.l.b16 %v3080
        %v3165 = vunpack.c.h.b16 %v3080
        %v3166 = vunpack.c.l.b16 %v3081
        %v3167 = vunpack.c.h.b16 %v3081
        %v3168 = vunpack.c.l.b16 %v3082
        %v3169 = vunpack.c.h.b16 %v3082
        %v3170 = vunpack.c.l.b16 %v3083
        %v3171 = vunpack.c.h.b16 %v3083
        %v3172 = vunpack.c.l.b16 %v3084
        %v3173 = vunpack.c.h.b16 %v3084
        %v3174 = vunpack.c.l.b16 %v3085
        %v3175 = vunpack.c.h.b16 %v3085
        %v3176 = vunpack.c.l.b16 %v3086
        %v3177 = vunpack.c.h.b16 %v3086
        %v3178 = vunpack.c.l.b16 %v3087
        %v3179 = vunpack.c.h.b16 %v3087
        %v3180 = vunpack.c.l.b16 %v3088
        %v3181 = vunpack.c.h.b16 %v3088
        %v3182 = vunpack.c.l.b16 %v3089
        %v3183 = vunpack.c.h.b16 %v3089
        %v3184 = vunpack.c.l.b16 %v3090
        %v3185 = vunpack.c.h.b16 %v3090
        %v3186 = vunpack.c.l.b16 %v3091
        %v3187 = vunpack.c.h.b16 %v3091
        %v3188 = vpack.c.b16 %v3128, %v3124
        %v3189 = vpack.c.b16 %v3129, %v3125
        %v3190 = vpack.c.b16 %v3130, %v3126
        %v3191 = vpack.c.b16 %v3131, %v3127
        %v3192 = vpack.c.b16 %v3136, %v3132
        %v3193 = vpack.c.b16 %v3137, %v3133
        %v3194 = vpack.c.b16 %v3138, %v3134
        %v3195 = vpack.c.b16 %v3139, %v3135
        %v3196 = vpack.c.b16 %v3144, %v3140
        %v3197 = vpack.c.b16 %v3145, %v3141
        %v3198 = vpack.c.b16 %v3146, %v3142
        %v3199 = vpack.c.b16 %v3147, %v3143
        %v3200 = vpack.c.b16 %v3152, %v3148
        %v3201 = vpack.c.b16 %v3153, %v3149
        %v3202 = vpack.c.b16 %v3154, %v3150
        %v3203 = vpack.c.b16 %v3155, %v3151
        %v3204 = vpack.c.b16 %v3160, %v3156
        %v3205 = vpack.c.b16 %v3161, %v3157
        %v3206 = vpack.c.b16 %v3162, %v3158
        %v3207 = vpack.c.b16 %v3163, %v3159
        %v3208 = vpack.c.b16 %v3168, %v3164
        %v3209 = vpack.c.b16 %v3169, %v3165
        %v3210 = vpack.c.b16 %v3170, %v3166
        %v3211 = vpack.c.b16 %v3171, %v3167
        %v3212 = vpack.c.b16 %v3176, %v3172
        %v3213 = vpack.c.b16 %v3177, %v3173
        %v3214 = vpack.c.b16 %v3178, %v3174
        %v3215 = vpack.c.b16 %v3179, %v3175
        %v3216 = vpack.c.b16 %v3184, %v3180
        %v3217 = vpack.c.b16 %v3185, %v3181
        %v3218 = vpack.c.b16 %v3186, %v3182
        %v3219 = vpack.c.b16 %v3187, %v3183
        %3252 = vmatpush.bf16.msra.mxu0 %v3216
        %3253 = vmatpush.bf16.msra.mxu0 %v3212
        %3254 = vmatpush.bf16.msra.mxu0 %v3208
        %3255 = vmatpush.bf16.msra.mxu0 %v3204
        %3256 = vmatpush.bf16.msra.mxu0 %v3200
        %3257 = vmatpush.bf16.msra.mxu0 %v3196
        %3258 = vmatpush.bf16.msra.mxu0 %v3192
        %3259 = vmatpush.bf16.msra.mxu0 %v3188
        %3260 = vmatmul.bf16.gmra.mxu0 %v3059
        %v3261 = vpop.f32.mrf.mxu0
        %v3262 = vadd.f32 0.0, %v3261
        %v3263 = vpop.f32.mrf.mxu0
        %3264 = vdwg.mxu0
        %3265 = vmatpush.bf16.msra.mxu0 %v3217
        %3266 = vmatpush.bf16.msra.mxu0 %v3213
        %3267 = vmatpush.bf16.msra.mxu0 %v3209
        %3268 = vmatpush.bf16.msra.mxu0 %v3205
        %3269 = vmatpush.bf16.msra.mxu0 %v3201
        %3270 = vmatpush.bf16.msra.mxu0 %v3197
        %3271 = vmatpush.bf16.msra.mxu0 %v3193
        %3272 = vmatpush.bf16.msra.mxu0 %v3189
        %3273 = vmatmul.bf16.gmra.mxu0 %v3059
        %v3274 = vpop.f32.mrf.mxu0
        %v3275 = vadd.f32 0.0, %v3274
        %v3276 = vpop.f32.mrf.mxu0
        %3277 = vdwg.mxu0
        %3278 = vmatpush.bf16.msra.mxu0 %v3218
        %3279 = vmatpush.bf16.msra.mxu0 %v3214
        %3280 = vmatpush.bf16.msra.mxu0 %v3210
        %3281 = vmatpush.bf16.msra.mxu0 %v3206
        %3282 = vmatpush.bf16.msra.mxu0 %v3202
        %3283 = vmatpush.bf16.msra.mxu0 %v3198
        %3284 = vmatpush.bf16.msra.mxu0 %v3194
        %3285 = vmatpush.bf16.msra.mxu0 %v3190
        %3286 = vmatmul.bf16.gmra.mxu0 %v3059
        %v3287 = vpop.f32.mrf.mxu0
        %v3288 = vadd.f32 0.0, %v3287
        %v3289 = vpop.f32.mrf.mxu0
        %3290 = vdwg.mxu0
        %3291 = vmatpush.bf16.msra.mxu0 %v3219
        %3292 = vmatpush.bf16.msra.mxu0 %v3215
        %3293 = vmatpush.bf16.msra.mxu0 %v3211
        %3294 = vmatpush.bf16.msra.mxu0 %v3207
        %3295 = vmatpush.bf16.msra.mxu0 %v3203
        %3296 = vmatpush.bf16.msra.mxu0 %v3199
        %3297 = vmatpush.bf16.msra.mxu0 %v3195
        %3298 = vmatpush.bf16.msra.mxu0 %v3191
        %3299 = vmatmul.bf16.gmra.mxu0 %v3059
        %v3300 = vpop.f32.mrf.mxu0
        %v3301 = vadd.f32 0.0, %v3300
        %v3302 = vpop.f32.mrf.mxu0
        %3303 = vdwg.mxu0
        %v3304 = vadd.f32 %v3055, %v3262
        %v3305 = vadd.f32 %v3056, %v3275
        %v3306 = vadd.f32 %v3057, %v3288
        %v3307 = vadd.f32 %v3058, %v3301
        %v3308 = vxor.u32 %v3304, 2147483648
        %v3309 = vmul.f32 %v3308, 1.442695
        %v3310 = vpow.pop %v3309
        %v3311 = vadd.f32 %v3310, 1.0
        %v3312 = vrcp.pop %v3311
        %v3313 = vmul.f32 %v3311, %v3312
        %v3314 = vsub.f32 1.0, %v3313
        %v3315 = vmul.f32 %v3312, %v3314
        %v3316 = vadd.f32 %v3312, %v3315
        %vm3317 = vweird.f32 %v3311
        %vm3318 = vweird.f32 %v3312
        %vm3319 = vmor %vm3317, %vm3318
        %v3320 = vsel %vm3319, %v3312, %v3316
        %v3321 = vand.u32 2147483647, %v3311
        %vm3322 = vcmp.eq.f32.partialorder %v3321, 8.507059e+37
        %v3323 = vand.u32 %v3311, 2147483648
        %v3324 = vor.u32 1.1754944e-38, %v3323
        %v3325 = vsel %vm3322, %v3324, %v3320
        %v3326 = vmul.f32 1.0, %v3325
        %v3327 = vxor.u32 %v3305, 2147483648
        %v3328 = vmul.f32 %v3327, 1.442695
        %v3329 = vpow.pop %v3328
        %v3330 = vadd.f32 %v3329, 1.0
        %v3331 = vrcp.pop %v3330
        %v3332 = vmul.f32 %v3330, %v3331
        %v3333 = vsub.f32 1.0, %v3332
        %v3334 = vmul.f32 %v3331, %v3333
        %v3335 = vadd.f32 %v3331, %v3334
        %vm3336 = vweird.f32 %v3330
        %vm3337 = vweird.f32 %v3331
        %vm3338 = vmor %vm3336, %vm3337
        %v3339 = vsel %vm3338, %v3331, %v3335
        %v3340 = vand.u32 2147483647, %v3330
        %vm3341 = vcmp.eq.f32.partialorder %v3340, 8.507059e+37
        %v3342 = vand.u32 %v3330, 2147483648
        %v3343 = vor.u32 1.1754944e-38, %v3342
        %v3344 = vsel %vm3341, %v3343, %v3339
        %v3345 = vmul.f32 1.0, %v3344
        %v3346 = vtanh.pop %v3306
        %v3347 = vxor.u32 %v3307, 2147483648
        %v3348 = vmul.f32 %v3347, 1.442695
        %v3349 = vpow.pop %v3348
        %v3350 = vadd.f32 %v3349, 1.0
        %v3351 = vrcp.pop %v3350
        %v3352 = vmul.f32 %v3350, %v3351
        %v3353 = vsub.f32 1.0, %v3352
        %v3354 = vmul.f32 %v3351, %v3353
        %v3355 = vadd.f32 %v3351, %v3354
        %vm3356 = vweird.f32 %v3350
        %vm3357 = vweird.f32 %v3351
        %vm3358 = vmor %vm3356, %vm3357
        %v3359 = vsel %vm3358, %v3351, %v3355
        %v3360 = vand.u32 2147483647, %v3350
        %vm3361 = vcmp.eq.f32.partialorder %v3360, 8.507059e+37
        %v3362 = vand.u32 %v3350, 2147483648
        %v3363 = vor.u32 1.1754944e-38, %v3362
        %v3364 = vsel %vm3361, %v3363, %v3359
        %v3365 = vmul.f32 1.0, %v3364
        %v3366 = vmul.f32 %v3345, %v3045
        %v3367 = vmul.f32 %v3326, %v3346
        %v3368 = vadd.f32 %v3366, %v3367
        %v3369 = vtanh.pop %v3368
        %v3370 = vmul.f32 %v3365, %v3369
        %s3371 = smul.u32 %s3051, 8
        %s3372 = scalar_lea.vmem %s409, %s3371 [#allocation6]
        %3373 = vst [vmem:[%s3372] sm:$0xff] %v3370
        %s3374 = sand.u32 %s179, 1
        %s3375 = sand.u32 %s179, 1
        %s3376 = smul.addr %s3375, 64
        %s3377 = scalar_lea.vmem [#allocation6], %s3376
        // Predicated region
        $region72: #{reaction_encoder_forward.3} parent=62 // pred_check
          %p3378 = pneg %p189
        $region73: #{reaction_encoder_forward.3} parent=62 // pred_check_branch
          %3380 = sbr.rel (%p3378) target = $region75
        $region74: #{reaction_encoder_forward.3} parent=62 // pred_region
          %s3381 = smul.addr %s20, 8
          %s3382 = scalar_lea.vmem %s6, %s3381
          // Predicated region
          $region76: #{reaction_encoder_forward.3} parent=74 // pred_check
            _
          $region77: #{reaction_encoder_forward.3} parent=74 // pred_check_branch
            %3384 = sbr.rel (0) target = $region79
          $region78: #{reaction_encoder_forward.3} parent=74 // pred_region
            // Predicated region
            $region80: #{reaction_encoder_forward.3} parent=78 // pred_check
              _
            $region81: #{reaction_encoder_forward.3} parent=78 // pred_check_branch
              %3386 = sbr.rel (0) target = $region83
            $region82: #{reaction_encoder_forward.3} parent=78 // pred_region
              // Predicated region
              $region95: #{reaction_encoder_forward.3} parent=82 // pred_check
                _
              $region96: #{reaction_encoder_forward.3} parent=82 // pred_check_branch
                %3416 = sbr.rel (0) target = $region98
              $region97: #{reaction_encoder_forward.3} parent=82 // pred_region
                loop: start=0, step=1, limit=1
                $region99: #{reaction_encoder_forward.3} parent=97 // loop_pre_header
                  _
                $region100: #{reaction_encoder_forward.3} parent=97 // loop_header
                  %s3418 = sphi 0, %s3422
                  %p3419 = scmp.ge.s32.totalorder %s3418, 1
                  %s3423 = sphi %s3377, %s3377
                  %s3424 = sphi %s3382, %s3382
                $region101: #{reaction_encoder_forward.3} parent=97 // loop_header_branch
                  %3421 = sbr.rel (%p3419) target = $region105
                $region102: #{reaction_encoder_forward.3} parent=97 // loop_body
                  %v3425 = vld [vmem:[%s3423] sm:$0xff]
                  %3426 = vst [vmem:[%s3424] sm:$0xff] %v3425
                  %v3427 = vld [vmem:[%s3423 + $0x8] sm:$0xff]
                  %3428 = vst [vmem:[%s3424 + $0x10] sm:$0xff] %v3427
                  %v3429 = vld [vmem:[%s3423 + $0x10] sm:$0xff]
                  %3430 = vst [vmem:[%s3424 + $0x20] sm:$0xff] %v3429
                  %v3431 = vld [vmem:[%s3423 + $0x18] sm:$0xff]
                  %3432 = vst [vmem:[%s3424 + $0x30] sm:$0xff] %v3431
                  %v3433 = vld [vmem:[%s3423 + $0x20] sm:$0xff]
                  %3434 = vst [vmem:[%s3424 + $0x40] sm:$0xff] %v3433
                  %v3435 = vld [vmem:[%s3423 + $0x28] sm:$0xff]
                  %3436 = vst [vmem:[%s3424 + $0x50] sm:$0xff] %v3435
                  %v3437 = vld [vmem:[%s3423 + $0x30] sm:$0xff]
                  %3438 = vst [vmem:[%s3424 + $0x60] sm:$0xff] %v3437
                  %v3439 = vld [vmem:[%s3423 + $0x38] sm:$0xff]
                  %3440 = vst [vmem:[%s3424 + $0x70] sm:$0xff] %v3439
                $region103: #{reaction_encoder_forward.3} parent=97 // loop_footer
                  %s3422 = sadd.s32 1, %s3418
                $region104: #{reaction_encoder_forward.3} parent=97 // loop_footer_branch
                  %3417 = sbr.rel target = $region100
                $region105: #{reaction_encoder_forward.3} parent=97 // loop_exit
                  _
              $region98: #{reaction_encoder_forward.3} parent=82 // pred_fallthru
                _
              // Predicated region
              $region106: #{reaction_encoder_forward.3} parent=82 // pred_check
                _
              $region107: #{reaction_encoder_forward.3} parent=82 // pred_check_branch
                %3442 = sbr.rel target = $region109
              $region108: #{reaction_encoder_forward.3} parent=82 // pred_region
                _
              $region109: #{reaction_encoder_forward.3} parent=82 // pred_fallthru
                _
            $region83: #{reaction_encoder_forward.3} parent=78 // pred_fallthru
              _
            // Predicated region
            $region84: #{reaction_encoder_forward.3} parent=78 // pred_check
              _
            $region85: #{reaction_encoder_forward.3} parent=78 // pred_check_branch
              %3388 = sbr.rel target = $region87
            $region86: #{reaction_encoder_forward.3} parent=78 // pred_region
              %s3390 = ssub.s32 256, 1
              loop: start=0, step=1, limit=1
              $region88: #{reaction_encoder_forward.3} parent=86 // loop_pre_header
                _
              $region89: #{reaction_encoder_forward.3} parent=86 // loop_header
                %s3392 = sphi 0, %s3396
                %p3393 = scmp.ge.s32.totalorder %s3392, 1
                %s3397 = sphi %s3377, %s3377
                %s3398 = sphi %s3382, %s3382
              $region90: #{reaction_encoder_forward.3} parent=86 // loop_header_branch
                %3395 = sbr.rel (%p3393) target = $region94
              $region91: #{reaction_encoder_forward.3} parent=86 // loop_body
                %v3399 = vld [vmem:[%s3397] sm:%s3390]
                %3400 = vst [vmem:[%s3398] sm:%s3390] %v3399
                %v3401 = vld [vmem:[%s3397 + $0x8] sm:%s3390]
                %3402 = vst [vmem:[%s3398 + $0x10] sm:%s3390] %v3401
                %v3403 = vld [vmem:[%s3397 + $0x10] sm:%s3390]
                %3404 = vst [vmem:[%s3398 + $0x20] sm:%s3390] %v3403
                %v3405 = vld [vmem:[%s3397 + $0x18] sm:%s3390]
                %3406 = vst [vmem:[%s3398 + $0x30] sm:%s3390] %v3405
                %v3407 = vld [vmem:[%s3397 + $0x20] sm:%s3390]
                %3408 = vst [vmem:[%s3398 + $0x40] sm:%s3390] %v3407
                %v3409 = vld [vmem:[%s3397 + $0x28] sm:%s3390]
                %3410 = vst [vmem:[%s3398 + $0x50] sm:%s3390] %v3409
                %v3411 = vld [vmem:[%s3397 + $0x30] sm:%s3390]
                %3412 = vst [vmem:[%s3398 + $0x60] sm:%s3390] %v3411
                %v3413 = vld [vmem:[%s3397 + $0x38] sm:%s3390]
                %3414 = vst [vmem:[%s3398 + $0x70] sm:%s3390] %v3413
              $region92: #{reaction_encoder_forward.3} parent=86 // loop_footer
                %s3396 = sadd.s32 1, %s3392
              $region93: #{reaction_encoder_forward.3} parent=86 // loop_footer_branch
                %3391 = sbr.rel target = $region89
              $region94: #{reaction_encoder_forward.3} parent=86 // loop_exit
                _
            $region87: #{reaction_encoder_forward.3} parent=78 // pred_fallthru
              _
          $region79: #{reaction_encoder_forward.3} parent=74 // pred_fallthru
            _
          %3443 = vnop
        $region75: #{reaction_encoder_forward.3} parent=62 // pred_fallthru
          _
      $region63: #{reaction_encoder_forward.3} parent=5 // pred_fallthru
        _
      %p3444 = scmp.le.s32.totalorder 2, %s15
      // Predicated region
      $region110: #{reaction_encoder_forward.3} parent=5 // pred_check
        %p3445 = pneg %p3444
      $region111: #{reaction_encoder_forward.3} parent=5 // pred_check_branch
        %3447 = sbr.rel (%p3445) target = $region113
      $region112: #{reaction_encoder_forward.3} parent=5 // pred_region
        %s3448 = ssub.s32 %s15, 2
        // Predicated region
        $region114: #{reaction_encoder_forward.3} parent=112 // pred_check
          %p3449 = pneg %p195
        $region115: #{reaction_encoder_forward.3} parent=112 // pred_check_branch
          %3451 = sbr.rel (%p3449) target = $region117
        $region116: #{reaction_encoder_forward.3} parent=112 // pred_region
          %s3452 = sand.u32 %s180, 1
          %s3453 = sand.u32 %s180, 1
          %s3454 = smul.addr %s3453, 64
          %s3455 = scalar_lea.vmem [#allocation6], %s3454
        $region117: #{reaction_encoder_forward.3} parent=112 // pred_fallthru
          _
      $region113: #{reaction_encoder_forward.3} parent=5 // pred_fallthru
        _
    $region6: #{reaction_encoder_forward.3} parent=1 // loop_footer
      %s19 = sadd.s32 1, %s15
    $region7: #{reaction_encoder_forward.3} parent=1 // loop_footer_branch
      %14 = sbr.rel target = $region3
    $region8: #{reaction_encoder_forward.3} parent=1 // loop_exit
      _
    %3456 = vsyncpa [#allocation5], 1
    %s3457 = scalar_lea.sflag [#allocation5], 1
    %3458 = vsyncpa %s3457, 1

</llo_original>
